<compile_context>
chip_gen: v5e
topology: v5e:2x2
jax: 0.10.0
libtpu: 0.0.40
codegen_flags: <defaults>
</compile_context>

<pallas_src>
import jax
import jax.numpy as jnp
from jax import lax
from jax.experimental import pallas as pl
from jax.experimental.pallas import tpu as pltpu


# ----------------------------------------------------------------------------
# Block-Toeplitz weights over the W axis, with the W zero-padding folded in.
#   w: (3,3,3,Cin,Cout) (kd,kh,kw,ci,co)  ->  (9, W*Cin, W*Cout)
#   T[kd*3+kh, x*Cin+ci, y*Cout+co] = w[kd,kh,x-y+1,ci,co] if 0 <= x-y+1 < 3 else 0
# so  row(W*Cin) @ T[t]  ==  kw-convolution (zero padded in W) of that row for tap t.
# ----------------------------------------------------------------------------
def _toeplitz_weights(w, W):
    Cin, Cout = w.shape[3], w.shape[4]
    wi = jnp.arange(W)
    # sel[k, y, x] = (x == y + k - 1), zero outside [0, W)
    sel = (wi[None, None, :] == (wi[None, :, None] + jnp.arange(3)[:, None, None] - 1))
    sel = sel.astype(w.dtype)                                  # (3, W_out, W_in)
    wt = jnp.einsum('kyx,dhkio->dhxiyo', sel, w)               # (3,3,W_in,Cin,W_out,Cout)
    return wt.reshape(9, W * Cin, W * Cout)


# ----------------------------------------------------------------------------
# Wrapper-side input prep: (N, D, H, W, C) f32 ->
#   (N, D, H+2, W*C) bf16, depth re-ordered parity-major (all even d, then all odd d),
#   H zero-padded by 1 on each side (the D halo + channel concat are done in-kernel,
#   the W halo is folded into the weights).
# ----------------------------------------------------------------------------
def _prep_input(v):
    n, d, h, w, c = v.shape
    v = jnp.pad(v, ((0, 0), (0, 0), (1, 1), (0, 0), (0, 0)))
    v = v.reshape(n, d // 2, 2, h + 2, w * c)
    v = jnp.transpose(v, (0, 2, 1, 3, 4))                      # parity-major depth
    return v.reshape(n, d, h + 2, w * c).astype(jnp.bfloat16)


# ----------------------------------------------------------------------------
# Fused kernel: CBR1 + CBR2 over one whole sample per grid step.
# ----------------------------------------------------------------------------
def _make_double_cbr_kernel(D, H, W, c1a, c1b, cm, co):
    D2 = D // 2
    MH = D2 * H                      # matmul rows per depth-parity group
    wc1a = W * c1a
    wc1 = W * (c1a + c1b)
    wcm = W * cm
    wco = W * co

    # Even-output / odd-output plane sources per kd tap.  Padded plane p (= input
    # depth p-1, halo at p=0 and p=D+1) lives in (even_scratch if p even else
    # odd_scratch)[p // 2].
    def conv_taps(src_e, src_o, wt_ref, K, Nout, row_off):
        plane_map = ((src_e, 0, src_o, 0),     # kd = 0
                     (src_o, 0, src_e, 1),     # kd = 1
                     (src_e, 1, src_o, 1))     # kd = 2
        acc = jnp.zeros((2 * MH, Nout), jnp.float32)
        for kd in range(3):
            ref_e, off_e, ref_o, off_o = plane_map[kd]
            for kh in range(3):
                r0 = row_off + kh
                se = ref_e[off_e:off_e + D2, r0:r0 + H, :].reshape(MH, K)
                so = ref_o[off_o:off_o + D2, r0:r0 + H, :].reshape(MH, K)
                slab = jnp.concatenate([se, so], axis=0)       # (2*MH, K) = (256, K)
                acc = acc + jnp.dot(slab, wt_ref[kd * 3 + kh],
                                    preferred_element_type=jnp.float32)
        return acc

    def kernel(x1_ref, x2_ref, wt1_ref, s1_ref, b1_ref, wt2_ref, s2_ref, b2_ref,
               o_ref, xs_e, xs_o, mid_e, mid_o):
        # x1_ref : (1, D, H+2, W*c1a) bf16   depth parity-major, H pre-padded
        # x2_ref : (1, D, H+2, W*c1b) bf16
        # wt1_ref: (9, W*C1, W*Cm)    bf16   Toeplitz weights (K rows: [x1 block | x2 block])
        # wt2_ref: (9, W*Cm, W*Cout)  bf16
        # s*/b*  : (1, W*C)           f32    folded BN scale/bias (tiled over W)
        # o_ref  : (1, D/2*H, 2*W*Cout) f32  lane-dense, even/odd depth packed in lanes
        # xs_e/o : (D/2+1, H+2, W*C1) bf16   padded input, even/odd padded planes
        # mid_e/o: (D/2+1, H+4, W*Cm) bf16   CBR1 output, interior rows 2..H+1 (aligned)
        bf = jnp.bfloat16

        # ---- assemble padded, channel-concatenated input volume in VMEM ------------
        # even input depths -> odd padded planes (xs_o[0:D2]); odd -> even (xs_e[1:]).
        xs_o[0:D2, :, 0:wc1a] = x1_ref[0, 0:D2]
        xs_o[0:D2, :, wc1a:wc1] = x2_ref[0, 0:D2]
        xs_e[1:D2 + 1, :, 0:wc1a] = x1_ref[0, D2:D]
        xs_e[1:D2 + 1, :, wc1a:wc1] = x2_ref[0, D2:D]
        xs_e[0:1] = jnp.zeros((1, H + 2, wc1), bf)       # depth halo (padded plane 0)
        xs_o[D2:D2 + 1] = jnp.zeros((1, H + 2, wc1), bf)  # depth halo (padded plane D+1)

        # ---- CBR1: 9 matmuls, M = D*H, K = W*C1, N = W*Cm ---------------------------
        acc1 = conv_taps(xs_e, xs_o, wt1_ref, wc1, wcm, 0)
        y1 = jnp.maximum(acc1 * s1_ref[...] + b1_ref[...], 0.0).astype(bf)
        y1e = y1[0:MH].reshape(D2, H, wcm)          # even output depths
        y1o = y1[MH:2 * MH].reshape(D2, H, wcm)     # odd output depths

        # ---- bf16 intermediate stays in VMEM; zero only its halo --------------------
        zrows = jnp.zeros((D2 + 1, 2, wcm), bf)
        mid_e[:, 0:2, :] = zrows
        mid_e[:, H + 2:H + 4, :] = zrows
        mid_o[:, 0:2, :] = zrows
        mid_o[:, H + 2:H + 4, :] = zrows
        mid_e[0:1] = jnp.zeros((1, H + 4, wcm), bf)
        mid_o[D2:D2 + 1] = jnp.zeros((1, H + 4, wcm), bf)
        mid_o[0:D2, 2:H + 2, :] = y1e               # even d -> odd padded planes
        mid_e[1:D2 + 1, 2:H + 2, :] = y1o           # odd d  -> even padded planes

        # ---- CBR2 --------------------------------------------------------------------
        acc2 = conv_taps(mid_e, mid_o, wt2_ref, wcm, wco, 1)
        y2 = jnp.maximum(acc2 * s2_ref[...] + b2_ref[...], 0.0)
        # lane-dense (>=128 wide) output block: [even-depth | odd-depth] per row
        o_ref[0, :, 0:wco] = y2[0:MH]
        o_ref[0, :, wco:2 * wco] = y2[MH:2 * MH]

    return kernel


def _vmem_bytes_estimate(D, H, W, c1a, c1b, cm, co):
    D2, bfb, f32b = D // 2, 2, 4
    c1 = c1a + c1b
    x_blocks = 2 * D * (H + 2) * W * c1 * bfb                       # double-buffered inputs
    w_blocks = 2 * 9 * (W * c1 * W * cm + W * cm * W * co) * bfb    # (weights double-buffered)
    sb = 2 * 2 * (W * cm + W * co) * f32b
    out_block = 2 * (D2 * H) * (2 * W * co) * f32b
    scratch = (2 * (D2 + 1) * (H + 2) * W * c1 + 2 * (D2 + 1) * (H + 4) * W * cm) * bfb
    return x_blocks + w_blocks + sb + out_block + scratch


def double_cbr_fused(x1u_cl, x2_cl, p1, p2):
    """x1u_cl: (N, D, H, W, C1a), x2_cl: (N, D, H, W, C1b) f32 channels-last
    -> (N, D, H, W, Cout) f32 = relu(bn(conv(relu(bn(conv(concat))))))."""
    N, D, H, W, c1a = x1u_cl.shape
    c1b = x2_cl.shape[-1]
    c1 = c1a + c1b
    cm = p1["w"].shape[-1]
    co = p2["w"].shape[-1]
    assert p1["w"].shape[-2] == c1 and p2["w"].shape[-2] == cm
    assert D % 2 == 0, "depth must be even for the parity-packed layout"
    D2 = D // 2

    # VMEM budget guard (v7x only has 64 MiB physical VMEM).
    vmem_est = _vmem_bytes_estimate(D, H, W, c1a, c1b, cm, co)
    # TODO(synk): add a Cout / W-strip tiled fallback when the resident set exceeds
    # ~half of VMEM at real decoder channel widths.
    assert vmem_est < 32 * 1024 * 1024, f"whole-sample tiling needs {vmem_est} B of VMEM"

    x1b = _prep_input(x1u_cl)                                  # (N, D, H+2, W*c1a) bf16
    x2b = _prep_input(x2_cl)

    w1 = p1["w"]
    # K rows ordered as [x1_up channel block | x2 channel block] to match the in-kernel
    # lane layout (conv is linear in input channels, so concat can stay inside the kernel).
    wt1 = jnp.concatenate(
        [_toeplitz_weights(w1[:, :, :, :c1a, :], W),
         _toeplitz_weights(w1[:, :, :, c1a:, :], W)], axis=1).astype(jnp.bfloat16)
    wt2 = _toeplitz_weights(p2["w"], W).astype(jnp.bfloat16)
    s1 = jnp.tile(p1["scale"].astype(jnp.float32), W).reshape(1, W * cm)
    b1 = jnp.tile(p1["bias"].astype(jnp.float32), W).reshape(1, W * cm)
    s2 = jnp.tile(p2["scale"].astype(jnp.float32), W).reshape(1, W * co)
    b2 = jnp.tile(p2["bias"].astype(jnp.float32), W).reshape(1, W * co)

    kernel = _make_double_cbr_kernel(D, H, W, c1a, c1b, cm, co)

    # TODO(synk): for v7x with very small batches, add a second "parallel" grid axis
    # (halo-aware D chunks) so each TensorCore gets >1 step of pipeline depth.
    # TODO(synk): weight/scale/bias blocks are grid-invariant and could be single-
    # buffered (pipeline_mode=pl.Buffered(1)) to shave VMEM at large channel counts.
    out = pl.pallas_call(
        kernel,
        out_shape=jax.ShapeDtypeStruct((N, D2 * H, 2 * W * co), jnp.float32),
        grid_spec=pltpu.PrefetchScalarGridSpec(
            num_scalar_prefetch=0,
            grid=(N,),
            in_specs=[
                pl.BlockSpec((1, D, H + 2, W * c1a), lambda n: (n, 0, 0, 0)),
                pl.BlockSpec((1, D, H + 2, W * c1b), lambda n: (n, 0, 0, 0)),
                pl.BlockSpec((9, W * c1, W * cm), lambda n: (0, 0, 0)),
                pl.BlockSpec((1, W * cm), lambda n: (0, 0)),
                pl.BlockSpec((1, W * cm), lambda n: (0, 0)),
                pl.BlockSpec((9, W * cm, W * co), lambda n: (0, 0, 0)),
                pl.BlockSpec((1, W * co), lambda n: (0, 0)),
                pl.BlockSpec((1, W * co), lambda n: (0, 0)),
            ],
            out_specs=pl.BlockSpec((1, D2 * H, 2 * W * co), lambda n: (n, 0, 0)),
            scratch_shapes=[
                pltpu.VMEM((D2 + 1, H + 2, W * c1), jnp.bfloat16),   # xs_e
                pltpu.VMEM((D2 + 1, H + 2, W * c1), jnp.bfloat16),   # xs_o
                pltpu.VMEM((D2 + 1, H + 4, W * cm), jnp.bfloat16),   # mid_e
                pltpu.VMEM((D2 + 1, H + 4, W * cm), jnp.bfloat16),   # mid_o
            ],
        ),
        compiler_params=pltpu.CompilerParams(
            dimension_semantics=("parallel",),
            vmem_limit_bytes=32 * 1024 * 1024),
    )(x1b, x2b, wt1, s1, b1, wt2, s2, b2)

    # Un-interleave the lane-packed even/odd depth planes (reshape + one small transpose).
    out = out.reshape(N, D2, H, 2, W, co)
    out = jnp.transpose(out, (0, 1, 3, 2, 4, 5)).reshape(N, D, H, W, co)
    return out


# ----------------------------------------------------------------------------
# Trilinear upsample (align_corners=True), separable, channels-last.
# TODO(synk): upsample stays in plain JAX (tiny data-dependent lerp glue); only the
# NCDHW<->NDHWC transposes sit outside the fused Pallas kernel.
# ----------------------------------------------------------------------------
def _upsample_linear_axis(x, axis, scale):
    in_size = x.shape[axis]
    out_size = in_size * scale
    if in_size == 1:
        reps = [1] * x.ndim
        reps[axis] = out_size
        return jnp.tile(x, reps)
    pos = jnp.arange(out_size, dtype=jnp.float32) * ((in_size - 1) / (out_size - 1))
    i0 = jnp.clip(jnp.floor(pos).astype(jnp.int32), 0, in_size - 1)
    i1 = jnp.clip(i0 + 1, 0, in_size - 1)
    frac = (pos - i0.astype(jnp.float32)).reshape(
        [out_size if a == axis else 1 for a in range(x.ndim)])
    return (jnp.take(x, i0, axis=axis) * (1.0 - frac)
            + jnp.take(x, i1, axis=axis) * frac)


def trilinear_upsample_align_corners_cl(x, scale=2):
    for ax in (1, 2, 3):
        x = _upsample_linear_axis(x, ax, scale)
    return x


# ----------------------------------------------------------------------------
# `up` module forward: x1 -> upsample, cat(x1_up, x2), CBR, CBR
# ----------------------------------------------------------------------------
def up_forward(params, x1, x2):
    # x1: (N, in_ch - out_ch, D, H, W); x2: (N, out_ch, 2D, 2H, 2W)   [NCDHW]
    x1c = jnp.transpose(x1, (0, 2, 3, 4, 1))          # NCDHW -> NDHWC
    x2c = jnp.transpose(x2, (0, 2, 3, 4, 1))
    x1u = trilinear_upsample_align_corners_cl(x1c, 2)
    y = double_cbr_fused(x1u, x2c, params["cbr1"], params["cbr2"])
    return jnp.transpose(y, (0, 4, 1, 2, 3))          # NDHWC -> NCDHW


# ----------------------------------------------------------------------------
# Plain-JAX reference (lax conv) for a correctness check of the Pallas path.
# ----------------------------------------------------------------------------
def _ref_cbr(x_ndhwc, p):
    y = lax.conv_general_dilated(
        x_ndhwc, p["w"], window_strides=(1, 1, 1), padding="SAME",
        dimension_numbers=("NDHWC", "DHWIO", "NDHWC"))
    y = y * p["scale"] + p["bias"]
    return jnp.maximum(y, 0.0)


def up_forward_ref(params, x1, x2):
    x1c = jnp.transpose(x1, (0, 2, 3, 4, 1))
    x2c = jnp.transpose(x2, (0, 2, 3, 4, 1))
    x1u = trilinear_upsample_align_corners_cl(x1c, 2)
    x = jnp.concatenate([x1u, x2c], axis=-1)
    y = _ref_cbr(x, params["cbr1"])
    y = _ref_cbr(y, params["cbr2"])
    return jnp.transpose(y, (0, 4, 1, 2, 3))


# ----------------------------------------------------------------------------
# Deterministic synthetic parameters (Conv3d + folded eval-mode BatchNorm3d).
# ----------------------------------------------------------------------------
def make_cbr_params(key, cin, cout):
    kw, kb, kg, kbe, km, kv = jax.random.split(key, 6)
    w = 0.1 * jax.random.normal(kw, (3, 3, 3, cin, cout), jnp.float32)
    conv_b = 0.1 * jax.random.normal(kb, (cout,), jnp.float32)
    gamma = 1.0 + 0.1 * jax.random.normal(kg, (cout,), jnp.float32)
    beta = 0.1 * jax.random.normal(kbe, (cout,), jnp.float32)
    mean = 0.1 * jax.random.normal(km, (cout,), jnp.float32)
    var = jnp.abs(jax.random.normal(kv, (cout,), jnp.float32)) + 0.5
    eps = 1e-5
    s = gamma / jnp.sqrt(var + eps)
    b = beta - mean * s + conv_b * s          # fold conv bias through BN
    return {"w": w, "scale": s, "bias": b}


if __name__ == "__main__":
    key = jax.random.PRNGKey(0)
    k1, k2, kp1, kp2 = jax.random.split(key, 4)

    in_ch, out_ch = 8, 4                      # up(in_ch=8, out_ch=4)
    N, D, H, W = 2, 8, 8, 8
    x1 = jax.random.normal(k1, (N, in_ch - out_ch, D, H, W), jnp.float32)
    x2 = jax.random.normal(k2, (N, out_ch, 2 * D, 2 * H, 2 * W), jnp.float32)

    params = {
        "cbr1": make_cbr_params(kp1, in_ch, out_ch),   # CBR(in_ch, out_ch)
        "cbr2": make_cbr_params(kp2, out_ch, out_ch),  # CBR(out_ch, out_ch)
    }

    out = jax.jit(up_forward)(params, x1, x2)
    out = jax.block_until_ready(out)
    assert out.shape == (N, out_ch, 2 * D, 2 * H, 2 * W)

    # Tolerance reflects bf16 MXU operands (f32 accumulation) vs f32 reference.
    ref = up_forward_ref(params, x1, x2)
    assert bool(jnp.allclose(out, ref, rtol=5e-2, atol=5e-2)), "mismatch vs reference"

    print("KERNEL_OK")
</pallas_src>

<mosaic_0001>
module attributes {stable_mosaic.version = 11 : i64} {
  func.func @kernel(%arg0: i32, %arg1: memref<1x16x18x64xbf16, #tpu.memory_space<vmem>>, %arg2: memref<1x16x18x64xbf16, #tpu.memory_space<vmem>>, %arg3: memref<9x128x64xbf16, #tpu.memory_space<vmem>>, %arg4: memref<1x64xf32, #tpu.memory_space<vmem>>, %arg5: memref<1x64xf32, #tpu.memory_space<vmem>>, %arg6: memref<9x64x64xbf16, #tpu.memory_space<vmem>>, %arg7: memref<1x64xf32, #tpu.memory_space<vmem>>, %arg8: memref<1x64xf32, #tpu.memory_space<vmem>>, %arg9: memref<1x128x128xf32, #tpu.memory_space<vmem>>, %arg10: memref<9x18x128xbf16, #tpu.memory_space<vmem>>, %arg11: memref<9x18x128xbf16, #tpu.memory_space<vmem>>, %arg12: memref<9x20x64xbf16, #tpu.memory_space<vmem>>, %arg13: memref<9x20x64xbf16, #tpu.memory_space<vmem>>) attributes {dimension_semantics = [#tpu.dimension_semantics<parallel>], iteration_bounds = array<i64: 2>, scalar_prefetch = 0 : i64, scratch_operands = 4 : i64, tpu.core_type = #tpu.core_type<tc>, window_params = [{transform_indices = @transform_0, window_bounds = array<i64: 1, 16, 18, 64>}, {transform_indices = @transform_1, window_bounds = array<i64: 1, 16, 18, 64>}, {pipeline_mode = #tpu.pipeline_mode<synchronous>, transform_indices = @transform_2, window_bounds = array<i64: 9, 128, 64>}, {pipeline_mode = #tpu.pipeline_mode<synchronous>, transform_indices = @transform_3, window_bounds = array<i64: 1, 64>}, {pipeline_mode = #tpu.pipeline_mode<synchronous>, transform_indices = @transform_4, window_bounds = array<i64: 1, 64>}, {pipeline_mode = #tpu.pipeline_mode<synchronous>, transform_indices = @transform_5, window_bounds = array<i64: 9, 64, 64>}, {pipeline_mode = #tpu.pipeline_mode<synchronous>, transform_indices = @transform_6, window_bounds = array<i64: 1, 64>}, {pipeline_mode = #tpu.pipeline_mode<synchronous>, transform_indices = @transform_7, window_bounds = array<i64: 1, 64>}, {transform_indices = @transform_8, window_bounds = array<i64: 1, 128, 128>}]} {
    %c0 = arith.constant 0 : index
    %c0_0 = arith.constant 0 : index
    %c0_1 = arith.constant 0 : index
    %c0_2 = arith.constant 0 : index
    %0 = vector.load %arg1[%c0, %c0_0, %c0_1, %c0_2] : memref<1x16x18x64xbf16, #tpu.memory_space<vmem>>, vector<1x8x18x64xbf16>
    %1 = vector.shape_cast %0 : vector<1x8x18x64xbf16> to vector<8x18x64xbf16>
    %c0_3 = arith.constant 0 : index
    %c0_4 = arith.constant 0 : index
    %c0_5 = arith.constant 0 : index
    %2 = vector.load %arg11[%c0_3, %c0_4, %c0_5] : memref<9x18x128xbf16, #tpu.memory_space<vmem>>, vector<8x18x64xbf16>
    tpu.vector_store %arg11[%c0_3, %c0_4, %c0_5], %1 {strides = array<i32>} : memref<9x18x128xbf16, #tpu.memory_space<vmem>>, vector<8x18x64xbf16>,
    %c0_6 = arith.constant 0 : index
    %c0_7 = arith.constant 0 : index
    %c0_8 = arith.constant 0 : index
    %c0_9 = arith.constant 0 : index
    %3 = vector.load %arg2[%c0_6, %c0_7, %c0_8, %c0_9] : memref<1x16x18x64xbf16, #tpu.memory_space<vmem>>, vector<1x8x18x64xbf16>
    %4 = vector.shape_cast %3 : vector<1x8x18x64xbf16> to vector<8x18x64xbf16>
    %c0_10 = arith.constant 0 : index
    %c0_11 = arith.constant 0 : index
    %c64 = arith.constant 64 : index
    %5 = vector.load %arg11[%c0_10, %c0_11, %c64] : memref<9x18x128xbf16, #tpu.memory_space<vmem>>, vector<8x18x64xbf16>
    tpu.vector_store %arg11[%c0_10, %c0_11, %c64], %4 {strides = array<i32>} : memref<9x18x128xbf16, #tpu.memory_space<vmem>>, vector<8x18x64xbf16>,
    %c0_12 = arith.constant 0 : index
    %c8 = arith.constant 8 : index
    %c0_13 = arith.constant 0 : index
    %c0_14 = arith.constant 0 : index
    %6 = vector.load %arg1[%c0_12, %c8, %c0_13, %c0_14] : memref<1x16x18x64xbf16, #tpu.memory_space<vmem>>, vector<1x8x18x64xbf16>
    %7 = vector.shape_cast %6 : vector<1x8x18x64xbf16> to vector<8x18x64xbf16>
    %c1 = arith.constant 1 : index
    %c0_15 = arith.constant 0 : index
    %c0_16 = arith.constant 0 : index
    %8 = vector.load %arg10[%c1, %c0_15, %c0_16] : memref<9x18x128xbf16, #tpu.memory_space<vmem>>, vector<8x18x64xbf16>
    tpu.vector_store %arg10[%c1, %c0_15, %c0_16], %7 {strides = array<i32>} : memref<9x18x128xbf16, #tpu.memory_space<vmem>>, vector<8x18x64xbf16>,
    %c0_17 = arith.constant 0 : index
    %c8_18 = arith.constant 8 : index
    %c0_19 = arith.constant 0 : index
    %c0_20 = arith.constant 0 : index
    %9 = vector.load %arg2[%c0_17, %c8_18, %c0_19, %c0_20] : memref<1x16x18x64xbf16, #tpu.memory_space<vmem>>, vector<1x8x18x64xbf16>
    %10 = vector.shape_cast %9 : vector<1x8x18x64xbf16> to vector<8x18x64xbf16>
    %c1_21 = arith.constant 1 : index
    %c0_22 = arith.constant 0 : index
    %c64_23 = arith.constant 64 : index
    %11 = vector.load %arg10[%c1_21, %c0_22, %c64_23] : memref<9x18x128xbf16, #tpu.memory_space<vmem>>, vector<8x18x64xbf16>
    tpu.vector_store %arg10[%c1_21, %c0_22, %c64_23], %10 {strides = array<i32>} : memref<9x18x128xbf16, #tpu.memory_space<vmem>>, vector<8x18x64xbf16>,
    %cst = arith.constant 0.000000e+00 : bf16
    %12 = vector.broadcast %cst : bf16 to vector<1x18x128xbf16>
    %c0_24 = arith.constant 0 : index
    %c0_25 = arith.constant 0 : index
    %c0_26 = arith.constant 0 : index
    %13 = vector.load %arg10[%c0_24, %c0_25, %c0_26] : memref<9x18x128xbf16, #tpu.memory_space<vmem>>, vector<1x18x128xbf16>
    tpu.vector_store %arg10[%c0_24, %c0_25, %c0_26], %12 {strides = array<i32>} : memref<9x18x128xbf16, #tpu.memory_space<vmem>>, vector<1x18x128xbf16>,
    %cst_27 = arith.constant 0.000000e+00 : bf16
    %14 = vector.broadcast %cst_27 : bf16 to vector<1x18x128xbf16>
    %c8_28 = arith.constant 8 : index
    %c0_29 = arith.constant 0 : index
    %c0_30 = arith.constant 0 : index
    %15 = vector.load %arg11[%c8_28, %c0_29, %c0_30] : memref<9x18x128xbf16, #tpu.memory_space<vmem>>, vector<1x18x128xbf16>
    tpu.vector_store %arg11[%c8_28, %c0_29, %c0_30], %14 {strides = array<i32>} : memref<9x18x128xbf16, #tpu.memory_space<vmem>>, vector<1x18x128xbf16>,
    %cst_31 = arith.constant 0.000000e+00 : f32
    %16 = vector.broadcast %cst_31 : f32 to vector<256x64xf32>
    %c0_32 = arith.constant 0 : index
    %c0_33 = arith.constant 0 : index
    %c0_34 = arith.constant 0 : index
    %17 = vector.load %arg10[%c0_32, %c0_33, %c0_34] : memref<9x18x128xbf16, #tpu.memory_space<vmem>>, vector<8x16x128xbf16>
    %18 = vector.shape_cast %17 : vector<8x16x128xbf16> to vector<128x128xbf16>
    %c0_35 = arith.constant 0 : index
    %c0_36 = arith.constant 0 : index
    %c0_37 = arith.constant 0 : index
    %19 = vector.load %arg11[%c0_35, %c0_36, %c0_37] : memref<9x18x128xbf16, #tpu.memory_space<vmem>>, vector<8x16x128xbf16>
    %20 = vector.shape_cast %19 : vector<8x16x128xbf16> to vector<128x128xbf16>
    %21 = tpu.concatenate %18, %20 in 0 : vector<128x128xbf16>, vector<128x128xbf16> -> vector<256x128xbf16>
    %c0_38 = arith.constant 0 : index
    %c0_39 = arith.constant 0 : index
    %c0_40 = arith.constant 0 : index
    %22 = vector.load %arg3[%c0_38, %c0_39, %c0_40] : memref<9x128x64xbf16, #tpu.memory_space<vmem>>, vector<1x128x64xbf16>
    %23 = vector.shape_cast %22 : vector<1x128x64xbf16> to vector<128x64xbf16>
    %cst_41 = arith.constant dense<0.000000e+00> : vector<256x64xf32>
    %24 = tpu.matmul %21, %23, %cst_41 {dimension_numbers = #tpu.dot_dimension_numbers<[1], [0], [0], [1], [0, 0, 1, 1], [], []>} : vector<256x128xbf16>, vector<128x64xbf16>, vector<256x64xf32> -> vector<256x64xf32>
    %25 = arith.addf %16, %24 : vector<256x64xf32>
    %c0_42 = arith.constant 0 : index
    %c1_43 = arith.constant 1 : index
    %c0_44 = arith.constant 0 : index
    %26 = vector.load %arg10[%c0_42, %c1_43, %c0_44] : memref<9x18x128xbf16, #tpu.memory_space<vmem>>, vector<8x16x128xbf16>
    %27 = vector.shape_cast %26 : vector<8x16x128xbf16> to vector<128x128xbf16>
    %c0_45 = arith.constant 0 : index
    %c1_46 = arith.constant 1 : index
    %c0_47 = arith.constant 0 : index
    %28 = vector.load %arg11[%c0_45, %c1_46, %c0_47] : memref<9x18x128xbf16, #tpu.memory_space<vmem>>, vector<8x16x128xbf16>
    %29 = vector.shape_cast %28 : vector<8x16x128xbf16> to vector<128x128xbf16>
    %30 = tpu.concatenate %27, %29 in 0 : vector<128x128xbf16>, vector<128x128xbf16> -> vector<256x128xbf16>
    %c1_48 = arith.constant 1 : index
    %c0_49 = arith.constant 0 : index
    %c0_50 = arith.constant 0 : index
    %31 = vector.load %arg3[%c1_48, %c0_49, %c0_50] : memref<9x128x64xbf16, #tpu.memory_space<vmem>>, vector<1x128x64xbf16>
    %32 = vector.shape_cast %31 : vector<1x128x64xbf16> to vector<128x64xbf16>
    %cst_51 = arith.constant dense<0.000000e+00> : vector<256x64xf32>
    %33 = tpu.matmul %30, %32, %cst_51 {dimension_numbers = #tpu.dot_dimension_numbers<[1], [0], [0], [1], [0, 0, 1, 1], [], []>} : vector<256x128xbf16>, vector<128x64xbf16>, vector<256x64xf32> -> vector<256x64xf32>
    %34 = arith.addf %25, %33 : vector<256x64xf32>
    %c0_52 = arith.constant 0 : index
    %c2 = arith.constant 2 : index
    %c0_53 = arith.constant 0 : index
    %35 = vector.load %arg10[%c0_52, %c2, %c0_53] : memref<9x18x128xbf16, #tpu.memory_space<vmem>>, vector<8x16x128xbf16>
    %36 = vector.shape_cast %35 : vector<8x16x128xbf16> to vector<128x128xbf16>
    %c0_54 = arith.constant 0 : index
    %c2_55 = arith.constant 2 : index
    %c0_56 = arith.constant 0 : index
    %37 = vector.load %arg11[%c0_54, %c2_55, %c0_56] : memref<9x18x128xbf16, #tpu.memory_space<vmem>>, vector<8x16x128xbf16>
    %38 = vector.shape_cast %37 : vector<8x16x128xbf16> to vector<128x128xbf16>
    %39 = tpu.concatenate %36, %38 in 0 : vector<128x128xbf16>, vector<128x128xbf16> -> vector<256x128xbf16>
    %c2_57 = arith.constant 2 : index
    %c0_58 = arith.constant 0 : index
    %c0_59 = arith.constant 0 : index
    %40 = vector.load %arg3[%c2_57, %c0_58, %c0_59] : memref<9x128x64xbf16, #tpu.memory_space<vmem>>, vector<1x128x64xbf16>
    %41 = vector.shape_cast %40 : vector<1x128x64xbf16> to vector<128x64xbf16>
    %cst_60 = arith.constant dense<0.000000e+00> : vector<256x64xf32>
    %42 = tpu.matmul %39, %41, %cst_60 {dimension_numbers = #tpu.dot_dimension_numbers<[1], [0], [0], [1], [0, 0, 1, 1], [], []>} : vector<256x128xbf16>, vector<128x64xbf16>, vector<256x64xf32> -> vector<256x64xf32>
    %43 = arith.addf %34, %42 : vector<256x64xf32>
    %c0_61 = arith.constant 0 : index
    %c0_62 = arith.constant 0 : index
    %c0_63 = arith.constant 0 : index
    %44 = vector.load %arg11[%c0_61, %c0_62, %c0_63] : memref<9x18x128xbf16, #tpu.memory_space<vmem>>, vector<8x16x128xbf16>
    %45 = vector.shape_cast %44 : vector<8x16x128xbf16> to vector<128x128xbf16>
    %c1_64 = arith.constant 1 : index
    %c0_65 = arith.constant 0 : index
    %c0_66 = arith.constant 0 : index
    %46 = vector.load %arg10[%c1_64, %c0_65, %c0_66] : memref<9x18x128xbf16, #tpu.memory_space<vmem>>, vector<8x16x128xbf16>
    %47 = vector.shape_cast %46 : vector<8x16x128xbf16> to vector<128x128xbf16>
    %48 = tpu.concatenate %45, %47 in 0 : vector<128x128xbf16>, vector<128x128xbf16> -> vector<256x128xbf16>
    %c3 = arith.constant 3 : index
    %c0_67 = arith.constant 0 : index
    %c0_68 = arith.constant 0 : index
    %49 = vector.load %arg3[%c3, %c0_67, %c0_68] : memref<9x128x64xbf16, #tpu.memory_space<vmem>>, vector<1x128x64xbf16>
    %50 = vector.shape_cast %49 : vector<1x128x64xbf16> to vector<128x64xbf16>
    %cst_69 = arith.constant dense<0.000000e+00> : vector<256x64xf32>
    %51 = tpu.matmul %48, %50, %cst_69 {dimension_numbers = #tpu.dot_dimension_numbers<[1], [0], [0], [1], [0, 0, 1, 1], [], []>} : vector<256x128xbf16>, vector<128x64xbf16>, vector<256x64xf32> -> vector<256x64xf32>
    %52 = arith.addf %43, %51 : vector<256x64xf32>
    %c0_70 = arith.constant 0 : index
    %c1_71 = arith.constant 1 : index
    %c0_72 = arith.constant 0 : index
    %53 = vector.load %arg11[%c0_70, %c1_71, %c0_72] : memref<9x18x128xbf16, #tpu.memory_space<vmem>>, vector<8x16x128xbf16>
    %54 = vector.shape_cast %53 : vector<8x16x128xbf16> to vector<128x128xbf16>
    %c1_73 = arith.constant 1 : index
    %c1_74 = arith.constant 1 : index
    %c0_75 = arith.constant 0 : index
    %55 = vector.load %arg10[%c1_73, %c1_74, %c0_75] : memref<9x18x128xbf16, #tpu.memory_space<vmem>>, vector<8x16x128xbf16>
    %56 = vector.shape_cast %55 : vector<8x16x128xbf16> to vector<128x128xbf16>
    %57 = tpu.concatenate %54, %56 in 0 : vector<128x128xbf16>, vector<128x128xbf16> -> vector<256x128xbf16>
    %c4 = arith.constant 4 : index
    %c0_76 = arith.constant 0 : index
    %c0_77 = arith.constant 0 : index
    %58 = vector.load %arg3[%c4, %c0_76, %c0_77] : memref<9x128x64xbf16, #tpu.memory_space<vmem>>, vector<1x128x64xbf16>
    %59 = vector.shape_cast %58 : vector<1x128x64xbf16> to vector<128x64xbf16>
    %cst_78 = arith.constant dense<0.000000e+00> : vector<256x64xf32>
    %60 = tpu.matmul %57, %59, %cst_78 {dimension_numbers = #tpu.dot_dimension_numbers<[1], [0], [0], [1], [0, 0, 1, 1], [], []>} : vector<256x128xbf16>, vector<128x64xbf16>, vector<256x64xf32> -> vector<256x64xf32>
    %61 = arith.addf %52, %60 : vector<256x64xf32>
    %c0_79 = arith.constant 0 : index
    %c2_80 = arith.constant 2 : index
    %c0_81 = arith.constant 0 : index
    %62 = vector.load %arg11[%c0_79, %c2_80, %c0_81] : memref<9x18x128xbf16, #tpu.memory_space<vmem>>, vector<8x16x128xbf16>
    %63 = vector.shape_cast %62 : vector<8x16x128xbf16> to vector<128x128xbf16>
    %c1_82 = arith.constant 1 : index
    %c2_83 = arith.constant 2 : index
    %c0_84 = arith.constant 0 : index
    %64 = vector.load %arg10[%c1_82, %c2_83, %c0_84] : memref<9x18x128xbf16, #tpu.memory_space<vmem>>, vector<8x16x128xbf16>
    %65 = vector.shape_cast %64 : vector<8x16x128xbf16> to vector<128x128xbf16>
    %66 = tpu.concatenate %63, %65 in 0 : vector<128x128xbf16>, vector<128x128xbf16> -> vector<256x128xbf16>
    %c5 = arith.constant 5 : index
    %c0_85 = arith.constant 0 : index
    %c0_86 = arith.constant 0 : index
    %67 = vector.load %arg3[%c5, %c0_85, %c0_86] : memref<9x128x64xbf16, #tpu.memory_space<vmem>>, vector<1x128x64xbf16>
    %68 = vector.shape_cast %67 : vector<1x128x64xbf16> to vector<128x64xbf16>
    %cst_87 = arith.constant dense<0.000000e+00> : vector<256x64xf32>
    %69 = tpu.matmul %66, %68, %cst_87 {dimension_numbers = #tpu.dot_dimension_numbers<[1], [0], [0], [1], [0, 0, 1, 1], [], []>} : vector<256x128xbf16>, vector<128x64xbf16>, vector<256x64xf32> -> vector<256x64xf32>
    %70 = arith.addf %61, %69 : vector<256x64xf32>
    %c1_88 = arith.constant 1 : index
    %c0_89 = arith.constant 0 : index
    %c0_90 = arith.constant 0 : index
    %71 = vector.load %arg10[%c1_88, %c0_89, %c0_90] : memref<9x18x128xbf16, #tpu.memory_space<vmem>>, vector<8x16x128xbf16>
    %72 = vector.shape_cast %71 : vector<8x16x128xbf16> to vector<128x128xbf16>
    %c1_91 = arith.constant 1 : index
    %c0_92 = arith.constant 0 : index
    %c0_93 = arith.constant 0 : index
    %73 = vector.load %arg11[%c1_91, %c0_92, %c0_93] : memref<9x18x128xbf16, #tpu.memory_space<vmem>>, vector<8x16x128xbf16>
    %74 = vector.shape_cast %73 : vector<8x16x128xbf16> to vector<128x128xbf16>
    %75 = tpu.concatenate %72, %74 in 0 : vector<128x128xbf16>, vector<128x128xbf16> -> vector<256x128xbf16>
    %c6 = arith.constant 6 : index
    %c0_94 = arith.constant 0 : index
    %c0_95 = arith.constant 0 : index
    %76 = vector.load %arg3[%c6, %c0_94, %c0_95] : memref<9x128x64xbf16, #tpu.memory_space<vmem>>, vector<1x128x64xbf16>
    %77 = vector.shape_cast %76 : vector<1x128x64xbf16> to vector<128x64xbf16>
    %cst_96 = arith.constant dense<0.000000e+00> : vector<256x64xf32>
    %78 = tpu.matmul %75, %77, %cst_96 {dimension_numbers = #tpu.dot_dimension_numbers<[1], [0], [0], [1], [0, 0, 1, 1], [], []>} : vector<256x128xbf16>, vector<128x64xbf16>, vector<256x64xf32> -> vector<256x64xf32>
    %79 = arith.addf %70, %78 : vector<256x64xf32>
    %c1_97 = arith.constant 1 : index
    %c1_98 = arith.constant 1 : index
    %c0_99 = arith.constant 0 : index
    %80 = vector.load %arg10[%c1_97, %c1_98, %c0_99] : memref<9x18x128xbf16, #tpu.memory_space<vmem>>, vector<8x16x128xbf16>
    %81 = vector.shape_cast %80 : vector<8x16x128xbf16> to vector<128x128xbf16>
    %c1_100 = arith.constant 1 : index
    %c1_101 = arith.constant 1 : index
    %c0_102 = arith.constant 0 : index
    %82 = vector.load %arg11[%c1_100, %c1_101, %c0_102] : memref<9x18x128xbf16, #tpu.memory_space<vmem>>, vector<8x16x128xbf16>
    %83 = vector.shape_cast %82 : vector<8x16x128xbf16> to vector<128x128xbf16>
    %84 = tpu.concatenate %81, %83 in 0 : vector<128x128xbf16>, vector<128x128xbf16> -> vector<256x128xbf16>
    %c7 = arith.constant 7 : index
    %c0_103 = arith.constant 0 : index
    %c0_104 = arith.constant 0 : index
    %85 = vector.load %arg3[%c7, %c0_103, %c0_104] : memref<9x128x64xbf16, #tpu.memory_space<vmem>>, vector<1x128x64xbf16>
    %86 = vector.shape_cast %85 : vector<1x128x64xbf16> to vector<128x64xbf16>
    %cst_105 = arith.constant dense<0.000000e+00> : vector<256x64xf32>
    %87 = tpu.matmul %84, %86, %cst_105 {dimension_numbers = #tpu.dot_dimension_numbers<[1], [0], [0], [1], [0, 0, 1, 1], [], []>} : vector<256x128xbf16>, vector<128x64xbf16>, vector<256x64xf32> -> vector<256x64xf32>
    %88 = arith.addf %79, %87 : vector<256x64xf32>
    %c1_106 = arith.constant 1 : index
    %c2_107 = arith.constant 2 : index
    %c0_108 = arith.constant 0 : index
    %89 = vector.load %arg10[%c1_106, %c2_107, %c0_108] : memref<9x18x128xbf16, #tpu.memory_space<vmem>>, vector<8x16x128xbf16>
    %90 = vector.shape_cast %89 : vector<8x16x128xbf16> to vector<128x128xbf16>
    %c1_109 = arith.constant 1 : index
    %c2_110 = arith.constant 2 : index
    %c0_111 = arith.constant 0 : index
    %91 = vector.load %arg11[%c1_109, %c2_110, %c0_111] : memref<9x18x128xbf16, #tpu.memory_space<vmem>>, vector<8x16x128xbf16>
    %92 = vector.shape_cast %91 : vector<8x16x128xbf16> to vector<128x128xbf16>
    %93 = tpu.concatenate %90, %92 in 0 : vector<128x128xbf16>, vector<128x128xbf16> -> vector<256x128xbf16>
    %c8_112 = arith.constant 8 : index
    %c0_113 = arith.constant 0 : index
    %c0_114 = arith.constant 0 : index
    %94 = vector.load %arg3[%c8_112, %c0_113, %c0_114] : memref<9x128x64xbf16, #tpu.memory_space<vmem>>, vector<1x128x64xbf16>
    %95 = vector.shape_cast %94 : vector<1x128x64xbf16> to vector<128x64xbf16>
    %cst_115 = arith.constant dense<0.000000e+00> : vector<256x64xf32>
    %96 = tpu.matmul %93, %95, %cst_115 {dimension_numbers = #tpu.dot_dimension_numbers<[1], [0], [0], [1], [0, 0, 1, 1], [], []>} : vector<256x128xbf16>, vector<128x64xbf16>, vector<256x64xf32> -> vector<256x64xf32>
    %97 = arith.addf %88, %96 : vector<256x64xf32>
    %c0_116 = arith.constant 0 : index
    %c0_117 = arith.constant 0 : index
    %98 = vector.load %arg4[%c0_116, %c0_117] : memref<1x64xf32, #tpu.memory_space<vmem>>, vector<1x64xf32>
    %99 = vector.broadcast %98 : vector<1x64xf32> to vector<256x64xf32>
    %100 = arith.mulf %97, %99 : vector<256x64xf32>
    %c0_118 = arith.constant 0 : index
    %c0_119 = arith.constant 0 : index
    %101 = vector.load %arg5[%c0_118, %c0_119] : memref<1x64xf32, #tpu.memory_space<vmem>>, vector<1x64xf32>
    %102 = vector.broadcast %101 : vector<1x64xf32> to vector<256x64xf32>
    %103 = arith.addf %100, %102 : vector<256x64xf32>
    %cst_120 = arith.constant 0.000000e+00 : f32
    %104 = vector.broadcast %cst_120 : f32 to vector<256x64xf32>
    %105 = arith.maximumf %103, %104 : vector<256x64xf32>
    %106 = arith.truncf %105 : vector<256x64xf32> to vector<256x64xbf16>
    %107 = vector.extract_strided_slice %106 {offsets = [0, 0], sizes = [128, 64], strides = [1, 1]} : vector<256x64xbf16> to vector<128x64xbf16>
    %108 = vector.shape_cast %107 : vector<128x64xbf16> to vector<8x16x64xbf16>
    %109 = vector.extract_strided_slice %106 {offsets = [128, 0], sizes = [128, 64], strides = [1, 1]} : vector<256x64xbf16> to vector<128x64xbf16>
    %110 = vector.shape_cast %109 : vector<128x64xbf16> to vector<8x16x64xbf16>
    %cst_121 = arith.constant 0.000000e+00 : bf16
    %111 = vector.broadcast %cst_121 : bf16 to vector<9x2x64xbf16>
    %c0_122 = arith.constant 0 : index
    %c0_123 = arith.constant 0 : index
    %c0_124 = arith.constant 0 : index
    %112 = vector.load %arg12[%c0_122, %c0_123, %c0_124] : memref<9x20x64xbf16, #tpu.memory_space<vmem>>, vector<9x2x64xbf16>
    tpu.vector_store %arg12[%c0_122, %c0_123, %c0_124], %111 {strides = array<i32>} : memref<9x20x64xbf16, #tpu.memory_space<vmem>>, vector<9x2x64xbf16>,
    %c0_125 = arith.constant 0 : index
    %c18 = arith.constant 18 : index
    %c0_126 = arith.constant 0 : index
    %113 = vector.load %arg12[%c0_125, %c18, %c0_126] : memref<9x20x64xbf16, #tpu.memory_space<vmem>>, vector<9x2x64xbf16>
    tpu.vector_store %arg12[%c0_125, %c18, %c0_126], %111 {strides = array<i32>} : memref<9x20x64xbf16, #tpu.memory_space<vmem>>, vector<9x2x64xbf16>,
    %c0_127 = arith.constant 0 : index
    %c0_128 = arith.constant 0 : index
    %c0_129 = arith.constant 0 : index
    %114 = vector.load %arg13[%c0_127, %c0_128, %c0_129] : memref<9x20x64xbf16, #tpu.memory_space<vmem>>, vector<9x2x64xbf16>
    tpu.vector_store %arg13[%c0_127, %c0_128, %c0_129], %111 {strides = array<i32>} : memref<9x20x64xbf16, #tpu.memory_space<vmem>>, vector<9x2x64xbf16>,
    %c0_130 = arith.constant 0 : index
    %c18_131 = arith.constant 18 : index
    %c0_132 = arith.constant 0 : index
    %115 = vector.load %arg13[%c0_130, %c18_131, %c0_132] : memref<9x20x64xbf16, #tpu.memory_space<vmem>>, vector<9x2x64xbf16>
    tpu.vector_store %arg13[%c0_130, %c18_131, %c0_132], %111 {strides = array<i32>} : memref<9x20x64xbf16, #tpu.memory_space<vmem>>, vector<9x2x64xbf16>,
    %cst_133 = arith.constant 0.000000e+00 : bf16
    %116 = vector.broadcast %cst_133 : bf16 to vector<1x20x64xbf16>
    %c0_134 = arith.constant 0 : index
    %c0_135 = arith.constant 0 : index
    %c0_136 = arith.constant 0 : index
    %117 = vector.load %arg12[%c0_134, %c0_135, %c0_136] : memref<9x20x64xbf16, #tpu.memory_space<vmem>>, vector<1x20x64xbf16>
    tpu.vector_store %arg12[%c0_134, %c0_135, %c0_136], %116 {strides = array<i32>} : memref<9x20x64xbf16, #tpu.memory_space<vmem>>, vector<1x20x64xbf16>,
    %cst_137 = arith.constant 0.000000e+00 : bf16
    %118 = vector.broadcast %cst_137 : bf16 to vector<1x20x64xbf16>
    %c8_138 = arith.constant 8 : index
    %c0_139 = arith.constant 0 : index
    %c0_140 = arith.constant 0 : index
    %119 = vector.load %arg13[%c8_138, %c0_139, %c0_140] : memref<9x20x64xbf16, #tpu.memory_space<vmem>>, vector<1x20x64xbf16>
    tpu.vector_store %arg13[%c8_138, %c0_139, %c0_140], %118 {strides = array<i32>} : memref<9x20x64xbf16, #tpu.memory_space<vmem>>, vector<1x20x64xbf16>,
    %c0_141 = arith.constant 0 : index
    %c2_142 = arith.constant 2 : index
    %c0_143 = arith.constant 0 : index
    %120 = vector.load %arg13[%c0_141, %c2_142, %c0_143] : memref<9x20x64xbf16, #tpu.memory_space<vmem>>, vector<8x16x64xbf16>
    tpu.vector_store %arg13[%c0_141, %c2_142, %c0_143], %108 {strides = array<i32>} : memref<9x20x64xbf16, #tpu.memory_space<vmem>>, vector<8x16x64xbf16>,
    %c1_144 = arith.constant 1 : index
    %c2_145 = arith.constant 2 : index
    %c0_146 = arith.constant 0 : index
    %121 = vector.load %arg12[%c1_144, %c2_145, %c0_146] : memref<9x20x64xbf16, #tpu.memory_space<vmem>>, vector<8x16x64xbf16>
    tpu.vector_store %arg12[%c1_144, %c2_145, %c0_146], %110 {strides = array<i32>} : memref<9x20x64xbf16, #tpu.memory_space<vmem>>, vector<8x16x64xbf16>,
    %cst_147 = arith.constant 0.000000e+00 : f32
    %122 = vector.broadcast %cst_147 : f32 to vector<256x64xf32>
    %c0_148 = arith.constant 0 : index
    %c1_149 = arith.constant 1 : index
    %c0_150 = arith.constant 0 : index
    %123 = vector.load %arg12[%c0_148, %c1_149, %c0_150] : memref<9x20x64xbf16, #tpu.memory_space<vmem>>, vector<8x16x64xbf16>
    %124 = vector.shape_cast %123 : vector<8x16x64xbf16> to vector<128x64xbf16>
    %c0_151 = arith.constant 0 : index
    %c1_152 = arith.constant 1 : index
    %c0_153 = arith.constant 0 : index
    %125 = vector.load %arg13[%c0_151, %c1_152, %c0_153] : memref<9x20x64xbf16, #tpu.memory_space<vmem>>, vector<8x16x64xbf16>
    %126 = vector.shape_cast %125 : vector<8x16x64xbf16> to vector<128x64xbf16>
    %127 = tpu.concatenate %124, %126 in 0 : vector<128x64xbf16>, vector<128x64xbf16> -> vector<256x64xbf16>
    %c0_154 = arith.constant 0 : index
    %c0_155 = arith.constant 0 : index
    %c0_156 = arith.constant 0 : index
    %128 = vector.load %arg6[%c0_154, %c0_155, %c0_156] : memref<9x64x64xbf16, #tpu.memory_space<vmem>>, vector<1x64x64xbf16>
    %129 = vector.shape_cast %128 : vector<1x64x64xbf16> to vector<64x64xbf16>
    %cst_157 = arith.constant dense<0.000000e+00> : vector<256x64xf32>
    %130 = tpu.matmul %127, %129, %cst_157 {dimension_numbers = #tpu.dot_dimension_numbers<[1], [0], [0], [1], [0, 0, 1, 1], [], []>} : vector<256x64xbf16>, vector<64x64xbf16>, vector<256x64xf32> -> vector<256x64xf32>
    %131 = arith.addf %122, %130 : vector<256x64xf32>
    %c0_158 = arith.constant 0 : index
    %c2_159 = arith.constant 2 : index
    %c0_160 = arith.constant 0 : index
    %132 = vector.load %arg12[%c0_158, %c2_159, %c0_160] : memref<9x20x64xbf16, #tpu.memory_space<vmem>>, vector<8x16x64xbf16>
    %133 = vector.shape_cast %132 : vector<8x16x64xbf16> to vector<128x64xbf16>
    %c0_161 = arith.constant 0 : index
    %c2_162 = arith.constant 2 : index
    %c0_163 = arith.constant 0 : index
    %134 = vector.load %arg13[%c0_161, %c2_162, %c0_163] : memref<9x20x64xbf16, #tpu.memory_space<vmem>>, vector<8x16x64xbf16>
    %135 = vector.shape_cast %134 : vector<8x16x64xbf16> to vector<128x64xbf16>
    %136 = tpu.concatenate %133, %135 in 0 : vector<128x64xbf16>, vector<128x64xbf16> -> vector<256x64xbf16>
    %c1_164 = arith.constant 1 : index
    %c0_165 = arith.constant 0 : index
    %c0_166 = arith.constant 0 : index
    %137 = vector.load %arg6[%c1_164, %c0_165, %c0_166] : memref<9x64x64xbf16, #tpu.memory_space<vmem>>, vector<1x64x64xbf16>
    %138 = vector.shape_cast %137 : vector<1x64x64xbf16> to vector<64x64xbf16>
    %cst_167 = arith.constant dense<0.000000e+00> : vector<256x64xf32>
    %139 = tpu.matmul %136, %138, %cst_167 {dimension_numbers = #tpu.dot_dimension_numbers<[1], [0], [0], [1], [0, 0, 1, 1], [], []>} : vector<256x64xbf16>, vector<64x64xbf16>, vector<256x64xf32> -> vector<256x64xf32>
    %140 = arith.addf %131, %139 : vector<256x64xf32>
    %c0_168 = arith.constant 0 : index
    %c3_169 = arith.constant 3 : index
    %c0_170 = arith.constant 0 : index
    %141 = vector.load %arg12[%c0_168, %c3_169, %c0_170] : memref<9x20x64xbf16, #tpu.memory_space<vmem>>, vector<8x16x64xbf16>
    %142 = vector.shape_cast %141 : vector<8x16x64xbf16> to vector<128x64xbf16>
    %c0_171 = arith.constant 0 : index
    %c3_172 = arith.constant 3 : index
    %c0_173 = arith.constant 0 : index
    %143 = vector.load %arg13[%c0_171, %c3_172, %c0_173] : memref<9x20x64xbf16, #tpu.memory_space<vmem>>, vector<8x16x64xbf16>
    %144 = vector.shape_cast %143 : vector<8x16x64xbf16> to vector<128x64xbf16>
    %145 = tpu.concatenate %142, %144 in 0 : vector<128x64xbf16>, vector<128x64xbf16> -> vector<256x64xbf16>
    %c2_174 = arith.constant 2 : index
    %c0_175 = arith.constant 0 : index
    %c0_176 = arith.constant 0 : index
    %146 = vector.load %arg6[%c2_174, %c0_175, %c0_176] : memref<9x64x64xbf16, #tpu.memory_space<vmem>>, vector<1x64x64xbf16>
    %147 = vector.shape_cast %146 : vector<1x64x64xbf16> to vector<64x64xbf16>
    %cst_177 = arith.constant dense<0.000000e+00> : vector<256x64xf32>
    %148 = tpu.matmul %145, %147, %cst_177 {dimension_numbers = #tpu.dot_dimension_numbers<[1], [0], [0], [1], [0, 0, 1, 1], [], []>} : vector<256x64xbf16>, vector<64x64xbf16>, vector<256x64xf32> -> vector<256x64xf32>
    %149 = arith.addf %140, %148 : vector<256x64xf32>
    %c0_178 = arith.constant 0 : index
    %c1_179 = arith.constant 1 : index
    %c0_180 = arith.constant 0 : index
    %150 = vector.load %arg13[%c0_178, %c1_179, %c0_180] : memref<9x20x64xbf16, #tpu.memory_space<vmem>>, vector<8x16x64xbf16>
    %151 = vector.shape_cast %150 : vector<8x16x64xbf16> to vector<128x64xbf16>
    %c1_181 = arith.constant 1 : index
    %c1_182 = arith.constant 1 : index
    %c0_183 = arith.constant 0 : index
    %152 = vector.load %arg12[%c1_181, %c1_182, %c0_183] : memref<9x20x64xbf16, #tpu.memory_space<vmem>>, vector<8x16x64xbf16>
    %153 = vector.shape_cast %152 : vector<8x16x64xbf16> to vector<128x64xbf16>
    %154 = tpu.concatenate %151, %153 in 0 : vector<128x64xbf16>, vector<128x64xbf16> -> vector<256x64xbf16>
    %c3_184 = arith.constant 3 : index
    %c0_185 = arith.constant 0 : index
    %c0_186 = arith.constant 0 : index
    %155 = vector.load %arg6[%c3_184, %c0_185, %c0_186] : memref<9x64x64xbf16, #tpu.memory_space<vmem>>, vector<1x64x64xbf16>
    %156 = vector.shape_cast %155 : vector<1x64x64xbf16> to vector<64x64xbf16>
    %cst_187 = arith.constant dense<0.000000e+00> : vector<256x64xf32>
    %157 = tpu.matmul %154, %156, %cst_187 {dimension_numbers = #tpu.dot_dimension_numbers<[1], [0], [0], [1], [0, 0, 1, 1], [], []>} : vector<256x64xbf16>, vector<64x64xbf16>, vector<256x64xf32> -> vector<256x64xf32>
    %158 = arith.addf %149, %157 : vector<256x64xf32>
    %c0_188 = arith.constant 0 : index
    %c2_189 = arith.constant 2 : index
    %c0_190 = arith.constant 0 : index
    %159 = vector.load %arg13[%c0_188, %c2_189, %c0_190] : memref<9x20x64xbf16, #tpu.memory_space<vmem>>, vector<8x16x64xbf16>
    %160 = vector.shape_cast %159 : vector<8x16x64xbf16> to vector<128x64xbf16>
    %c1_191 = arith.constant 1 : index
    %c2_192 = arith.constant 2 : index
    %c0_193 = arith.constant 0 : index
    %161 = vector.load %arg12[%c1_191, %c2_192, %c0_193] : memref<9x20x64xbf16, #tpu.memory_space<vmem>>, vector<8x16x64xbf16>
    %162 = vector.shape_cast %161 : vector<8x16x64xbf16> to vector<128x64xbf16>
    %163 = tpu.concatenate %160, %162 in 0 : vector<128x64xbf16>, vector<128x64xbf16> -> vector<256x64xbf16>
    %c4_194 = arith.constant 4 : index
    %c0_195 = arith.constant 0 : index
    %c0_196 = arith.constant 0 : index
    %164 = vector.load %arg6[%c4_194, %c0_195, %c0_196] : memref<9x64x64xbf16, #tpu.memory_space<vmem>>, vector<1x64x64xbf16>
    %165 = vector.shape_cast %164 : vector<1x64x64xbf16> to vector<64x64xbf16>
    %cst_197 = arith.constant dense<0.000000e+00> : vector<256x64xf32>
    %166 = tpu.matmul %163, %165, %cst_197 {dimension_numbers = #tpu.dot_dimension_numbers<[1], [0], [0], [1], [0, 0, 1, 1], [], []>} : vector<256x64xbf16>, vector<64x64xbf16>, vector<256x64xf32> -> vector<256x64xf32>
    %167 = arith.addf %158, %166 : vector<256x64xf32>
    %c0_198 = arith.constant 0 : index
    %c3_199 = arith.constant 3 : index
    %c0_200 = arith.constant 0 : index
    %168 = vector.load %arg13[%c0_198, %c3_199, %c0_200] : memref<9x20x64xbf16, #tpu.memory_space<vmem>>, vector<8x16x64xbf16>
    %169 = vector.shape_cast %168 : vector<8x16x64xbf16> to vector<128x64xbf16>
    %c1_201 = arith.constant 1 : index
    %c3_202 = arith.constant 3 : index
    %c0_203 = arith.constant 0 : index
    %170 = vector.load %arg12[%c1_201, %c3_202, %c0_203] : memref<9x20x64xbf16, #tpu.memory_space<vmem>>, vector<8x16x64xbf16>
    %171 = vector.shape_cast %170 : vector<8x16x64xbf16> to vector<128x64xbf16>
    %172 = tpu.concatenate %169, %171 in 0 : vector<128x64xbf16>, vector<128x64xbf16> -> vector<256x64xbf16>
    %c5_204 = arith.constant 5 : index
    %c0_205 = arith.constant 0 : index
    %c0_206 = arith.constant 0 : index
    %173 = vector.load %arg6[%c5_204, %c0_205, %c0_206] : memref<9x64x64xbf16, #tpu.memory_space<vmem>>, vector<1x64x64xbf16>
    %174 = vector.shape_cast %173 : vector<1x64x64xbf16> to vector<64x64xbf16>
    %cst_207 = arith.constant dense<0.000000e+00> : vector<256x64xf32>
    %175 = tpu.matmul %172, %174, %cst_207 {dimension_numbers = #tpu.dot_dimension_numbers<[1], [0], [0], [1], [0, 0, 1, 1], [], []>} : vector<256x64xbf16>, vector<64x64xbf16>, vector<256x64xf32> -> vector<256x64xf32>
    %176 = arith.addf %167, %175 : vector<256x64xf32>
    %c1_208 = arith.constant 1 : index
    %c1_209 = arith.constant 1 : index
    %c0_210 = arith.constant 0 : index
    %177 = vector.load %arg12[%c1_208, %c1_209, %c0_210] : memref<9x20x64xbf16, #tpu.memory_space<vmem>>, vector<8x16x64xbf16>
    %178 = vector.shape_cast %177 : vector<8x16x64xbf16> to vector<128x64xbf16>
    %c1_211 = arith.constant 1 : index
    %c1_212 = arith.constant 1 : index
    %c0_213 = arith.constant 0 : index
    %179 = vector.load %arg13[%c1_211, %c1_212, %c0_213] : memref<9x20x64xbf16, #tpu.memory_space<vmem>>, vector<8x16x64xbf16>
    %180 = vector.shape_cast %179 : vector<8x16x64xbf16> to vector<128x64xbf16>
    %181 = tpu.concatenate %178, %180 in 0 : vector<128x64xbf16>, vector<128x64xbf16> -> vector<256x64xbf16>
    %c6_214 = arith.constant 6 : index
    %c0_215 = arith.constant 0 : index
    %c0_216 = arith.constant 0 : index
    %182 = vector.load %arg6[%c6_214, %c0_215, %c0_216] : memref<9x64x64xbf16, #tpu.memory_space<vmem>>, vector<1x64x64xbf16>
    %183 = vector.shape_cast %182 : vector<1x64x64xbf16> to vector<64x64xbf16>
    %cst_217 = arith.constant dense<0.000000e+00> : vector<256x64xf32>
    %184 = tpu.matmul %181, %183, %cst_217 {dimension_numbers = #tpu.dot_dimension_numbers<[1], [0], [0], [1], [0, 0, 1, 1], [], []>} : vector<256x64xbf16>, vector<64x64xbf16>, vector<256x64xf32> -> vector<256x64xf32>
    %185 = arith.addf %176, %184 : vector<256x64xf32>
    %c1_218 = arith.constant 1 : index
    %c2_219 = arith.constant 2 : index
    %c0_220 = arith.constant 0 : index
    %186 = vector.load %arg12[%c1_218, %c2_219, %c0_220] : memref<9x20x64xbf16, #tpu.memory_space<vmem>>, vector<8x16x64xbf16>
    %187 = vector.shape_cast %186 : vector<8x16x64xbf16> to vector<128x64xbf16>
    %c1_221 = arith.constant 1 : index
    %c2_222 = arith.constant 2 : index
    %c0_223 = arith.constant 0 : index
    %188 = vector.load %arg13[%c1_221, %c2_222, %c0_223] : memref<9x20x64xbf16, #tpu.memory_space<vmem>>, vector<8x16x64xbf16>
    %189 = vector.shape_cast %188 : vector<8x16x64xbf16> to vector<128x64xbf16>
    %190 = tpu.concatenate %187, %189 in 0 : vector<128x64xbf16>, vector<128x64xbf16> -> vector<256x64xbf16>
    %c7_224 = arith.constant 7 : index
    %c0_225 = arith.constant 0 : index
    %c0_226 = arith.constant 0 : index
    %191 = vector.load %arg6[%c7_224, %c0_225, %c0_226] : memref<9x64x64xbf16, #tpu.memory_space<vmem>>, vector<1x64x64xbf16>
    %192 = vector.shape_cast %191 : vector<1x64x64xbf16> to vector<64x64xbf16>
    %cst_227 = arith.constant dense<0.000000e+00> : vector<256x64xf32>
    %193 = tpu.matmul %190, %192, %cst_227 {dimension_numbers = #tpu.dot_dimension_numbers<[1], [0], [0], [1], [0, 0, 1, 1], [], []>} : vector<256x64xbf16>, vector<64x64xbf16>, vector<256x64xf32> -> vector<256x64xf32>
    %194 = arith.addf %185, %193 : vector<256x64xf32>
    %c1_228 = arith.constant 1 : index
    %c3_229 = arith.constant 3 : index
    %c0_230 = arith.constant 0 : index
    %195 = vector.load %arg12[%c1_228, %c3_229, %c0_230] : memref<9x20x64xbf16, #tpu.memory_space<vmem>>, vector<8x16x64xbf16>
    %196 = vector.shape_cast %195 : vector<8x16x64xbf16> to vector<128x64xbf16>
    %c1_231 = arith.constant 1 : index
    %c3_232 = arith.constant 3 : index
    %c0_233 = arith.constant 0 : index
    %197 = vector.load %arg13[%c1_231, %c3_232, %c0_233] : memref<9x20x64xbf16, #tpu.memory_space<vmem>>, vector<8x16x64xbf16>
    %198 = vector.shape_cast %197 : vector<8x16x64xbf16> to vector<128x64xbf16>
    %199 = tpu.concatenate %196, %198 in 0 : vector<128x64xbf16>, vector<128x64xbf16> -> vector<256x64xbf16>
    %c8_234 = arith.constant 8 : index
    %c0_235 = arith.constant 0 : index
    %c0_236 = arith.constant 0 : index
    %200 = vector.load %arg6[%c8_234, %c0_235, %c0_236] : memref<9x64x64xbf16, #tpu.memory_space<vmem>>, vector<1x64x64xbf16>
    %201 = vector.shape_cast %200 : vector<1x64x64xbf16> to vector<64x64xbf16>
    %cst_237 = arith.constant dense<0.000000e+00> : vector<256x64xf32>
    %202 = tpu.matmul %199, %201, %cst_237 {dimension_numbers = #tpu.dot_dimension_numbers<[1], [0], [0], [1], [0, 0, 1, 1], [], []>} : vector<256x64xbf16>, vector<64x64xbf16>, vector<256x64xf32> -> vector<256x64xf32>
    %203 = arith.addf %194, %202 : vector<256x64xf32>
    %c0_238 = arith.constant 0 : index
    %c0_239 = arith.constant 0 : index
    %204 = vector.load %arg7[%c0_238, %c0_239] : memref<1x64xf32, #tpu.memory_space<vmem>>, vector<1x64xf32>
    %205 = vector.broadcast %204 : vector<1x64xf32> to vector<256x64xf32>
    %206 = arith.mulf %203, %205 : vector<256x64xf32>
    %c0_240 = arith.constant 0 : index
    %c0_241 = arith.constant 0 : index
    %207 = vector.load %arg8[%c0_240, %c0_241] : memref<1x64xf32, #tpu.memory_space<vmem>>, vector<1x64xf32>
    %208 = vector.broadcast %207 : vector<1x64xf32> to vector<256x64xf32>
    %209 = arith.addf %206, %208 : vector<256x64xf32>
    %cst_242 = arith.constant 0.000000e+00 : f32
    %210 = vector.broadcast %cst_242 : f32 to vector<256x64xf32>
    %211 = arith.maximumf %209, %210 : vector<256x64xf32>
    %212 = vector.extract_strided_slice %211 {offsets = [0, 0], sizes = [128, 64], strides = [1, 1]} : vector<256x64xf32> to vector<128x64xf32>
    %c0_243 = arith.constant 0 : index
    %c0_244 = arith.constant 0 : index
    %c0_245 = arith.constant 0 : index
    %213 = vector.load %arg9[%c0_243, %c0_244, %c0_245] : memref<1x128x128xf32, #tpu.memory_space<vmem>>, vector<1x128x64xf32>
    %214 = vector.shape_cast %213 : vector<1x128x64xf32> to vector<128x64xf32>
    %215 = vector.shape_cast %212 : vector<128x64xf32> to vector<1x128x64xf32>
    tpu.vector_store %arg9[%c0_243, %c0_244, %c0_245], %215 {strides = array<i32>} : memref<1x128x128xf32, #tpu.memory_space<vmem>>, vector<1x128x64xf32>,
    %216 = vector.extract_strided_slice %211 {offsets = [128, 0], sizes = [128, 64], strides = [1, 1]} : vector<256x64xf32> to vector<128x64xf32>
    %c0_246 = arith.constant 0 : index
    %c0_247 = arith.constant 0 : index
    %c64_248 = arith.constant 64 : index
    %217 = vector.load %arg9[%c0_246, %c0_247, %c64_248] : memref<1x128x128xf32, #tpu.memory_space<vmem>>, vector<1x128x64xf32>
    %218 = vector.shape_cast %217 : vector<1x128x64xf32> to vector<128x64xf32>
    %219 = vector.shape_cast %216 : vector<128x64xf32> to vector<1x128x64xf32>
    tpu.vector_store %arg9[%c0_246, %c0_247, %c64_248], %219 {strides = array<i32>} : memref<1x128x128xf32, #tpu.memory_space<vmem>>, vector<1x128x64xf32>,
    return
  }
  func.func @transform_0(%arg0: i32) -> (i32, i32, i32, i32) {
    %c0_i32 = arith.constant 0 : i32
    %c0_i32_0 = arith.constant 0 : i32
    %c0_i32_1 = arith.constant 0 : i32
    %c0_i32_2 = arith.constant 0 : i32
    return %arg0, %c0_i32, %c0_i32_0, %c0_i32_1 : i32, i32, i32, i32
  }
  func.func @transform_1(%arg0: i32) -> (i32, i32, i32, i32) {
    %c0_i32 = arith.constant 0 : i32
    %c0_i32_0 = arith.constant 0 : i32
    %c0_i32_1 = arith.constant 0 : i32
    %c0_i32_2 = arith.constant 0 : i32
    return %arg0, %c0_i32, %c0_i32_0, %c0_i32_1 : i32, i32, i32, i32
  }
  func.func @transform_2(%arg0: i32) -> (i32, i32, i32) {
    %c0_i32 = arith.constant 0 : i32
    %c0_i32_0 = arith.constant 0 : i32
    %c0_i32_1 = arith.constant 0 : i32
    %c0_i32_2 = arith.constant 0 : i32
    return %c0_i32, %c0_i32_0, %c0_i32_1 : i32, i32, i32
  }
  func.func @transform_3(%arg0: i32) -> (i32, i32) {
    %c0_i32 = arith.constant 0 : i32
    %c0_i32_0 = arith.constant 0 : i32
    %c0_i32_1 = arith.constant 0 : i32
    return %c0_i32, %c0_i32_0 : i32, i32
  }
  func.func @transform_4(%arg0: i32) -> (i32, i32) {
    %c0_i32 = arith.constant 0 : i32
    %c0_i32_0 = arith.constant 0 : i32
    %c0_i32_1 = arith.constant 0 : i32
    return %c0_i32, %c0_i32_0 : i32, i32
  }
  func.func @transform_5(%arg0: i32) -> (i32, i32, i32) {
    %c0_i32 = arith.constant 0 : i32
    %c0_i32_0 = arith.constant 0 : i32
    %c0_i32_1 = arith.constant 0 : i32
    %c0_i32_2 = arith.constant 0 : i32
    return %c0_i32, %c0_i32_0, %c0_i32_1 : i32, i32, i32
  }
  func.func @transform_6(%arg0: i32) -> (i32, i32) {
    %c0_i32 = arith.constant 0 : i32
    %c0_i32_0 = arith.constant 0 : i32
    %c0_i32_1 = arith.constant 0 : i32
    return %c0_i32, %c0_i32_0 : i32, i32
  }
  func.func @transform_7(%arg0: i32) -> (i32, i32) {
    %c0_i32 = arith.constant 0 : i32
    %c0_i32_0 = arith.constant 0 : i32
    %c0_i32_1 = arith.constant 0 : i32
    return %c0_i32, %c0_i32_0 : i32, i32
  }
  func.func @transform_8(%arg0: i32) -> (i32, i32, i32) {
    %c0_i32 = arith.constant 0 : i32
    %c0_i32_0 = arith.constant 0 : i32
    %c0_i32_1 = arith.constant 0 : i32
    return %arg0, %c0_i32, %c0_i32_0 : i32, i32, i32
  }
}

</mosaic_0001>

<llo_original>
// kernel: tile.23
$region0: #{tile.23}
  #allocation0 [shape = 's32[1]{0}', space=sflag, size = 0x4, scoped, tag = 'scoped memory for tile.23']
  %s0 = inlined_call_operand.vmem [shape: f32[4], index: 0, kind: input, shape index: {}]
  %s1 = inlined_call_operand.vmem [shape: f32[16,4], index: 1, kind: output, shape index: {}]
  // Predicated region
  $region2: #{tile.23} parent=0 // pred_check
    _
  $region3: #{tile.23} parent=0 // pred_check_branch
    %3 = sbr.rel (0) target = $region5
  $region4: #{tile.23} parent=0 // pred_region
    _
  $region5: #{tile.23} parent=0 // pred_fallthru
    _
  %v4 = vld [vmem:[%s0] ss:$0 sm:$0xff]
  %5 = vst [vmem:[%s1] sm:$0xff] %v4
  %s6 = scalar_lea.vmem %s1, 8
  %7 = vst [vmem:[%s6] sm:$0xff] %v4

// kernel: tile.24
$region0: #{tile.24}
  %s0 = inlined_call_operand.vmem [shape: f32[16,4], index: 0, kind: input, shape index: {}]
  %s1 = inlined_call_operand.vmem [shape: f32[1,64], index: 1, kind: output, shape index: {}]
  $region1: #{tile.24} parent=0
    #allocation0 [shape = 'u8[4096]{0}', space=vmem, size = 0x1000, scoped, tag = 'scoped mem for output reshape']
    %v2 = vld [vmem:[%s0] sm:$0x1]
    %vm3 = vcmask 31744
    %4 = vst.msk [vmem:[#allocation0] sm:$0x1] %vm3, %v2
    %s5 = scalar_lea.vmem %s0, 15
    %v6 = vld [vmem:[%s5] sm:$0x1]
    %7 = vrot.lane.b32.xlu0 %v6, 60
    %v8 = vpop.permute.xlu0 %7
    %vm9 = vcmask 523744
    %10 = vst.msk [vmem:[#allocation0] sm:$0x1] %vm9, %v8
    %s11 = scalar_lea.vmem %s0, 14
    %v12 = vld [vmem:[%s11] sm:$0x1]
    %13 = vrot.lane.b32.xlu0 %v12, 56
    %v14 = vpop.permute.xlu0 %13
    %vm15 = vcmask 490944
    %16 = vst.msk [vmem:[#allocation0] sm:$0x1] %vm15, %v14
    %s17 = scalar_lea.vmem %s0, 13
    %v18 = vld [vmem:[%s17] sm:$0x1]
    %19 = vrot.lane.b32.xlu0 %v18, 52
    %v20 = vpop.permute.xlu0 %19
    %vm21 = vcmask 458144
    %22 = vst.msk [vmem:[#allocation0] sm:$0x1] %vm21, %v20
    %s23 = scalar_lea.vmem %s0, 12
    %v24 = vld [vmem:[%s23] sm:$0x1]
    %25 = vrot.lane.b32.xlu0 %v24, 48
    %v26 = vpop.permute.xlu0 %25
    %vm27 = vcmask 425344
    %28 = vst.msk [vmem:[#allocation0] sm:$0x1] %vm27, %v26
    %s29 = scalar_lea.vmem %s0, 11
    %v30 = vld [vmem:[%s29] sm:$0x1]
    %31 = vrot.lane.b32.xlu0 %v30, 44
    %v32 = vpop.permute.xlu0 %31
    %vm33 = vcmask 392544
    %34 = vst.msk [vmem:[#allocation0] sm:$0x1] %vm33, %v32
    %s35 = scalar_lea.vmem %s0, 10
    %v36 = vld [vmem:[%s35] sm:$0x1]
    %37 = vrot.lane.b32.xlu0 %v36, 40
    %v38 = vpop.permute.xlu0 %37
    %vm39 = vcmask 359744
    %40 = vst.msk [vmem:[#allocation0] sm:$0x1] %vm39, %v38
    %s41 = scalar_lea.vmem %s0, 9
    %v42 = vld [vmem:[%s41] sm:$0x1]
    %43 = vrot.lane.b32.xlu0 %v42, 36
    %v44 = vpop.permute.xlu0 %43
    %vm45 = vcmask 326944
    %46 = vst.msk [vmem:[#allocation0] sm:$0x1] %vm45, %v44
    %s47 = scalar_lea.vmem %s0, 8
    %v48 = vld [vmem:[%s47] sm:$0x1]
    %49 = vrot.lane.b32.xlu0 %v48, 32
    %v50 = vpop.permute.xlu0 %49
    %vm51 = vcmask 294144
    %52 = vst.msk [vmem:[#allocation0] sm:$0x1] %vm51, %v50
    %s53 = scalar_lea.vmem %s0, 7
    %v54 = vld [vmem:[%s53] sm:$0x1]
    %55 = vrot.lane.b32.xlu0 %v54, 28
    %v56 = vpop.permute.xlu0 %55
    %vm57 = vcmask 261344
    %58 = vst.msk [vmem:[#allocation0] sm:$0x1] %vm57, %v56
    %s59 = scalar_lea.vmem %s0, 6
    %v60 = vld [vmem:[%s59] sm:$0x1]
    %61 = vrot.lane.b32.xlu0 %v60, 24
    %v62 = vpop.permute.xlu0 %61
    %vm63 = vcmask 228544
    %64 = vst.msk [vmem:[#allocation0] sm:$0x1] %vm63, %v62
    %s65 = scalar_lea.vmem %s0, 5
    %v66 = vld [vmem:[%s65] sm:$0x1]
    %67 = vrot.lane.b32.xlu0 %v66, 20
    %v68 = vpop.permute.xlu0 %67
    %vm69 = vcmask 195744
    %70 = vst.msk [vmem:[#allocation0] sm:$0x1] %vm69, %v68
    %s71 = scalar_lea.vmem %s0, 4
    %v72 = vld [vmem:[%s71] sm:$0x1]
    %73 = vrot.lane.b32.xlu0 %v72, 16
    %v74 = vpop.permute.xlu0 %73
    %vm75 = vcmask 162944
    %76 = vst.msk [vmem:[#allocation0] sm:$0x1] %vm75, %v74
    %s77 = scalar_lea.vmem %s0, 3
    %v78 = vld [vmem:[%s77] sm:$0x1]
    %79 = vrot.lane.b32.xlu0 %v78, 12
    %v80 = vpop.permute.xlu0 %79
    %vm81 = vcmask 130144
    %82 = vst.msk [vmem:[#allocation0] sm:$0x1] %vm81, %v80
    %s83 = scalar_lea.vmem %s0, 2
    %v84 = vld [vmem:[%s83] sm:$0x1]
    %85 = vrot.lane.b32.xlu0 %v84, 8
    %v86 = vpop.permute.xlu0 %85
    %vm87 = vcmask 97344
    %88 = vst.msk [vmem:[#allocation0] sm:$0x1] %vm87, %v86
    %s89 = scalar_lea.vmem %s0, 1
    %v90 = vld [vmem:[%s89] sm:$0x1]
    %91 = vrot.lane.b32.xlu0 %v90, 4
    %v92 = vpop.permute.xlu0 %91
    %vm93 = vcmask 64544
    %94 = vst.msk [vmem:[#allocation0] sm:$0x1] %vm93, %v92
    %s96 = ssub.s32 2, 1
    %v97 = vld [vmem:[#allocation0] sm:%s96]
    %s99 = ssub.s32 2, 1
    %100 = vst [vmem:[%s1] sm:%s99] %v97

// kernel: up_forward.1
$region0: #{up_forward.1}
  #allocation0 [shape = 'u32[]', space=smem, size = 0x4, offset = 0x4, fixed_abs, tag = 'smem constant byte address 0x4 - core index']
  #allocation1 [shape = 'u32[72,128]{1,0:T(1,128)}', space=vmem, size = 0x9000, scoped, tag = 'internal scratch']
  #allocation2 [shape = 'bf16[9,18,128]{2,1,0:T(8,128)(2,1)}', space=vmem, size = 0xd800, scoped, tag = 'scratch operand']
  #allocation3 [shape = 'bf16[9,18,128]{2,1,0:T(8,128)(2,1)}', space=vmem, size = 0xd800, scoped, tag = 'scratch operand']
  #allocation4 [shape = 'bf16[9,20,64]{2,1,0:T(8,128)(2,1)}', space=vmem, size = 0xd800, scoped, tag = 'scratch operand']
  #allocation5 [shape = 'bf16[9,20,64]{2,1,0:T(8,128)(2,1)}', space=vmem, size = 0xd800, scoped, tag = 'scratch operand']
  %s0 = inlined_call_operand.vmem [shape: bf16[2,16,18,64], index: 0, kind: input, shape index: {}]
  %s1 = inlined_call_operand.vmem [shape: bf16[2,16,18,64], index: 1, kind: input, shape index: {}]
  %s2 = inlined_call_operand.vmem [shape: bf16[9,128,64], index: 2, kind: input, shape index: {}]
  %s3 = inlined_call_operand.vmem [shape: f32[1,64], index: 3, kind: input, shape index: {}]
  %s4 = inlined_call_operand.vmem [shape: f32[1,64], index: 4, kind: input, shape index: {}]
  %s5 = inlined_call_operand.vmem [shape: bf16[9,64,64], index: 5, kind: input, shape index: {}]
  %s6 = inlined_call_operand.vmem [shape: f32[1,64], index: 6, kind: input, shape index: {}]
  %s7 = inlined_call_operand.vmem [shape: f32[1,64], index: 7, kind: input, shape index: {}]
  %s8 = inlined_call_operand.vmem [shape: f32[2,128,128], index: 8, kind: output, shape index: {}]
  %s9 = sld [smem:[#allocation0]]
  $region65: #{up_forward.1} parent=0
    _
  %s11 = ssub.s32 1, %s9
  %s12 = scalar_select 0, %s11, %s9
  loop: start=0, step=1, limit=4
  $region2: #{up_forward.1} parent=0 // loop_pre_header
    _
  $region3: #{up_forward.1} parent=0 // loop_header
    %s14 = sphi 0, %s18
    %p15 = scmp.ge.s32.totalorder %s14, 4
    %s24 = sphi 0, %s26
    %s27 = sphi 0, %s24
    %s28 = sphi 0, %s27
    %s44 = sphi 0, %s28
    %s50 = sphi 0, %s52
    %s53 = sphi 0, %s50
    %s54 = sphi 0, %s53
    %s70 = sphi 0, %s54
    %s74 = sphi 0, %s74
    %s76 = sphi 0, %s74
    %s77 = sphi 0, %s76
    %s91 = sphi 0, %s77
    %s95 = sphi 0, %s95
    %s97 = sphi 0, %s95
    %s98 = sphi 0, %s97
    %s112 = sphi 0, %s98
    %s116 = sphi 0, %s116
    %s118 = sphi 0, %s116
    %s119 = sphi 0, %s118
    %s133 = sphi 0, %s119
    %s137 = sphi 0, %s137
    %s139 = sphi 0, %s137
    %s140 = sphi 0, %s139
    %s154 = sphi 0, %s140
    %s158 = sphi 0, %s158
    %s160 = sphi 0, %s158
    %s161 = sphi 0, %s160
    %s175 = sphi 0, %s161
    %s179 = sphi 0, %s179
    %s181 = sphi 0, %s179
    %s182 = sphi 0, %s181
    %s196 = sphi 0, %s182
    %s202 = sphi 0, %s204
    %s205 = sphi 0, %s202
    %s206 = sphi 0, %s205
    %s222 = sphi 0, %s206
  $region4: #{up_forward.1} parent=0 // loop_header_branch
    %17 = sbr.rel (%p15) target = $region8
  $region5: #{up_forward.1} parent=0 // loop_body
    %s19 = ssub.s32 %s14, 1
    %s20 = ssub.s32 %s14, 2
    %s21 = sadd.s32 %s14, 1
    %s22 = ssub.s32 %s14, %s21
    %p23 = scmp.eq.s32.totalorder %s22, 0
    %s25 = sadd.s32 %s24, 1
    %s26 = scalar_select %p23, %s24, %s25
    %p29 = pneg %p23
    %p30 = scmp.eq.s32.totalorder %s14, 1
    %p31 = por %p29, %p30
    %p32 = scmp.ne.s32.totalorder %s24, %s27
    %p33 = scmp.eq.s32.totalorder %s14, 0
    %p34 = por %p32, %p33
    %p35 = scmp.ne.s32.totalorder %s24, %s27
    %p36 = scmp.eq.s32.totalorder %s19, 1
    %p37 = por %p35, %p36
    %p38 = scmp.ne.s32.totalorder %s27, %s28
    %p39 = scmp.eq.s32.totalorder %s19, 0
    %p40 = por %p38, %p39
    %p41 = scmp.ne.s32.totalorder %s27, %s28
    %p42 = scmp.eq.s32.totalorder %s20, 1
    %p43 = por %p41, %p42
    %p45 = scmp.ne.s32.totalorder %s28, %s44
    %p46 = scmp.eq.s32.totalorder %s20, 0
    %p47 = por %p45, %p46
    %s48 = ssub.s32 %s14, %s21
    %p49 = scmp.eq.s32.totalorder %s48, 0
    %s51 = sadd.s32 %s50, 1
    %s52 = scalar_select %p49, %s50, %s51
    %p55 = pneg %p49
    %p56 = scmp.eq.s32.totalorder %s14, 1
    %p57 = por %p55, %p56
    %p58 = scmp.ne.s32.totalorder %s50, %s53
    %p59 = scmp.eq.s32.totalorder %s14, 0
    %p60 = por %p58, %p59
    %p61 = scmp.ne.s32.totalorder %s50, %s53
    %p62 = scmp.eq.s32.totalorder %s19, 1
    %p63 = por %p61, %p62
    %p64 = scmp.ne.s32.totalorder %s53, %s54
    %p65 = scmp.eq.s32.totalorder %s19, 0
    %p66 = por %p64, %p65
    %p67 = scmp.ne.s32.totalorder %s53, %s54
    %p68 = scmp.eq.s32.totalorder %s20, 1
    %p69 = por %p67, %p68
    %p71 = scmp.ne.s32.totalorder %s54, %s70
    %p72 = scmp.eq.s32.totalorder %s20, 0
    %p73 = por %p71, %p72
    %s75 = sadd.s32 %s74, 1
    %p78 = scmp.eq.s32.totalorder %s14, 1
    %p79 = scmp.ne.s32.totalorder %s74, %s76
    %p80 = scmp.eq.s32.totalorder %s14, 0
    %p81 = por %p79, %p80
    %p82 = scmp.ne.s32.totalorder %s74, %s76
    %p83 = scmp.eq.s32.totalorder %s19, 1
    %p84 = por %p82, %p83
    %p85 = scmp.ne.s32.totalorder %s76, %s77
    %p86 = scmp.eq.s32.totalorder %s19, 0
    %p87 = por %p85, %p86
    %p88 = scmp.ne.s32.totalorder %s76, %s77
    %p89 = scmp.eq.s32.totalorder %s20, 1
    %p90 = por %p88, %p89
    %p92 = scmp.ne.s32.totalorder %s77, %s91
    %p93 = scmp.eq.s32.totalorder %s20, 0
    %p94 = por %p92, %p93
    %s96 = sadd.s32 %s95, 1
    %p99 = scmp.eq.s32.totalorder %s14, 1
    %p100 = scmp.ne.s32.totalorder %s95, %s97
    %p101 = scmp.eq.s32.totalorder %s14, 0
    %p102 = por %p100, %p101
    %p103 = scmp.ne.s32.totalorder %s95, %s97
    %p104 = scmp.eq.s32.totalorder %s19, 1
    %p105 = por %p103, %p104
    %p106 = scmp.ne.s32.totalorder %s97, %s98
    %p107 = scmp.eq.s32.totalorder %s19, 0
    %p108 = por %p106, %p107
    %p109 = scmp.ne.s32.totalorder %s97, %s98
    %p110 = scmp.eq.s32.totalorder %s20, 1
    %p111 = por %p109, %p110
    %p113 = scmp.ne.s32.totalorder %s98, %s112
    %p114 = scmp.eq.s32.totalorder %s20, 0
    %p115 = por %p113, %p114
    %s117 = sadd.s32 %s116, 1
    %p120 = scmp.eq.s32.totalorder %s14, 1
    %p121 = scmp.ne.s32.totalorder %s116, %s118
    %p122 = scmp.eq.s32.totalorder %s14, 0
    %p123 = por %p121, %p122
    %p124 = scmp.ne.s32.totalorder %s116, %s118
    %p125 = scmp.eq.s32.totalorder %s19, 1
    %p126 = por %p124, %p125
    %p127 = scmp.ne.s32.totalorder %s118, %s119
    %p128 = scmp.eq.s32.totalorder %s19, 0
    %p129 = por %p127, %p128
    %p130 = scmp.ne.s32.totalorder %s118, %s119
    %p131 = scmp.eq.s32.totalorder %s20, 1
    %p132 = por %p130, %p131
    %p134 = scmp.ne.s32.totalorder %s119, %s133
    %p135 = scmp.eq.s32.totalorder %s20, 0
    %p136 = por %p134, %p135
    %s138 = sadd.s32 %s137, 1
    %p141 = scmp.eq.s32.totalorder %s14, 1
    %p142 = scmp.ne.s32.totalorder %s137, %s139
    %p143 = scmp.eq.s32.totalorder %s14, 0
    %p144 = por %p142, %p143
    %p145 = scmp.ne.s32.totalorder %s137, %s139
    %p146 = scmp.eq.s32.totalorder %s19, 1
    %p147 = por %p145, %p146
    %p148 = scmp.ne.s32.totalorder %s139, %s140
    %p149 = scmp.eq.s32.totalorder %s19, 0
    %p150 = por %p148, %p149
    %p151 = scmp.ne.s32.totalorder %s139, %s140
    %p152 = scmp.eq.s32.totalorder %s20, 1
    %p153 = por %p151, %p152
    %p155 = scmp.ne.s32.totalorder %s140, %s154
    %p156 = scmp.eq.s32.totalorder %s20, 0
    %p157 = por %p155, %p156
    %s159 = sadd.s32 %s158, 1
    %p162 = scmp.eq.s32.totalorder %s14, 1
    %p163 = scmp.ne.s32.totalorder %s158, %s160
    %p164 = scmp.eq.s32.totalorder %s14, 0
    %p165 = por %p163, %p164
    %p166 = scmp.ne.s32.totalorder %s158, %s160
    %p167 = scmp.eq.s32.totalorder %s19, 1
    %p168 = por %p166, %p167
    %p169 = scmp.ne.s32.totalorder %s160, %s161
    %p170 = scmp.eq.s32.totalorder %s19, 0
    %p171 = por %p169, %p170
    %p172 = scmp.ne.s32.totalorder %s160, %s161
    %p173 = scmp.eq.s32.totalorder %s20, 1
    %p174 = por %p172, %p173
    %p176 = scmp.ne.s32.totalorder %s161, %s175
    %p177 = scmp.eq.s32.totalorder %s20, 0
    %p178 = por %p176, %p177
    %s180 = sadd.s32 %s179, 1
    %p183 = scmp.eq.s32.totalorder %s14, 1
    %p184 = scmp.ne.s32.totalorder %s179, %s181
    %p185 = scmp.eq.s32.totalorder %s14, 0
    %p186 = por %p184, %p185
    %p187 = scmp.ne.s32.totalorder %s179, %s181
    %p188 = scmp.eq.s32.totalorder %s19, 1
    %p189 = por %p187, %p188
    %p190 = scmp.ne.s32.totalorder %s181, %s182
    %p191 = scmp.eq.s32.totalorder %s19, 0
    %p192 = por %p190, %p191
    %p193 = scmp.ne.s32.totalorder %s181, %s182
    %p194 = scmp.eq.s32.totalorder %s20, 1
    %p195 = por %p193, %p194
    %p197 = scmp.ne.s32.totalorder %s182, %s196
    %p198 = scmp.eq.s32.totalorder %s20, 0
    %p199 = por %p197, %p198
    %s200 = ssub.s32 %s14, %s21
    %p201 = scmp.eq.s32.totalorder %s200, 0
    %s203 = sadd.s32 %s202, 1
    %s204 = scalar_select %p201, %s202, %s203
    %p207 = pneg %p201
    %p208 = scmp.eq.s32.totalorder %s14, 1
    %p209 = por %p207, %p208
    %p210 = scmp.ne.s32.totalorder %s202, %s205
    %p211 = scmp.eq.s32.totalorder %s14, 0
    %p212 = por %p210, %p211
    %p213 = scmp.ne.s32.totalorder %s202, %s205
    %p214 = scmp.eq.s32.totalorder %s19, 1
    %p215 = por %p213, %p214
    %p216 = scmp.ne.s32.totalorder %s205, %s206
    %p217 = scmp.eq.s32.totalorder %s19, 0
    %p218 = por %p216, %p217
    %p219 = scmp.ne.s32.totalorder %s205, %s206
    %p220 = scmp.eq.s32.totalorder %s20, 1
    %p221 = por %p219, %p220
    %p223 = scmp.ne.s32.totalorder %s206, %s222
    %p224 = scmp.eq.s32.totalorder %s20, 0
    %p225 = por %p223, %p224
    %p226 = scmp.le.s32.totalorder 1, %s14
    %p227 = scmp.lt.s32.totalorder %s14, 3
    %p228 = pnand %p226, %p227
    %p229 = pneg %p228
    // Predicated region
    $region9: #{up_forward.1} parent=5 // pred_check
      _
    $region10: #{up_forward.1} parent=5 // pred_check_branch
      %231 = sbr.rel (%p228) target = $region12
    $region11: #{up_forward.1} parent=5 // pred_region
      %s232 = ssub.s32 %s14, 1
      // Predicated region
      $region13: #{up_forward.1} parent=11 // pred_check
        %p233 = pneg %p87
      $region14: #{up_forward.1} parent=11 // pred_check_branch
        %235 = sbr.rel (%p233) target = $region16
      $region15: #{up_forward.1} parent=11 // pred_region
        _
      $region16: #{up_forward.1} parent=11 // pred_fallthru
        _
      // Predicated region
      $region17: #{up_forward.1} parent=11 // pred_check
        %p236 = pneg %p108
      $region18: #{up_forward.1} parent=11 // pred_check_branch
        %238 = sbr.rel (%p236) target = $region20
      $region19: #{up_forward.1} parent=11 // pred_region
        _
      $region20: #{up_forward.1} parent=11 // pred_fallthru
        _
      // Predicated region
      $region21: #{up_forward.1} parent=11 // pred_check
        %p239 = pneg %p129
      $region22: #{up_forward.1} parent=11 // pred_check_branch
        %241 = sbr.rel (%p239) target = $region24
      $region23: #{up_forward.1} parent=11 // pred_region
        _
      $region24: #{up_forward.1} parent=11 // pred_fallthru
        _
      // Predicated region
      $region25: #{up_forward.1} parent=11 // pred_check
        %p242 = pneg %p150
      $region26: #{up_forward.1} parent=11 // pred_check_branch
        %244 = sbr.rel (%p242) target = $region28
      $region27: #{up_forward.1} parent=11 // pred_region
        _
      $region28: #{up_forward.1} parent=11 // pred_fallthru
        _
      // Predicated region
      $region29: #{up_forward.1} parent=11 // pred_check
        %p245 = pneg %p171
      $region30: #{up_forward.1} parent=11 // pred_check_branch
        %247 = sbr.rel (%p245) target = $region32
      $region31: #{up_forward.1} parent=11 // pred_region
        _
      $region32: #{up_forward.1} parent=11 // pred_fallthru
        _
      // Predicated region
      $region33: #{up_forward.1} parent=11 // pred_check
        %p248 = pneg %p192
      $region34: #{up_forward.1} parent=11 // pred_check_branch
        %250 = sbr.rel (%p248) target = $region36
      $region35: #{up_forward.1} parent=11 // pred_region
        _
      $region36: #{up_forward.1} parent=11 // pred_fallthru
        _
    $region12: #{up_forward.1} parent=5 // pred_fallthru
      _
    %p251 = scmp.lt.s32.totalorder %s14, 2
    // Predicated region
    $region37: #{up_forward.1} parent=5 // pred_check
      %p252 = pneg %p251
    $region38: #{up_forward.1} parent=5 // pred_check_branch
      %254 = sbr.rel (%p252) target = $region40
    $region39: #{up_forward.1} parent=5 // pred_region
      // Predicated region
      $region41: #{up_forward.1} parent=39 // pred_check
        %p255 = pneg %p34
      $region42: #{up_forward.1} parent=39 // pred_check_branch
        %257 = sbr.rel (%p255) target = $region44
      $region43: #{up_forward.1} parent=39 // pred_region
        %p258 = scmp.lt.s32.totalorder %s14, 1
        %s259 = scalar_select %p258, %s14, 1
        %s260 = smul.addr %s259, 48
        %s261 = smul.addr %s260, 4
        %s262 = scalar_lea.vmem %s0, %s261
      $region44: #{up_forward.1} parent=39 // pred_fallthru
        _
      // Predicated region
      $region45: #{up_forward.1} parent=39 // pred_check
        %p263 = pneg %p60
      $region46: #{up_forward.1} parent=39 // pred_check_branch
        %265 = sbr.rel (%p263) target = $region48
      $region47: #{up_forward.1} parent=39 // pred_region
        %p266 = scmp.lt.s32.totalorder %s14, 1
        %s267 = scalar_select %p266, %s14, 1
        %s268 = smul.addr %s267, 48
        %s269 = smul.addr %s268, 4
        %s270 = scalar_lea.vmem %s1, %s269
      $region48: #{up_forward.1} parent=39 // pred_fallthru
        _
    $region40: #{up_forward.1} parent=5 // pred_fallthru
      _
    %p271 = scmp.le.s32.totalorder 1, %s14
    %p272 = scmp.lt.s32.totalorder %s14, 3
    %p273 = pnand %p271, %p272
    %p274 = pneg %p273
    // Predicated region
    $region49: #{up_forward.1} parent=5 // pred_check
      _
    $region50: #{up_forward.1} parent=5 // pred_check_branch
      %276 = sbr.rel (%p273) target = $region52
    $region51: #{up_forward.1} parent=5 // pred_region
      %s277 = ssub.s32 %s14, 1
      %p278 = scmp.lt.s32.totalorder %s19, 1
      %s279 = scalar_select %p278, %s19, 1
      %s280 = smul.addr %s279, 48
      %s281 = smul.addr %s280, 4
      %s282 = scalar_lea.vmem %s0, %s281
      %p283 = pneg %p40
      %p284 = pneg %p37
      %p285 = scmp.lt.s32.totalorder %s19, 1
      %s286 = scalar_select %p285, %s19, 1
      %s287 = smul.addr %s286, 48
      %s288 = smul.addr %s287, 4
      %s289 = scalar_lea.vmem %s1, %s288
      %p290 = pneg %p66
      %p291 = pneg %p63
      %p292 = pneg %p87
      %p293 = pneg %p84
      %p294 = pneg %p108
      %p295 = pneg %p105
      %p296 = pneg %p129
      %p297 = pneg %p126
      %p298 = pneg %p150
      %p299 = pneg %p147
      %p300 = pneg %p171
      %p301 = pneg %p168
      %p302 = pneg %p192
      %p303 = pneg %p189
      %p304 = pneg %p218
      %p305 = pneg %p215
      %p306 = scmp.lt.s32.totalorder %s19, 1
      %s307 = scalar_select %p306, %s19, 1
      %s308 = smul.addr %s307, 16
      %s309 = smul.addr %s308, 8
      %s310 = scalar_lea.vmem %s8, %s309
      %p311 = scmp.lt.s32.totalorder %s19, 1
      %s312 = scalar_select %p311, %s19, 1
      %s313 = smul.addr %s312, 48
      %s314 = smul.addr %s313, 4
      %s315 = scalar_lea.vmem %s0, %s314
      %p316 = scmp.lt.s32.totalorder %s19, 1
      %s317 = scalar_select %p316, %s19, 1
      %s318 = smul.addr %s317, 48
      %s319 = smul.addr %s318, 4
      %s320 = scalar_lea.vmem %s1, %s319
      %p321 = scmp.lt.s32.totalorder %s19, 1
      %s322 = scalar_select %p321, %s19, 1
      %s323 = smul.addr %s322, 16
      %s324 = smul.addr %s323, 8
      %s325 = scalar_lea.vmem %s8, %s324
      %v327 = vld [vmem:[%s315] sm:$0xf]
      %v328 = vld [vmem:[%s315 + $0x4] sm:$0xf]
      %v329 = vld [vmem:[%s315 + $0x8] sm:$0x1]
      %v330 = vld [vmem:[%s315 + $0xc] sm:$0xf]
      %v331 = vld [vmem:[%s315 + $0x10] sm:$0xf]
      %v332 = vld [vmem:[%s315 + $0x14] sm:$0x1]
      %v333 = vld [vmem:[%s315 + $0x18] sm:$0xf]
      %v334 = vld [vmem:[%s315 + $0x1c] sm:$0xf]
      %v335 = vld [vmem:[%s315 + $0x20] sm:$0x1]
      %v336 = vld [vmem:[%s315 + $0x24] sm:$0xf]
      %v337 = vld [vmem:[%s315 + $0x28] sm:$0xf]
      %v338 = vld [vmem:[%s315 + $0x2c] sm:$0x1]
      %v339 = vld [vmem:[%s315 + $0x30] sm:$0xf]
      %v340 = vld [vmem:[%s315 + $0x34] sm:$0xf]
      %v341 = vld [vmem:[%s315 + $0x38] sm:$0x1]
      %v342 = vld [vmem:[%s315 + $0x3c] sm:$0xf]
      %v343 = vld [vmem:[%s315 + $0x40] sm:$0xf]
      %v344 = vld [vmem:[%s315 + $0x44] sm:$0x1]
      %v345 = vld [vmem:[%s315 + $0x48] sm:$0xf]
      %v346 = vld [vmem:[%s315 + $0x4c] sm:$0xf]
      %v347 = vld [vmem:[%s315 + $0x50] sm:$0x1]
      %v348 = vld [vmem:[%s315 + $0x54] sm:$0xf]
      %v349 = vld [vmem:[%s315 + $0x58] sm:$0xf]
      %v350 = vld [vmem:[%s315 + $0x5c] sm:$0x1]
      %vm351 = vcmask 519168
      %352 = vst.msk [vmem:[#allocation3] sm:$0xf] %vm351, %v327
      %353 = vst.msk [vmem:[#allocation3 + $0x4] sm:$0xf] %vm351, %v328
      %vm354 = vcmask 516096
      %355 = vst.msk [vmem:[#allocation3 + $0x8] sm:$0x1] %vm354, %v329
      %356 = vst.msk [vmem:[#allocation3 + $0xc] sm:$0xf] %vm351, %v330
      %357 = vst.msk [vmem:[#allocation3 + $0x10] sm:$0xf] %vm351, %v331
      %358 = vst.msk [vmem:[#allocation3 + $0x14] sm:$0x1] %vm354, %v332
      %359 = vst.msk [vmem:[#allocation3 + $0x18] sm:$0xf] %vm351, %v333
      %360 = vst.msk [vmem:[#allocation3 + $0x1c] sm:$0xf] %vm351, %v334
      %361 = vst.msk [vmem:[#allocation3 + $0x20] sm:$0x1] %vm354, %v335
      %362 = vst.msk [vmem:[#allocation3 + $0x24] sm:$0xf] %vm351, %v336
      %363 = vst.msk [vmem:[#allocation3 + $0x28] sm:$0xf] %vm351, %v337
      %364 = vst.msk [vmem:[#allocation3 + $0x2c] sm:$0x1] %vm354, %v338
      %365 = vst.msk [vmem:[#allocation3 + $0x30] sm:$0xf] %vm351, %v339
      %366 = vst.msk [vmem:[#allocation3 + $0x34] sm:$0xf] %vm351, %v340
      %367 = vst.msk [vmem:[#allocation3 + $0x38] sm:$0x1] %vm354, %v341
      %368 = vst.msk [vmem:[#allocation3 + $0x3c] sm:$0xf] %vm351, %v342
      %369 = vst.msk [vmem:[#allocation3 + $0x40] sm:$0xf] %vm351, %v343
      %370 = vst.msk [vmem:[#allocation3 + $0x44] sm:$0x1] %vm354, %v344
      %371 = vst.msk [vmem:[#allocation3 + $0x48] sm:$0xf] %vm351, %v345
      %372 = vst.msk [vmem:[#allocation3 + $0x4c] sm:$0xf] %vm351, %v346
      %373 = vst.msk [vmem:[#allocation3 + $0x50] sm:$0x1] %vm354, %v347
      %374 = vst.msk [vmem:[#allocation3 + $0x54] sm:$0xf] %vm351, %v348
      %375 = vst.msk [vmem:[#allocation3 + $0x58] sm:$0xf] %vm351, %v349
      %376 = vst.msk [vmem:[#allocation3 + $0x5c] sm:$0x1] %vm354, %v350
      %v377 = vld [vmem:[%s320] sm:$0xf]
      %v378 = vld [vmem:[%s320 + $0x4] sm:$0xf]
      %v379 = vld [vmem:[%s320 + $0x8] sm:$0x1]
      %v380 = vld [vmem:[%s320 + $0xc] sm:$0xf]
      %v381 = vld [vmem:[%s320 + $0x10] sm:$0xf]
      %v382 = vld [vmem:[%s320 + $0x14] sm:$0x1]
      %v383 = vld [vmem:[%s320 + $0x18] sm:$0xf]
      %v384 = vld [vmem:[%s320 + $0x1c] sm:$0xf]
      %v385 = vld [vmem:[%s320 + $0x20] sm:$0x1]
      %v386 = vld [vmem:[%s320 + $0x24] sm:$0xf]
      %v387 = vld [vmem:[%s320 + $0x28] sm:$0xf]
      %v388 = vld [vmem:[%s320 + $0x2c] sm:$0x1]
      %v389 = vld [vmem:[%s320 + $0x30] sm:$0xf]
      %v390 = vld [vmem:[%s320 + $0x34] sm:$0xf]
      %v391 = vld [vmem:[%s320 + $0x38] sm:$0x1]
      %v392 = vld [vmem:[%s320 + $0x3c] sm:$0xf]
      %v393 = vld [vmem:[%s320 + $0x40] sm:$0xf]
      %v394 = vld [vmem:[%s320 + $0x44] sm:$0x1]
      %v395 = vld [vmem:[%s320 + $0x48] sm:$0xf]
      %v396 = vld [vmem:[%s320 + $0x4c] sm:$0xf]
      %v397 = vld [vmem:[%s320 + $0x50] sm:$0x1]
      %v398 = vld [vmem:[%s320 + $0x54] sm:$0xf]
      %v399 = vld [vmem:[%s320 + $0x58] sm:$0xf]
      %v400 = vld [vmem:[%s320 + $0x5c] sm:$0x1]
      %425 = vrot.lane.b32.xlu0 %v377, 64
      %v426 = vpop.permute.xlu0 %425
      %427 = vrot.lane.b32.xlu0 %v378, 64
      %v428 = vpop.permute.xlu0 %427
      %429 = vrot.lane.b32.xlu0 %v379, 64
      %v430 = vpop.permute.xlu0 %429
      %431 = vrot.lane.b32.xlu0 %v380, 64
      %v432 = vpop.permute.xlu0 %431
      %433 = vrot.lane.b32.xlu0 %v381, 64
      %v434 = vpop.permute.xlu0 %433
      %435 = vrot.lane.b32.xlu0 %v382, 64
      %v436 = vpop.permute.xlu0 %435
      %437 = vrot.lane.b32.xlu0 %v383, 64
      %v438 = vpop.permute.xlu0 %437
      %439 = vrot.lane.b32.xlu0 %v384, 64
      %v440 = vpop.permute.xlu0 %439
      %441 = vrot.lane.b32.xlu0 %v385, 64
      %v442 = vpop.permute.xlu0 %441
      %443 = vrot.lane.b32.xlu0 %v386, 64
      %v444 = vpop.permute.xlu0 %443
      %445 = vrot.lane.b32.xlu0 %v387, 64
      %v446 = vpop.permute.xlu0 %445
      %447 = vrot.lane.b32.xlu0 %v388, 64
      %v448 = vpop.permute.xlu0 %447
      %449 = vrot.lane.b32.xlu0 %v389, 64
      %v450 = vpop.permute.xlu0 %449
      %451 = vrot.lane.b32.xlu0 %v390, 64
      %v452 = vpop.permute.xlu0 %451
      %453 = vrot.lane.b32.xlu0 %v391, 64
      %v454 = vpop.permute.xlu0 %453
      %455 = vrot.lane.b32.xlu0 %v392, 64
      %v456 = vpop.permute.xlu0 %455
      %457 = vrot.lane.b32.xlu0 %v393, 64
      %v458 = vpop.permute.xlu0 %457
      %459 = vrot.lane.b32.xlu0 %v394, 64
      %v460 = vpop.permute.xlu0 %459
      %461 = vrot.lane.b32.xlu0 %v395, 64
      %v462 = vpop.permute.xlu0 %461
      %463 = vrot.lane.b32.xlu0 %v396, 64
      %v464 = vpop.permute.xlu0 %463
      %465 = vrot.lane.b32.xlu0 %v397, 64
      %v466 = vpop.permute.xlu0 %465
      %467 = vrot.lane.b32.xlu0 %v398, 64
      %v468 = vpop.permute.xlu0 %467
      %469 = vrot.lane.b32.xlu0 %v399, 64
      %v470 = vpop.permute.xlu0 %469
      %471 = vrot.lane.b32.xlu0 %v400, 64
      %v472 = vpop.permute.xlu0 %471
      %vm497 = vcmask 1043968
      %498 = vst.msk [vmem:[#allocation3] sm:$0xf] %vm497, %v426
      %499 = vst.msk [vmem:[#allocation3 + $0x4] sm:$0xf] %vm497, %v428
      %vm500 = vcmask 1040896
      %501 = vst.msk [vmem:[#allocation3 + $0x8] sm:$0x1] %vm500, %v430
      %502 = vst.msk [vmem:[#allocation3 + $0xc] sm:$0xf] %vm497, %v432
      %503 = vst.msk [vmem:[#allocation3 + $0x10] sm:$0xf] %vm497, %v434
      %504 = vst.msk [vmem:[#allocation3 + $0x14] sm:$0x1] %vm500, %v436
      %505 = vst.msk [vmem:[#allocation3 + $0x18] sm:$0xf] %vm497, %v438
      %506 = vst.msk [vmem:[#allocation3 + $0x1c] sm:$0xf] %vm497, %v440
      %507 = vst.msk [vmem:[#allocation3 + $0x20] sm:$0x1] %vm500, %v442
      %508 = vst.msk [vmem:[#allocation3 + $0x24] sm:$0xf] %vm497, %v444
      %509 = vst.msk [vmem:[#allocation3 + $0x28] sm:$0xf] %vm497, %v446
      %510 = vst.msk [vmem:[#allocation3 + $0x2c] sm:$0x1] %vm500, %v448
      %511 = vst.msk [vmem:[#allocation3 + $0x30] sm:$0xf] %vm497, %v450
      %512 = vst.msk [vmem:[#allocation3 + $0x34] sm:$0xf] %vm497, %v452
      %513 = vst.msk [vmem:[#allocation3 + $0x38] sm:$0x1] %vm500, %v454
      %514 = vst.msk [vmem:[#allocation3 + $0x3c] sm:$0xf] %vm497, %v456
      %515 = vst.msk [vmem:[#allocation3 + $0x40] sm:$0xf] %vm497, %v458
      %516 = vst.msk [vmem:[#allocation3 + $0x44] sm:$0x1] %vm500, %v460
      %517 = vst.msk [vmem:[#allocation3 + $0x48] sm:$0xf] %vm497, %v462
      %518 = vst.msk [vmem:[#allocation3 + $0x4c] sm:$0xf] %vm497, %v464
      %519 = vst.msk [vmem:[#allocation3 + $0x50] sm:$0x1] %vm500, %v466
      %520 = vst.msk [vmem:[#allocation3 + $0x54] sm:$0xf] %vm497, %v468
      %521 = vst.msk [vmem:[#allocation3 + $0x58] sm:$0xf] %vm497, %v470
      %522 = vst.msk [vmem:[#allocation3 + $0x5c] sm:$0x1] %vm500, %v472
      %s523 = scalar_lea.vmem %s315, 96
      %v524 = vld [vmem:[%s523] sm:$0xf]
      %v525 = vld [vmem:[%s523 + $0x4] sm:$0xf]
      %v526 = vld [vmem:[%s523 + $0x8] sm:$0x1]
      %v527 = vld [vmem:[%s523 + $0xc] sm:$0xf]
      %v528 = vld [vmem:[%s523 + $0x10] sm:$0xf]
      %v529 = vld [vmem:[%s523 + $0x14] sm:$0x1]
      %v530 = vld [vmem:[%s523 + $0x18] sm:$0xf]
      %v531 = vld [vmem:[%s523 + $0x1c] sm:$0xf]
      %v532 = vld [vmem:[%s523 + $0x20] sm:$0x1]
      %v533 = vld [vmem:[%s523 + $0x24] sm:$0xf]
      %v534 = vld [vmem:[%s523 + $0x28] sm:$0xf]
      %v535 = vld [vmem:[%s523 + $0x2c] sm:$0x1]
      %v536 = vld [vmem:[%s523 + $0x30] sm:$0xf]
      %v537 = vld [vmem:[%s523 + $0x34] sm:$0xf]
      %v538 = vld [vmem:[%s523 + $0x38] sm:$0x1]
      %v539 = vld [vmem:[%s523 + $0x3c] sm:$0xf]
      %v540 = vld [vmem:[%s523 + $0x40] sm:$0xf]
      %v541 = vld [vmem:[%s523 + $0x44] sm:$0x1]
      %v542 = vld [vmem:[%s523 + $0x48] sm:$0xf]
      %v543 = vld [vmem:[%s523 + $0x4c] sm:$0xf]
      %v544 = vld [vmem:[%s523 + $0x50] sm:$0x1]
      %v545 = vld [vmem:[%s523 + $0x54] sm:$0xf]
      %v546 = vld [vmem:[%s523 + $0x58] sm:$0xf]
      %v547 = vld [vmem:[%s523 + $0x5c] sm:$0x1]
      %s548 = scalar_lea.vmem [#allocation2], 12
      %549 = vst.msk [vmem:[%s548] sm:$0xf] %vm351, %v524
      %550 = vst.msk [vmem:[%s548 + $0x4] sm:$0xf] %vm351, %v525
      %551 = vst.msk [vmem:[%s548 + $0x8] sm:$0x1] %vm354, %v526
      %552 = vst.msk [vmem:[%s548 + $0xc] sm:$0xf] %vm351, %v527
      %553 = vst.msk [vmem:[%s548 + $0x10] sm:$0xf] %vm351, %v528
      %554 = vst.msk [vmem:[%s548 + $0x14] sm:$0x1] %vm354, %v529
      %555 = vst.msk [vmem:[%s548 + $0x18] sm:$0xf] %vm351, %v530
      %556 = vst.msk [vmem:[%s548 + $0x1c] sm:$0xf] %vm351, %v531
      %557 = vst.msk [vmem:[%s548 + $0x20] sm:$0x1] %vm354, %v532
      %558 = vst.msk [vmem:[%s548 + $0x24] sm:$0xf] %vm351, %v533
      %559 = vst.msk [vmem:[%s548 + $0x28] sm:$0xf] %vm351, %v534
      %560 = vst.msk [vmem:[%s548 + $0x2c] sm:$0x1] %vm354, %v535
      %561 = vst.msk [vmem:[%s548 + $0x30] sm:$0xf] %vm351, %v536
      %562 = vst.msk [vmem:[%s548 + $0x34] sm:$0xf] %vm351, %v537
      %563 = vst.msk [vmem:[%s548 + $0x38] sm:$0x1] %vm354, %v538
      %564 = vst.msk [vmem:[%s548 + $0x3c] sm:$0xf] %vm351, %v539
      %565 = vst.msk [vmem:[%s548 + $0x40] sm:$0xf] %vm351, %v540
      %566 = vst.msk [vmem:[%s548 + $0x44] sm:$0x1] %vm354, %v541
      %567 = vst.msk [vmem:[%s548 + $0x48] sm:$0xf] %vm351, %v542
      %568 = vst.msk [vmem:[%s548 + $0x4c] sm:$0xf] %vm351, %v543
      %569 = vst.msk [vmem:[%s548 + $0x50] sm:$0x1] %vm354, %v544
      %570 = vst.msk [vmem:[%s548 + $0x54] sm:$0xf] %vm351, %v545
      %571 = vst.msk [vmem:[%s548 + $0x58] sm:$0xf] %vm351, %v546
      %572 = vst.msk [vmem:[%s548 + $0x5c] sm:$0x1] %vm354, %v547
      %s573 = scalar_lea.vmem %s320, 96
      %v574 = vld [vmem:[%s573] sm:$0xf]
      %v575 = vld [vmem:[%s573 + $0x4] sm:$0xf]
      %v576 = vld [vmem:[%s573 + $0x8] sm:$0x1]
      %v577 = vld [vmem:[%s573 + $0xc] sm:$0xf]
      %v578 = vld [vmem:[%s573 + $0x10] sm:$0xf]
      %v579 = vld [vmem:[%s573 + $0x14] sm:$0x1]
      %v580 = vld [vmem:[%s573 + $0x18] sm:$0xf]
      %v581 = vld [vmem:[%s573 + $0x1c] sm:$0xf]
      %v582 = vld [vmem:[%s573 + $0x20] sm:$0x1]
      %v583 = vld [vmem:[%s573 + $0x24] sm:$0xf]
      %v584 = vld [vmem:[%s573 + $0x28] sm:$0xf]
      %v585 = vld [vmem:[%s573 + $0x2c] sm:$0x1]
      %v586 = vld [vmem:[%s573 + $0x30] sm:$0xf]
      %v587 = vld [vmem:[%s573 + $0x34] sm:$0xf]
      %v588 = vld [vmem:[%s573 + $0x38] sm:$0x1]
      %v589 = vld [vmem:[%s573 + $0x3c] sm:$0xf]
      %v590 = vld [vmem:[%s573 + $0x40] sm:$0xf]
      %v591 = vld [vmem:[%s573 + $0x44] sm:$0x1]
      %v592 = vld [vmem:[%s573 + $0x48] sm:$0xf]
      %v593 = vld [vmem:[%s573 + $0x4c] sm:$0xf]
      %v594 = vld [vmem:[%s573 + $0x50] sm:$0x1]
      %v595 = vld [vmem:[%s573 + $0x54] sm:$0xf]
      %v596 = vld [vmem:[%s573 + $0x58] sm:$0xf]
      %v597 = vld [vmem:[%s573 + $0x5c] sm:$0x1]
      %622 = vrot.lane.b32.xlu0 %v574, 64
      %v623 = vpop.permute.xlu0 %622
      %624 = vrot.lane.b32.xlu0 %v575, 64
      %v625 = vpop.permute.xlu0 %624
      %626 = vrot.lane.b32.xlu0 %v576, 64
      %v627 = vpop.permute.xlu0 %626
      %628 = vrot.lane.b32.xlu0 %v577, 64
      %v629 = vpop.permute.xlu0 %628
      %630 = vrot.lane.b32.xlu0 %v578, 64
      %v631 = vpop.permute.xlu0 %630
      %632 = vrot.lane.b32.xlu0 %v579, 64
      %v633 = vpop.permute.xlu0 %632
      %634 = vrot.lane.b32.xlu0 %v580, 64
      %v635 = vpop.permute.xlu0 %634
      %636 = vrot.lane.b32.xlu0 %v581, 64
      %v637 = vpop.permute.xlu0 %636
      %638 = vrot.lane.b32.xlu0 %v582, 64
      %v639 = vpop.permute.xlu0 %638
      %640 = vrot.lane.b32.xlu0 %v583, 64
      %v641 = vpop.permute.xlu0 %640
      %642 = vrot.lane.b32.xlu0 %v584, 64
      %v643 = vpop.permute.xlu0 %642
      %644 = vrot.lane.b32.xlu0 %v585, 64
      %v645 = vpop.permute.xlu0 %644
      %646 = vrot.lane.b32.xlu0 %v586, 64
      %v647 = vpop.permute.xlu0 %646
      %648 = vrot.lane.b32.xlu0 %v587, 64
      %v649 = vpop.permute.xlu0 %648
      %650 = vrot.lane.b32.xlu0 %v588, 64
      %v651 = vpop.permute.xlu0 %650
      %652 = vrot.lane.b32.xlu0 %v589, 64
      %v653 = vpop.permute.xlu0 %652
      %654 = vrot.lane.b32.xlu0 %v590, 64
      %v655 = vpop.permute.xlu0 %654
      %656 = vrot.lane.b32.xlu0 %v591, 64
      %v657 = vpop.permute.xlu0 %656
      %658 = vrot.lane.b32.xlu0 %v592, 64
      %v659 = vpop.permute.xlu0 %658
      %660 = vrot.lane.b32.xlu0 %v593, 64
      %v661 = vpop.permute.xlu0 %660
      %662 = vrot.lane.b32.xlu0 %v594, 64
      %v663 = vpop.permute.xlu0 %662
      %664 = vrot.lane.b32.xlu0 %v595, 64
      %v665 = vpop.permute.xlu0 %664
      %666 = vrot.lane.b32.xlu0 %v596, 64
      %v667 = vpop.permute.xlu0 %666
      %668 = vrot.lane.b32.xlu0 %v597, 64
      %v669 = vpop.permute.xlu0 %668
      %694 = vst.msk [vmem:[%s548] sm:$0xf] %vm497, %v623
      %695 = vst.msk [vmem:[%s548 + $0x4] sm:$0xf] %vm497, %v625
      %696 = vst.msk [vmem:[%s548 + $0x8] sm:$0x1] %vm500, %v627
      %697 = vst.msk [vmem:[%s548 + $0xc] sm:$0xf] %vm497, %v629
      %698 = vst.msk [vmem:[%s548 + $0x10] sm:$0xf] %vm497, %v631
      %699 = vst.msk [vmem:[%s548 + $0x14] sm:$0x1] %vm500, %v633
      %700 = vst.msk [vmem:[%s548 + $0x18] sm:$0xf] %vm497, %v635
      %701 = vst.msk [vmem:[%s548 + $0x1c] sm:$0xf] %vm497, %v637
      %702 = vst.msk [vmem:[%s548 + $0x20] sm:$0x1] %vm500, %v639
      %703 = vst.msk [vmem:[%s548 + $0x24] sm:$0xf] %vm497, %v641
      %704 = vst.msk [vmem:[%s548 + $0x28] sm:$0xf] %vm497, %v643
      %705 = vst.msk [vmem:[%s548 + $0x2c] sm:$0x1] %vm500, %v645
      %706 = vst.msk [vmem:[%s548 + $0x30] sm:$0xf] %vm497, %v647
      %707 = vst.msk [vmem:[%s548 + $0x34] sm:$0xf] %vm497, %v649
      %708 = vst.msk [vmem:[%s548 + $0x38] sm:$0x1] %vm500, %v651
      %709 = vst.msk [vmem:[%s548 + $0x3c] sm:$0xf] %vm497, %v653
      %710 = vst.msk [vmem:[%s548 + $0x40] sm:$0xf] %vm497, %v655
      %711 = vst.msk [vmem:[%s548 + $0x44] sm:$0x1] %vm500, %v657
      %712 = vst.msk [vmem:[%s548 + $0x48] sm:$0xf] %vm497, %v659
      %713 = vst.msk [vmem:[%s548 + $0x4c] sm:$0xf] %vm497, %v661
      %714 = vst.msk [vmem:[%s548 + $0x50] sm:$0x1] %vm500, %v663
      %715 = vst.msk [vmem:[%s548 + $0x54] sm:$0xf] %vm497, %v665
      %716 = vst.msk [vmem:[%s548 + $0x58] sm:$0xf] %vm497, %v667
      %717 = vst.msk [vmem:[%s548 + $0x5c] sm:$0x1] %vm500, %v669
      %718 = vst [vmem:[#allocation2] sm:$0xf] 0
      %719 = vst [vmem:[#allocation2 + $0x4] sm:$0xf] 0
      %720 = vst [vmem:[#allocation2 + $0x8] sm:$0x1] 0
      %s721 = scalar_lea.vmem [#allocation3], 96
      %722 = vst [vmem:[%s721] sm:$0xf] 0
      %723 = vst [vmem:[%s721 + $0x4] sm:$0xf] 0
      %724 = vst [vmem:[%s721 + $0x8] sm:$0x1] 0
      %v725 = vld [vmem:[#allocation2] sm:$0xf]
      %v726 = vld [vmem:[#allocation2 + $0x4] sm:$0xf]
      %v727 = vld [vmem:[#allocation2 + $0xc] sm:$0xf]
      %v728 = vld [vmem:[#allocation2 + $0x10] sm:$0xf]
      %v729 = vld [vmem:[#allocation2 + $0x18] sm:$0xf]
      %v730 = vld [vmem:[#allocation2 + $0x1c] sm:$0xf]
      %v731 = vld [vmem:[#allocation2 + $0x24] sm:$0xf]
      %v732 = vld [vmem:[#allocation2 + $0x28] sm:$0xf]
      %v733 = vld [vmem:[#allocation2 + $0x30] sm:$0xf]
      %v734 = vld [vmem:[#allocation2 + $0x34] sm:$0xf]
      %v735 = vld [vmem:[#allocation2 + $0x3c] sm:$0xf]
      %v736 = vld [vmem:[#allocation2 + $0x40] sm:$0xf]
      %v737 = vld [vmem:[#allocation2 + $0x48] sm:$0xf]
      %v738 = vld [vmem:[#allocation2 + $0x4c] sm:$0xf]
      %v739 = vld [vmem:[#allocation2 + $0x54] sm:$0xf]
      %v740 = vld [vmem:[#allocation2 + $0x58] sm:$0xf]
      %v741 = vld [vmem:[#allocation3] sm:$0xf]
      %v742 = vld [vmem:[#allocation3 + $0x4] sm:$0xf]
      %v743 = vld [vmem:[#allocation3 + $0xc] sm:$0xf]
      %v744 = vld [vmem:[#allocation3 + $0x10] sm:$0xf]
      %v745 = vld [vmem:[#allocation3 + $0x18] sm:$0xf]
      %v746 = vld [vmem:[#allocation3 + $0x1c] sm:$0xf]
      %v747 = vld [vmem:[#allocation3 + $0x24] sm:$0xf]
      %v748 = vld [vmem:[#allocation3 + $0x28] sm:$0xf]
      %v749 = vld [vmem:[#allocation3 + $0x30] sm:$0xf]
      %v750 = vld [vmem:[#allocation3 + $0x34] sm:$0xf]
      %v751 = vld [vmem:[#allocation3 + $0x3c] sm:$0xf]
      %v752 = vld [vmem:[#allocation3 + $0x40] sm:$0xf]
      %v753 = vld [vmem:[#allocation3 + $0x48] sm:$0xf]
      %v754 = vld [vmem:[#allocation3 + $0x4c] sm:$0xf]
      %v755 = vld [vmem:[#allocation3 + $0x54] sm:$0xf]
      %v756 = vld [vmem:[#allocation3 + $0x58] sm:$0xf]
      %v773 = vunpack.c.l.b16 %v725
      %v774 = vunpack.c.l.b16 %v726
      %v775 = vunpack.c.l.b16 %v727
      %v776 = vunpack.c.l.b16 %v728
      %v777 = vunpack.c.l.b16 %v729
      %v778 = vunpack.c.l.b16 %v730
      %v779 = vunpack.c.l.b16 %v731
      %v780 = vunpack.c.l.b16 %v732
      %v781 = vunpack.c.l.b16 %v733
      %v782 = vunpack.c.l.b16 %v734
      %v783 = vunpack.c.l.b16 %v735
      %v784 = vunpack.c.l.b16 %v736
      %v785 = vunpack.c.l.b16 %v737
      %v786 = vunpack.c.l.b16 %v738
      %v787 = vunpack.c.l.b16 %v739
      %v788 = vunpack.c.l.b16 %v740
      %v789 = vpack.c.b16 %v774, %v773
      %v790 = vpack.c.b16 %v776, %v775
      %v791 = vpack.c.b16 %v778, %v777
      %v792 = vpack.c.b16 %v780, %v779
      %v793 = vpack.c.b16 %v782, %v781
      %v794 = vpack.c.b16 %v784, %v783
      %v795 = vpack.c.b16 %v786, %v785
      %v796 = vpack.c.b16 %v788, %v787
      %v821 = vunpack.c.l.b16 %v741
      %v822 = vunpack.c.l.b16 %v742
      %v823 = vunpack.c.l.b16 %v743
      %v824 = vunpack.c.l.b16 %v744
      %v825 = vunpack.c.l.b16 %v745
      %v826 = vunpack.c.l.b16 %v746
      %v827 = vunpack.c.l.b16 %v747
      %v828 = vunpack.c.l.b16 %v748
      %v829 = vunpack.c.l.b16 %v749
      %v830 = vunpack.c.l.b16 %v750
      %v831 = vunpack.c.l.b16 %v751
      %v832 = vunpack.c.l.b16 %v752
      %v833 = vunpack.c.l.b16 %v753
      %v834 = vunpack.c.l.b16 %v754
      %v835 = vunpack.c.l.b16 %v755
      %v836 = vunpack.c.l.b16 %v756
      %v837 = vpack.c.b16 %v822, %v821
      %v838 = vpack.c.b16 %v824, %v823
      %v839 = vpack.c.b16 %v826, %v825
      %v840 = vpack.c.b16 %v828, %v827
      %v841 = vpack.c.b16 %v830, %v829
      %v842 = vpack.c.b16 %v832, %v831
      %v843 = vpack.c.b16 %v834, %v833
      %v844 = vpack.c.b16 %v836, %v835
      %v853 = vld [vmem:[%s2] sm:$0xf]
      %v854 = vld [vmem:[%s2 + $0x4] sm:$0xf]
      %v855 = vld [vmem:[%s2 + $0x8] sm:$0xf]
      %v856 = vld [vmem:[%s2 + $0xc] sm:$0xf]
      %v857 = vld [vmem:[%s2 + $0x10] sm:$0xf]
      %v858 = vld [vmem:[%s2 + $0x14] sm:$0xf]
      %v859 = vld [vmem:[%s2 + $0x18] sm:$0xf]
      %v860 = vld [vmem:[%s2 + $0x1c] sm:$0xf]
      %v861 = vld [vmem:[%s2 + $0x20] sm:$0xf]
      %v862 = vld [vmem:[%s2 + $0x24] sm:$0xf]
      %v863 = vld [vmem:[%s2 + $0x28] sm:$0xf]
      %v864 = vld [vmem:[%s2 + $0x2c] sm:$0xf]
      %v865 = vld [vmem:[%s2 + $0x30] sm:$0xf]
      %v866 = vld [vmem:[%s2 + $0x34] sm:$0xf]
      %v867 = vld [vmem:[%s2 + $0x38] sm:$0xf]
      %v868 = vld [vmem:[%s2 + $0x3c] sm:$0xf]
      %v869 = vld [vmem:[#allocation2 + $0x8] sm:$0x1]
      %v870 = vld [vmem:[#allocation2 + $0x14] sm:$0x1]
      %v871 = vld [vmem:[#allocation2 + $0x20] sm:$0x1]
      %v872 = vld [vmem:[#allocation2 + $0x2c] sm:$0x1]
      %v873 = vld [vmem:[#allocation2 + $0x38] sm:$0x1]
      %v874 = vld [vmem:[#allocation2 + $0x44] sm:$0x1]
      %v875 = vld [vmem:[#allocation2 + $0x50] sm:$0x1]
      %v876 = vld [vmem:[#allocation2 + $0x5c] sm:$0x1]
      %vm877 = vsmask.f32 3328
      %vm878 = vsmask.f32 7440
      %vm879 = vmor %vm877, %vm878
      %v881 = vshrl.u32 %v725, 16
      %v883 = vrot.slane %v881, 4
      %v884 = vshll.u32 %v725, 16
      %v886 = vrot.slane %v884, 5
      %v887 = vor.u32 %v883, %v886
      %v888 = vrot.slane %v887, 4
      %v890 = vshll.u32 %v726, 16
      %v892 = vrot.slane %v890, 5
      %v893 = vsel %vm879, %v888, %v892
      %v894 = vshrl.u32 %v726, 16
      %v896 = vrot.slane %v894, 4
      %v897 = vor.u32 %v896, %v892
      %v898 = vrot.slane %v897, 4
      %v900 = vshll.u32 %v869, 16
      %v902 = vrot.slane %v900, 5
      %v903 = vsel %vm879, %v898, %v902
      %v905 = vshrl.u32 %v727, 16
      %v907 = vrot.slane %v905, 4
      %v908 = vshll.u32 %v727, 16
      %v910 = vrot.slane %v908, 5
      %v911 = vor.u32 %v907, %v910
      %v912 = vrot.slane %v911, 4
      %v914 = vshll.u32 %v728, 16
      %v916 = vrot.slane %v914, 5
      %v917 = vsel %vm879, %v912, %v916
      %v918 = vshrl.u32 %v728, 16
      %v920 = vrot.slane %v918, 4
      %v921 = vor.u32 %v920, %v916
      %v922 = vrot.slane %v921, 4
      %v924 = vshll.u32 %v870, 16
      %v926 = vrot.slane %v924, 5
      %v927 = vsel %vm879, %v922, %v926
      %v929 = vshrl.u32 %v729, 16
      %v931 = vrot.slane %v929, 4
      %v932 = vshll.u32 %v729, 16
      %v934 = vrot.slane %v932, 5
      %v935 = vor.u32 %v931, %v934
      %v936 = vrot.slane %v935, 4
      %v938 = vshll.u32 %v730, 16
      %v940 = vrot.slane %v938, 5
      %v941 = vsel %vm879, %v936, %v940
      %v942 = vshrl.u32 %v730, 16
      %v944 = vrot.slane %v942, 4
      %v945 = vor.u32 %v944, %v940
      %v946 = vrot.slane %v945, 4
      %v948 = vshll.u32 %v871, 16
      %v950 = vrot.slane %v948, 5
      %v951 = vsel %vm879, %v946, %v950
      %v953 = vshrl.u32 %v731, 16
      %v955 = vrot.slane %v953, 4
      %v956 = vshll.u32 %v731, 16
      %v958 = vrot.slane %v956, 5
      %v959 = vor.u32 %v955, %v958
      %v960 = vrot.slane %v959, 4
      %v962 = vshll.u32 %v732, 16
      %v964 = vrot.slane %v962, 5
      %v965 = vsel %vm879, %v960, %v964
      %v966 = vshrl.u32 %v732, 16
      %v968 = vrot.slane %v966, 4
      %v969 = vor.u32 %v968, %v964
      %v970 = vrot.slane %v969, 4
      %v972 = vshll.u32 %v872, 16
      %v974 = vrot.slane %v972, 5
      %v975 = vsel %vm879, %v970, %v974
      %v977 = vshrl.u32 %v733, 16
      %v979 = vrot.slane %v977, 4
      %v980 = vshll.u32 %v733, 16
      %v982 = vrot.slane %v980, 5
      %v983 = vor.u32 %v979, %v982
      %v984 = vrot.slane %v983, 4
      %v986 = vshll.u32 %v734, 16
      %v988 = vrot.slane %v986, 5
      %v989 = vsel %vm879, %v984, %v988
      %v990 = vshrl.u32 %v734, 16
      %v992 = vrot.slane %v990, 4
      %v993 = vor.u32 %v992, %v988
      %v994 = vrot.slane %v993, 4
      %v996 = vshll.u32 %v873, 16
      %v998 = vrot.slane %v996, 5
      %v999 = vsel %vm879, %v994, %v998
      %v1001 = vshrl.u32 %v735, 16
      %v1003 = vrot.slane %v1001, 4
      %v1004 = vshll.u32 %v735, 16
      %v1006 = vrot.slane %v1004, 5
      %v1007 = vor.u32 %v1003, %v1006
      %v1008 = vrot.slane %v1007, 4
      %v1010 = vshll.u32 %v736, 16
      %v1012 = vrot.slane %v1010, 5
      %v1013 = vsel %vm879, %v1008, %v1012
      %v1014 = vshrl.u32 %v736, 16
      %v1016 = vrot.slane %v1014, 4
      %v1017 = vor.u32 %v1016, %v1012
      %v1018 = vrot.slane %v1017, 4
      %v1020 = vshll.u32 %v874, 16
      %v1022 = vrot.slane %v1020, 5
      %v1023 = vsel %vm879, %v1018, %v1022
      %v1025 = vshrl.u32 %v737, 16
      %v1027 = vrot.slane %v1025, 4
      %v1028 = vshll.u32 %v737, 16
      %v1030 = vrot.slane %v1028, 5
      %v1031 = vor.u32 %v1027, %v1030
      %v1032 = vrot.slane %v1031, 4
      %v1034 = vshll.u32 %v738, 16
      %v1036 = vrot.slane %v1034, 5
      %v1037 = vsel %vm879, %v1032, %v1036
      %v1038 = vshrl.u32 %v738, 16
      %v1040 = vrot.slane %v1038, 4
      %v1041 = vor.u32 %v1040, %v1036
      %v1042 = vrot.slane %v1041, 4
      %v1044 = vshll.u32 %v875, 16
      %v1046 = vrot.slane %v1044, 5
      %v1047 = vsel %vm879, %v1042, %v1046
      %v1049 = vshrl.u32 %v739, 16
      %v1051 = vrot.slane %v1049, 4
      %v1052 = vshll.u32 %v739, 16
      %v1054 = vrot.slane %v1052, 5
      %v1055 = vor.u32 %v1051, %v1054
      %v1056 = vrot.slane %v1055, 4
      %v1058 = vshll.u32 %v740, 16
      %v1060 = vrot.slane %v1058, 5
      %v1061 = vsel %vm879, %v1056, %v1060
      %v1062 = vshrl.u32 %v740, 16
      %v1064 = vrot.slane %v1062, 4
      %v1065 = vor.u32 %v1064, %v1060
      %v1066 = vrot.slane %v1065, 4
      %v1068 = vshll.u32 %v876, 16
      %v1070 = vrot.slane %v1068, 5
      %v1071 = vsel %vm879, %v1066, %v1070
      %v1072 = vld [vmem:[#allocation3 + $0x8] sm:$0x1]
      %v1073 = vld [vmem:[#allocation3 + $0x14] sm:$0x1]
      %v1074 = vld [vmem:[#allocation3 + $0x20] sm:$0x1]
      %v1075 = vld [vmem:[#allocation3 + $0x2c] sm:$0x1]
      %v1076 = vld [vmem:[#allocation3 + $0x38] sm:$0x1]
      %v1077 = vld [vmem:[#allocation3 + $0x44] sm:$0x1]
      %v1078 = vld [vmem:[#allocation3 + $0x50] sm:$0x1]
      %v1079 = vld [vmem:[#allocation3 + $0x5c] sm:$0x1]
      %v1081 = vshrl.u32 %v741, 16
      %v1083 = vrot.slane %v1081, 4
      %v1084 = vshll.u32 %v741, 16
      %v1086 = vrot.slane %v1084, 5
      %v1087 = vor.u32 %v1083, %v1086
      %v1088 = vrot.slane %v1087, 4
      %v1090 = vshll.u32 %v742, 16
      %v1092 = vrot.slane %v1090, 5
      %v1093 = vsel %vm879, %v1088, %v1092
      %v1094 = vshrl.u32 %v742, 16
      %v1096 = vrot.slane %v1094, 4
      %v1097 = vor.u32 %v1096, %v1092
      %v1098 = vrot.slane %v1097, 4
      %v1100 = vshll.u32 %v1072, 16
      %v1102 = vrot.slane %v1100, 5
      %v1103 = vsel %vm879, %v1098, %v1102
      %v1105 = vshrl.u32 %v743, 16
      %v1107 = vrot.slane %v1105, 4
      %v1108 = vshll.u32 %v743, 16
      %v1110 = vrot.slane %v1108, 5
      %v1111 = vor.u32 %v1107, %v1110
      %v1112 = vrot.slane %v1111, 4
      %v1114 = vshll.u32 %v744, 16
      %v1116 = vrot.slane %v1114, 5
      %v1117 = vsel %vm879, %v1112, %v1116
      %v1118 = vshrl.u32 %v744, 16
      %v1120 = vrot.slane %v1118, 4
      %v1121 = vor.u32 %v1120, %v1116
      %v1122 = vrot.slane %v1121, 4
      %v1124 = vshll.u32 %v1073, 16
      %v1126 = vrot.slane %v1124, 5
      %v1127 = vsel %vm879, %v1122, %v1126
      %v1129 = vshrl.u32 %v745, 16
      %v1131 = vrot.slane %v1129, 4
      %v1132 = vshll.u32 %v745, 16
      %v1134 = vrot.slane %v1132, 5
      %v1135 = vor.u32 %v1131, %v1134
      %v1136 = vrot.slane %v1135, 4
      %v1138 = vshll.u32 %v746, 16
      %v1140 = vrot.slane %v1138, 5
      %v1141 = vsel %vm879, %v1136, %v1140
      %v1142 = vshrl.u32 %v746, 16
      %v1144 = vrot.slane %v1142, 4
      %v1145 = vor.u32 %v1144, %v1140
      %v1146 = vrot.slane %v1145, 4
      %v1148 = vshll.u32 %v1074, 16
      %v1150 = vrot.slane %v1148, 5
      %v1151 = vsel %vm879, %v1146, %v1150
      %v1153 = vshrl.u32 %v747, 16
      %v1155 = vrot.slane %v1153, 4
      %v1156 = vshll.u32 %v747, 16
      %v1158 = vrot.slane %v1156, 5
      %v1159 = vor.u32 %v1155, %v1158
      %v1160 = vrot.slane %v1159, 4
      %v1162 = vshll.u32 %v748, 16
      %v1164 = vrot.slane %v1162, 5
      %v1165 = vsel %vm879, %v1160, %v1164
      %v1166 = vshrl.u32 %v748, 16
      %v1168 = vrot.slane %v1166, 4
      %v1169 = vor.u32 %v1168, %v1164
      %v1170 = vrot.slane %v1169, 4
      %v1172 = vshll.u32 %v1075, 16
      %v1174 = vrot.slane %v1172, 5
      %v1175 = vsel %vm879, %v1170, %v1174
      %v1177 = vshrl.u32 %v749, 16
      %v1179 = vrot.slane %v1177, 4
      %v1180 = vshll.u32 %v749, 16
      %v1182 = vrot.slane %v1180, 5
      %v1183 = vor.u32 %v1179, %v1182
      %v1184 = vrot.slane %v1183, 4
      %v1186 = vshll.u32 %v750, 16
      %v1188 = vrot.slane %v1186, 5
      %v1189 = vsel %vm879, %v1184, %v1188
      %v1190 = vshrl.u32 %v750, 16
      %v1192 = vrot.slane %v1190, 4
      %v1193 = vor.u32 %v1192, %v1188
      %v1194 = vrot.slane %v1193, 4
      %v1196 = vshll.u32 %v1076, 16
      %v1198 = vrot.slane %v1196, 5
      %v1199 = vsel %vm879, %v1194, %v1198
      %v1201 = vshrl.u32 %v751, 16
      %v1203 = vrot.slane %v1201, 4
      %v1204 = vshll.u32 %v751, 16
      %v1206 = vrot.slane %v1204, 5
      %v1207 = vor.u32 %v1203, %v1206
      %v1208 = vrot.slane %v1207, 4
      %v1210 = vshll.u32 %v752, 16
      %v1212 = vrot.slane %v1210, 5
      %v1213 = vsel %vm879, %v1208, %v1212
      %v1214 = vshrl.u32 %v752, 16
      %v1216 = vrot.slane %v1214, 4
      %v1217 = vor.u32 %v1216, %v1212
      %v1218 = vrot.slane %v1217, 4
      %v1220 = vshll.u32 %v1077, 16
      %v1222 = vrot.slane %v1220, 5
      %v1223 = vsel %vm879, %v1218, %v1222
      %v1225 = vshrl.u32 %v753, 16
      %v1227 = vrot.slane %v1225, 4
      %v1228 = vshll.u32 %v753, 16
      %v1230 = vrot.slane %v1228, 5
      %v1231 = vor.u32 %v1227, %v1230
      %v1232 = vrot.slane %v1231, 4
      %v1234 = vshll.u32 %v754, 16
      %v1236 = vrot.slane %v1234, 5
      %v1237 = vsel %vm879, %v1232, %v1236
      %v1238 = vshrl.u32 %v754, 16
      %v1240 = vrot.slane %v1238, 4
      %v1241 = vor.u32 %v1240, %v1236
      %v1242 = vrot.slane %v1241, 4
      %v1244 = vshll.u32 %v1078, 16
      %v1246 = vrot.slane %v1244, 5
      %v1247 = vsel %vm879, %v1242, %v1246
      %v1249 = vshrl.u32 %v755, 16
      %v1251 = vrot.slane %v1249, 4
      %v1252 = vshll.u32 %v755, 16
      %v1254 = vrot.slane %v1252, 5
      %v1255 = vor.u32 %v1251, %v1254
      %v1256 = vrot.slane %v1255, 4
      %v1258 = vshll.u32 %v756, 16
      %v1260 = vrot.slane %v1258, 5
      %v1261 = vsel %vm879, %v1256, %v1260
      %v1262 = vshrl.u32 %v756, 16
      %v1264 = vrot.slane %v1262, 4
      %v1265 = vor.u32 %v1264, %v1260
      %v1266 = vrot.slane %v1265, 4
      %v1268 = vshll.u32 %v1079, 16
      %v1270 = vrot.slane %v1268, 5
      %v1271 = vsel %vm879, %v1266, %v1270
      %v1272 = vunpack.c.l.b16 %v893
      %v1273 = vunpack.c.l.b16 %v903
      %v1274 = vunpack.c.l.b16 %v917
      %v1275 = vunpack.c.l.b16 %v927
      %v1276 = vunpack.c.l.b16 %v941
      %v1277 = vunpack.c.l.b16 %v951
      %v1278 = vunpack.c.l.b16 %v965
      %v1279 = vunpack.c.l.b16 %v975
      %v1280 = vunpack.c.l.b16 %v989
      %v1281 = vunpack.c.l.b16 %v999
      %v1282 = vunpack.c.l.b16 %v1013
      %v1283 = vunpack.c.l.b16 %v1023
      %v1284 = vunpack.c.l.b16 %v1037
      %v1285 = vunpack.c.l.b16 %v1047
      %v1286 = vunpack.c.l.b16 %v1061
      %v1287 = vunpack.c.l.b16 %v1071
      %v1288 = vpack.c.b16 %v1273, %v1272
      %v1289 = vpack.c.b16 %v1275, %v1274
      %v1290 = vpack.c.b16 %v1277, %v1276
      %v1291 = vpack.c.b16 %v1279, %v1278
      %v1292 = vpack.c.b16 %v1281, %v1280
      %v1293 = vpack.c.b16 %v1283, %v1282
      %v1294 = vpack.c.b16 %v1285, %v1284
      %v1295 = vpack.c.b16 %v1287, %v1286
      %v1304 = vunpack.c.l.b16 %v1093
      %v1305 = vunpack.c.l.b16 %v1103
      %v1306 = vunpack.c.l.b16 %v1117
      %v1307 = vunpack.c.l.b16 %v1127
      %v1308 = vunpack.c.l.b16 %v1141
      %v1309 = vunpack.c.l.b16 %v1151
      %v1310 = vunpack.c.l.b16 %v1165
      %v1311 = vunpack.c.l.b16 %v1175
      %v1312 = vunpack.c.l.b16 %v1189
      %v1313 = vunpack.c.l.b16 %v1199
      %v1314 = vunpack.c.l.b16 %v1213
      %v1315 = vunpack.c.l.b16 %v1223
      %v1316 = vunpack.c.l.b16 %v1237
      %v1317 = vunpack.c.l.b16 %v1247
      %v1318 = vunpack.c.l.b16 %v1261
      %v1319 = vunpack.c.l.b16 %v1271
      %v1320 = vpack.c.b16 %v1305, %v1304
      %v1321 = vpack.c.b16 %v1307, %v1306
      %v1322 = vpack.c.b16 %v1309, %v1308
      %v1323 = vpack.c.b16 %v1311, %v1310
      %v1324 = vpack.c.b16 %v1313, %v1312
      %v1325 = vpack.c.b16 %v1315, %v1314
      %v1326 = vpack.c.b16 %v1317, %v1316
      %v1327 = vpack.c.b16 %v1319, %v1318
      %s1336 = scalar_lea.vmem %s2, 64
      %v1337 = vld [vmem:[%s1336] sm:$0xf]
      %v1338 = vld [vmem:[%s1336 + $0x4] sm:$0xf]
      %v1339 = vld [vmem:[%s1336 + $0x8] sm:$0xf]
      %v1340 = vld [vmem:[%s1336 + $0xc] sm:$0xf]
      %v1341 = vld [vmem:[%s1336 + $0x10] sm:$0xf]
      %v1342 = vld [vmem:[%s1336 + $0x14] sm:$0xf]
      %v1343 = vld [vmem:[%s1336 + $0x18] sm:$0xf]
      %v1344 = vld [vmem:[%s1336 + $0x1c] sm:$0xf]
      %v1345 = vld [vmem:[%s1336 + $0x20] sm:$0xf]
      %v1346 = vld [vmem:[%s1336 + $0x24] sm:$0xf]
      %v1347 = vld [vmem:[%s1336 + $0x28] sm:$0xf]
      %v1348 = vld [vmem:[%s1336 + $0x2c] sm:$0xf]
      %v1349 = vld [vmem:[%s1336 + $0x30] sm:$0xf]
      %v1350 = vld [vmem:[%s1336 + $0x34] sm:$0xf]
      %v1351 = vld [vmem:[%s1336 + $0x38] sm:$0xf]
      %v1352 = vld [vmem:[%s1336 + $0x3c] sm:$0xf]
      %v1369 = vunpack.c.l.b16 %v1337
      %v1370 = vunpack.c.l.b16 %v1338
      %v1371 = vunpack.c.l.b16 %v1339
      %v1372 = vunpack.c.l.b16 %v1340
      %v1373 = vunpack.c.l.b16 %v1341
      %v1374 = vunpack.c.l.b16 %v1342
      %v1375 = vunpack.c.l.b16 %v1343
      %v1376 = vunpack.c.l.b16 %v1344
      %v1377 = vunpack.c.l.b16 %v1345
      %v1378 = vunpack.c.l.b16 %v1346
      %v1379 = vunpack.c.l.b16 %v1347
      %v1380 = vunpack.c.l.b16 %v1348
      %v1381 = vunpack.c.l.b16 %v1349
      %v1382 = vunpack.c.l.b16 %v1350
      %v1383 = vunpack.c.l.b16 %v1351
      %v1384 = vunpack.c.l.b16 %v1352
      %v1385 = vpack.c.b16 %v1370, %v1369
      %v1386 = vpack.c.b16 %v1372, %v1371
      %v1387 = vpack.c.b16 %v1374, %v1373
      %v1388 = vpack.c.b16 %v1376, %v1375
      %v1389 = vpack.c.b16 %v1378, %v1377
      %v1390 = vpack.c.b16 %v1380, %v1379
      %v1391 = vpack.c.b16 %v1382, %v1381
      %v1392 = vpack.c.b16 %v1384, %v1383
      %1401 = vmatpush.bf16.msra.mxu0 %v1392
      %1402 = vmatpush.bf16.msra.mxu0 %v1391
      %1403 = vmatpush.bf16.msra.mxu0 %v1390
      %1404 = vmatpush.bf16.msra.mxu0 %v1389
      %1405 = vmatpush.bf16.msra.mxu0 %v1388
      %1406 = vmatpush.bf16.msra.mxu0 %v1387
      %1407 = vmatpush.bf16.msra.mxu0 %v1386
      %1408 = vmatpush.bf16.msra.mxu0 %v1385
      %1409 = vmatmul.bf16.gmra.mxu0 %v1288
      %v1410 = vpop.f32.mrf.mxu0
      %v1411 = vadd.f32 0.0, %v1410
      %v1412 = vpop.f32.mrf.mxu0
      %v1413 = vadd.f32 0.0, %v1412
      %1414 = vmatmul.bf16.gmra.mxu0 %v1289
      %v1415 = vpop.f32.mrf.mxu0
      %v1416 = vadd.f32 0.0, %v1415
      %v1417 = vpop.f32.mrf.mxu0
      %v1418 = vadd.f32 0.0, %v1417
      %1419 = vmatmul.bf16.gmra.mxu0 %v1290
      %v1420 = vpop.f32.mrf.mxu0
      %v1421 = vadd.f32 0.0, %v1420
      %v1422 = vpop.f32.mrf.mxu0
      %v1423 = vadd.f32 0.0, %v1422
      %1424 = vmatmul.bf16.gmra.mxu0 %v1291
      %v1425 = vpop.f32.mrf.mxu0
      %v1426 = vadd.f32 0.0, %v1425
      %v1427 = vpop.f32.mrf.mxu0
      %v1428 = vadd.f32 0.0, %v1427
      %1429 = vmatmul.bf16.gmra.mxu0 %v1292
      %v1430 = vpop.f32.mrf.mxu0
      %v1431 = vadd.f32 0.0, %v1430
      %v1432 = vpop.f32.mrf.mxu0
      %v1433 = vadd.f32 0.0, %v1432
      %1434 = vmatmul.bf16.gmra.mxu0 %v1293
      %v1435 = vpop.f32.mrf.mxu0
      %v1436 = vadd.f32 0.0, %v1435
      %v1437 = vpop.f32.mrf.mxu0
      %v1438 = vadd.f32 0.0, %v1437
      %1439 = vmatmul.bf16.gmra.mxu0 %v1294
      %v1440 = vpop.f32.mrf.mxu0
      %v1441 = vadd.f32 0.0, %v1440
      %v1442 = vpop.f32.mrf.mxu0
      %v1443 = vadd.f32 0.0, %v1442
      %1444 = vmatmul.bf16.gmra.mxu0 %v1295
      %v1445 = vpop.f32.mrf.mxu0
      %v1446 = vadd.f32 0.0, %v1445
      %v1447 = vpop.f32.mrf.mxu0
      %v1448 = vadd.f32 0.0, %v1447
      %1449 = vmatmul.bf16.gmra.mxu0 %v1320
      %v1450 = vpop.f32.mrf.mxu0
      %v1451 = vadd.f32 0.0, %v1450
      %v1452 = vpop.f32.mrf.mxu0
      %v1453 = vadd.f32 0.0, %v1452
      %1454 = vmatmul.bf16.gmra.mxu0 %v1321
      %v1455 = vpop.f32.mrf.mxu0
      %v1456 = vadd.f32 0.0, %v1455
      %v1457 = vpop.f32.mrf.mxu0
      %v1458 = vadd.f32 0.0, %v1457
      %1459 = vmatmul.bf16.gmra.mxu0 %v1322
      %v1460 = vpop.f32.mrf.mxu0
      %v1461 = vadd.f32 0.0, %v1460
      %v1462 = vpop.f32.mrf.mxu0
      %v1463 = vadd.f32 0.0, %v1462
      %1464 = vmatmul.bf16.gmra.mxu0 %v1323
      %v1465 = vpop.f32.mrf.mxu0
      %v1466 = vadd.f32 0.0, %v1465
      %v1467 = vpop.f32.mrf.mxu0
      %v1468 = vadd.f32 0.0, %v1467
      %1469 = vmatmul.bf16.gmra.mxu0 %v1324
      %v1470 = vpop.f32.mrf.mxu0
      %v1471 = vadd.f32 0.0, %v1470
      %v1472 = vpop.f32.mrf.mxu0
      %v1473 = vadd.f32 0.0, %v1472
      %1474 = vmatmul.bf16.gmra.mxu0 %v1325
      %v1475 = vpop.f32.mrf.mxu0
      %v1476 = vadd.f32 0.0, %v1475
      %v1477 = vpop.f32.mrf.mxu0
      %v1478 = vadd.f32 0.0, %v1477
      %1479 = vmatmul.bf16.gmra.mxu0 %v1326
      %v1480 = vpop.f32.mrf.mxu0
      %v1481 = vadd.f32 0.0, %v1480
      %v1482 = vpop.f32.mrf.mxu0
      %v1483 = vadd.f32 0.0, %v1482
      %1484 = vmatmul.bf16.gmra.mxu0 %v1327
      %v1485 = vpop.f32.mrf.mxu0
      %v1486 = vadd.f32 0.0, %v1485
      %v1487 = vpop.f32.mrf.mxu0
      %v1488 = vadd.f32 0.0, %v1487
      %1489 = vdwg.mxu0
      %v1506 = vunpack.c.l.b16 %v853
      %v1507 = vunpack.c.l.b16 %v854
      %v1508 = vunpack.c.l.b16 %v855
      %v1509 = vunpack.c.l.b16 %v856
      %v1510 = vunpack.c.l.b16 %v857
      %v1511 = vunpack.c.l.b16 %v858
      %v1512 = vunpack.c.l.b16 %v859
      %v1513 = vunpack.c.l.b16 %v860
      %v1514 = vunpack.c.l.b16 %v861
      %v1515 = vunpack.c.l.b16 %v862
      %v1516 = vunpack.c.l.b16 %v863
      %v1517 = vunpack.c.l.b16 %v864
      %v1518 = vunpack.c.l.b16 %v865
      %v1519 = vunpack.c.l.b16 %v866
      %v1520 = vunpack.c.l.b16 %v867
      %v1521 = vunpack.c.l.b16 %v868
      %v1522 = vpack.c.b16 %v1507, %v1506
      %v1523 = vpack.c.b16 %v1509, %v1508
      %v1524 = vpack.c.b16 %v1511, %v1510
      %v1525 = vpack.c.b16 %v1513, %v1512
      %v1526 = vpack.c.b16 %v1515, %v1514
      %v1527 = vpack.c.b16 %v1517, %v1516
      %v1528 = vpack.c.b16 %v1519, %v1518
      %v1529 = vpack.c.b16 %v1521, %v1520
      %1538 = vmatpush.bf16.msra.mxu0 %v1529
      %1539 = vmatpush.bf16.msra.mxu0 %v1528
      %1540 = vmatpush.bf16.msra.mxu0 %v1527
      %1541 = vmatpush.bf16.msra.mxu0 %v1526
      %1542 = vmatpush.bf16.msra.mxu0 %v1525
      %1543 = vmatpush.bf16.msra.mxu0 %v1524
      %1544 = vmatpush.bf16.msra.mxu0 %v1523
      %1545 = vmatpush.bf16.msra.mxu0 %v1522
      %1546 = vmatmul.bf16.gmra.mxu0 %v789
      %v1547 = vpop.f32.mrf.mxu0
      %v1548 = vadd.f32 %v1411, %v1547
      %v1549 = vpop.f32.mrf.mxu0
      %v1550 = vadd.f32 %v1413, %v1549
      %1551 = vmatmul.bf16.gmra.mxu0 %v790
      %v1552 = vpop.f32.mrf.mxu0
      %v1553 = vadd.f32 %v1416, %v1552
      %v1554 = vpop.f32.mrf.mxu0
      %v1555 = vadd.f32 %v1418, %v1554
      %1556 = vmatmul.bf16.gmra.mxu0 %v791
      %v1557 = vpop.f32.mrf.mxu0
      %v1558 = vadd.f32 %v1421, %v1557
      %v1559 = vpop.f32.mrf.mxu0
      %v1560 = vadd.f32 %v1423, %v1559
      %1561 = vmatmul.bf16.gmra.mxu0 %v792
      %v1562 = vpop.f32.mrf.mxu0
      %v1563 = vadd.f32 %v1426, %v1562
      %v1564 = vpop.f32.mrf.mxu0
      %v1565 = vadd.f32 %v1428, %v1564
      %1566 = vmatmul.bf16.gmra.mxu0 %v793
      %v1567 = vpop.f32.mrf.mxu0
      %v1568 = vadd.f32 %v1431, %v1567
      %v1569 = vpop.f32.mrf.mxu0
      %v1570 = vadd.f32 %v1433, %v1569
      %1571 = vmatmul.bf16.gmra.mxu0 %v794
      %v1572 = vpop.f32.mrf.mxu0
      %v1573 = vadd.f32 %v1436, %v1572
      %v1574 = vpop.f32.mrf.mxu0
      %v1575 = vadd.f32 %v1438, %v1574
      %1576 = vmatmul.bf16.gmra.mxu0 %v795
      %v1577 = vpop.f32.mrf.mxu0
      %v1578 = vadd.f32 %v1441, %v1577
      %v1579 = vpop.f32.mrf.mxu0
      %v1580 = vadd.f32 %v1443, %v1579
      %1581 = vmatmul.bf16.gmra.mxu0 %v796
      %v1582 = vpop.f32.mrf.mxu0
      %v1583 = vadd.f32 %v1446, %v1582
      %v1584 = vpop.f32.mrf.mxu0
      %v1585 = vadd.f32 %v1448, %v1584
      %1586 = vmatmul.bf16.gmra.mxu0 %v837
      %v1587 = vpop.f32.mrf.mxu0
      %v1588 = vadd.f32 %v1451, %v1587
      %v1589 = vpop.f32.mrf.mxu0
      %v1590 = vadd.f32 %v1453, %v1589
      %1591 = vmatmul.bf16.gmra.mxu0 %v838
      %v1592 = vpop.f32.mrf.mxu0
      %v1593 = vadd.f32 %v1456, %v1592
      %v1594 = vpop.f32.mrf.mxu0
      %v1595 = vadd.f32 %v1458, %v1594
      %1596 = vmatmul.bf16.gmra.mxu0 %v839
      %v1597 = vpop.f32.mrf.mxu0
      %v1598 = vadd.f32 %v1461, %v1597
      %v1599 = vpop.f32.mrf.mxu0
      %v1600 = vadd.f32 %v1463, %v1599
      %1601 = vmatmul.bf16.gmra.mxu0 %v840
      %v1602 = vpop.f32.mrf.mxu0
      %v1603 = vadd.f32 %v1466, %v1602
      %v1604 = vpop.f32.mrf.mxu0
      %v1605 = vadd.f32 %v1468, %v1604
      %1606 = vmatmul.bf16.gmra.mxu0 %v841
      %v1607 = vpop.f32.mrf.mxu0
      %v1608 = vadd.f32 %v1471, %v1607
      %v1609 = vpop.f32.mrf.mxu0
      %v1610 = vadd.f32 %v1473, %v1609
      %1611 = vmatmul.bf16.gmra.mxu0 %v842
      %v1612 = vpop.f32.mrf.mxu0
      %v1613 = vadd.f32 %v1476, %v1612
      %v1614 = vpop.f32.mrf.mxu0
      %v1615 = vadd.f32 %v1478, %v1614
      %1616 = vmatmul.bf16.gmra.mxu0 %v843
      %v1617 = vpop.f32.mrf.mxu0
      %v1618 = vadd.f32 %v1481, %v1617
      %v1619 = vpop.f32.mrf.mxu0
      %v1620 = vadd.f32 %v1483, %v1619
      %1621 = vmatmul.bf16.gmra.mxu0 %v844
      %v1622 = vpop.f32.mrf.mxu0
      %v1623 = vadd.f32 %v1486, %v1622
      %v1624 = vpop.f32.mrf.mxu0
      %v1625 = vadd.f32 %v1488, %v1624
      %1626 = vdwg.mxu0
      %v1627 = vld [vmem:[#allocation2] sm:$0xe]
      %v1628 = vld [vmem:[#allocation2 + $0xc] sm:$0xe]
      %v1629 = vld [vmem:[#allocation2 + $0x18] sm:$0xe]
      %v1630 = vld [vmem:[#allocation2 + $0x24] sm:$0xe]
      %v1631 = vld [vmem:[#allocation2 + $0x30] sm:$0xe]
      %v1632 = vld [vmem:[#allocation2 + $0x3c] sm:$0xe]
      %v1633 = vld [vmem:[#allocation2 + $0x48] sm:$0xe]
      %v1634 = vld [vmem:[#allocation2 + $0x54] sm:$0xe]
      %vm1651 = vcmask 1042432
      %vm1652 = vcmask 1046532
      %vm1653 = vmor %vm1651, %vm1652
      %v1654 = vrot.slane %v1627, 5
      %v1655 = vrot.slane %v1654, 4
      %v1656 = vrot.slane %v726, 5
      %v1657 = vsel %vm1653, %v1655, %v1656
      %v1658 = vrot.slane %v1656, 4
      %v1659 = vrot.slane %v869, 5
      %v1660 = vsel %vm1653, %v1658, %v1659
      %v1661 = vrot.slane %v1628, 5
      %v1662 = vrot.slane %v1661, 4
      %v1663 = vrot.slane %v728, 5
      %v1664 = vsel %vm1653, %v1662, %v1663
      %v1665 = vrot.slane %v1663, 4
      %v1666 = vrot.slane %v870, 5
      %v1667 = vsel %vm1653, %v1665, %v1666
      %v1668 = vrot.slane %v1629, 5
      %v1669 = vrot.slane %v1668, 4
      %v1670 = vrot.slane %v730, 5
      %v1671 = vsel %vm1653, %v1669, %v1670
      %v1672 = vrot.slane %v1670, 4
      %v1673 = vrot.slane %v871, 5
      %v1674 = vsel %vm1653, %v1672, %v1673
      %v1675 = vrot.slane %v1630, 5
      %v1676 = vrot.slane %v1675, 4
      %v1677 = vrot.slane %v732, 5
      %v1678 = vsel %vm1653, %v1676, %v1677
      %v1679 = vrot.slane %v1677, 4
      %v1680 = vrot.slane %v872, 5
      %v1681 = vsel %vm1653, %v1679, %v1680
      %v1682 = vrot.slane %v1631, 5
      %v1683 = vrot.slane %v1682, 4
      %v1684 = vrot.slane %v734, 5
      %v1685 = vsel %vm1653, %v1683, %v1684
      %v1686 = vrot.slane %v1684, 4
      %v1687 = vrot.slane %v873, 5
      %v1688 = vsel %vm1653, %v1686, %v1687
      %v1689 = vrot.slane %v1632, 5
      %v1690 = vrot.slane %v1689, 4
      %v1691 = vrot.slane %v736, 5
      %v1692 = vsel %vm1653, %v1690, %v1691
      %v1693 = vrot.slane %v1691, 4
      %v1694 = vrot.slane %v874, 5
      %v1695 = vsel %vm1653, %v1693, %v1694
      %v1696 = vrot.slane %v1633, 5
      %v1697 = vrot.slane %v1696, 4
      %v1698 = vrot.slane %v738, 5
      %v1699 = vsel %vm1653, %v1697, %v1698
      %v1700 = vrot.slane %v1698, 4
      %v1701 = vrot.slane %v875, 5
      %v1702 = vsel %vm1653, %v1700, %v1701
      %v1703 = vrot.slane %v1634, 5
      %v1704 = vrot.slane %v1703, 4
      %v1705 = vrot.slane %v740, 5
      %v1706 = vsel %vm1653, %v1704, %v1705
      %v1707 = vrot.slane %v1705, 4
      %v1708 = vrot.slane %v876, 5
      %v1709 = vsel %vm1653, %v1707, %v1708
      %v1710 = vld [vmem:[#allocation3] sm:$0xe]
      %v1711 = vld [vmem:[#allocation3 + $0xc] sm:$0xe]
      %v1712 = vld [vmem:[#allocation3 + $0x18] sm:$0xe]
      %v1713 = vld [vmem:[#allocation3 + $0x24] sm:$0xe]
      %v1714 = vld [vmem:[#allocation3 + $0x30] sm:$0xe]
      %v1715 = vld [vmem:[#allocation3 + $0x3c] sm:$0xe]
      %v1716 = vld [vmem:[#allocation3 + $0x48] sm:$0xe]
      %v1717 = vld [vmem:[#allocation3 + $0x54] sm:$0xe]
      %v1734 = vrot.slane %v1710, 5
      %v1735 = vrot.slane %v1734, 4
      %v1736 = vrot.slane %v742, 5
      %v1737 = vsel %vm1653, %v1735, %v1736
      %v1738 = vrot.slane %v1736, 4
      %v1739 = vrot.slane %v1072, 5
      %v1740 = vsel %vm1653, %v1738, %v1739
      %v1741 = vrot.slane %v1711, 5
      %v1742 = vrot.slane %v1741, 4
      %v1743 = vrot.slane %v744, 5
      %v1744 = vsel %vm1653, %v1742, %v1743
      %v1745 = vrot.slane %v1743, 4
      %v1746 = vrot.slane %v1073, 5
      %v1747 = vsel %vm1653, %v1745, %v1746
      %v1748 = vrot.slane %v1712, 5
      %v1749 = vrot.slane %v1748, 4
      %v1750 = vrot.slane %v746, 5
      %v1751 = vsel %vm1653, %v1749, %v1750
      %v1752 = vrot.slane %v1750, 4
      %v1753 = vrot.slane %v1074, 5
      %v1754 = vsel %vm1653, %v1752, %v1753
      %v1755 = vrot.slane %v1713, 5
      %v1756 = vrot.slane %v1755, 4
      %v1757 = vrot.slane %v748, 5
      %v1758 = vsel %vm1653, %v1756, %v1757
      %v1759 = vrot.slane %v1757, 4
      %v1760 = vrot.slane %v1075, 5
      %v1761 = vsel %vm1653, %v1759, %v1760
      %v1762 = vrot.slane %v1714, 5
      %v1763 = vrot.slane %v1762, 4
      %v1764 = vrot.slane %v750, 5
      %v1765 = vsel %vm1653, %v1763, %v1764
      %v1766 = vrot.slane %v1764, 4
      %v1767 = vrot.slane %v1076, 5
      %v1768 = vsel %vm1653, %v1766, %v1767
      %v1769 = vrot.slane %v1715, 5
      %v1770 = vrot.slane %v1769, 4
      %v1771 = vrot.slane %v752, 5
      %v1772 = vsel %vm1653, %v1770, %v1771
      %v1773 = vrot.slane %v1771, 4
      %v1774 = vrot.slane %v1077, 5
      %v1775 = vsel %vm1653, %v1773, %v1774
      %v1776 = vrot.slane %v1716, 5
      %v1777 = vrot.slane %v1776, 4
      %v1778 = vrot.slane %v754, 5
      %v1779 = vsel %vm1653, %v1777, %v1778
      %v1780 = vrot.slane %v1778, 4
      %v1781 = vrot.slane %v1078, 5
      %v1782 = vsel %vm1653, %v1780, %v1781
      %v1783 = vrot.slane %v1717, 5
      %v1784 = vrot.slane %v1783, 4
      %v1785 = vrot.slane %v756, 5
      %v1786 = vsel %vm1653, %v1784, %v1785
      %v1787 = vrot.slane %v1785, 4
      %v1788 = vrot.slane %v1079, 5
      %v1789 = vsel %vm1653, %v1787, %v1788
      %v1790 = vunpack.c.l.b16 %v1657
      %v1791 = vunpack.c.l.b16 %v1660
      %v1792 = vunpack.c.l.b16 %v1664
      %v1793 = vunpack.c.l.b16 %v1667
      %v1794 = vunpack.c.l.b16 %v1671
      %v1795 = vunpack.c.l.b16 %v1674
      %v1796 = vunpack.c.l.b16 %v1678
      %v1797 = vunpack.c.l.b16 %v1681
      %v1798 = vunpack.c.l.b16 %v1685
      %v1799 = vunpack.c.l.b16 %v1688
      %v1800 = vunpack.c.l.b16 %v1692
      %v1801 = vunpack.c.l.b16 %v1695
      %v1802 = vunpack.c.l.b16 %v1699
      %v1803 = vunpack.c.l.b16 %v1702
      %v1804 = vunpack.c.l.b16 %v1706
      %v1805 = vunpack.c.l.b16 %v1709
      %v1806 = vpack.c.b16 %v1791, %v1790
      %v1807 = vpack.c.b16 %v1793, %v1792
      %v1808 = vpack.c.b16 %v1795, %v1794
      %v1809 = vpack.c.b16 %v1797, %v1796
      %v1810 = vpack.c.b16 %v1799, %v1798
      %v1811 = vpack.c.b16 %v1801, %v1800
      %v1812 = vpack.c.b16 %v1803, %v1802
      %v1813 = vpack.c.b16 %v1805, %v1804
      %v1822 = vunpack.c.l.b16 %v1737
      %v1823 = vunpack.c.l.b16 %v1740
      %v1824 = vunpack.c.l.b16 %v1744
      %v1825 = vunpack.c.l.b16 %v1747
      %v1826 = vunpack.c.l.b16 %v1751
      %v1827 = vunpack.c.l.b16 %v1754
      %v1828 = vunpack.c.l.b16 %v1758
      %v1829 = vunpack.c.l.b16 %v1761
      %v1830 = vunpack.c.l.b16 %v1765
      %v1831 = vunpack.c.l.b16 %v1768
      %v1832 = vunpack.c.l.b16 %v1772
      %v1833 = vunpack.c.l.b16 %v1775
      %v1834 = vunpack.c.l.b16 %v1779
      %v1835 = vunpack.c.l.b16 %v1782
      %v1836 = vunpack.c.l.b16 %v1786
      %v1837 = vunpack.c.l.b16 %v1789
      %v1838 = vpack.c.b16 %v1823, %v1822
      %v1839 = vpack.c.b16 %v1825, %v1824
      %v1840 = vpack.c.b16 %v1827, %v1826
      %v1841 = vpack.c.b16 %v1829, %v1828
      %v1842 = vpack.c.b16 %v1831, %v1830
      %v1843 = vpack.c.b16 %v1833, %v1832
      %v1844 = vpack.c.b16 %v1835, %v1834
      %v1845 = vpack.c.b16 %v1837, %v1836
      %s1854 = scalar_lea.vmem %s2, 128
      %v1855 = vld [vmem:[%s1854] sm:$0xf]
      %v1856 = vld [vmem:[%s1854 + $0x4] sm:$0xf]
      %v1857 = vld [vmem:[%s1854 + $0x8] sm:$0xf]
      %v1858 = vld [vmem:[%s1854 + $0xc] sm:$0xf]
      %v1859 = vld [vmem:[%s1854 + $0x10] sm:$0xf]
      %v1860 = vld [vmem:[%s1854 + $0x14] sm:$0xf]
      %v1861 = vld [vmem:[%s1854 + $0x18] sm:$0xf]
      %v1862 = vld [vmem:[%s1854 + $0x1c] sm:$0xf]
      %v1863 = vld [vmem:[%s1854 + $0x20] sm:$0xf]
      %v1864 = vld [vmem:[%s1854 + $0x24] sm:$0xf]
      %v1865 = vld [vmem:[%s1854 + $0x28] sm:$0xf]
      %v1866 = vld [vmem:[%s1854 + $0x2c] sm:$0xf]
      %v1867 = vld [vmem:[%s1854 + $0x30] sm:$0xf]
      %v1868 = vld [vmem:[%s1854 + $0x34] sm:$0xf]
      %v1869 = vld [vmem:[%s1854 + $0x38] sm:$0xf]
      %v1870 = vld [vmem:[%s1854 + $0x3c] sm:$0xf]
      %v1887 = vunpack.c.l.b16 %v1855
      %v1888 = vunpack.c.l.b16 %v1856
      %v1889 = vunpack.c.l.b16 %v1857
      %v1890 = vunpack.c.l.b16 %v1858
      %v1891 = vunpack.c.l.b16 %v1859
      %v1892 = vunpack.c.l.b16 %v1860
      %v1893 = vunpack.c.l.b16 %v1861
      %v1894 = vunpack.c.l.b16 %v1862
      %v1895 = vunpack.c.l.b16 %v1863
      %v1896 = vunpack.c.l.b16 %v1864
      %v1897 = vunpack.c.l.b16 %v1865
      %v1898 = vunpack.c.l.b16 %v1866
      %v1899 = vunpack.c.l.b16 %v1867
      %v1900 = vunpack.c.l.b16 %v1868
      %v1901 = vunpack.c.l.b16 %v1869
      %v1902 = vunpack.c.l.b16 %v1870
      %v1903 = vpack.c.b16 %v1888, %v1887
      %v1904 = vpack.c.b16 %v1890, %v1889
      %v1905 = vpack.c.b16 %v1892, %v1891
      %v1906 = vpack.c.b16 %v1894, %v1893
      %v1907 = vpack.c.b16 %v1896, %v1895
      %v1908 = vpack.c.b16 %v1898, %v1897
      %v1909 = vpack.c.b16 %v1900, %v1899
      %v1910 = vpack.c.b16 %v1902, %v1901
      %1919 = vmatpush.bf16.msra.mxu0 %v1910
      %1920 = vmatpush.bf16.msra.mxu0 %v1909
      %1921 = vmatpush.bf16.msra.mxu0 %v1908
      %1922 = vmatpush.bf16.msra.mxu0 %v1907
      %1923 = vmatpush.bf16.msra.mxu0 %v1906
      %1924 = vmatpush.bf16.msra.mxu0 %v1905
      %1925 = vmatpush.bf16.msra.mxu0 %v1904
      %1926 = vmatpush.bf16.msra.mxu0 %v1903
      %1927 = vmatmul.bf16.gmra.mxu0 %v1806
      %v1928 = vpop.f32.mrf.mxu0
      %v1929 = vadd.f32 0.0, %v1928
      %v1930 = vpop.f32.mrf.mxu0
      %v1931 = vadd.f32 0.0, %v1930
      %1932 = vmatmul.bf16.gmra.mxu0 %v1807
      %v1933 = vpop.f32.mrf.mxu0
      %v1934 = vadd.f32 0.0, %v1933
      %v1935 = vpop.f32.mrf.mxu0
      %v1936 = vadd.f32 0.0, %v1935
      %1937 = vmatmul.bf16.gmra.mxu0 %v1808
      %v1938 = vpop.f32.mrf.mxu0
      %v1939 = vadd.f32 0.0, %v1938
      %v1940 = vpop.f32.mrf.mxu0
      %v1941 = vadd.f32 0.0, %v1940
      %1942 = vmatmul.bf16.gmra.mxu0 %v1809
      %v1943 = vpop.f32.mrf.mxu0
      %v1944 = vadd.f32 0.0, %v1943
      %v1945 = vpop.f32.mrf.mxu0
      %v1946 = vadd.f32 0.0, %v1945
      %1947 = vmatmul.bf16.gmra.mxu0 %v1810
      %v1948 = vpop.f32.mrf.mxu0
      %v1949 = vadd.f32 0.0, %v1948
      %v1950 = vpop.f32.mrf.mxu0
      %v1951 = vadd.f32 0.0, %v1950
      %1952 = vmatmul.bf16.gmra.mxu0 %v1811
      %v1953 = vpop.f32.mrf.mxu0
      %v1954 = vadd.f32 0.0, %v1953
      %v1955 = vpop.f32.mrf.mxu0
      %v1956 = vadd.f32 0.0, %v1955
      %1957 = vmatmul.bf16.gmra.mxu0 %v1812
      %v1958 = vpop.f32.mrf.mxu0
      %v1959 = vadd.f32 0.0, %v1958
      %v1960 = vpop.f32.mrf.mxu0
      %v1961 = vadd.f32 0.0, %v1960
      %1962 = vmatmul.bf16.gmra.mxu0 %v1813
      %v1963 = vpop.f32.mrf.mxu0
      %v1964 = vadd.f32 0.0, %v1963
      %v1965 = vpop.f32.mrf.mxu0
      %v1966 = vadd.f32 0.0, %v1965
      %1967 = vmatmul.bf16.gmra.mxu0 %v1838
      %v1968 = vpop.f32.mrf.mxu0
      %v1969 = vadd.f32 0.0, %v1968
      %v1970 = vpop.f32.mrf.mxu0
      %v1971 = vadd.f32 0.0, %v1970
      %1972 = vmatmul.bf16.gmra.mxu0 %v1839
      %v1973 = vpop.f32.mrf.mxu0
      %v1974 = vadd.f32 0.0, %v1973
      %v1975 = vpop.f32.mrf.mxu0
      %v1976 = vadd.f32 0.0, %v1975
      %1977 = vmatmul.bf16.gmra.mxu0 %v1840
      %v1978 = vpop.f32.mrf.mxu0
      %v1979 = vadd.f32 0.0, %v1978
      %v1980 = vpop.f32.mrf.mxu0
      %v1981 = vadd.f32 0.0, %v1980
      %1982 = vmatmul.bf16.gmra.mxu0 %v1841
      %v1983 = vpop.f32.mrf.mxu0
      %v1984 = vadd.f32 0.0, %v1983
      %v1985 = vpop.f32.mrf.mxu0
      %v1986 = vadd.f32 0.0, %v1985
      %1987 = vmatmul.bf16.gmra.mxu0 %v1842
      %v1988 = vpop.f32.mrf.mxu0
      %v1989 = vadd.f32 0.0, %v1988
      %v1990 = vpop.f32.mrf.mxu0
      %v1991 = vadd.f32 0.0, %v1990
      %1992 = vmatmul.bf16.gmra.mxu0 %v1843
      %v1993 = vpop.f32.mrf.mxu0
      %v1994 = vadd.f32 0.0, %v1993
      %v1995 = vpop.f32.mrf.mxu0
      %v1996 = vadd.f32 0.0, %v1995
      %1997 = vmatmul.bf16.gmra.mxu0 %v1844
      %v1998 = vpop.f32.mrf.mxu0
      %v1999 = vadd.f32 0.0, %v1998
      %v2000 = vpop.f32.mrf.mxu0
      %v2001 = vadd.f32 0.0, %v2000
      %2002 = vmatmul.bf16.gmra.mxu0 %v1845
      %v2003 = vpop.f32.mrf.mxu0
      %v2004 = vadd.f32 0.0, %v2003
      %v2005 = vpop.f32.mrf.mxu0
      %v2006 = vadd.f32 0.0, %v2005
      %2007 = vdwg.mxu0
      %v2008 = vadd.f32 %v1548, %v1929
      %v2009 = vadd.f32 %v1550, %v1931
      %v2010 = vadd.f32 %v1553, %v1934
      %v2011 = vadd.f32 %v1555, %v1936
      %v2012 = vadd.f32 %v1558, %v1939
      %v2013 = vadd.f32 %v1560, %v1941
      %v2014 = vadd.f32 %v1563, %v1944
      %v2015 = vadd.f32 %v1565, %v1946
      %v2016 = vadd.f32 %v1568, %v1949
      %v2017 = vadd.f32 %v1570, %v1951
      %v2018 = vadd.f32 %v1573, %v1954
      %v2019 = vadd.f32 %v1575, %v1956
      %v2020 = vadd.f32 %v1578, %v1959
      %v2021 = vadd.f32 %v1580, %v1961
      %v2022 = vadd.f32 %v1583, %v1964
      %v2023 = vadd.f32 %v1585, %v1966
      %v2024 = vadd.f32 %v1588, %v1969
      %v2025 = vadd.f32 %v1590, %v1971
      %v2026 = vadd.f32 %v1593, %v1974
      %v2027 = vadd.f32 %v1595, %v1976
      %v2028 = vadd.f32 %v1598, %v1979
      %v2029 = vadd.f32 %v1600, %v1981
      %v2030 = vadd.f32 %v1603, %v1984
      %v2031 = vadd.f32 %v1605, %v1986
      %v2032 = vadd.f32 %v1608, %v1989
      %v2033 = vadd.f32 %v1610, %v1991
      %v2034 = vadd.f32 %v1613, %v1994
      %v2035 = vadd.f32 %v1615, %v1996
      %v2036 = vadd.f32 %v1618, %v1999
      %v2037 = vadd.f32 %v1620, %v2001
      %v2038 = vadd.f32 %v1623, %v2004
      %v2039 = vadd.f32 %v1625, %v2006
      %v2040 = vld [vmem:[%s548] sm:$0xf]
      %v2041 = vld [vmem:[%s548 + $0x4] sm:$0xf]
      %v2042 = vld [vmem:[%s548 + $0xc] sm:$0xf]
      %v2043 = vld [vmem:[%s548 + $0x10] sm:$0xf]
      %v2044 = vld [vmem:[%s548 + $0x18] sm:$0xf]
      %v2045 = vld [vmem:[%s548 + $0x1c] sm:$0xf]
      %v2046 = vld [vmem:[%s548 + $0x24] sm:$0xf]
      %v2047 = vld [vmem:[%s548 + $0x28] sm:$0xf]
      %v2048 = vld [vmem:[%s548 + $0x30] sm:$0xf]
      %v2049 = vld [vmem:[%s548 + $0x34] sm:$0xf]
      %v2050 = vld [vmem:[%s548 + $0x3c] sm:$0xf]
      %v2051 = vld [vmem:[%s548 + $0x40] sm:$0xf]
      %v2052 = vld [vmem:[%s548 + $0x48] sm:$0xf]
      %v2053 = vld [vmem:[%s548 + $0x4c] sm:$0xf]
      %v2054 = vld [vmem:[%s548 + $0x54] sm:$0xf]
      %v2055 = vld [vmem:[%s548 + $0x58] sm:$0xf]
      %v2072 = vunpack.c.l.b16 %v2040
      %v2073 = vunpack.c.l.b16 %v2041
      %v2074 = vunpack.c.l.b16 %v2042
      %v2075 = vunpack.c.l.b16 %v2043
      %v2076 = vunpack.c.l.b16 %v2044
      %v2077 = vunpack.c.l.b16 %v2045
      %v2078 = vunpack.c.l.b16 %v2046
      %v2079 = vunpack.c.l.b16 %v2047
      %v2080 = vunpack.c.l.b16 %v2048
      %v2081 = vunpack.c.l.b16 %v2049
      %v2082 = vunpack.c.l.b16 %v2050
      %v2083 = vunpack.c.l.b16 %v2051
      %v2084 = vunpack.c.l.b16 %v2052
      %v2085 = vunpack.c.l.b16 %v2053
      %v2086 = vunpack.c.l.b16 %v2054
      %v2087 = vunpack.c.l.b16 %v2055
      %v2088 = vpack.c.b16 %v2073, %v2072
      %v2089 = vpack.c.b16 %v2075, %v2074
      %v2090 = vpack.c.b16 %v2077, %v2076
      %v2091 = vpack.c.b16 %v2079, %v2078
      %v2092 = vpack.c.b16 %v2081, %v2080
      %v2093 = vpack.c.b16 %v2083, %v2082
      %v2094 = vpack.c.b16 %v2085, %v2084
      %v2095 = vpack.c.b16 %v2087, %v2086
      %s2104 = scalar_lea.vmem %s2, 192
      %v2105 = vld [vmem:[%s2104] sm:$0xf]
      %v2106 = vld [vmem:[%s2104 + $0x4] sm:$0xf]
      %v2107 = vld [vmem:[%s2104 + $0x8] sm:$0xf]
      %v2108 = vld [vmem:[%s2104 + $0xc] sm:$0xf]
      %v2109 = vld [vmem:[%s2104 + $0x10] sm:$0xf]
      %v2110 = vld [vmem:[%s2104 + $0x14] sm:$0xf]
      %v2111 = vld [vmem:[%s2104 + $0x18] sm:$0xf]
      %v2112 = vld [vmem:[%s2104 + $0x1c] sm:$0xf]
      %v2113 = vld [vmem:[%s2104 + $0x20] sm:$0xf]
      %v2114 = vld [vmem:[%s2104 + $0x24] sm:$0xf]
      %v2115 = vld [vmem:[%s2104 + $0x28] sm:$0xf]
      %v2116 = vld [vmem:[%s2104 + $0x2c] sm:$0xf]
      %v2117 = vld [vmem:[%s2104 + $0x30] sm:$0xf]
      %v2118 = vld [vmem:[%s2104 + $0x34] sm:$0xf]
      %v2119 = vld [vmem:[%s2104 + $0x38] sm:$0xf]
      %v2120 = vld [vmem:[%s2104 + $0x3c] sm:$0xf]
      %v2137 = vunpack.c.l.b16 %v2105
      %v2138 = vunpack.c.l.b16 %v2106
      %v2139 = vunpack.c.l.b16 %v2107
      %v2140 = vunpack.c.l.b16 %v2108
      %v2141 = vunpack.c.l.b16 %v2109
      %v2142 = vunpack.c.l.b16 %v2110
      %v2143 = vunpack.c.l.b16 %v2111
      %v2144 = vunpack.c.l.b16 %v2112
      %v2145 = vunpack.c.l.b16 %v2113
      %v2146 = vunpack.c.l.b16 %v2114
      %v2147 = vunpack.c.l.b16 %v2115
      %v2148 = vunpack.c.l.b16 %v2116
      %v2149 = vunpack.c.l.b16 %v2117
      %v2150 = vunpack.c.l.b16 %v2118
      %v2151 = vunpack.c.l.b16 %v2119
      %v2152 = vunpack.c.l.b16 %v2120
      %v2153 = vpack.c.b16 %v2138, %v2137
      %v2154 = vpack.c.b16 %v2140, %v2139
      %v2155 = vpack.c.b16 %v2142, %v2141
      %v2156 = vpack.c.b16 %v2144, %v2143
      %v2157 = vpack.c.b16 %v2146, %v2145
      %v2158 = vpack.c.b16 %v2148, %v2147
      %v2159 = vpack.c.b16 %v2150, %v2149
      %v2160 = vpack.c.b16 %v2152, %v2151
      %2169 = vmatpush.bf16.msra.mxu0 %v2160
      %2170 = vmatpush.bf16.msra.mxu0 %v2159
      %2171 = vmatpush.bf16.msra.mxu0 %v2158
      %2172 = vmatpush.bf16.msra.mxu0 %v2157
      %2173 = vmatpush.bf16.msra.mxu0 %v2156
      %2174 = vmatpush.bf16.msra.mxu0 %v2155
      %2175 = vmatpush.bf16.msra.mxu0 %v2154
      %2176 = vmatpush.bf16.msra.mxu0 %v2153
      %2177 = vmatmul.bf16.gmra.mxu0 %v837
      %v2178 = vpop.f32.mrf.mxu0
      %v2179 = vadd.f32 0.0, %v2178
      %v2180 = vpop.f32.mrf.mxu0
      %v2181 = vadd.f32 0.0, %v2180
      %2182 = vmatmul.bf16.gmra.mxu0 %v838
      %v2183 = vpop.f32.mrf.mxu0
      %v2184 = vadd.f32 0.0, %v2183
      %v2185 = vpop.f32.mrf.mxu0
      %v2186 = vadd.f32 0.0, %v2185
      %2187 = vmatmul.bf16.gmra.mxu0 %v839
      %v2188 = vpop.f32.mrf.mxu0
      %v2189 = vadd.f32 0.0, %v2188
      %v2190 = vpop.f32.mrf.mxu0
      %v2191 = vadd.f32 0.0, %v2190
      %2192 = vmatmul.bf16.gmra.mxu0 %v840
      %v2193 = vpop.f32.mrf.mxu0
      %v2194 = vadd.f32 0.0, %v2193
      %v2195 = vpop.f32.mrf.mxu0
      %v2196 = vadd.f32 0.0, %v2195
      %2197 = vmatmul.bf16.gmra.mxu0 %v841
      %v2198 = vpop.f32.mrf.mxu0
      %v2199 = vadd.f32 0.0, %v2198
      %v2200 = vpop.f32.mrf.mxu0
      %v2201 = vadd.f32 0.0, %v2200
      %2202 = vmatmul.bf16.gmra.mxu0 %v842
      %v2203 = vpop.f32.mrf.mxu0
      %v2204 = vadd.f32 0.0, %v2203
      %v2205 = vpop.f32.mrf.mxu0
      %v2206 = vadd.f32 0.0, %v2205
      %2207 = vmatmul.bf16.gmra.mxu0 %v843
      %v2208 = vpop.f32.mrf.mxu0
      %v2209 = vadd.f32 0.0, %v2208
      %v2210 = vpop.f32.mrf.mxu0
      %v2211 = vadd.f32 0.0, %v2210
      %2212 = vmatmul.bf16.gmra.mxu0 %v844
      %v2213 = vpop.f32.mrf.mxu0
      %v2214 = vadd.f32 0.0, %v2213
      %v2215 = vpop.f32.mrf.mxu0
      %v2216 = vadd.f32 0.0, %v2215
      %2217 = vmatmul.bf16.gmra.mxu0 %v2088
      %v2218 = vpop.f32.mrf.mxu0
      %v2219 = vadd.f32 0.0, %v2218
      %v2220 = vpop.f32.mrf.mxu0
      %v2221 = vadd.f32 0.0, %v2220
      %2222 = vmatmul.bf16.gmra.mxu0 %v2089
      %v2223 = vpop.f32.mrf.mxu0
      %v2224 = vadd.f32 0.0, %v2223
      %v2225 = vpop.f32.mrf.mxu0
      %v2226 = vadd.f32 0.0, %v2225
      %2227 = vmatmul.bf16.gmra.mxu0 %v2090
      %v2228 = vpop.f32.mrf.mxu0
      %v2229 = vadd.f32 0.0, %v2228
      %v2230 = vpop.f32.mrf.mxu0
      %v2231 = vadd.f32 0.0, %v2230
      %2232 = vmatmul.bf16.gmra.mxu0 %v2091
      %v2233 = vpop.f32.mrf.mxu0
      %v2234 = vadd.f32 0.0, %v2233
      %v2235 = vpop.f32.mrf.mxu0
      %v2236 = vadd.f32 0.0, %v2235
      %2237 = vmatmul.bf16.gmra.mxu0 %v2092
      %v2238 = vpop.f32.mrf.mxu0
      %v2239 = vadd.f32 0.0, %v2238
      %v2240 = vpop.f32.mrf.mxu0
      %v2241 = vadd.f32 0.0, %v2240
      %2242 = vmatmul.bf16.gmra.mxu0 %v2093
      %v2243 = vpop.f32.mrf.mxu0
      %v2244 = vadd.f32 0.0, %v2243
      %v2245 = vpop.f32.mrf.mxu0
      %v2246 = vadd.f32 0.0, %v2245
      %2247 = vmatmul.bf16.gmra.mxu0 %v2094
      %v2248 = vpop.f32.mrf.mxu0
      %v2249 = vadd.f32 0.0, %v2248
      %v2250 = vpop.f32.mrf.mxu0
      %v2251 = vadd.f32 0.0, %v2250
      %2252 = vmatmul.bf16.gmra.mxu0 %v2095
      %v2253 = vpop.f32.mrf.mxu0
      %v2254 = vadd.f32 0.0, %v2253
      %v2255 = vpop.f32.mrf.mxu0
      %v2256 = vadd.f32 0.0, %v2255
      %2257 = vdwg.mxu0
      %v2258 = vadd.f32 %v2008, %v2179
      %v2259 = vadd.f32 %v2009, %v2181
      %v2260 = vadd.f32 %v2010, %v2184
      %v2261 = vadd.f32 %v2011, %v2186
      %v2262 = vadd.f32 %v2012, %v2189
      %v2263 = vadd.f32 %v2013, %v2191
      %v2264 = vadd.f32 %v2014, %v2194
      %v2265 = vadd.f32 %v2015, %v2196
      %v2266 = vadd.f32 %v2016, %v2199
      %v2267 = vadd.f32 %v2017, %v2201
      %v2268 = vadd.f32 %v2018, %v2204
      %v2269 = vadd.f32 %v2019, %v2206
      %v2270 = vadd.f32 %v2020, %v2209
      %v2271 = vadd.f32 %v2021, %v2211
      %v2272 = vadd.f32 %v2022, %v2214
      %v2273 = vadd.f32 %v2023, %v2216
      %v2274 = vadd.f32 %v2024, %v2219
      %v2275 = vadd.f32 %v2025, %v2221
      %v2276 = vadd.f32 %v2026, %v2224
      %v2277 = vadd.f32 %v2027, %v2226
      %v2278 = vadd.f32 %v2028, %v2229
      %v2279 = vadd.f32 %v2029, %v2231
      %v2280 = vadd.f32 %v2030, %v2234
      %v2281 = vadd.f32 %v2031, %v2236
      %v2282 = vadd.f32 %v2032, %v2239
      %v2283 = vadd.f32 %v2033, %v2241
      %v2284 = vadd.f32 %v2034, %v2244
      %v2285 = vadd.f32 %v2035, %v2246
      %v2286 = vadd.f32 %v2036, %v2249
      %v2287 = vadd.f32 %v2037, %v2251
      %v2288 = vadd.f32 %v2038, %v2254
      %v2289 = vadd.f32 %v2039, %v2256
      %v2290 = vld [vmem:[%s548] sm:$0xf]
      %v2291 = vld [vmem:[%s548 + $0x4] sm:$0xf]
      %v2292 = vld [vmem:[%s548 + $0x8] sm:$0x1]
      %v2293 = vld [vmem:[%s548 + $0xc] sm:$0xf]
      %v2294 = vld [vmem:[%s548 + $0x10] sm:$0xf]
      %v2295 = vld [vmem:[%s548 + $0x14] sm:$0x1]
      %v2296 = vld [vmem:[%s548 + $0x18] sm:$0xf]
      %v2297 = vld [vmem:[%s548 + $0x1c] sm:$0xf]
      %v2298 = vld [vmem:[%s548 + $0x20] sm:$0x1]
      %v2299 = vld [vmem:[%s548 + $0x24] sm:$0xf]
      %v2300 = vld [vmem:[%s548 + $0x28] sm:$0xf]
      %v2301 = vld [vmem:[%s548 + $0x2c] sm:$0x1]
      %v2302 = vld [vmem:[%s548 + $0x30] sm:$0xf]
      %v2303 = vld [vmem:[%s548 + $0x34] sm:$0xf]
      %v2304 = vld [vmem:[%s548 + $0x38] sm:$0x1]
      %v2305 = vld [vmem:[%s548 + $0x3c] sm:$0xf]
      %v2306 = vld [vmem:[%s548 + $0x40] sm:$0xf]
      %v2307 = vld [vmem:[%s548 + $0x44] sm:$0x1]
      %v2308 = vld [vmem:[%s548 + $0x48] sm:$0xf]
      %v2309 = vld [vmem:[%s548 + $0x4c] sm:$0xf]
      %v2310 = vld [vmem:[%s548 + $0x50] sm:$0x1]
      %v2311 = vld [vmem:[%s548 + $0x54] sm:$0xf]
      %v2312 = vld [vmem:[%s548 + $0x58] sm:$0xf]
      %v2313 = vld [vmem:[%s548 + $0x5c] sm:$0x1]
      %v2315 = vshrl.u32 %v2290, 16
      %v2317 = vrot.slane %v2315, 4
      %v2318 = vshll.u32 %v2290, 16
      %v2320 = vrot.slane %v2318, 5
      %v2321 = vor.u32 %v2317, %v2320
      %v2322 = vrot.slane %v2321, 4
      %v2324 = vshll.u32 %v2291, 16
      %v2326 = vrot.slane %v2324, 5
      %v2327 = vsel %vm879, %v2322, %v2326
      %v2328 = vshrl.u32 %v2291, 16
      %v2330 = vrot.slane %v2328, 4
      %v2331 = vor.u32 %v2330, %v2326
      %v2332 = vrot.slane %v2331, 4
      %v2334 = vshll.u32 %v2292, 16
      %v2336 = vrot.slane %v2334, 5
      %v2337 = vsel %vm879, %v2332, %v2336
      %v2339 = vshrl.u32 %v2293, 16
      %v2341 = vrot.slane %v2339, 4
      %v2342 = vshll.u32 %v2293, 16
      %v2344 = vrot.slane %v2342, 5
      %v2345 = vor.u32 %v2341, %v2344
      %v2346 = vrot.slane %v2345, 4
      %v2348 = vshll.u32 %v2294, 16
      %v2350 = vrot.slane %v2348, 5
      %v2351 = vsel %vm879, %v2346, %v2350
      %v2352 = vshrl.u32 %v2294, 16
      %v2354 = vrot.slane %v2352, 4
      %v2355 = vor.u32 %v2354, %v2350
      %v2356 = vrot.slane %v2355, 4
      %v2358 = vshll.u32 %v2295, 16
      %v2360 = vrot.slane %v2358, 5
      %v2361 = vsel %vm879, %v2356, %v2360
      %v2363 = vshrl.u32 %v2296, 16
      %v2365 = vrot.slane %v2363, 4
      %v2366 = vshll.u32 %v2296, 16
      %v2368 = vrot.slane %v2366, 5
      %v2369 = vor.u32 %v2365, %v2368
      %v2370 = vrot.slane %v2369, 4
      %v2372 = vshll.u32 %v2297, 16
      %v2374 = vrot.slane %v2372, 5
      %v2375 = vsel %vm879, %v2370, %v2374
      %v2376 = vshrl.u32 %v2297, 16
      %v2378 = vrot.slane %v2376, 4
      %v2379 = vor.u32 %v2378, %v2374
      %v2380 = vrot.slane %v2379, 4
      %v2382 = vshll.u32 %v2298, 16
      %v2384 = vrot.slane %v2382, 5
      %v2385 = vsel %vm879, %v2380, %v2384
      %v2387 = vshrl.u32 %v2299, 16
      %v2389 = vrot.slane %v2387, 4
      %v2390 = vshll.u32 %v2299, 16
      %v2392 = vrot.slane %v2390, 5
      %v2393 = vor.u32 %v2389, %v2392
      %v2394 = vrot.slane %v2393, 4
      %v2396 = vshll.u32 %v2300, 16
      %v2398 = vrot.slane %v2396, 5
      %v2399 = vsel %vm879, %v2394, %v2398
      %v2400 = vshrl.u32 %v2300, 16
      %v2402 = vrot.slane %v2400, 4
      %v2403 = vor.u32 %v2402, %v2398
      %v2404 = vrot.slane %v2403, 4
      %v2406 = vshll.u32 %v2301, 16
      %v2408 = vrot.slane %v2406, 5
      %v2409 = vsel %vm879, %v2404, %v2408
      %v2411 = vshrl.u32 %v2302, 16
      %v2413 = vrot.slane %v2411, 4
      %v2414 = vshll.u32 %v2302, 16
      %v2416 = vrot.slane %v2414, 5
      %v2417 = vor.u32 %v2413, %v2416
      %v2418 = vrot.slane %v2417, 4
      %v2420 = vshll.u32 %v2303, 16
      %v2422 = vrot.slane %v2420, 5
      %v2423 = vsel %vm879, %v2418, %v2422
      %v2424 = vshrl.u32 %v2303, 16
      %v2426 = vrot.slane %v2424, 4
      %v2427 = vor.u32 %v2426, %v2422
      %v2428 = vrot.slane %v2427, 4
      %v2430 = vshll.u32 %v2304, 16
      %v2432 = vrot.slane %v2430, 5
      %v2433 = vsel %vm879, %v2428, %v2432
      %v2435 = vshrl.u32 %v2305, 16
      %v2437 = vrot.slane %v2435, 4
      %v2438 = vshll.u32 %v2305, 16
      %v2440 = vrot.slane %v2438, 5
      %v2441 = vor.u32 %v2437, %v2440
      %v2442 = vrot.slane %v2441, 4
      %v2444 = vshll.u32 %v2306, 16
      %v2446 = vrot.slane %v2444, 5
      %v2447 = vsel %vm879, %v2442, %v2446
      %v2448 = vshrl.u32 %v2306, 16
      %v2450 = vrot.slane %v2448, 4
      %v2451 = vor.u32 %v2450, %v2446
      %v2452 = vrot.slane %v2451, 4
      %v2454 = vshll.u32 %v2307, 16
      %v2456 = vrot.slane %v2454, 5
      %v2457 = vsel %vm879, %v2452, %v2456
      %v2459 = vshrl.u32 %v2308, 16
      %v2461 = vrot.slane %v2459, 4
      %v2462 = vshll.u32 %v2308, 16
      %v2464 = vrot.slane %v2462, 5
      %v2465 = vor.u32 %v2461, %v2464
      %v2466 = vrot.slane %v2465, 4
      %v2468 = vshll.u32 %v2309, 16
      %v2470 = vrot.slane %v2468, 5
      %v2471 = vsel %vm879, %v2466, %v2470
      %v2472 = vshrl.u32 %v2309, 16
      %v2474 = vrot.slane %v2472, 4
      %v2475 = vor.u32 %v2474, %v2470
      %v2476 = vrot.slane %v2475, 4
      %v2478 = vshll.u32 %v2310, 16
      %v2480 = vrot.slane %v2478, 5
      %v2481 = vsel %vm879, %v2476, %v2480
      %v2483 = vshrl.u32 %v2311, 16
      %v2485 = vrot.slane %v2483, 4
      %v2486 = vshll.u32 %v2311, 16
      %v2488 = vrot.slane %v2486, 5
      %v2489 = vor.u32 %v2485, %v2488
      %v2490 = vrot.slane %v2489, 4
      %v2492 = vshll.u32 %v2312, 16
      %v2494 = vrot.slane %v2492, 5
      %v2495 = vsel %vm879, %v2490, %v2494
      %v2496 = vshrl.u32 %v2312, 16
      %v2498 = vrot.slane %v2496, 4
      %v2499 = vor.u32 %v2498, %v2494
      %v2500 = vrot.slane %v2499, 4
      %v2502 = vshll.u32 %v2313, 16
      %v2504 = vrot.slane %v2502, 5
      %v2505 = vsel %vm879, %v2500, %v2504
      %v2506 = vunpack.c.l.b16 %v2327
      %v2507 = vunpack.c.l.b16 %v2337
      %v2508 = vunpack.c.l.b16 %v2351
      %v2509 = vunpack.c.l.b16 %v2361
      %v2510 = vunpack.c.l.b16 %v2375
      %v2511 = vunpack.c.l.b16 %v2385
      %v2512 = vunpack.c.l.b16 %v2399
      %v2513 = vunpack.c.l.b16 %v2409
      %v2514 = vunpack.c.l.b16 %v2423
      %v2515 = vunpack.c.l.b16 %v2433
      %v2516 = vunpack.c.l.b16 %v2447
      %v2517 = vunpack.c.l.b16 %v2457
      %v2518 = vunpack.c.l.b16 %v2471
      %v2519 = vunpack.c.l.b16 %v2481
      %v2520 = vunpack.c.l.b16 %v2495
      %v2521 = vunpack.c.l.b16 %v2505
      %v2522 = vpack.c.b16 %v2507, %v2506
      %v2523 = vpack.c.b16 %v2509, %v2508
      %v2524 = vpack.c.b16 %v2511, %v2510
      %v2525 = vpack.c.b16 %v2513, %v2512
      %v2526 = vpack.c.b16 %v2515, %v2514
      %v2527 = vpack.c.b16 %v2517, %v2516
      %v2528 = vpack.c.b16 %v2519, %v2518
      %v2529 = vpack.c.b16 %v2521, %v2520
      %s2538 = scalar_lea.vmem %s2, 256
      %v2539 = vld [vmem:[%s2538] sm:$0xf]
      %v2540 = vld [vmem:[%s2538 + $0x4] sm:$0xf]
      %v2541 = vld [vmem:[%s2538 + $0x8] sm:$0xf]
      %v2542 = vld [vmem:[%s2538 + $0xc] sm:$0xf]
      %v2543 = vld [vmem:[%s2538 + $0x10] sm:$0xf]
      %v2544 = vld [vmem:[%s2538 + $0x14] sm:$0xf]
      %v2545 = vld [vmem:[%s2538 + $0x18] sm:$0xf]
      %v2546 = vld [vmem:[%s2538 + $0x1c] sm:$0xf]
      %v2547 = vld [vmem:[%s2538 + $0x20] sm:$0xf]
      %v2548 = vld [vmem:[%s2538 + $0x24] sm:$0xf]
      %v2549 = vld [vmem:[%s2538 + $0x28] sm:$0xf]
      %v2550 = vld [vmem:[%s2538 + $0x2c] sm:$0xf]
      %v2551 = vld [vmem:[%s2538 + $0x30] sm:$0xf]
      %v2552 = vld [vmem:[%s2538 + $0x34] sm:$0xf]
      %v2553 = vld [vmem:[%s2538 + $0x38] sm:$0xf]
      %v2554 = vld [vmem:[%s2538 + $0x3c] sm:$0xf]
      %v2571 = vunpack.c.l.b16 %v2539
      %v2572 = vunpack.c.l.b16 %v2540
      %v2573 = vunpack.c.l.b16 %v2541
      %v2574 = vunpack.c.l.b16 %v2542
      %v2575 = vunpack.c.l.b16 %v2543
      %v2576 = vunpack.c.l.b16 %v2544
      %v2577 = vunpack.c.l.b16 %v2545
      %v2578 = vunpack.c.l.b16 %v2546
      %v2579 = vunpack.c.l.b16 %v2547
      %v2580 = vunpack.c.l.b16 %v2548
      %v2581 = vunpack.c.l.b16 %v2549
      %v2582 = vunpack.c.l.b16 %v2550
      %v2583 = vunpack.c.l.b16 %v2551
      %v2584 = vunpack.c.l.b16 %v2552
      %v2585 = vunpack.c.l.b16 %v2553
      %v2586 = vunpack.c.l.b16 %v2554
      %v2587 = vpack.c.b16 %v2572, %v2571
      %v2588 = vpack.c.b16 %v2574, %v2573
      %v2589 = vpack.c.b16 %v2576, %v2575
      %v2590 = vpack.c.b16 %v2578, %v2577
      %v2591 = vpack.c.b16 %v2580, %v2579
      %v2592 = vpack.c.b16 %v2582, %v2581
      %v2593 = vpack.c.b16 %v2584, %v2583
      %v2594 = vpack.c.b16 %v2586, %v2585
      %2603 = vmatpush.bf16.msra.mxu0 %v2594
      %2604 = vmatpush.bf16.msra.mxu0 %v2593
      %2605 = vmatpush.bf16.msra.mxu0 %v2592
      %2606 = vmatpush.bf16.msra.mxu0 %v2591
      %2607 = vmatpush.bf16.msra.mxu0 %v2590
      %2608 = vmatpush.bf16.msra.mxu0 %v2589
      %2609 = vmatpush.bf16.msra.mxu0 %v2588
      %2610 = vmatpush.bf16.msra.mxu0 %v2587
      %2611 = vmatmul.bf16.gmra.mxu0 %v1320
      %v2612 = vpop.f32.mrf.mxu0
      %v2613 = vadd.f32 0.0, %v2612
      %v2614 = vpop.f32.mrf.mxu0
      %v2615 = vadd.f32 0.0, %v2614
      %2616 = vmatmul.bf16.gmra.mxu0 %v1321
      %v2617 = vpop.f32.mrf.mxu0
      %v2618 = vadd.f32 0.0, %v2617
      %v2619 = vpop.f32.mrf.mxu0
      %v2620 = vadd.f32 0.0, %v2619
      %2621 = vmatmul.bf16.gmra.mxu0 %v1322
      %v2622 = vpop.f32.mrf.mxu0
      %v2623 = vadd.f32 0.0, %v2622
      %v2624 = vpop.f32.mrf.mxu0
      %v2625 = vadd.f32 0.0, %v2624
      %2626 = vmatmul.bf16.gmra.mxu0 %v1323
      %v2627 = vpop.f32.mrf.mxu0
      %v2628 = vadd.f32 0.0, %v2627
      %v2629 = vpop.f32.mrf.mxu0
      %v2630 = vadd.f32 0.0, %v2629
      %2631 = vmatmul.bf16.gmra.mxu0 %v1324
      %v2632 = vpop.f32.mrf.mxu0
      %v2633 = vadd.f32 0.0, %v2632
      %v2634 = vpop.f32.mrf.mxu0
      %v2635 = vadd.f32 0.0, %v2634
      %2636 = vmatmul.bf16.gmra.mxu0 %v1325
      %v2637 = vpop.f32.mrf.mxu0
      %v2638 = vadd.f32 0.0, %v2637
      %v2639 = vpop.f32.mrf.mxu0
      %v2640 = vadd.f32 0.0, %v2639
      %2641 = vmatmul.bf16.gmra.mxu0 %v1326
      %v2642 = vpop.f32.mrf.mxu0
      %v2643 = vadd.f32 0.0, %v2642
      %v2644 = vpop.f32.mrf.mxu0
      %v2645 = vadd.f32 0.0, %v2644
      %2646 = vmatmul.bf16.gmra.mxu0 %v1327
      %v2647 = vpop.f32.mrf.mxu0
      %v2648 = vadd.f32 0.0, %v2647
      %v2649 = vpop.f32.mrf.mxu0
      %v2650 = vadd.f32 0.0, %v2649
      %2651 = vmatmul.bf16.gmra.mxu0 %v2522
      %v2652 = vpop.f32.mrf.mxu0
      %v2653 = vadd.f32 0.0, %v2652
      %v2654 = vpop.f32.mrf.mxu0
      %v2655 = vadd.f32 0.0, %v2654
      %2656 = vmatmul.bf16.gmra.mxu0 %v2523
      %v2657 = vpop.f32.mrf.mxu0
      %v2658 = vadd.f32 0.0, %v2657
      %v2659 = vpop.f32.mrf.mxu0
      %v2660 = vadd.f32 0.0, %v2659
      %2661 = vmatmul.bf16.gmra.mxu0 %v2524
      %v2662 = vpop.f32.mrf.mxu0
      %v2663 = vadd.f32 0.0, %v2662
      %v2664 = vpop.f32.mrf.mxu0
      %v2665 = vadd.f32 0.0, %v2664
      %2666 = vmatmul.bf16.gmra.mxu0 %v2525
      %v2667 = vpop.f32.mrf.mxu0
      %v2668 = vadd.f32 0.0, %v2667
      %v2669 = vpop.f32.mrf.mxu0
      %v2670 = vadd.f32 0.0, %v2669
      %2671 = vmatmul.bf16.gmra.mxu0 %v2526
      %v2672 = vpop.f32.mrf.mxu0
      %v2673 = vadd.f32 0.0, %v2672
      %v2674 = vpop.f32.mrf.mxu0
      %v2675 = vadd.f32 0.0, %v2674
      %2676 = vmatmul.bf16.gmra.mxu0 %v2527
      %v2677 = vpop.f32.mrf.mxu0
      %v2678 = vadd.f32 0.0, %v2677
      %v2679 = vpop.f32.mrf.mxu0
      %v2680 = vadd.f32 0.0, %v2679
      %2681 = vmatmul.bf16.gmra.mxu0 %v2528
      %v2682 = vpop.f32.mrf.mxu0
      %v2683 = vadd.f32 0.0, %v2682
      %v2684 = vpop.f32.mrf.mxu0
      %v2685 = vadd.f32 0.0, %v2684
      %2686 = vmatmul.bf16.gmra.mxu0 %v2529
      %v2687 = vpop.f32.mrf.mxu0
      %v2688 = vadd.f32 0.0, %v2687
      %v2689 = vpop.f32.mrf.mxu0
      %v2690 = vadd.f32 0.0, %v2689
      %2691 = vdwg.mxu0
      %v2692 = vadd.f32 %v2258, %v2613
      %v2693 = vadd.f32 %v2259, %v2615
      %v2694 = vadd.f32 %v2260, %v2618
      %v2695 = vadd.f32 %v2261, %v2620
      %v2696 = vadd.f32 %v2262, %v2623
      %v2697 = vadd.f32 %v2263, %v2625
      %v2698 = vadd.f32 %v2264, %v2628
      %v2699 = vadd.f32 %v2265, %v2630
      %v2700 = vadd.f32 %v2266, %v2633
      %v2701 = vadd.f32 %v2267, %v2635
      %v2702 = vadd.f32 %v2268, %v2638
      %v2703 = vadd.f32 %v2269, %v2640
      %v2704 = vadd.f32 %v2270, %v2643
      %v2705 = vadd.f32 %v2271, %v2645
      %v2706 = vadd.f32 %v2272, %v2648
      %v2707 = vadd.f32 %v2273, %v2650
      %v2708 = vadd.f32 %v2274, %v2653
      %v2709 = vadd.f32 %v2275, %v2655
      %v2710 = vadd.f32 %v2276, %v2658
      %v2711 = vadd.f32 %v2277, %v2660
      %v2712 = vadd.f32 %v2278, %v2663
      %v2713 = vadd.f32 %v2279, %v2665
      %v2714 = vadd.f32 %v2280, %v2668
      %v2715 = vadd.f32 %v2281, %v2670
      %v2716 = vadd.f32 %v2282, %v2673
      %v2717 = vadd.f32 %v2283, %v2675
      %v2718 = vadd.f32 %v2284, %v2678
      %v2719 = vadd.f32 %v2285, %v2680
      %v2720 = vadd.f32 %v2286, %v2683
      %v2721 = vadd.f32 %v2287, %v2685
      %v2722 = vadd.f32 %v2288, %v2688
      %v2723 = vadd.f32 %v2289, %v2690
      %v2724 = vld [vmem:[%s548] sm:$0xe]
      %v2725 = vld [vmem:[%s548 + $0xc] sm:$0xe]
      %v2726 = vld [vmem:[%s548 + $0x18] sm:$0xe]
      %v2727 = vld [vmem:[%s548 + $0x24] sm:$0xe]
      %v2728 = vld [vmem:[%s548 + $0x30] sm:$0xe]
      %v2729 = vld [vmem:[%s548 + $0x3c] sm:$0xe]
      %v2730 = vld [vmem:[%s548 + $0x48] sm:$0xe]
      %v2731 = vld [vmem:[%s548 + $0x54] sm:$0xe]
      %v2756 = vrot.slane %v2724, 5
      %v2757 = vrot.slane %v2756, 4
      %v2758 = vrot.slane %v2291, 5
      %v2759 = vsel %vm1653, %v2757, %v2758
      %v2760 = vrot.slane %v2758, 4
      %v2761 = vrot.slane %v2292, 5
      %v2762 = vsel %vm1653, %v2760, %v2761
      %v2763 = vrot.slane %v2725, 5
      %v2764 = vrot.slane %v2763, 4
      %v2765 = vrot.slane %v2294, 5
      %v2766 = vsel %vm1653, %v2764, %v2765
      %v2767 = vrot.slane %v2765, 4
      %v2768 = vrot.slane %v2295, 5
      %v2769 = vsel %vm1653, %v2767, %v2768
      %v2770 = vrot.slane %v2726, 5
      %v2771 = vrot.slane %v2770, 4
      %v2772 = vrot.slane %v2297, 5
      %v2773 = vsel %vm1653, %v2771, %v2772
      %v2774 = vrot.slane %v2772, 4
      %v2775 = vrot.slane %v2298, 5
      %v2776 = vsel %vm1653, %v2774, %v2775
      %v2777 = vrot.slane %v2727, 5
      %v2778 = vrot.slane %v2777, 4
      %v2779 = vrot.slane %v2300, 5
      %v2780 = vsel %vm1653, %v2778, %v2779
      %v2781 = vrot.slane %v2779, 4
      %v2782 = vrot.slane %v2301, 5
      %v2783 = vsel %vm1653, %v2781, %v2782
      %v2784 = vrot.slane %v2728, 5
      %v2785 = vrot.slane %v2784, 4
      %v2786 = vrot.slane %v2303, 5
      %v2787 = vsel %vm1653, %v2785, %v2786
      %v2788 = vrot.slane %v2786, 4
      %v2789 = vrot.slane %v2304, 5
      %v2790 = vsel %vm1653, %v2788, %v2789
      %v2791 = vrot.slane %v2729, 5
      %v2792 = vrot.slane %v2791, 4
      %v2793 = vrot.slane %v2306, 5
      %v2794 = vsel %vm1653, %v2792, %v2793
      %v2795 = vrot.slane %v2793, 4
      %v2796 = vrot.slane %v2307, 5
      %v2797 = vsel %vm1653, %v2795, %v2796
      %v2798 = vrot.slane %v2730, 5
      %v2799 = vrot.slane %v2798, 4
      %v2800 = vrot.slane %v2309, 5
      %v2801 = vsel %vm1653, %v2799, %v2800
      %v2802 = vrot.slane %v2800, 4
      %v2803 = vrot.slane %v2310, 5
      %v2804 = vsel %vm1653, %v2802, %v2803
      %v2805 = vrot.slane %v2731, 5
      %v2806 = vrot.slane %v2805, 4
      %v2807 = vrot.slane %v2312, 5
      %v2808 = vsel %vm1653, %v2806, %v2807
      %v2809 = vrot.slane %v2807, 4
      %v2810 = vrot.slane %v2313, 5
      %v2811 = vsel %vm1653, %v2809, %v2810
      %v2812 = vunpack.c.l.b16 %v2759
      %v2813 = vunpack.c.l.b16 %v2762
      %v2814 = vunpack.c.l.b16 %v2766
      %v2815 = vunpack.c.l.b16 %v2769
      %v2816 = vunpack.c.l.b16 %v2773
      %v2817 = vunpack.c.l.b16 %v2776
      %v2818 = vunpack.c.l.b16 %v2780
      %v2819 = vunpack.c.l.b16 %v2783
      %v2820 = vunpack.c.l.b16 %v2787
      %v2821 = vunpack.c.l.b16 %v2790
      %v2822 = vunpack.c.l.b16 %v2794
      %v2823 = vunpack.c.l.b16 %v2797
      %v2824 = vunpack.c.l.b16 %v2801
      %v2825 = vunpack.c.l.b16 %v2804
      %v2826 = vunpack.c.l.b16 %v2808
      %v2827 = vunpack.c.l.b16 %v2811
      %v2828 = vpack.c.b16 %v2813, %v2812
      %v2829 = vpack.c.b16 %v2815, %v2814
      %v2830 = vpack.c.b16 %v2817, %v2816
      %v2831 = vpack.c.b16 %v2819, %v2818
      %v2832 = vpack.c.b16 %v2821, %v2820
      %v2833 = vpack.c.b16 %v2823, %v2822
      %v2834 = vpack.c.b16 %v2825, %v2824
      %v2835 = vpack.c.b16 %v2827, %v2826
      %s2844 = scalar_lea.vmem %s2, 320
      %v2845 = vld [vmem:[%s2844] sm:$0xf]
      %v2846 = vld [vmem:[%s2844 + $0x4] sm:$0xf]
      %v2847 = vld [vmem:[%s2844 + $0x8] sm:$0xf]
      %v2848 = vld [vmem:[%s2844 + $0xc] sm:$0xf]
      %v2849 = vld [vmem:[%s2844 + $0x10] sm:$0xf]
      %v2850 = vld [vmem:[%s2844 + $0x14] sm:$0xf]
      %v2851 = vld [vmem:[%s2844 + $0x18] sm:$0xf]
      %v2852 = vld [vmem:[%s2844 + $0x1c] sm:$0xf]
      %v2853 = vld [vmem:[%s2844 + $0x20] sm:$0xf]
      %v2854 = vld [vmem:[%s2844 + $0x24] sm:$0xf]
      %v2855 = vld [vmem:[%s2844 + $0x28] sm:$0xf]
      %v2856 = vld [vmem:[%s2844 + $0x2c] sm:$0xf]
      %v2857 = vld [vmem:[%s2844 + $0x30] sm:$0xf]
      %v2858 = vld [vmem:[%s2844 + $0x34] sm:$0xf]
      %v2859 = vld [vmem:[%s2844 + $0x38] sm:$0xf]
      %v2860 = vld [vmem:[%s2844 + $0x3c] sm:$0xf]
      %v2877 = vunpack.c.l.b16 %v2845
      %v2878 = vunpack.c.l.b16 %v2846
      %v2879 = vunpack.c.l.b16 %v2847
      %v2880 = vunpack.c.l.b16 %v2848
      %v2881 = vunpack.c.l.b16 %v2849
      %v2882 = vunpack.c.l.b16 %v2850
      %v2883 = vunpack.c.l.b16 %v2851
      %v2884 = vunpack.c.l.b16 %v2852
      %v2885 = vunpack.c.l.b16 %v2853
      %v2886 = vunpack.c.l.b16 %v2854
      %v2887 = vunpack.c.l.b16 %v2855
      %v2888 = vunpack.c.l.b16 %v2856
      %v2889 = vunpack.c.l.b16 %v2857
      %v2890 = vunpack.c.l.b16 %v2858
      %v2891 = vunpack.c.l.b16 %v2859
      %v2892 = vunpack.c.l.b16 %v2860
      %v2893 = vpack.c.b16 %v2878, %v2877
      %v2894 = vpack.c.b16 %v2880, %v2879
      %v2895 = vpack.c.b16 %v2882, %v2881
      %v2896 = vpack.c.b16 %v2884, %v2883
      %v2897 = vpack.c.b16 %v2886, %v2885
      %v2898 = vpack.c.b16 %v2888, %v2887
      %v2899 = vpack.c.b16 %v2890, %v2889
      %v2900 = vpack.c.b16 %v2892, %v2891
      %2909 = vmatpush.bf16.msra.mxu0 %v2900
      %2910 = vmatpush.bf16.msra.mxu0 %v2899
      %2911 = vmatpush.bf16.msra.mxu0 %v2898
      %2912 = vmatpush.bf16.msra.mxu0 %v2897
      %2913 = vmatpush.bf16.msra.mxu0 %v2896
      %2914 = vmatpush.bf16.msra.mxu0 %v2895
      %2915 = vmatpush.bf16.msra.mxu0 %v2894
      %2916 = vmatpush.bf16.msra.mxu0 %v2893
      %2917 = vmatmul.bf16.gmra.mxu0 %v1838
      %v2918 = vpop.f32.mrf.mxu0
      %v2919 = vadd.f32 0.0, %v2918
      %v2920 = vpop.f32.mrf.mxu0
      %v2921 = vadd.f32 0.0, %v2920
      %2922 = vmatmul.bf16.gmra.mxu0 %v1839
      %v2923 = vpop.f32.mrf.mxu0
      %v2924 = vadd.f32 0.0, %v2923
      %v2925 = vpop.f32.mrf.mxu0
      %v2926 = vadd.f32 0.0, %v2925
      %2927 = vmatmul.bf16.gmra.mxu0 %v1840
      %v2928 = vpop.f32.mrf.mxu0
      %v2929 = vadd.f32 0.0, %v2928
      %v2930 = vpop.f32.mrf.mxu0
      %v2931 = vadd.f32 0.0, %v2930
      %2932 = vmatmul.bf16.gmra.mxu0 %v1841
      %v2933 = vpop.f32.mrf.mxu0
      %v2934 = vadd.f32 0.0, %v2933
      %v2935 = vpop.f32.mrf.mxu0
      %v2936 = vadd.f32 0.0, %v2935
      %2937 = vmatmul.bf16.gmra.mxu0 %v1842
      %v2938 = vpop.f32.mrf.mxu0
      %v2939 = vadd.f32 0.0, %v2938
      %v2940 = vpop.f32.mrf.mxu0
      %v2941 = vadd.f32 0.0, %v2940
      %2942 = vmatmul.bf16.gmra.mxu0 %v1843
      %v2943 = vpop.f32.mrf.mxu0
      %v2944 = vadd.f32 0.0, %v2943
      %v2945 = vpop.f32.mrf.mxu0
      %v2946 = vadd.f32 0.0, %v2945
      %2947 = vmatmul.bf16.gmra.mxu0 %v1844
      %v2948 = vpop.f32.mrf.mxu0
      %v2949 = vadd.f32 0.0, %v2948
      %v2950 = vpop.f32.mrf.mxu0
      %v2951 = vadd.f32 0.0, %v2950
      %2952 = vmatmul.bf16.gmra.mxu0 %v1845
      %v2953 = vpop.f32.mrf.mxu0
      %v2954 = vadd.f32 0.0, %v2953
      %v2955 = vpop.f32.mrf.mxu0
      %v2956 = vadd.f32 0.0, %v2955
      %2957 = vmatmul.bf16.gmra.mxu0 %v2828
      %v2958 = vpop.f32.mrf.mxu0
      %v2959 = vadd.f32 0.0, %v2958
      %v2960 = vpop.f32.mrf.mxu0
      %v2961 = vadd.f32 0.0, %v2960
      %2962 = vmatmul.bf16.gmra.mxu0 %v2829
      %v2963 = vpop.f32.mrf.mxu0
      %v2964 = vadd.f32 0.0, %v2963
      %v2965 = vpop.f32.mrf.mxu0
      %v2966 = vadd.f32 0.0, %v2965
      %2967 = vmatmul.bf16.gmra.mxu0 %v2830
      %v2968 = vpop.f32.mrf.mxu0
      %v2969 = vadd.f32 0.0, %v2968
      %v2970 = vpop.f32.mrf.mxu0
      %v2971 = vadd.f32 0.0, %v2970
      %2972 = vmatmul.bf16.gmra.mxu0 %v2831
      %v2973 = vpop.f32.mrf.mxu0
      %v2974 = vadd.f32 0.0, %v2973
      %v2975 = vpop.f32.mrf.mxu0
      %v2976 = vadd.f32 0.0, %v2975
      %2977 = vmatmul.bf16.gmra.mxu0 %v2832
      %v2978 = vpop.f32.mrf.mxu0
      %v2979 = vadd.f32 0.0, %v2978
      %v2980 = vpop.f32.mrf.mxu0
      %v2981 = vadd.f32 0.0, %v2980
      %2982 = vmatmul.bf16.gmra.mxu0 %v2833
      %v2983 = vpop.f32.mrf.mxu0
      %v2984 = vadd.f32 0.0, %v2983
      %v2985 = vpop.f32.mrf.mxu0
      %v2986 = vadd.f32 0.0, %v2985
      %2987 = vmatmul.bf16.gmra.mxu0 %v2834
      %v2988 = vpop.f32.mrf.mxu0
      %v2989 = vadd.f32 0.0, %v2988
      %v2990 = vpop.f32.mrf.mxu0
      %v2991 = vadd.f32 0.0, %v2990
      %2992 = vmatmul.bf16.gmra.mxu0 %v2835
      %v2993 = vpop.f32.mrf.mxu0
      %v2994 = vadd.f32 0.0, %v2993
      %v2995 = vpop.f32.mrf.mxu0
      %v2996 = vadd.f32 0.0, %v2995
      %2997 = vdwg.mxu0
      %v2998 = vadd.f32 %v2692, %v2919
      %v2999 = vadd.f32 %v2693, %v2921
      %v3000 = vadd.f32 %v2694, %v2924
      %v3001 = vadd.f32 %v2695, %v2926
      %v3002 = vadd.f32 %v2696, %v2929
      %v3003 = vadd.f32 %v2697, %v2931
      %v3004 = vadd.f32 %v2698, %v2934
      %v3005 = vadd.f32 %v2699, %v2936
      %v3006 = vadd.f32 %v2700, %v2939
      %v3007 = vadd.f32 %v2701, %v2941
      %v3008 = vadd.f32 %v2702, %v2944
      %v3009 = vadd.f32 %v2703, %v2946
      %v3010 = vadd.f32 %v2704, %v2949
      %v3011 = vadd.f32 %v2705, %v2951
      %v3012 = vadd.f32 %v2706, %v2954
      %v3013 = vadd.f32 %v2707, %v2956
      %v3014 = vadd.f32 %v2708, %v2959
      %v3015 = vadd.f32 %v2709, %v2961
      %v3016 = vadd.f32 %v2710, %v2964
      %v3017 = vadd.f32 %v2711, %v2966
      %v3018 = vadd.f32 %v2712, %v2969
      %v3019 = vadd.f32 %v2713, %v2971
      %v3020 = vadd.f32 %v2714, %v2974
      %v3021 = vadd.f32 %v2715, %v2976
      %v3022 = vadd.f32 %v2716, %v2979
      %v3023 = vadd.f32 %v2717, %v2981
      %v3024 = vadd.f32 %v2718, %v2984
      %v3025 = vadd.f32 %v2719, %v2986
      %v3026 = vadd.f32 %v2720, %v2989
      %v3027 = vadd.f32 %v2721, %v2991
      %v3028 = vadd.f32 %v2722, %v2994
      %v3029 = vadd.f32 %v2723, %v2996
      %s3030 = scalar_lea.vmem [#allocation3], 12
      %v3031 = vld [vmem:[%s3030] sm:$0xf]
      %v3032 = vld [vmem:[%s3030 + $0x4] sm:$0xf]
      %v3033 = vld [vmem:[%s3030 + $0xc] sm:$0xf]
      %v3034 = vld [vmem:[%s3030 + $0x10] sm:$0xf]
      %v3035 = vld [vmem:[%s3030 + $0x18] sm:$0xf]
      %v3036 = vld [vmem:[%s3030 + $0x1c] sm:$0xf]
      %v3037 = vld [vmem:[%s3030 + $0x24] sm:$0xf]
      %v3038 = vld [vmem:[%s3030 + $0x28] sm:$0xf]
      %v3039 = vld [vmem:[%s3030 + $0x30] sm:$0xf]
      %v3040 = vld [vmem:[%s3030 + $0x34] sm:$0xf]
      %v3041 = vld [vmem:[%s3030 + $0x3c] sm:$0xf]
      %v3042 = vld [vmem:[%s3030 + $0x40] sm:$0xf]
      %v3043 = vld [vmem:[%s3030 + $0x48] sm:$0xf]
      %v3044 = vld [vmem:[%s3030 + $0x4c] sm:$0xf]
      %v3045 = vld [vmem:[%s3030 + $0x54] sm:$0xf]
      %v3046 = vld [vmem:[%s3030 + $0x58] sm:$0xf]
      %v3063 = vunpack.c.l.b16 %v3031
      %v3064 = vunpack.c.l.b16 %v3032
      %v3065 = vunpack.c.l.b16 %v3033
      %v3066 = vunpack.c.l.b16 %v3034
      %v3067 = vunpack.c.l.b16 %v3035
      %v3068 = vunpack.c.l.b16 %v3036
      %v3069 = vunpack.c.l.b16 %v3037
      %v3070 = vunpack.c.l.b16 %v3038
      %v3071 = vunpack.c.l.b16 %v3039
      %v3072 = vunpack.c.l.b16 %v3040
      %v3073 = vunpack.c.l.b16 %v3041
      %v3074 = vunpack.c.l.b16 %v3042
      %v3075 = vunpack.c.l.b16 %v3043
      %v3076 = vunpack.c.l.b16 %v3044
      %v3077 = vunpack.c.l.b16 %v3045
      %v3078 = vunpack.c.l.b16 %v3046
      %v3079 = vpack.c.b16 %v3064, %v3063
      %v3080 = vpack.c.b16 %v3066, %v3065
      %v3081 = vpack.c.b16 %v3068, %v3067
      %v3082 = vpack.c.b16 %v3070, %v3069
      %v3083 = vpack.c.b16 %v3072, %v3071
      %v3084 = vpack.c.b16 %v3074, %v3073
      %v3085 = vpack.c.b16 %v3076, %v3075
      %v3086 = vpack.c.b16 %v3078, %v3077
      %s3095 = scalar_lea.vmem %s2, 384
      %v3096 = vld [vmem:[%s3095] sm:$0xf]
      %v3097 = vld [vmem:[%s3095 + $0x4] sm:$0xf]
      %v3098 = vld [vmem:[%s3095 + $0x8] sm:$0xf]
      %v3099 = vld [vmem:[%s3095 + $0xc] sm:$0xf]
      %v3100 = vld [vmem:[%s3095 + $0x10] sm:$0xf]
      %v3101 = vld [vmem:[%s3095 + $0x14] sm:$0xf]
      %v3102 = vld [vmem:[%s3095 + $0x18] sm:$0xf]
      %v3103 = vld [vmem:[%s3095 + $0x1c] sm:$0xf]
      %v3104 = vld [vmem:[%s3095 + $0x20] sm:$0xf]
      %v3105 = vld [vmem:[%s3095 + $0x24] sm:$0xf]
      %v3106 = vld [vmem:[%s3095 + $0x28] sm:$0xf]
      %v3107 = vld [vmem:[%s3095 + $0x2c] sm:$0xf]
      %v3108 = vld [vmem:[%s3095 + $0x30] sm:$0xf]
      %v3109 = vld [vmem:[%s3095 + $0x34] sm:$0xf]
      %v3110 = vld [vmem:[%s3095 + $0x38] sm:$0xf]
      %v3111 = vld [vmem:[%s3095 + $0x3c] sm:$0xf]
      %v3128 = vunpack.c.l.b16 %v3096
      %v3129 = vunpack.c.l.b16 %v3097
      %v3130 = vunpack.c.l.b16 %v3098
      %v3131 = vunpack.c.l.b16 %v3099
      %v3132 = vunpack.c.l.b16 %v3100
      %v3133 = vunpack.c.l.b16 %v3101
      %v3134 = vunpack.c.l.b16 %v3102
      %v3135 = vunpack.c.l.b16 %v3103
      %v3136 = vunpack.c.l.b16 %v3104
      %v3137 = vunpack.c.l.b16 %v3105
      %v3138 = vunpack.c.l.b16 %v3106
      %v3139 = vunpack.c.l.b16 %v3107
      %v3140 = vunpack.c.l.b16 %v3108
      %v3141 = vunpack.c.l.b16 %v3109
      %v3142 = vunpack.c.l.b16 %v3110
      %v3143 = vunpack.c.l.b16 %v3111
      %v3144 = vpack.c.b16 %v3129, %v3128
      %v3145 = vpack.c.b16 %v3131, %v3130
      %v3146 = vpack.c.b16 %v3133, %v3132
      %v3147 = vpack.c.b16 %v3135, %v3134
      %v3148 = vpack.c.b16 %v3137, %v3136
      %v3149 = vpack.c.b16 %v3139, %v3138
      %v3150 = vpack.c.b16 %v3141, %v3140
      %v3151 = vpack.c.b16 %v3143, %v3142
      %3160 = vmatpush.bf16.msra.mxu0 %v3151
      %3161 = vmatpush.bf16.msra.mxu0 %v3150
      %3162 = vmatpush.bf16.msra.mxu0 %v3149
      %3163 = vmatpush.bf16.msra.mxu0 %v3148
      %3164 = vmatpush.bf16.msra.mxu0 %v3147
      %3165 = vmatpush.bf16.msra.mxu0 %v3146
      %3166 = vmatpush.bf16.msra.mxu0 %v3145
      %3167 = vmatpush.bf16.msra.mxu0 %v3144
      %3168 = vmatmul.bf16.gmra.mxu0 %v2088
      %v3169 = vpop.f32.mrf.mxu0
      %v3170 = vadd.f32 0.0, %v3169
      %v3171 = vpop.f32.mrf.mxu0
      %v3172 = vadd.f32 0.0, %v3171
      %3173 = vmatmul.bf16.gmra.mxu0 %v2089
      %v3174 = vpop.f32.mrf.mxu0
      %v3175 = vadd.f32 0.0, %v3174
      %v3176 = vpop.f32.mrf.mxu0
      %v3177 = vadd.f32 0.0, %v3176
      %3178 = vmatmul.bf16.gmra.mxu0 %v2090
      %v3179 = vpop.f32.mrf.mxu0
      %v3180 = vadd.f32 0.0, %v3179
      %v3181 = vpop.f32.mrf.mxu0
      %v3182 = vadd.f32 0.0, %v3181
      %3183 = vmatmul.bf16.gmra.mxu0 %v2091
      %v3184 = vpop.f32.mrf.mxu0
      %v3185 = vadd.f32 0.0, %v3184
      %v3186 = vpop.f32.mrf.mxu0
      %v3187 = vadd.f32 0.0, %v3186
      %3188 = vmatmul.bf16.gmra.mxu0 %v2092
      %v3189 = vpop.f32.mrf.mxu0
      %v3190 = vadd.f32 0.0, %v3189
      %v3191 = vpop.f32.mrf.mxu0
      %v3192 = vadd.f32 0.0, %v3191
      %3193 = vmatmul.bf16.gmra.mxu0 %v2093
      %v3194 = vpop.f32.mrf.mxu0
      %v3195 = vadd.f32 0.0, %v3194
      %v3196 = vpop.f32.mrf.mxu0
      %v3197 = vadd.f32 0.0, %v3196
      %3198 = vmatmul.bf16.gmra.mxu0 %v2094
      %v3199 = vpop.f32.mrf.mxu0
      %v3200 = vadd.f32 0.0, %v3199
      %v3201 = vpop.f32.mrf.mxu0
      %v3202 = vadd.f32 0.0, %v3201
      %3203 = vmatmul.bf16.gmra.mxu0 %v2095
      %v3204 = vpop.f32.mrf.mxu0
      %v3205 = vadd.f32 0.0, %v3204
      %v3206 = vpop.f32.mrf.mxu0
      %v3207 = vadd.f32 0.0, %v3206
      %3208 = vmatmul.bf16.gmra.mxu0 %v3079
      %v3209 = vpop.f32.mrf.mxu0
      %v3210 = vadd.f32 0.0, %v3209
      %v3211 = vpop.f32.mrf.mxu0
      %v3212 = vadd.f32 0.0, %v3211
      %3213 = vmatmul.bf16.gmra.mxu0 %v3080
      %v3214 = vpop.f32.mrf.mxu0
      %v3215 = vadd.f32 0.0, %v3214
      %v3216 = vpop.f32.mrf.mxu0
      %v3217 = vadd.f32 0.0, %v3216
      %3218 = vmatmul.bf16.gmra.mxu0 %v3081
      %v3219 = vpop.f32.mrf.mxu0
      %v3220 = vadd.f32 0.0, %v3219
      %v3221 = vpop.f32.mrf.mxu0
      %v3222 = vadd.f32 0.0, %v3221
      %3223 = vmatmul.bf16.gmra.mxu0 %v3082
      %v3224 = vpop.f32.mrf.mxu0
      %v3225 = vadd.f32 0.0, %v3224
      %v3226 = vpop.f32.mrf.mxu0
      %v3227 = vadd.f32 0.0, %v3226
      %3228 = vmatmul.bf16.gmra.mxu0 %v3083
      %v3229 = vpop.f32.mrf.mxu0
      %v3230 = vadd.f32 0.0, %v3229
      %v3231 = vpop.f32.mrf.mxu0
      %v3232 = vadd.f32 0.0, %v3231
      %3233 = vmatmul.bf16.gmra.mxu0 %v3084
      %v3234 = vpop.f32.mrf.mxu0
      %v3235 = vadd.f32 0.0, %v3234
      %v3236 = vpop.f32.mrf.mxu0
      %v3237 = vadd.f32 0.0, %v3236
      %3238 = vmatmul.bf16.gmra.mxu0 %v3085
      %v3239 = vpop.f32.mrf.mxu0
      %v3240 = vadd.f32 0.0, %v3239
      %v3241 = vpop.f32.mrf.mxu0
      %v3242 = vadd.f32 0.0, %v3241
      %3243 = vmatmul.bf16.gmra.mxu0 %v3086
      %v3244 = vpop.f32.mrf.mxu0
      %v3245 = vadd.f32 0.0, %v3244
      %v3246 = vpop.f32.mrf.mxu0
      %v3247 = vadd.f32 0.0, %v3246
      %3248 = vdwg.mxu0
      %v3249 = vadd.f32 %v2998, %v3170
      %v3250 = vadd.f32 %v2999, %v3172
      %v3251 = vadd.f32 %v3000, %v3175
      %v3252 = vadd.f32 %v3001, %v3177
      %v3253 = vadd.f32 %v3002, %v3180
      %v3254 = vadd.f32 %v3003, %v3182
      %v3255 = vadd.f32 %v3004, %v3185
      %v3256 = vadd.f32 %v3005, %v3187
      %v3257 = vadd.f32 %v3006, %v3190
      %v3258 = vadd.f32 %v3007, %v3192
      %v3259 = vadd.f32 %v3008, %v3195
      %v3260 = vadd.f32 %v3009, %v3197
      %v3261 = vadd.f32 %v3010, %v3200
      %v3262 = vadd.f32 %v3011, %v3202
      %v3263 = vadd.f32 %v3012, %v3205
      %v3264 = vadd.f32 %v3013, %v3207
      %v3265 = vadd.f32 %v3014, %v3210
      %v3266 = vadd.f32 %v3015, %v3212
      %v3267 = vadd.f32 %v3016, %v3215
      %v3268 = vadd.f32 %v3017, %v3217
      %v3269 = vadd.f32 %v3018, %v3220
      %v3270 = vadd.f32 %v3019, %v3222
      %v3271 = vadd.f32 %v3020, %v3225
      %v3272 = vadd.f32 %v3021, %v3227
      %v3273 = vadd.f32 %v3022, %v3230
      %v3274 = vadd.f32 %v3023, %v3232
      %v3275 = vadd.f32 %v3024, %v3235
      %v3276 = vadd.f32 %v3025, %v3237
      %v3277 = vadd.f32 %v3026, %v3240
      %v3278 = vadd.f32 %v3027, %v3242
      %v3279 = vadd.f32 %v3028, %v3245
      %v3280 = vadd.f32 %v3029, %v3247
      %v3281 = vld [vmem:[%s3030] sm:$0xf]
      %v3282 = vld [vmem:[%s3030 + $0x4] sm:$0xf]
      %v3283 = vld [vmem:[%s3030 + $0x8] sm:$0x1]
      %v3284 = vld [vmem:[%s3030 + $0xc] sm:$0xf]
      %v3285 = vld [vmem:[%s3030 + $0x10] sm:$0xf]
      %v3286 = vld [vmem:[%s3030 + $0x14] sm:$0x1]
      %v3287 = vld [vmem:[%s3030 + $0x18] sm:$0xf]
      %v3288 = vld [vmem:[%s3030 + $0x1c] sm:$0xf]
      %v3289 = vld [vmem:[%s3030 + $0x20] sm:$0x1]
      %v3290 = vld [vmem:[%s3030 + $0x24] sm:$0xf]
      %v3291 = vld [vmem:[%s3030 + $0x28] sm:$0xf]
      %v3292 = vld [vmem:[%s3030 + $0x2c] sm:$0x1]
      %v3293 = vld [vmem:[%s3030 + $0x30] sm:$0xf]
      %v3294 = vld [vmem:[%s3030 + $0x34] sm:$0xf]
      %v3295 = vld [vmem:[%s3030 + $0x38] sm:$0x1]
      %v3296 = vld [vmem:[%s3030 + $0x3c] sm:$0xf]
      %v3297 = vld [vmem:[%s3030 + $0x40] sm:$0xf]
      %v3298 = vld [vmem:[%s3030 + $0x44] sm:$0x1]
      %v3299 = vld [vmem:[%s3030 + $0x48] sm:$0xf]
      %v3300 = vld [vmem:[%s3030 + $0x4c] sm:$0xf]
      %v3301 = vld [vmem:[%s3030 + $0x50] sm:$0x1]
      %v3302 = vld [vmem:[%s3030 + $0x54] sm:$0xf]
      %v3303 = vld [vmem:[%s3030 + $0x58] sm:$0xf]
      %v3304 = vld [vmem:[%s3030 + $0x5c] sm:$0x1]
      %v3306 = vshrl.u32 %v3281, 16
      %v3308 = vrot.slane %v3306, 4
      %v3309 = vshll.u32 %v3281, 16
      %v3311 = vrot.slane %v3309, 5
      %v3312 = vor.u32 %v3308, %v3311
      %v3313 = vrot.slane %v3312, 4
      %v3315 = vshll.u32 %v3282, 16
      %v3317 = vrot.slane %v3315, 5
      %v3318 = vsel %vm879, %v3313, %v3317
      %v3319 = vshrl.u32 %v3282, 16
      %v3321 = vrot.slane %v3319, 4
      %v3322 = vor.u32 %v3321, %v3317
      %v3323 = vrot.slane %v3322, 4
      %v3325 = vshll.u32 %v3283, 16
      %v3327 = vrot.slane %v3325, 5
      %v3328 = vsel %vm879, %v3323, %v3327
      %v3330 = vshrl.u32 %v3284, 16
      %v3332 = vrot.slane %v3330, 4
      %v3333 = vshll.u32 %v3284, 16
      %v3335 = vrot.slane %v3333, 5
      %v3336 = vor.u32 %v3332, %v3335
      %v3337 = vrot.slane %v3336, 4
      %v3339 = vshll.u32 %v3285, 16
      %v3341 = vrot.slane %v3339, 5
      %v3342 = vsel %vm879, %v3337, %v3341
      %v3343 = vshrl.u32 %v3285, 16
      %v3345 = vrot.slane %v3343, 4
      %v3346 = vor.u32 %v3345, %v3341
      %v3347 = vrot.slane %v3346, 4
      %v3349 = vshll.u32 %v3286, 16
      %v3351 = vrot.slane %v3349, 5
      %v3352 = vsel %vm879, %v3347, %v3351
      %v3354 = vshrl.u32 %v3287, 16
      %v3356 = vrot.slane %v3354, 4
      %v3357 = vshll.u32 %v3287, 16
      %v3359 = vrot.slane %v3357, 5
      %v3360 = vor.u32 %v3356, %v3359
      %v3361 = vrot.slane %v3360, 4
      %v3363 = vshll.u32 %v3288, 16
      %v3365 = vrot.slane %v3363, 5
      %v3366 = vsel %vm879, %v3361, %v3365
      %v3367 = vshrl.u32 %v3288, 16
      %v3369 = vrot.slane %v3367, 4
      %v3370 = vor.u32 %v3369, %v3365
      %v3371 = vrot.slane %v3370, 4
      %v3373 = vshll.u32 %v3289, 16
      %v3375 = vrot.slane %v3373, 5
      %v3376 = vsel %vm879, %v3371, %v3375
      %v3378 = vshrl.u32 %v3290, 16
      %v3380 = vrot.slane %v3378, 4
      %v3381 = vshll.u32 %v3290, 16
      %v3383 = vrot.slane %v3381, 5
      %v3384 = vor.u32 %v3380, %v3383
      %v3385 = vrot.slane %v3384, 4
      %v3387 = vshll.u32 %v3291, 16
      %v3389 = vrot.slane %v3387, 5
      %v3390 = vsel %vm879, %v3385, %v3389
      %v3391 = vshrl.u32 %v3291, 16
      %v3393 = vrot.slane %v3391, 4
      %v3394 = vor.u32 %v3393, %v3389
      %v3395 = vrot.slane %v3394, 4
      %v3397 = vshll.u32 %v3292, 16
      %v3399 = vrot.slane %v3397, 5
      %v3400 = vsel %vm879, %v3395, %v3399
      %v3402 = vshrl.u32 %v3293, 16
      %v3404 = vrot.slane %v3402, 4
      %v3405 = vshll.u32 %v3293, 16
      %v3407 = vrot.slane %v3405, 5
      %v3408 = vor.u32 %v3404, %v3407
      %v3409 = vrot.slane %v3408, 4
      %v3411 = vshll.u32 %v3294, 16
      %v3413 = vrot.slane %v3411, 5
      %v3414 = vsel %vm879, %v3409, %v3413
      %v3415 = vshrl.u32 %v3294, 16
      %v3417 = vrot.slane %v3415, 4
      %v3418 = vor.u32 %v3417, %v3413
      %v3419 = vrot.slane %v3418, 4
      %v3421 = vshll.u32 %v3295, 16
      %v3423 = vrot.slane %v3421, 5
      %v3424 = vsel %vm879, %v3419, %v3423
      %v3426 = vshrl.u32 %v3296, 16
      %v3428 = vrot.slane %v3426, 4
      %v3429 = vshll.u32 %v3296, 16
      %v3431 = vrot.slane %v3429, 5
      %v3432 = vor.u32 %v3428, %v3431
      %v3433 = vrot.slane %v3432, 4
      %v3435 = vshll.u32 %v3297, 16
      %v3437 = vrot.slane %v3435, 5
      %v3438 = vsel %vm879, %v3433, %v3437
      %v3439 = vshrl.u32 %v3297, 16
      %v3441 = vrot.slane %v3439, 4
      %v3442 = vor.u32 %v3441, %v3437
      %v3443 = vrot.slane %v3442, 4
      %v3445 = vshll.u32 %v3298, 16
      %v3447 = vrot.slane %v3445, 5
      %v3448 = vsel %vm879, %v3443, %v3447
      %v3450 = vshrl.u32 %v3299, 16
      %v3452 = vrot.slane %v3450, 4
      %v3453 = vshll.u32 %v3299, 16
      %v3455 = vrot.slane %v3453, 5
      %v3456 = vor.u32 %v3452, %v3455
      %v3457 = vrot.slane %v3456, 4
      %v3459 = vshll.u32 %v3300, 16
      %v3461 = vrot.slane %v3459, 5
      %v3462 = vsel %vm879, %v3457, %v3461
      %v3463 = vshrl.u32 %v3300, 16
      %v3465 = vrot.slane %v3463, 4
      %v3466 = vor.u32 %v3465, %v3461
      %v3467 = vrot.slane %v3466, 4
      %v3469 = vshll.u32 %v3301, 16
      %v3471 = vrot.slane %v3469, 5
      %v3472 = vsel %vm879, %v3467, %v3471
      %v3474 = vshrl.u32 %v3302, 16
      %v3476 = vrot.slane %v3474, 4
      %v3477 = vshll.u32 %v3302, 16
      %v3479 = vrot.slane %v3477, 5
      %v3480 = vor.u32 %v3476, %v3479
      %v3481 = vrot.slane %v3480, 4
      %v3483 = vshll.u32 %v3303, 16
      %v3485 = vrot.slane %v3483, 5
      %v3486 = vsel %vm879, %v3481, %v3485
      %v3487 = vshrl.u32 %v3303, 16
      %v3489 = vrot.slane %v3487, 4
      %v3490 = vor.u32 %v3489, %v3485
      %v3491 = vrot.slane %v3490, 4
      %v3493 = vshll.u32 %v3304, 16
      %v3495 = vrot.slane %v3493, 5
      %v3496 = vsel %vm879, %v3491, %v3495
      %v3497 = vunpack.c.l.b16 %v3318
      %v3498 = vunpack.c.l.b16 %v3328
      %v3499 = vunpack.c.l.b16 %v3342
      %v3500 = vunpack.c.l.b16 %v3352
      %v3501 = vunpack.c.l.b16 %v3366
      %v3502 = vunpack.c.l.b16 %v3376
      %v3503 = vunpack.c.l.b16 %v3390
      %v3504 = vunpack.c.l.b16 %v3400
      %v3505 = vunpack.c.l.b16 %v3414
      %v3506 = vunpack.c.l.b16 %v3424
      %v3507 = vunpack.c.l.b16 %v3438
      %v3508 = vunpack.c.l.b16 %v3448
      %v3509 = vunpack.c.l.b16 %v3462
      %v3510 = vunpack.c.l.b16 %v3472
      %v3511 = vunpack.c.l.b16 %v3486
      %v3512 = vunpack.c.l.b16 %v3496
      %v3513 = vpack.c.b16 %v3498, %v3497
      %v3514 = vpack.c.b16 %v3500, %v3499
      %v3515 = vpack.c.b16 %v3502, %v3501
      %v3516 = vpack.c.b16 %v3504, %v3503
      %v3517 = vpack.c.b16 %v3506, %v3505
      %v3518 = vpack.c.b16 %v3508, %v3507
      %v3519 = vpack.c.b16 %v3510, %v3509
      %v3520 = vpack.c.b16 %v3512, %v3511
      %s3529 = scalar_lea.vmem %s2, 448
      %v3530 = vld [vmem:[%s3529] sm:$0xf]
      %v3531 = vld [vmem:[%s3529 + $0x4] sm:$0xf]
      %v3532 = vld [vmem:[%s3529 + $0x8] sm:$0xf]
      %v3533 = vld [vmem:[%s3529 + $0xc] sm:$0xf]
      %v3534 = vld [vmem:[%s3529 + $0x10] sm:$0xf]
      %v3535 = vld [vmem:[%s3529 + $0x14] sm:$0xf]
      %v3536 = vld [vmem:[%s3529 + $0x18] sm:$0xf]
      %v3537 = vld [vmem:[%s3529 + $0x1c] sm:$0xf]
      %v3538 = vld [vmem:[%s3529 + $0x20] sm:$0xf]
      %v3539 = vld [vmem:[%s3529 + $0x24] sm:$0xf]
      %v3540 = vld [vmem:[%s3529 + $0x28] sm:$0xf]
      %v3541 = vld [vmem:[%s3529 + $0x2c] sm:$0xf]
      %v3542 = vld [vmem:[%s3529 + $0x30] sm:$0xf]
      %v3543 = vld [vmem:[%s3529 + $0x34] sm:$0xf]
      %v3544 = vld [vmem:[%s3529 + $0x38] sm:$0xf]
      %v3545 = vld [vmem:[%s3529 + $0x3c] sm:$0xf]
      %v3562 = vunpack.c.l.b16 %v3530
      %v3563 = vunpack.c.l.b16 %v3531
      %v3564 = vunpack.c.l.b16 %v3532
      %v3565 = vunpack.c.l.b16 %v3533
      %v3566 = vunpack.c.l.b16 %v3534
      %v3567 = vunpack.c.l.b16 %v3535
      %v3568 = vunpack.c.l.b16 %v3536
      %v3569 = vunpack.c.l.b16 %v3537
      %v3570 = vunpack.c.l.b16 %v3538
      %v3571 = vunpack.c.l.b16 %v3539
      %v3572 = vunpack.c.l.b16 %v3540
      %v3573 = vunpack.c.l.b16 %v3541
      %v3574 = vunpack.c.l.b16 %v3542
      %v3575 = vunpack.c.l.b16 %v3543
      %v3576 = vunpack.c.l.b16 %v3544
      %v3577 = vunpack.c.l.b16 %v3545
      %v3578 = vpack.c.b16 %v3563, %v3562
      %v3579 = vpack.c.b16 %v3565, %v3564
      %v3580 = vpack.c.b16 %v3567, %v3566
      %v3581 = vpack.c.b16 %v3569, %v3568
      %v3582 = vpack.c.b16 %v3571, %v3570
      %v3583 = vpack.c.b16 %v3573, %v3572
      %v3584 = vpack.c.b16 %v3575, %v3574
      %v3585 = vpack.c.b16 %v3577, %v3576
      %3594 = vmatpush.bf16.msra.mxu0 %v3585
      %3595 = vmatpush.bf16.msra.mxu0 %v3584
      %3596 = vmatpush.bf16.msra.mxu0 %v3583
      %3597 = vmatpush.bf16.msra.mxu0 %v3582
      %3598 = vmatpush.bf16.msra.mxu0 %v3581
      %3599 = vmatpush.bf16.msra.mxu0 %v3580
      %3600 = vmatpush.bf16.msra.mxu0 %v3579
      %3601 = vmatpush.bf16.msra.mxu0 %v3578
      %3602 = vmatmul.bf16.gmra.mxu0 %v2522
      %v3603 = vpop.f32.mrf.mxu0
      %v3604 = vadd.f32 0.0, %v3603
      %v3605 = vpop.f32.mrf.mxu0
      %v3606 = vadd.f32 0.0, %v3605
      %3607 = vmatmul.bf16.gmra.mxu0 %v2523
      %v3608 = vpop.f32.mrf.mxu0
      %v3609 = vadd.f32 0.0, %v3608
      %v3610 = vpop.f32.mrf.mxu0
      %v3611 = vadd.f32 0.0, %v3610
      %3612 = vmatmul.bf16.gmra.mxu0 %v2524
      %v3613 = vpop.f32.mrf.mxu0
      %v3614 = vadd.f32 0.0, %v3613
      %v3615 = vpop.f32.mrf.mxu0
      %v3616 = vadd.f32 0.0, %v3615
      %3617 = vmatmul.bf16.gmra.mxu0 %v2525
      %v3618 = vpop.f32.mrf.mxu0
      %v3619 = vadd.f32 0.0, %v3618
      %v3620 = vpop.f32.mrf.mxu0
      %v3621 = vadd.f32 0.0, %v3620
      %3622 = vmatmul.bf16.gmra.mxu0 %v2526
      %v3623 = vpop.f32.mrf.mxu0
      %v3624 = vadd.f32 0.0, %v3623
      %v3625 = vpop.f32.mrf.mxu0
      %v3626 = vadd.f32 0.0, %v3625
      %3627 = vmatmul.bf16.gmra.mxu0 %v2527
      %v3628 = vpop.f32.mrf.mxu0
      %v3629 = vadd.f32 0.0, %v3628
      %v3630 = vpop.f32.mrf.mxu0
      %v3631 = vadd.f32 0.0, %v3630
      %3632 = vmatmul.bf16.gmra.mxu0 %v2528
      %v3633 = vpop.f32.mrf.mxu0
      %v3634 = vadd.f32 0.0, %v3633
      %v3635 = vpop.f32.mrf.mxu0
      %v3636 = vadd.f32 0.0, %v3635
      %3637 = vmatmul.bf16.gmra.mxu0 %v2529
      %v3638 = vpop.f32.mrf.mxu0
      %v3639 = vadd.f32 0.0, %v3638
      %v3640 = vpop.f32.mrf.mxu0
      %v3641 = vadd.f32 0.0, %v3640
      %3642 = vmatmul.bf16.gmra.mxu0 %v3513
      %v3643 = vpop.f32.mrf.mxu0
      %v3644 = vadd.f32 0.0, %v3643
      %v3645 = vpop.f32.mrf.mxu0
      %v3646 = vadd.f32 0.0, %v3645
      %3647 = vmatmul.bf16.gmra.mxu0 %v3514
      %v3648 = vpop.f32.mrf.mxu0
      %v3649 = vadd.f32 0.0, %v3648
      %v3650 = vpop.f32.mrf.mxu0
      %v3651 = vadd.f32 0.0, %v3650
      %3652 = vmatmul.bf16.gmra.mxu0 %v3515
      %v3653 = vpop.f32.mrf.mxu0
      %v3654 = vadd.f32 0.0, %v3653
      %v3655 = vpop.f32.mrf.mxu0
      %v3656 = vadd.f32 0.0, %v3655
      %3657 = vmatmul.bf16.gmra.mxu0 %v3516
      %v3658 = vpop.f32.mrf.mxu0
      %v3659 = vadd.f32 0.0, %v3658
      %v3660 = vpop.f32.mrf.mxu0
      %v3661 = vadd.f32 0.0, %v3660
      %3662 = vmatmul.bf16.gmra.mxu0 %v3517
      %v3663 = vpop.f32.mrf.mxu0
      %v3664 = vadd.f32 0.0, %v3663
      %v3665 = vpop.f32.mrf.mxu0
      %v3666 = vadd.f32 0.0, %v3665
      %3667 = vmatmul.bf16.gmra.mxu0 %v3518
      %v3668 = vpop.f32.mrf.mxu0
      %v3669 = vadd.f32 0.0, %v3668
      %v3670 = vpop.f32.mrf.mxu0
      %v3671 = vadd.f32 0.0, %v3670
      %3672 = vmatmul.bf16.gmra.mxu0 %v3519
      %v3673 = vpop.f32.mrf.mxu0
      %v3674 = vadd.f32 0.0, %v3673
      %v3675 = vpop.f32.mrf.mxu0
      %v3676 = vadd.f32 0.0, %v3675
      %3677 = vmatmul.bf16.gmra.mxu0 %v3520
      %v3678 = vpop.f32.mrf.mxu0
      %v3679 = vadd.f32 0.0, %v3678
      %v3680 = vpop.f32.mrf.mxu0
      %v3681 = vadd.f32 0.0, %v3680
      %3682 = vdwg.mxu0
      %v3683 = vadd.f32 %v3249, %v3604
      %v3684 = vadd.f32 %v3250, %v3606
      %v3685 = vadd.f32 %v3251, %v3609
      %v3686 = vadd.f32 %v3252, %v3611
      %v3687 = vadd.f32 %v3253, %v3614
      %v3688 = vadd.f32 %v3254, %v3616
      %v3689 = vadd.f32 %v3255, %v3619
      %v3690 = vadd.f32 %v3256, %v3621
      %v3691 = vadd.f32 %v3257, %v3624
      %v3692 = vadd.f32 %v3258, %v3626
      %v3693 = vadd.f32 %v3259, %v3629
      %v3694 = vadd.f32 %v3260, %v3631
      %v3695 = vadd.f32 %v3261, %v3634
      %v3696 = vadd.f32 %v3262, %v3636
      %v3697 = vadd.f32 %v3263, %v3639
      %v3698 = vadd.f32 %v3264, %v3641
      %v3699 = vadd.f32 %v3265, %v3644
      %v3700 = vadd.f32 %v3266, %v3646
      %v3701 = vadd.f32 %v3267, %v3649
      %v3702 = vadd.f32 %v3268, %v3651
      %v3703 = vadd.f32 %v3269, %v3654
      %v3704 = vadd.f32 %v3270, %v3656
      %v3705 = vadd.f32 %v3271, %v3659
      %v3706 = vadd.f32 %v3272, %v3661
      %v3707 = vadd.f32 %v3273, %v3664
      %v3708 = vadd.f32 %v3274, %v3666
      %v3709 = vadd.f32 %v3275, %v3669
      %v3710 = vadd.f32 %v3276, %v3671
      %v3711 = vadd.f32 %v3277, %v3674
      %v3712 = vadd.f32 %v3278, %v3676
      %v3713 = vadd.f32 %v3279, %v3679
      %v3714 = vadd.f32 %v3280, %v3681
      %v3715 = vld [vmem:[%s3030] sm:$0xe]
      %v3716 = vld [vmem:[%s3030 + $0xc] sm:$0xe]
      %v3717 = vld [vmem:[%s3030 + $0x18] sm:$0xe]
      %v3718 = vld [vmem:[%s3030 + $0x24] sm:$0xe]
      %v3719 = vld [vmem:[%s3030 + $0x30] sm:$0xe]
      %v3720 = vld [vmem:[%s3030 + $0x3c] sm:$0xe]
      %v3721 = vld [vmem:[%s3030 + $0x48] sm:$0xe]
      %v3722 = vld [vmem:[%s3030 + $0x54] sm:$0xe]
      %v3747 = vrot.slane %v3715, 5
      %v3748 = vrot.slane %v3747, 4
      %v3749 = vrot.slane %v3282, 5
      %v3750 = vsel %vm1653, %v3748, %v3749
      %v3751 = vrot.slane %v3749, 4
      %v3752 = vrot.slane %v3283, 5
      %v3753 = vsel %vm1653, %v3751, %v3752
      %v3754 = vrot.slane %v3716, 5
      %v3755 = vrot.slane %v3754, 4
      %v3756 = vrot.slane %v3285, 5
      %v3757 = vsel %vm1653, %v3755, %v3756
      %v3758 = vrot.slane %v3756, 4
      %v3759 = vrot.slane %v3286, 5
      %v3760 = vsel %vm1653, %v3758, %v3759
      %v3761 = vrot.slane %v3717, 5
      %v3762 = vrot.slane %v3761, 4
      %v3763 = vrot.slane %v3288, 5
      %v3764 = vsel %vm1653, %v3762, %v3763
      %v3765 = vrot.slane %v3763, 4
      %v3766 = vrot.slane %v3289, 5
      %v3767 = vsel %vm1653, %v3765, %v3766
      %v3768 = vrot.slane %v3718, 5
      %v3769 = vrot.slane %v3768, 4
      %v3770 = vrot.slane %v3291, 5
      %v3771 = vsel %vm1653, %v3769, %v3770
      %v3772 = vrot.slane %v3770, 4
      %v3773 = vrot.slane %v3292, 5
      %v3774 = vsel %vm1653, %v3772, %v3773
      %v3775 = vrot.slane %v3719, 5
      %v3776 = vrot.slane %v3775, 4
      %v3777 = vrot.slane %v3294, 5
      %v3778 = vsel %vm1653, %v3776, %v3777
      %v3779 = vrot.slane %v3777, 4
      %v3780 = vrot.slane %v3295, 5
      %v3781 = vsel %vm1653, %v3779, %v3780
      %v3782 = vrot.slane %v3720, 5
      %v3783 = vrot.slane %v3782, 4
      %v3784 = vrot.slane %v3297, 5
      %v3785 = vsel %vm1653, %v3783, %v3784
      %v3786 = vrot.slane %v3784, 4
      %v3787 = vrot.slane %v3298, 5
      %v3788 = vsel %vm1653, %v3786, %v3787
      %v3789 = vrot.slane %v3721, 5
      %v3790 = vrot.slane %v3789, 4
      %v3791 = vrot.slane %v3300, 5
      %v3792 = vsel %vm1653, %v3790, %v3791
      %v3793 = vrot.slane %v3791, 4
      %v3794 = vrot.slane %v3301, 5
      %v3795 = vsel %vm1653, %v3793, %v3794
      %v3796 = vrot.slane %v3722, 5
      %v3797 = vrot.slane %v3796, 4
      %v3798 = vrot.slane %v3303, 5
      %v3799 = vsel %vm1653, %v3797, %v3798
      %v3800 = vrot.slane %v3798, 4
      %v3801 = vrot.slane %v3304, 5
      %v3802 = vsel %vm1653, %v3800, %v3801
      %v3803 = vunpack.c.l.b16 %v3750
      %v3804 = vunpack.c.l.b16 %v3753
      %v3805 = vunpack.c.l.b16 %v3757
      %v3806 = vunpack.c.l.b16 %v3760
      %v3807 = vunpack.c.l.b16 %v3764
      %v3808 = vunpack.c.l.b16 %v3767
      %v3809 = vunpack.c.l.b16 %v3771
      %v3810 = vunpack.c.l.b16 %v3774
      %v3811 = vunpack.c.l.b16 %v3778
      %v3812 = vunpack.c.l.b16 %v3781
      %v3813 = vunpack.c.l.b16 %v3785
      %v3814 = vunpack.c.l.b16 %v3788
      %v3815 = vunpack.c.l.b16 %v3792
      %v3816 = vunpack.c.l.b16 %v3795
      %v3817 = vunpack.c.l.b16 %v3799
      %v3818 = vunpack.c.l.b16 %v3802
      %v3819 = vpack.c.b16 %v3804, %v3803
      %v3820 = vpack.c.b16 %v3806, %v3805
      %v3821 = vpack.c.b16 %v3808, %v3807
      %v3822 = vpack.c.b16 %v3810, %v3809
      %v3823 = vpack.c.b16 %v3812, %v3811
      %v3824 = vpack.c.b16 %v3814, %v3813
      %v3825 = vpack.c.b16 %v3816, %v3815
      %v3826 = vpack.c.b16 %v3818, %v3817
      %s3835 = scalar_lea.vmem %s2, 512
      %v3836 = vld [vmem:[%s3835] sm:$0xf]
      %v3837 = vld [vmem:[%s3835 + $0x4] sm:$0xf]
      %v3838 = vld [vmem:[%s3835 + $0x8] sm:$0xf]
      %v3839 = vld [vmem:[%s3835 + $0xc] sm:$0xf]
      %v3840 = vld [vmem:[%s3835 + $0x10] sm:$0xf]
      %v3841 = vld [vmem:[%s3835 + $0x14] sm:$0xf]
      %v3842 = vld [vmem:[%s3835 + $0x18] sm:$0xf]
      %v3843 = vld [vmem:[%s3835 + $0x1c] sm:$0xf]
      %v3844 = vld [vmem:[%s3835 + $0x20] sm:$0xf]
      %v3845 = vld [vmem:[%s3835 + $0x24] sm:$0xf]
      %v3846 = vld [vmem:[%s3835 + $0x28] sm:$0xf]
      %v3847 = vld [vmem:[%s3835 + $0x2c] sm:$0xf]
      %v3848 = vld [vmem:[%s3835 + $0x30] sm:$0xf]
      %v3849 = vld [vmem:[%s3835 + $0x34] sm:$0xf]
      %v3850 = vld [vmem:[%s3835 + $0x38] sm:$0xf]
      %v3851 = vld [vmem:[%s3835 + $0x3c] sm:$0xf]
      %v3868 = vunpack.c.l.b16 %v3836
      %v3869 = vunpack.c.l.b16 %v3837
      %v3870 = vunpack.c.l.b16 %v3838
      %v3871 = vunpack.c.l.b16 %v3839
      %v3872 = vunpack.c.l.b16 %v3840
      %v3873 = vunpack.c.l.b16 %v3841
      %v3874 = vunpack.c.l.b16 %v3842
      %v3875 = vunpack.c.l.b16 %v3843
      %v3876 = vunpack.c.l.b16 %v3844
      %v3877 = vunpack.c.l.b16 %v3845
      %v3878 = vunpack.c.l.b16 %v3846
      %v3879 = vunpack.c.l.b16 %v3847
      %v3880 = vunpack.c.l.b16 %v3848
      %v3881 = vunpack.c.l.b16 %v3849
      %v3882 = vunpack.c.l.b16 %v3850
      %v3883 = vunpack.c.l.b16 %v3851
      %v3884 = vpack.c.b16 %v3869, %v3868
      %v3885 = vpack.c.b16 %v3871, %v3870
      %v3886 = vpack.c.b16 %v3873, %v3872
      %v3887 = vpack.c.b16 %v3875, %v3874
      %v3888 = vpack.c.b16 %v3877, %v3876
      %v3889 = vpack.c.b16 %v3879, %v3878
      %v3890 = vpack.c.b16 %v3881, %v3880
      %v3891 = vpack.c.b16 %v3883, %v3882
      %3900 = vmatpush.bf16.msra.mxu0 %v3891
      %3901 = vmatpush.bf16.msra.mxu0 %v3890
      %3902 = vmatpush.bf16.msra.mxu0 %v3889
      %3903 = vmatpush.bf16.msra.mxu0 %v3888
      %3904 = vmatpush.bf16.msra.mxu0 %v3887
      %3905 = vmatpush.bf16.msra.mxu0 %v3886
      %3906 = vmatpush.bf16.msra.mxu0 %v3885
      %3907 = vmatpush.bf16.msra.mxu0 %v3884
      %3908 = vmatmul.bf16.gmra.mxu0 %v2828
      %v3909 = vpop.f32.mrf.mxu0
      %v3910 = vadd.f32 0.0, %v3909
      %v3911 = vpop.f32.mrf.mxu0
      %v3912 = vadd.f32 0.0, %v3911
      %3913 = vmatmul.bf16.gmra.mxu0 %v2829
      %v3914 = vpop.f32.mrf.mxu0
      %v3915 = vadd.f32 0.0, %v3914
      %v3916 = vpop.f32.mrf.mxu0
      %v3917 = vadd.f32 0.0, %v3916
      %3918 = vmatmul.bf16.gmra.mxu0 %v2830
      %v3919 = vpop.f32.mrf.mxu0
      %v3920 = vadd.f32 0.0, %v3919
      %v3921 = vpop.f32.mrf.mxu0
      %v3922 = vadd.f32 0.0, %v3921
      %3923 = vmatmul.bf16.gmra.mxu0 %v2831
      %v3924 = vpop.f32.mrf.mxu0
      %v3925 = vadd.f32 0.0, %v3924
      %v3926 = vpop.f32.mrf.mxu0
      %v3927 = vadd.f32 0.0, %v3926
      %3928 = vmatmul.bf16.gmra.mxu0 %v2832
      %v3929 = vpop.f32.mrf.mxu0
      %v3930 = vadd.f32 0.0, %v3929
      %v3931 = vpop.f32.mrf.mxu0
      %v3932 = vadd.f32 0.0, %v3931
      %3933 = vmatmul.bf16.gmra.mxu0 %v2833
      %v3934 = vpop.f32.mrf.mxu0
      %v3935 = vadd.f32 0.0, %v3934
      %v3936 = vpop.f32.mrf.mxu0
      %v3937 = vadd.f32 0.0, %v3936
      %3938 = vmatmul.bf16.gmra.mxu0 %v2834
      %v3939 = vpop.f32.mrf.mxu0
      %v3940 = vadd.f32 0.0, %v3939
      %v3941 = vpop.f32.mrf.mxu0
      %v3942 = vadd.f32 0.0, %v3941
      %3943 = vmatmul.bf16.gmra.mxu0 %v2835
      %v3944 = vpop.f32.mrf.mxu0
      %v3945 = vadd.f32 0.0, %v3944
      %v3946 = vpop.f32.mrf.mxu0
      %v3947 = vadd.f32 0.0, %v3946
      %3948 = vmatmul.bf16.gmra.mxu0 %v3819
      %v3949 = vpop.f32.mrf.mxu0
      %v3950 = vadd.f32 0.0, %v3949
      %v3951 = vpop.f32.mrf.mxu0
      %v3952 = vadd.f32 0.0, %v3951
      %3953 = vmatmul.bf16.gmra.mxu0 %v3820
      %v3954 = vpop.f32.mrf.mxu0
      %v3955 = vadd.f32 0.0, %v3954
      %v3956 = vpop.f32.mrf.mxu0
      %v3957 = vadd.f32 0.0, %v3956
      %3958 = vmatmul.bf16.gmra.mxu0 %v3821
      %v3959 = vpop.f32.mrf.mxu0
      %v3960 = vadd.f32 0.0, %v3959
      %v3961 = vpop.f32.mrf.mxu0
      %v3962 = vadd.f32 0.0, %v3961
      %3963 = vmatmul.bf16.gmra.mxu0 %v3822
      %v3964 = vpop.f32.mrf.mxu0
      %v3965 = vadd.f32 0.0, %v3964
      %v3966 = vpop.f32.mrf.mxu0
      %v3967 = vadd.f32 0.0, %v3966
      %3968 = vmatmul.bf16.gmra.mxu0 %v3823
      %v3969 = vpop.f32.mrf.mxu0
      %v3970 = vadd.f32 0.0, %v3969
      %v3971 = vpop.f32.mrf.mxu0
      %v3972 = vadd.f32 0.0, %v3971
      %3973 = vmatmul.bf16.gmra.mxu0 %v3824
      %v3974 = vpop.f32.mrf.mxu0
      %v3975 = vadd.f32 0.0, %v3974
      %v3976 = vpop.f32.mrf.mxu0
      %v3977 = vadd.f32 0.0, %v3976
      %3978 = vmatmul.bf16.gmra.mxu0 %v3825
      %v3979 = vpop.f32.mrf.mxu0
      %v3980 = vadd.f32 0.0, %v3979
      %v3981 = vpop.f32.mrf.mxu0
      %v3982 = vadd.f32 0.0, %v3981
      %3983 = vmatmul.bf16.gmra.mxu0 %v3826
      %v3984 = vpop.f32.mrf.mxu0
      %v3985 = vadd.f32 0.0, %v3984
      %v3986 = vpop.f32.mrf.mxu0
      %v3987 = vadd.f32 0.0, %v3986
      %3988 = vdwg.mxu0
      %v3989 = vadd.f32 %v3683, %v3910
      %v3990 = vadd.f32 %v3684, %v3912
      %v3991 = vadd.f32 %v3685, %v3915
      %v3992 = vadd.f32 %v3686, %v3917
      %v3993 = vadd.f32 %v3687, %v3920
      %v3994 = vadd.f32 %v3688, %v3922
      %v3995 = vadd.f32 %v3689, %v3925
      %v3996 = vadd.f32 %v3690, %v3927
      %v3997 = vadd.f32 %v3691, %v3930
      %v3998 = vadd.f32 %v3692, %v3932
      %v3999 = vadd.f32 %v3693, %v3935
      %v4000 = vadd.f32 %v3694, %v3937
      %v4001 = vadd.f32 %v3695, %v3940
      %v4002 = vadd.f32 %v3696, %v3942
      %v4003 = vadd.f32 %v3697, %v3945
      %v4004 = vadd.f32 %v3698, %v3947
      %v4005 = vadd.f32 %v3699, %v3950
      %v4006 = vadd.f32 %v3700, %v3952
      %v4007 = vadd.f32 %v3701, %v3955
      %v4008 = vadd.f32 %v3702, %v3957
      %v4009 = vadd.f32 %v3703, %v3960
      %v4010 = vadd.f32 %v3704, %v3962
      %v4011 = vadd.f32 %v3705, %v3965
      %v4012 = vadd.f32 %v3706, %v3967
      %v4013 = vadd.f32 %v3707, %v3970
      %v4014 = vadd.f32 %v3708, %v3972
      %v4015 = vadd.f32 %v3709, %v3975
      %v4016 = vadd.f32 %v3710, %v3977
      %v4017 = vadd.f32 %v3711, %v3980
      %v4018 = vadd.f32 %v3712, %v3982
      %v4019 = vadd.f32 %v3713, %v3985
      %v4020 = vadd.f32 %v3714, %v3987
      %v4021 = vld [vmem:[%s3] sm:$0x1]
      %v4023 = vperm.slane %v4021, 0
      %v4025 = vmul.f32 %v3989, %v4023
      %v4026 = vmul.f32 %v3990, %v4023
      %v4027 = vmul.f32 %v3991, %v4023
      %v4028 = vmul.f32 %v3992, %v4023
      %v4029 = vmul.f32 %v3993, %v4023
      %v4030 = vmul.f32 %v3994, %v4023
      %v4031 = vmul.f32 %v3995, %v4023
      %v4032 = vmul.f32 %v3996, %v4023
      %v4033 = vmul.f32 %v3997, %v4023
      %v4034 = vmul.f32 %v3998, %v4023
      %v4035 = vmul.f32 %v3999, %v4023
      %v4036 = vmul.f32 %v4000, %v4023
      %v4037 = vmul.f32 %v4001, %v4023
      %v4038 = vmul.f32 %v4002, %v4023
      %v4039 = vmul.f32 %v4003, %v4023
      %v4040 = vmul.f32 %v4004, %v4023
      %v4041 = vmul.f32 %v4005, %v4023
      %v4042 = vmul.f32 %v4006, %v4023
      %v4043 = vmul.f32 %v4007, %v4023
      %v4044 = vmul.f32 %v4008, %v4023
      %v4045 = vmul.f32 %v4009, %v4023
      %v4046 = vmul.f32 %v4010, %v4023
      %v4047 = vmul.f32 %v4011, %v4023
      %v4048 = vmul.f32 %v4012, %v4023
      %v4049 = vmul.f32 %v4013, %v4023
      %v4050 = vmul.f32 %v4014, %v4023
      %v4051 = vmul.f32 %v4015, %v4023
      %v4052 = vmul.f32 %v4016, %v4023
      %v4053 = vmul.f32 %v4017, %v4023
      %v4054 = vmul.f32 %v4018, %v4023
      %v4055 = vmul.f32 %v4019, %v4023
      %v4056 = vmul.f32 %v4020, %v4023
      %v4057 = vld [vmem:[%s4] sm:$0x1]
      %v4059 = vperm.slane %v4057, 0
      %v4061 = vadd.f32 %v4025, %v4059
      %v4062 = vadd.f32 %v4026, %v4059
      %v4063 = vadd.f32 %v4027, %v4059
      %v4064 = vadd.f32 %v4028, %v4059
      %v4065 = vadd.f32 %v4029, %v4059
      %v4066 = vadd.f32 %v4030, %v4059
      %v4067 = vadd.f32 %v4031, %v4059
      %v4068 = vadd.f32 %v4032, %v4059
      %v4069 = vadd.f32 %v4033, %v4059
      %v4070 = vadd.f32 %v4034, %v4059
      %v4071 = vadd.f32 %v4035, %v4059
      %v4072 = vadd.f32 %v4036, %v4059
      %v4073 = vadd.f32 %v4037, %v4059
      %v4074 = vadd.f32 %v4038, %v4059
      %v4075 = vadd.f32 %v4039, %v4059
      %v4076 = vadd.f32 %v4040, %v4059
      %v4077 = vadd.f32 %v4041, %v4059
      %v4078 = vadd.f32 %v4042, %v4059
      %v4079 = vadd.f32 %v4043, %v4059
      %v4080 = vadd.f32 %v4044, %v4059
      %v4081 = vadd.f32 %v4045, %v4059
      %v4082 = vadd.f32 %v4046, %v4059
      %v4083 = vadd.f32 %v4047, %v4059
      %v4084 = vadd.f32 %v4048, %v4059
      %v4085 = vadd.f32 %v4049, %v4059
      %v4086 = vadd.f32 %v4050, %v4059
      %v4087 = vadd.f32 %v4051, %v4059
      %v4088 = vadd.f32 %v4052, %v4059
      %v4089 = vadd.f32 %v4053, %v4059
      %v4090 = vadd.f32 %v4054, %v4059
      %v4091 = vadd.f32 %v4055, %v4059
      %v4092 = vadd.f32 %v4056, %v4059
      %v4093 = vmax.f32 %v4061, 0.0
      %v4094 = vmax.f32 %v4062, 0.0
      %v4095 = vmax.f32 %v4063, 0.0
      %v4096 = vmax.f32 %v4064, 0.0
      %v4097 = vmax.f32 %v4065, 0.0
      %v4098 = vmax.f32 %v4066, 0.0
      %v4099 = vmax.f32 %v4067, 0.0
      %v4100 = vmax.f32 %v4068, 0.0
      %v4101 = vmax.f32 %v4069, 0.0
      %v4102 = vmax.f32 %v4070, 0.0
      %v4103 = vmax.f32 %v4071, 0.0
      %v4104 = vmax.f32 %v4072, 0.0
      %v4105 = vmax.f32 %v4073, 0.0
      %v4106 = vmax.f32 %v4074, 0.0
      %v4107 = vmax.f32 %v4075, 0.0
      %v4108 = vmax.f32 %v4076, 0.0
      %v4109 = vmax.f32 %v4077, 0.0
      %v4110 = vmax.f32 %v4078, 0.0
      %v4111 = vmax.f32 %v4079, 0.0
      %v4112 = vmax.f32 %v4080, 0.0
      %v4113 = vmax.f32 %v4081, 0.0
      %v4114 = vmax.f32 %v4082, 0.0
      %v4115 = vmax.f32 %v4083, 0.0
      %v4116 = vmax.f32 %v4084, 0.0
      %v4117 = vmax.f32 %v4085, 0.0
      %v4118 = vmax.f32 %v4086, 0.0
      %v4119 = vmax.f32 %v4087, 0.0
      %v4120 = vmax.f32 %v4088, 0.0
      %v4121 = vmax.f32 %v4089, 0.0
      %v4122 = vmax.f32 %v4090, 0.0
      %v4123 = vmax.f32 %v4091, 0.0
      %v4124 = vmax.f32 %v4092, 0.0
      %v4125 = vpack.c.bf16 %v4093, %v4093
      %v4126 = vpack.c.bf16 %v4094, %v4094
      %v4127 = vpack.c.bf16 %v4095, %v4095
      %v4128 = vpack.c.bf16 %v4096, %v4096
      %v4129 = vpack.c.bf16 %v4097, %v4097
      %v4130 = vpack.c.bf16 %v4098, %v4098
      %v4131 = vpack.c.bf16 %v4099, %v4099
      %v4132 = vpack.c.bf16 %v4100, %v4100
      %v4133 = vpack.c.bf16 %v4101, %v4101
      %v4134 = vpack.c.bf16 %v4102, %v4102
      %v4135 = vpack.c.bf16 %v4103, %v4103
      %v4136 = vpack.c.bf16 %v4104, %v4104
      %v4137 = vpack.c.bf16 %v4105, %v4105
      %v4138 = vpack.c.bf16 %v4106, %v4106
      %v4139 = vpack.c.bf16 %v4107, %v4107
      %v4140 = vpack.c.bf16 %v4108, %v4108
      %v4141 = vpack.c.bf16 %v4109, %v4109
      %v4142 = vpack.c.bf16 %v4110, %v4110
      %v4143 = vpack.c.bf16 %v4111, %v4111
      %v4144 = vpack.c.bf16 %v4112, %v4112
      %v4145 = vpack.c.bf16 %v4113, %v4113
      %v4146 = vpack.c.bf16 %v4114, %v4114
      %v4147 = vpack.c.bf16 %v4115, %v4115
      %v4148 = vpack.c.bf16 %v4116, %v4116
      %v4149 = vpack.c.bf16 %v4117, %v4117
      %v4150 = vpack.c.bf16 %v4118, %v4118
      %v4151 = vpack.c.bf16 %v4119, %v4119
      %v4152 = vpack.c.bf16 %v4120, %v4120
      %v4153 = vpack.c.bf16 %v4121, %v4121
      %v4154 = vpack.c.bf16 %v4122, %v4122
      %v4155 = vpack.c.bf16 %v4123, %v4123
      %v4156 = vpack.c.bf16 %v4124, %v4124
      %4157 = vst.msk [vmem:[#allocation4] sm:$0x1] %vm354, 0
      %4158 = vst.msk [vmem:[#allocation4 + $0xc] sm:$0x1] %vm354, 0
      %4159 = vst.msk [vmem:[#allocation4 + $0x18] sm:$0x1] %vm354, 0
      %4160 = vst.msk [vmem:[#allocation4 + $0x24] sm:$0x1] %vm354, 0
      %4161 = vst.msk [vmem:[#allocation4 + $0x30] sm:$0x1] %vm354, 0
      %4162 = vst.msk [vmem:[#allocation4 + $0x3c] sm:$0x1] %vm354, 0
      %4163 = vst.msk [vmem:[#allocation4 + $0x48] sm:$0x1] %vm354, 0
      %4164 = vst.msk [vmem:[#allocation4 + $0x54] sm:$0x1] %vm354, 0
      %4165 = vst.msk [vmem:[#allocation4 + $0x60] sm:$0x1] %vm354, 0
      %vm4166 = vcmask 517121
      %4167 = vst.msk [vmem:[#allocation4 + $0x8] sm:$0x2] %vm4166, 0
      %4168 = vst.msk [vmem:[#allocation4 + $0x14] sm:$0x2] %vm4166, 0
      %4169 = vst.msk [vmem:[#allocation4 + $0x20] sm:$0x2] %vm4166, 0
      %4170 = vst.msk [vmem:[#allocation4 + $0x2c] sm:$0x2] %vm4166, 0
      %4171 = vst.msk [vmem:[#allocation4 + $0x38] sm:$0x2] %vm4166, 0
      %4172 = vst.msk [vmem:[#allocation4 + $0x44] sm:$0x2] %vm4166, 0
      %4173 = vst.msk [vmem:[#allocation4 + $0x50] sm:$0x2] %vm4166, 0
      %4174 = vst.msk [vmem:[#allocation4 + $0x5c] sm:$0x2] %vm4166, 0
      %4175 = vst.msk [vmem:[#allocation4 + $0x68] sm:$0x2] %vm4166, 0
      %4176 = vst.msk [vmem:[#allocation5] sm:$0x1] %vm354, 0
      %4177 = vst.msk [vmem:[#allocation5 + $0xc] sm:$0x1] %vm354, 0
      %4178 = vst.msk [vmem:[#allocation5 + $0x18] sm:$0x1] %vm354, 0
      %4179 = vst.msk [vmem:[#allocation5 + $0x24] sm:$0x1] %vm354, 0
      %4180 = vst.msk [vmem:[#allocation5 + $0x30] sm:$0x1] %vm354, 0
      %4181 = vst.msk [vmem:[#allocation5 + $0x3c] sm:$0x1] %vm354, 0
      %4182 = vst.msk [vmem:[#allocation5 + $0x48] sm:$0x1] %vm354, 0
      %4183 = vst.msk [vmem:[#allocation5 + $0x54] sm:$0x1] %vm354, 0
      %4184 = vst.msk [vmem:[#allocation5 + $0x60] sm:$0x1] %vm354, 0
      %4185 = vst.msk [vmem:[#allocation5 + $0x8] sm:$0x2] %vm4166, 0
      %4186 = vst.msk [vmem:[#allocation5 + $0x14] sm:$0x2] %vm4166, 0
      %4187 = vst.msk [vmem:[#allocation5 + $0x20] sm:$0x2] %vm4166, 0
      %4188 = vst.msk [vmem:[#allocation5 + $0x2c] sm:$0x2] %vm4166, 0
      %4189 = vst.msk [vmem:[#allocation5 + $0x38] sm:$0x2] %vm4166, 0
      %4190 = vst.msk [vmem:[#allocation5 + $0x44] sm:$0x2] %vm4166, 0
      %4191 = vst.msk [vmem:[#allocation5 + $0x50] sm:$0x2] %vm4166, 0
      %4192 = vst.msk [vmem:[#allocation5 + $0x5c] sm:$0x2] %vm4166, 0
      %4193 = vst.msk [vmem:[#allocation5 + $0x68] sm:$0x2] %vm4166, 0
      %4194 = vst.msk [vmem:[#allocation4] sm:$0xf] %vm351, 0
      %4195 = vst.msk [vmem:[#allocation4 + $0x4] sm:$0xf] %vm351, 0
      %vm4196 = vcmask 517120
      %4197 = vst.msk [vmem:[#allocation4 + $0x8] sm:$0x3] %vm4196, 0
      %s4198 = scalar_lea.vmem [#allocation5], 96
      %4199 = vst.msk [vmem:[%s4198] sm:$0xf] %vm351, 0
      %4200 = vst.msk [vmem:[%s4198 + $0x4] sm:$0xf] %vm351, 0
      %4201 = vst.msk [vmem:[%s4198 + $0x8] sm:$0x3] %vm4196, 0
      %vm4218 = vcmask 1040384
      %vm4219 = vcmask 1044484
      %vm4220 = vmor %vm4218, %vm4219
      %v4221 = vrot.slane %v4125, 7
      %v4222 = vrot.slane %v4221, 4
      %v4223 = vrot.slane %v4126, 7
      %v4224 = vsel %vm4220, %v4222, %v4223
      %v4225 = vrot.slane %v4223, 4
      %v4226 = vrot.slane %v4127, 7
      %v4227 = vrot.slane %v4226, 4
      %v4228 = vrot.slane %v4128, 7
      %v4229 = vsel %vm4220, %v4227, %v4228
      %v4230 = vrot.slane %v4228, 4
      %v4231 = vrot.slane %v4129, 7
      %v4232 = vrot.slane %v4231, 4
      %v4233 = vrot.slane %v4130, 7
      %v4234 = vsel %vm4220, %v4232, %v4233
      %v4235 = vrot.slane %v4233, 4
      %v4236 = vrot.slane %v4131, 7
      %v4237 = vrot.slane %v4236, 4
      %v4238 = vrot.slane %v4132, 7
      %v4239 = vsel %vm4220, %v4237, %v4238
      %v4240 = vrot.slane %v4238, 4
      %v4241 = vrot.slane %v4133, 7
      %v4242 = vrot.slane %v4241, 4
      %v4243 = vrot.slane %v4134, 7
      %v4244 = vsel %vm4220, %v4242, %v4243
      %v4245 = vrot.slane %v4243, 4
      %v4246 = vrot.slane %v4135, 7
      %v4247 = vrot.slane %v4246, 4
      %v4248 = vrot.slane %v4136, 7
      %v4249 = vsel %vm4220, %v4247, %v4248
      %v4250 = vrot.slane %v4248, 4
      %v4251 = vrot.slane %v4137, 7
      %v4252 = vrot.slane %v4251, 4
      %v4253 = vrot.slane %v4138, 7
      %v4254 = vsel %vm4220, %v4252, %v4253
      %v4255 = vrot.slane %v4253, 4
      %v4256 = vrot.slane %v4139, 7
      %v4257 = vrot.slane %v4256, 4
      %v4258 = vrot.slane %v4140, 7
      %v4259 = vsel %vm4220, %v4257, %v4258
      %v4260 = vrot.slane %v4258, 4
      %vm4285 = vcmask 519169
      %4286 = vst.msk [vmem:[#allocation5] sm:$0xe] %vm4285, %v4221
      %4287 = vst.msk [vmem:[#allocation5 + $0x4] sm:$0xf] %vm351, %v4224
      %4288 = vst.msk [vmem:[#allocation5 + $0x8] sm:$0x1] %vm354, %v4225
      %4289 = vst.msk [vmem:[#allocation5 + $0xc] sm:$0xe] %vm4285, %v4226
      %4290 = vst.msk [vmem:[#allocation5 + $0x10] sm:$0xf] %vm351, %v4229
      %4291 = vst.msk [vmem:[#allocation5 + $0x14] sm:$0x1] %vm354, %v4230
      %4292 = vst.msk [vmem:[#allocation5 + $0x18] sm:$0xe] %vm4285, %v4231
      %4293 = vst.msk [vmem:[#allocation5 + $0x1c] sm:$0xf] %vm351, %v4234
      %4294 = vst.msk [vmem:[#allocation5 + $0x20] sm:$0x1] %vm354, %v4235
      %4295 = vst.msk [vmem:[#allocation5 + $0x24] sm:$0xe] %vm4285, %v4236
      %4296 = vst.msk [vmem:[#allocation5 + $0x28] sm:$0xf] %vm351, %v4239
      %4297 = vst.msk [vmem:[#allocation5 + $0x2c] sm:$0x1] %vm354, %v4240
      %4298 = vst.msk [vmem:[#allocation5 + $0x30] sm:$0xe] %vm4285, %v4241
      %4299 = vst.msk [vmem:[#allocation5 + $0x34] sm:$0xf] %vm351, %v4244
      %4300 = vst.msk [vmem:[#allocation5 + $0x38] sm:$0x1] %vm354, %v4245
      %4301 = vst.msk [vmem:[#allocation5 + $0x3c] sm:$0xe] %vm4285, %v4246
      %4302 = vst.msk [vmem:[#allocation5 + $0x40] sm:$0xf] %vm351, %v4249
      %4303 = vst.msk [vmem:[#allocation5 + $0x44] sm:$0x1] %vm354, %v4250
      %4304 = vst.msk [vmem:[#allocation5 + $0x48] sm:$0xe] %vm4285, %v4251
      %4305 = vst.msk [vmem:[#allocation5 + $0x4c] sm:$0xf] %vm351, %v4254
      %4306 = vst.msk [vmem:[#allocation5 + $0x50] sm:$0x1] %vm354, %v4255
      %4307 = vst.msk [vmem:[#allocation5 + $0x54] sm:$0xe] %vm4285, %v4256
      %4308 = vst.msk [vmem:[#allocation5 + $0x58] sm:$0xf] %vm351, %v4259
      %4309 = vst.msk [vmem:[#allocation5 + $0x5c] sm:$0x1] %vm354, %v4260
      %v4326 = vrot.slane %v4141, 7
      %v4327 = vrot.slane %v4326, 4
      %v4328 = vrot.slane %v4142, 7
      %v4329 = vsel %vm4220, %v4327, %v4328
      %v4330 = vrot.slane %v4328, 4
      %v4331 = vrot.slane %v4143, 7
      %v4332 = vrot.slane %v4331, 4
      %v4333 = vrot.slane %v4144, 7
      %v4334 = vsel %vm4220, %v4332, %v4333
      %v4335 = vrot.slane %v4333, 4
      %v4336 = vrot.slane %v4145, 7
      %v4337 = vrot.slane %v4336, 4
      %v4338 = vrot.slane %v4146, 7
      %v4339 = vsel %vm4220, %v4337, %v4338
      %v4340 = vrot.slane %v4338, 4
      %v4341 = vrot.slane %v4147, 7
      %v4342 = vrot.slane %v4341, 4
      %v4343 = vrot.slane %v4148, 7
      %v4344 = vsel %vm4220, %v4342, %v4343
      %v4345 = vrot.slane %v4343, 4
      %v4346 = vrot.slane %v4149, 7
      %v4347 = vrot.slane %v4346, 4
      %v4348 = vrot.slane %v4150, 7
      %v4349 = vsel %vm4220, %v4347, %v4348
      %v4350 = vrot.slane %v4348, 4
      %v4351 = vrot.slane %v4151, 7
      %v4352 = vrot.slane %v4351, 4
      %v4353 = vrot.slane %v4152, 7
      %v4354 = vsel %vm4220, %v4352, %v4353
      %v4355 = vrot.slane %v4353, 4
      %v4356 = vrot.slane %v4153, 7
      %v4357 = vrot.slane %v4356, 4
      %v4358 = vrot.slane %v4154, 7
      %v4359 = vsel %vm4220, %v4357, %v4358
      %v4360 = vrot.slane %v4358, 4
      %v4361 = vrot.slane %v4155, 7
      %v4362 = vrot.slane %v4361, 4
      %v4363 = vrot.slane %v4156, 7
      %v4364 = vsel %vm4220, %v4362, %v4363
      %v4365 = vrot.slane %v4363, 4
      %s4390 = scalar_lea.vmem [#allocation4], 12
      %4391 = vst.msk [vmem:[%s4390] sm:$0xe] %vm4285, %v4326
      %4392 = vst.msk [vmem:[%s4390 + $0x4] sm:$0xf] %vm351, %v4329
      %4393 = vst.msk [vmem:[%s4390 + $0x8] sm:$0x1] %vm354, %v4330
      %4394 = vst.msk [vmem:[%s4390 + $0xc] sm:$0xe] %vm4285, %v4331
      %4395 = vst.msk [vmem:[%s4390 + $0x10] sm:$0xf] %vm351, %v4334
      %4396 = vst.msk [vmem:[%s4390 + $0x14] sm:$0x1] %vm354, %v4335
      %4397 = vst.msk [vmem:[%s4390 + $0x18] sm:$0xe] %vm4285, %v4336
      %4398 = vst.msk [vmem:[%s4390 + $0x1c] sm:$0xf] %vm351, %v4339
      %4399 = vst.msk [vmem:[%s4390 + $0x20] sm:$0x1] %vm354, %v4340
      %4400 = vst.msk [vmem:[%s4390 + $0x24] sm:$0xe] %vm4285, %v4341
      %4401 = vst.msk [vmem:[%s4390 + $0x28] sm:$0xf] %vm351, %v4344
      %4402 = vst.msk [vmem:[%s4390 + $0x2c] sm:$0x1] %vm354, %v4345
      %4403 = vst.msk [vmem:[%s4390 + $0x30] sm:$0xe] %vm4285, %v4346
      %4404 = vst.msk [vmem:[%s4390 + $0x34] sm:$0xf] %vm351, %v4349
      %4405 = vst.msk [vmem:[%s4390 + $0x38] sm:$0x1] %vm354, %v4350
      %4406 = vst.msk [vmem:[%s4390 + $0x3c] sm:$0xe] %vm4285, %v4351
      %4407 = vst.msk [vmem:[%s4390 + $0x40] sm:$0xf] %vm351, %v4354
      %4408 = vst.msk [vmem:[%s4390 + $0x44] sm:$0x1] %vm354, %v4355
      %4409 = vst.msk [vmem:[%s4390 + $0x48] sm:$0xe] %vm4285, %v4356
      %4410 = vst.msk [vmem:[%s4390 + $0x4c] sm:$0xf] %vm351, %v4359
      %4411 = vst.msk [vmem:[%s4390 + $0x50] sm:$0x1] %vm354, %v4360
      %4412 = vst.msk [vmem:[%s4390 + $0x54] sm:$0xe] %vm4285, %v4361
      %4413 = vst.msk [vmem:[%s4390 + $0x58] sm:$0xf] %vm351, %v4364
      %4414 = vst.msk [vmem:[%s4390 + $0x5c] sm:$0x1] %vm354, %v4365
      %v4415 = vld [vmem:[#allocation4] sm:$0xf]
      %v4416 = vld [vmem:[#allocation4 + $0x4] sm:$0xf]
      %v4417 = vld [vmem:[#allocation4 + $0x8] sm:$0x1]
      %v4418 = vld [vmem:[#allocation4 + $0xc] sm:$0xf]
      %v4419 = vld [vmem:[#allocation4 + $0x10] sm:$0xf]
      %v4420 = vld [vmem:[#allocation4 + $0x14] sm:$0x1]
      %v4421 = vld [vmem:[#allocation4 + $0x18] sm:$0xf]
      %v4422 = vld [vmem:[#allocation4 + $0x1c] sm:$0xf]
      %v4423 = vld [vmem:[#allocation4 + $0x20] sm:$0x1]
      %v4424 = vld [vmem:[#allocation4 + $0x24] sm:$0xf]
      %v4425 = vld [vmem:[#allocation4 + $0x28] sm:$0xf]
      %v4426 = vld [vmem:[#allocation4 + $0x2c] sm:$0x1]
      %v4427 = vld [vmem:[#allocation4 + $0x30] sm:$0xf]
      %v4428 = vld [vmem:[#allocation4 + $0x34] sm:$0xf]
      %v4429 = vld [vmem:[#allocation4 + $0x38] sm:$0x1]
      %v4430 = vld [vmem:[#allocation4 + $0x3c] sm:$0xf]
      %v4431 = vld [vmem:[#allocation4 + $0x40] sm:$0xf]
      %v4432 = vld [vmem:[#allocation4 + $0x44] sm:$0x1]
      %v4433 = vld [vmem:[#allocation4 + $0x48] sm:$0xf]
      %v4434 = vld [vmem:[#allocation4 + $0x4c] sm:$0xf]
      %v4435 = vld [vmem:[#allocation4 + $0x50] sm:$0x1]
      %v4436 = vld [vmem:[#allocation4 + $0x54] sm:$0xf]
      %v4437 = vld [vmem:[#allocation4 + $0x58] sm:$0xf]
      %v4438 = vld [vmem:[#allocation4 + $0x5c] sm:$0x1]
      %v4440 = vshrl.u32 %v4415, 16
      %v4442 = vrot.slane %v4440, 4
      %v4443 = vshll.u32 %v4415, 16
      %v4445 = vrot.slane %v4443, 5
      %v4446 = vor.u32 %v4442, %v4445
      %v4447 = vrot.slane %v4446, 4
      %v4449 = vshll.u32 %v4416, 16
      %v4451 = vrot.slane %v4449, 5
      %v4452 = vsel %vm879, %v4447, %v4451
      %v4453 = vshrl.u32 %v4416, 16
      %v4455 = vrot.slane %v4453, 4
      %v4456 = vor.u32 %v4455, %v4451
      %v4457 = vrot.slane %v4456, 4
      %v4459 = vshll.u32 %v4417, 16
      %v4461 = vrot.slane %v4459, 5
      %v4462 = vsel %vm879, %v4457, %v4461
      %v4464 = vshrl.u32 %v4418, 16
      %v4466 = vrot.slane %v4464, 4
      %v4467 = vshll.u32 %v4418, 16
      %v4469 = vrot.slane %v4467, 5
      %v4470 = vor.u32 %v4466, %v4469
      %v4471 = vrot.slane %v4470, 4
      %v4473 = vshll.u32 %v4419, 16
      %v4475 = vrot.slane %v4473, 5
      %v4476 = vsel %vm879, %v4471, %v4475
      %v4477 = vshrl.u32 %v4419, 16
      %v4479 = vrot.slane %v4477, 4
      %v4480 = vor.u32 %v4479, %v4475
      %v4481 = vrot.slane %v4480, 4
      %v4483 = vshll.u32 %v4420, 16
      %v4485 = vrot.slane %v4483, 5
      %v4486 = vsel %vm879, %v4481, %v4485
      %v4488 = vshrl.u32 %v4421, 16
      %v4490 = vrot.slane %v4488, 4
      %v4491 = vshll.u32 %v4421, 16
      %v4493 = vrot.slane %v4491, 5
      %v4494 = vor.u32 %v4490, %v4493
      %v4495 = vrot.slane %v4494, 4
      %v4497 = vshll.u32 %v4422, 16
      %v4499 = vrot.slane %v4497, 5
      %v4500 = vsel %vm879, %v4495, %v4499
      %v4501 = vshrl.u32 %v4422, 16
      %v4503 = vrot.slane %v4501, 4
      %v4504 = vor.u32 %v4503, %v4499
      %v4505 = vrot.slane %v4504, 4
      %v4507 = vshll.u32 %v4423, 16
      %v4509 = vrot.slane %v4507, 5
      %v4510 = vsel %vm879, %v4505, %v4509
      %v4512 = vshrl.u32 %v4424, 16
      %v4514 = vrot.slane %v4512, 4
      %v4515 = vshll.u32 %v4424, 16
      %v4517 = vrot.slane %v4515, 5
      %v4518 = vor.u32 %v4514, %v4517
      %v4519 = vrot.slane %v4518, 4
      %v4521 = vshll.u32 %v4425, 16
      %v4523 = vrot.slane %v4521, 5
      %v4524 = vsel %vm879, %v4519, %v4523
      %v4525 = vshrl.u32 %v4425, 16
      %v4527 = vrot.slane %v4525, 4
      %v4528 = vor.u32 %v4527, %v4523
      %v4529 = vrot.slane %v4528, 4
      %v4531 = vshll.u32 %v4426, 16
      %v4533 = vrot.slane %v4531, 5
      %v4534 = vsel %vm879, %v4529, %v4533
      %v4536 = vshrl.u32 %v4427, 16
      %v4538 = vrot.slane %v4536, 4
      %v4539 = vshll.u32 %v4427, 16
      %v4541 = vrot.slane %v4539, 5
      %v4542 = vor.u32 %v4538, %v4541
      %v4543 = vrot.slane %v4542, 4
      %v4545 = vshll.u32 %v4428, 16
      %v4547 = vrot.slane %v4545, 5
      %v4548 = vsel %vm879, %v4543, %v4547
      %v4549 = vshrl.u32 %v4428, 16
      %v4551 = vrot.slane %v4549, 4
      %v4552 = vor.u32 %v4551, %v4547
      %v4553 = vrot.slane %v4552, 4
      %v4555 = vshll.u32 %v4429, 16
      %v4557 = vrot.slane %v4555, 5
      %v4558 = vsel %vm879, %v4553, %v4557
      %v4560 = vshrl.u32 %v4430, 16
      %v4562 = vrot.slane %v4560, 4
      %v4563 = vshll.u32 %v4430, 16
      %v4565 = vrot.slane %v4563, 5
      %v4566 = vor.u32 %v4562, %v4565
      %v4567 = vrot.slane %v4566, 4
      %v4569 = vshll.u32 %v4431, 16
      %v4571 = vrot.slane %v4569, 5
      %v4572 = vsel %vm879, %v4567, %v4571
      %v4573 = vshrl.u32 %v4431, 16
      %v4575 = vrot.slane %v4573, 4
      %v4576 = vor.u32 %v4575, %v4571
      %v4577 = vrot.slane %v4576, 4
      %v4579 = vshll.u32 %v4432, 16
      %v4581 = vrot.slane %v4579, 5
      %v4582 = vsel %vm879, %v4577, %v4581
      %v4584 = vshrl.u32 %v4433, 16
      %v4586 = vrot.slane %v4584, 4
      %v4587 = vshll.u32 %v4433, 16
      %v4589 = vrot.slane %v4587, 5
      %v4590 = vor.u32 %v4586, %v4589
      %v4591 = vrot.slane %v4590, 4
      %v4593 = vshll.u32 %v4434, 16
      %v4595 = vrot.slane %v4593, 5
      %v4596 = vsel %vm879, %v4591, %v4595
      %v4597 = vshrl.u32 %v4434, 16
      %v4599 = vrot.slane %v4597, 4
      %v4600 = vor.u32 %v4599, %v4595
      %v4601 = vrot.slane %v4600, 4
      %v4603 = vshll.u32 %v4435, 16
      %v4605 = vrot.slane %v4603, 5
      %v4606 = vsel %vm879, %v4601, %v4605
      %v4608 = vshrl.u32 %v4436, 16
      %v4610 = vrot.slane %v4608, 4
      %v4611 = vshll.u32 %v4436, 16
      %v4613 = vrot.slane %v4611, 5
      %v4614 = vor.u32 %v4610, %v4613
      %v4615 = vrot.slane %v4614, 4
      %v4617 = vshll.u32 %v4437, 16
      %v4619 = vrot.slane %v4617, 5
      %v4620 = vsel %vm879, %v4615, %v4619
      %v4621 = vshrl.u32 %v4437, 16
      %v4623 = vrot.slane %v4621, 4
      %v4624 = vor.u32 %v4623, %v4619
      %v4625 = vrot.slane %v4624, 4
      %v4627 = vshll.u32 %v4438, 16
      %v4629 = vrot.slane %v4627, 5
      %v4630 = vsel %vm879, %v4625, %v4629
      %v4631 = vld [vmem:[#allocation5] sm:$0xf]
      %v4632 = vld [vmem:[#allocation5 + $0x4] sm:$0xf]
      %v4633 = vld [vmem:[#allocation5 + $0x8] sm:$0x1]
      %v4634 = vld [vmem:[#allocation5 + $0xc] sm:$0xf]
      %v4635 = vld [vmem:[#allocation5 + $0x10] sm:$0xf]
      %v4636 = vld [vmem:[#allocation5 + $0x14] sm:$0x1]
      %v4637 = vld [vmem:[#allocation5 + $0x18] sm:$0xf]
      %v4638 = vld [vmem:[#allocation5 + $0x1c] sm:$0xf]
      %v4639 = vld [vmem:[#allocation5 + $0x20] sm:$0x1]
      %v4640 = vld [vmem:[#allocation5 + $0x24] sm:$0xf]
      %v4641 = vld [vmem:[#allocation5 + $0x28] sm:$0xf]
      %v4642 = vld [vmem:[#allocation5 + $0x2c] sm:$0x1]
      %v4643 = vld [vmem:[#allocation5 + $0x30] sm:$0xf]
      %v4644 = vld [vmem:[#allocation5 + $0x34] sm:$0xf]
      %v4645 = vld [vmem:[#allocation5 + $0x38] sm:$0x1]
      %v4646 = vld [vmem:[#allocation5 + $0x3c] sm:$0xf]
      %v4647 = vld [vmem:[#allocation5 + $0x40] sm:$0xf]
      %v4648 = vld [vmem:[#allocation5 + $0x44] sm:$0x1]
      %v4649 = vld [vmem:[#allocation5 + $0x48] sm:$0xf]
      %v4650 = vld [vmem:[#allocation5 + $0x4c] sm:$0xf]
      %v4651 = vld [vmem:[#allocation5 + $0x50] sm:$0x1]
      %v4652 = vld [vmem:[#allocation5 + $0x54] sm:$0xf]
      %v4653 = vld [vmem:[#allocation5 + $0x58] sm:$0xf]
      %v4654 = vld [vmem:[#allocation5 + $0x5c] sm:$0x1]
      %v4656 = vshrl.u32 %v4631, 16
      %v4658 = vrot.slane %v4656, 4
      %v4659 = vshll.u32 %v4631, 16
      %v4661 = vrot.slane %v4659, 5
      %v4662 = vor.u32 %v4658, %v4661
      %v4663 = vrot.slane %v4662, 4
      %v4665 = vshll.u32 %v4632, 16
      %v4667 = vrot.slane %v4665, 5
      %v4668 = vsel %vm879, %v4663, %v4667
      %v4669 = vshrl.u32 %v4632, 16
      %v4671 = vrot.slane %v4669, 4
      %v4672 = vor.u32 %v4671, %v4667
      %v4673 = vrot.slane %v4672, 4
      %v4675 = vshll.u32 %v4633, 16
      %v4677 = vrot.slane %v4675, 5
      %v4678 = vsel %vm879, %v4673, %v4677
      %v4680 = vshrl.u32 %v4634, 16
      %v4682 = vrot.slane %v4680, 4
      %v4683 = vshll.u32 %v4634, 16
      %v4685 = vrot.slane %v4683, 5
      %v4686 = vor.u32 %v4682, %v4685
      %v4687 = vrot.slane %v4686, 4
      %v4689 = vshll.u32 %v4635, 16
      %v4691 = vrot.slane %v4689, 5
      %v4692 = vsel %vm879, %v4687, %v4691
      %v4693 = vshrl.u32 %v4635, 16
      %v4695 = vrot.slane %v4693, 4
      %v4696 = vor.u32 %v4695, %v4691
      %v4697 = vrot.slane %v4696, 4
      %v4699 = vshll.u32 %v4636, 16
      %v4701 = vrot.slane %v4699, 5
      %v4702 = vsel %vm879, %v4697, %v4701
      %v4704 = vshrl.u32 %v4637, 16
      %v4706 = vrot.slane %v4704, 4
      %v4707 = vshll.u32 %v4637, 16
      %v4709 = vrot.slane %v4707, 5
      %v4710 = vor.u32 %v4706, %v4709
      %v4711 = vrot.slane %v4710, 4
      %v4713 = vshll.u32 %v4638, 16
      %v4715 = vrot.slane %v4713, 5
      %v4716 = vsel %vm879, %v4711, %v4715
      %v4717 = vshrl.u32 %v4638, 16
      %v4719 = vrot.slane %v4717, 4
      %v4720 = vor.u32 %v4719, %v4715
      %v4721 = vrot.slane %v4720, 4
      %v4723 = vshll.u32 %v4639, 16
      %v4725 = vrot.slane %v4723, 5
      %v4726 = vsel %vm879, %v4721, %v4725
      %v4728 = vshrl.u32 %v4640, 16
      %v4730 = vrot.slane %v4728, 4
      %v4731 = vshll.u32 %v4640, 16
      %v4733 = vrot.slane %v4731, 5
      %v4734 = vor.u32 %v4730, %v4733
      %v4735 = vrot.slane %v4734, 4
      %v4737 = vshll.u32 %v4641, 16
      %v4739 = vrot.slane %v4737, 5
      %v4740 = vsel %vm879, %v4735, %v4739
      %v4741 = vshrl.u32 %v4641, 16
      %v4743 = vrot.slane %v4741, 4
      %v4744 = vor.u32 %v4743, %v4739
      %v4745 = vrot.slane %v4744, 4
      %v4747 = vshll.u32 %v4642, 16
      %v4749 = vrot.slane %v4747, 5
      %v4750 = vsel %vm879, %v4745, %v4749
      %v4752 = vshrl.u32 %v4643, 16
      %v4754 = vrot.slane %v4752, 4
      %v4755 = vshll.u32 %v4643, 16
      %v4757 = vrot.slane %v4755, 5
      %v4758 = vor.u32 %v4754, %v4757
      %v4759 = vrot.slane %v4758, 4
      %v4761 = vshll.u32 %v4644, 16
      %v4763 = vrot.slane %v4761, 5
      %v4764 = vsel %vm879, %v4759, %v4763
      %v4765 = vshrl.u32 %v4644, 16
      %v4767 = vrot.slane %v4765, 4
      %v4768 = vor.u32 %v4767, %v4763
      %v4769 = vrot.slane %v4768, 4
      %v4771 = vshll.u32 %v4645, 16
      %v4773 = vrot.slane %v4771, 5
      %v4774 = vsel %vm879, %v4769, %v4773
      %v4776 = vshrl.u32 %v4646, 16
      %v4778 = vrot.slane %v4776, 4
      %v4779 = vshll.u32 %v4646, 16
      %v4781 = vrot.slane %v4779, 5
      %v4782 = vor.u32 %v4778, %v4781
      %v4783 = vrot.slane %v4782, 4
      %v4785 = vshll.u32 %v4647, 16
      %v4787 = vrot.slane %v4785, 5
      %v4788 = vsel %vm879, %v4783, %v4787
      %v4789 = vshrl.u32 %v4647, 16
      %v4791 = vrot.slane %v4789, 4
      %v4792 = vor.u32 %v4791, %v4787
      %v4793 = vrot.slane %v4792, 4
      %v4795 = vshll.u32 %v4648, 16
      %v4797 = vrot.slane %v4795, 5
      %v4798 = vsel %vm879, %v4793, %v4797
      %v4800 = vshrl.u32 %v4649, 16
      %v4802 = vrot.slane %v4800, 4
      %v4803 = vshll.u32 %v4649, 16
      %v4805 = vrot.slane %v4803, 5
      %v4806 = vor.u32 %v4802, %v4805
      %v4807 = vrot.slane %v4806, 4
      %v4809 = vshll.u32 %v4650, 16
      %v4811 = vrot.slane %v4809, 5
      %v4812 = vsel %vm879, %v4807, %v4811
      %v4813 = vshrl.u32 %v4650, 16
      %v4815 = vrot.slane %v4813, 4
      %v4816 = vor.u32 %v4815, %v4811
      %v4817 = vrot.slane %v4816, 4
      %v4819 = vshll.u32 %v4651, 16
      %v4821 = vrot.slane %v4819, 5
      %v4822 = vsel %vm879, %v4817, %v4821
      %v4824 = vshrl.u32 %v4652, 16
      %v4826 = vrot.slane %v4824, 4
      %v4827 = vshll.u32 %v4652, 16
      %v4829 = vrot.slane %v4827, 5
      %v4830 = vor.u32 %v4826, %v4829
      %v4831 = vrot.slane %v4830, 4
      %v4833 = vshll.u32 %v4653, 16
      %v4835 = vrot.slane %v4833, 5
      %v4836 = vsel %vm879, %v4831, %v4835
      %v4837 = vshrl.u32 %v4653, 16
      %v4839 = vrot.slane %v4837, 4
      %v4840 = vor.u32 %v4839, %v4835
      %v4841 = vrot.slane %v4840, 4
      %v4843 = vshll.u32 %v4654, 16
      %v4845 = vrot.slane %v4843, 5
      %v4846 = vsel %vm879, %v4841, %v4845
      %v4847 = vunpack.c.l.b16 %v4452
      %v4848 = vunpack.c.l.b16 %v4462
      %v4849 = vunpack.c.l.b16 %v4476
      %v4850 = vunpack.c.l.b16 %v4486
      %v4851 = vunpack.c.l.b16 %v4500
      %v4852 = vunpack.c.l.b16 %v4510
      %v4853 = vunpack.c.l.b16 %v4524
      %v4854 = vunpack.c.l.b16 %v4534
      %v4855 = vunpack.c.l.b16 %v4548
      %v4856 = vunpack.c.l.b16 %v4558
      %v4857 = vunpack.c.l.b16 %v4572
      %v4858 = vunpack.c.l.b16 %v4582
      %v4859 = vunpack.c.l.b16 %v4596
      %v4860 = vunpack.c.l.b16 %v4606
      %v4861 = vunpack.c.l.b16 %v4620
      %v4862 = vunpack.c.l.b16 %v4630
      %v4863 = vpack.c.b16 %v4848, %v4847
      %v4864 = vpack.c.b16 %v4850, %v4849
      %v4865 = vpack.c.b16 %v4852, %v4851
      %v4866 = vpack.c.b16 %v4854, %v4853
      %v4867 = vpack.c.b16 %v4856, %v4855
      %v4868 = vpack.c.b16 %v4858, %v4857
      %v4869 = vpack.c.b16 %v4860, %v4859
      %v4870 = vpack.c.b16 %v4862, %v4861
      %v4871 = vunpack.c.l.b16 %v4668
      %v4872 = vunpack.c.l.b16 %v4678
      %v4873 = vunpack.c.l.b16 %v4692
      %v4874 = vunpack.c.l.b16 %v4702
      %v4875 = vunpack.c.l.b16 %v4716
      %v4876 = vunpack.c.l.b16 %v4726
      %v4877 = vunpack.c.l.b16 %v4740
      %v4878 = vunpack.c.l.b16 %v4750
      %v4879 = vunpack.c.l.b16 %v4764
      %v4880 = vunpack.c.l.b16 %v4774
      %v4881 = vunpack.c.l.b16 %v4788
      %v4882 = vunpack.c.l.b16 %v4798
      %v4883 = vunpack.c.l.b16 %v4812
      %v4884 = vunpack.c.l.b16 %v4822
      %v4885 = vunpack.c.l.b16 %v4836
      %v4886 = vunpack.c.l.b16 %v4846
      %v4887 = vpack.c.b16 %v4872, %v4871
      %v4888 = vpack.c.b16 %v4874, %v4873
      %v4889 = vpack.c.b16 %v4876, %v4875
      %v4890 = vpack.c.b16 %v4878, %v4877
      %v4891 = vpack.c.b16 %v4880, %v4879
      %v4892 = vpack.c.b16 %v4882, %v4881
      %v4893 = vpack.c.b16 %v4884, %v4883
      %v4894 = vpack.c.b16 %v4886, %v4885
      %v4895 = vld [vmem:[%s5] sm:$0xf]
      %v4896 = vld [vmem:[%s5 + $0x4] sm:$0xf]
      %v4897 = vld [vmem:[%s5 + $0x8] sm:$0xf]
      %v4898 = vld [vmem:[%s5 + $0xc] sm:$0xf]
      %v4899 = vld [vmem:[%s5 + $0x10] sm:$0xf]
      %v4900 = vld [vmem:[%s5 + $0x14] sm:$0xf]
      %v4901 = vld [vmem:[%s5 + $0x18] sm:$0xf]
      %v4902 = vld [vmem:[%s5 + $0x1c] sm:$0xf]
      %v4903 = vld [vmem:[#allocation4] sm:$0xe]
      %v4904 = vld [vmem:[#allocation4 + $0xc] sm:$0xe]
      %v4905 = vld [vmem:[#allocation4 + $0x18] sm:$0xe]
      %v4906 = vld [vmem:[#allocation4 + $0x24] sm:$0xe]
      %v4907 = vld [vmem:[#allocation4 + $0x30] sm:$0xe]
      %v4908 = vld [vmem:[#allocation4 + $0x3c] sm:$0xe]
      %v4909 = vld [vmem:[#allocation4 + $0x48] sm:$0xe]
      %v4910 = vld [vmem:[#allocation4 + $0x54] sm:$0xe]
      %v4935 = vrot.slane %v4903, 5
      %v4936 = vrot.slane %v4935, 4
      %v4937 = vrot.slane %v4416, 5
      %v4938 = vsel %vm1653, %v4936, %v4937
      %v4939 = vrot.slane %v4937, 4
      %v4940 = vrot.slane %v4417, 5
      %v4941 = vsel %vm1653, %v4939, %v4940
      %v4942 = vrot.slane %v4904, 5
      %v4943 = vrot.slane %v4942, 4
      %v4944 = vrot.slane %v4419, 5
      %v4945 = vsel %vm1653, %v4943, %v4944
      %v4946 = vrot.slane %v4944, 4
      %v4947 = vrot.slane %v4420, 5
      %v4948 = vsel %vm1653, %v4946, %v4947
      %v4949 = vrot.slane %v4905, 5
      %v4950 = vrot.slane %v4949, 4
      %v4951 = vrot.slane %v4422, 5
      %v4952 = vsel %vm1653, %v4950, %v4951
      %v4953 = vrot.slane %v4951, 4
      %v4954 = vrot.slane %v4423, 5
      %v4955 = vsel %vm1653, %v4953, %v4954
      %v4956 = vrot.slane %v4906, 5
      %v4957 = vrot.slane %v4956, 4
      %v4958 = vrot.slane %v4425, 5
      %v4959 = vsel %vm1653, %v4957, %v4958
      %v4960 = vrot.slane %v4958, 4
      %v4961 = vrot.slane %v4426, 5
      %v4962 = vsel %vm1653, %v4960, %v4961
      %v4963 = vrot.slane %v4907, 5
      %v4964 = vrot.slane %v4963, 4
      %v4965 = vrot.slane %v4428, 5
      %v4966 = vsel %vm1653, %v4964, %v4965
      %v4967 = vrot.slane %v4965, 4
      %v4968 = vrot.slane %v4429, 5
      %v4969 = vsel %vm1653, %v4967, %v4968
      %v4970 = vrot.slane %v4908, 5
      %v4971 = vrot.slane %v4970, 4
      %v4972 = vrot.slane %v4431, 5
      %v4973 = vsel %vm1653, %v4971, %v4972
      %v4974 = vrot.slane %v4972, 4
      %v4975 = vrot.slane %v4432, 5
      %v4976 = vsel %vm1653, %v4974, %v4975
      %v4977 = vrot.slane %v4909, 5
      %v4978 = vrot.slane %v4977, 4
      %v4979 = vrot.slane %v4434, 5
      %v4980 = vsel %vm1653, %v4978, %v4979
      %v4981 = vrot.slane %v4979, 4
      %v4982 = vrot.slane %v4435, 5
      %v4983 = vsel %vm1653, %v4981, %v4982
      %v4984 = vrot.slane %v4910, 5
      %v4985 = vrot.slane %v4984, 4
      %v4986 = vrot.slane %v4437, 5
      %v4987 = vsel %vm1653, %v4985, %v4986
      %v4988 = vrot.slane %v4986, 4
      %v4989 = vrot.slane %v4438, 5
      %v4990 = vsel %vm1653, %v4988, %v4989
      %v4991 = vld [vmem:[#allocation5] sm:$0xe]
      %v4992 = vld [vmem:[#allocation5 + $0xc] sm:$0xe]
      %v4993 = vld [vmem:[#allocation5 + $0x18] sm:$0xe]
      %v4994 = vld [vmem:[#allocation5 + $0x24] sm:$0xe]
      %v4995 = vld [vmem:[#allocation5 + $0x30] sm:$0xe]
      %v4996 = vld [vmem:[#allocation5 + $0x3c] sm:$0xe]
      %v4997 = vld [vmem:[#allocation5 + $0x48] sm:$0xe]
      %v4998 = vld [vmem:[#allocation5 + $0x54] sm:$0xe]
      %v5023 = vrot.slane %v4991, 5
      %v5024 = vrot.slane %v5023, 4
      %v5025 = vrot.slane %v4632, 5
      %v5026 = vsel %vm1653, %v5024, %v5025
      %v5027 = vrot.slane %v5025, 4
      %v5028 = vrot.slane %v4633, 5
      %v5029 = vsel %vm1653, %v5027, %v5028
      %v5030 = vrot.slane %v4992, 5
      %v5031 = vrot.slane %v5030, 4
      %v5032 = vrot.slane %v4635, 5
      %v5033 = vsel %vm1653, %v5031, %v5032
      %v5034 = vrot.slane %v5032, 4
      %v5035 = vrot.slane %v4636, 5
      %v5036 = vsel %vm1653, %v5034, %v5035
      %v5037 = vrot.slane %v4993, 5
      %v5038 = vrot.slane %v5037, 4
      %v5039 = vrot.slane %v4638, 5
      %v5040 = vsel %vm1653, %v5038, %v5039
      %v5041 = vrot.slane %v5039, 4
      %v5042 = vrot.slane %v4639, 5
      %v5043 = vsel %vm1653, %v5041, %v5042
      %v5044 = vrot.slane %v4994, 5
      %v5045 = vrot.slane %v5044, 4
      %v5046 = vrot.slane %v4641, 5
      %v5047 = vsel %vm1653, %v5045, %v5046
      %v5048 = vrot.slane %v5046, 4
      %v5049 = vrot.slane %v4642, 5
      %v5050 = vsel %vm1653, %v5048, %v5049
      %v5051 = vrot.slane %v4995, 5
      %v5052 = vrot.slane %v5051, 4
      %v5053 = vrot.slane %v4644, 5
      %v5054 = vsel %vm1653, %v5052, %v5053
      %v5055 = vrot.slane %v5053, 4
      %v5056 = vrot.slane %v4645, 5
      %v5057 = vsel %vm1653, %v5055, %v5056
      %v5058 = vrot.slane %v4996, 5
      %v5059 = vrot.slane %v5058, 4
      %v5060 = vrot.slane %v4647, 5
      %v5061 = vsel %vm1653, %v5059, %v5060
      %v5062 = vrot.slane %v5060, 4
      %v5063 = vrot.slane %v4648, 5
      %v5064 = vsel %vm1653, %v5062, %v5063
      %v5065 = vrot.slane %v4997, 5
      %v5066 = vrot.slane %v5065, 4
      %v5067 = vrot.slane %v4650, 5
      %v5068 = vsel %vm1653, %v5066, %v5067
      %v5069 = vrot.slane %v5067, 4
      %v5070 = vrot.slane %v4651, 5
      %v5071 = vsel %vm1653, %v5069, %v5070
      %v5072 = vrot.slane %v4998, 5
      %v5073 = vrot.slane %v5072, 4
      %v5074 = vrot.slane %v4653, 5
      %v5075 = vsel %vm1653, %v5073, %v5074
      %v5076 = vrot.slane %v5074, 4
      %v5077 = vrot.slane %v4654, 5
      %v5078 = vsel %vm1653, %v5076, %v5077
      %v5079 = vunpack.c.l.b16 %v4938
      %v5080 = vunpack.c.l.b16 %v4941
      %v5081 = vunpack.c.l.b16 %v4945
      %v5082 = vunpack.c.l.b16 %v4948
      %v5083 = vunpack.c.l.b16 %v4952
      %v5084 = vunpack.c.l.b16 %v4955
      %v5085 = vunpack.c.l.b16 %v4959
      %v5086 = vunpack.c.l.b16 %v4962
      %v5087 = vunpack.c.l.b16 %v4966
      %v5088 = vunpack.c.l.b16 %v4969
      %v5089 = vunpack.c.l.b16 %v4973
      %v5090 = vunpack.c.l.b16 %v4976
      %v5091 = vunpack.c.l.b16 %v4980
      %v5092 = vunpack.c.l.b16 %v4983
      %v5093 = vunpack.c.l.b16 %v4987
      %v5094 = vunpack.c.l.b16 %v4990
      %v5095 = vpack.c.b16 %v5080, %v5079
      %v5096 = vpack.c.b16 %v5082, %v5081
      %v5097 = vpack.c.b16 %v5084, %v5083
      %v5098 = vpack.c.b16 %v5086, %v5085
      %v5099 = vpack.c.b16 %v5088, %v5087
      %v5100 = vpack.c.b16 %v5090, %v5089
      %v5101 = vpack.c.b16 %v5092, %v5091
      %v5102 = vpack.c.b16 %v5094, %v5093
      %v5103 = vunpack.c.l.b16 %v5026
      %v5104 = vunpack.c.l.b16 %v5029
      %v5105 = vunpack.c.l.b16 %v5033
      %v5106 = vunpack.c.l.b16 %v5036
      %v5107 = vunpack.c.l.b16 %v5040
      %v5108 = vunpack.c.l.b16 %v5043
      %v5109 = vunpack.c.l.b16 %v5047
      %v5110 = vunpack.c.l.b16 %v5050
      %v5111 = vunpack.c.l.b16 %v5054
      %v5112 = vunpack.c.l.b16 %v5057
      %v5113 = vunpack.c.l.b16 %v5061
      %v5114 = vunpack.c.l.b16 %v5064
      %v5115 = vunpack.c.l.b16 %v5068
      %v5116 = vunpack.c.l.b16 %v5071
      %v5117 = vunpack.c.l.b16 %v5075
      %v5118 = vunpack.c.l.b16 %v5078
      %v5119 = vpack.c.b16 %v5104, %v5103
      %v5120 = vpack.c.b16 %v5106, %v5105
      %v5121 = vpack.c.b16 %v5108, %v5107
      %v5122 = vpack.c.b16 %v5110, %v5109
      %v5123 = vpack.c.b16 %v5112, %v5111
      %v5124 = vpack.c.b16 %v5114, %v5113
      %v5125 = vpack.c.b16 %v5116, %v5115
      %v5126 = vpack.c.b16 %v5118, %v5117
      %s5127 = scalar_lea.vmem %s5, 32
      %v5128 = vld [vmem:[%s5127] sm:$0xf]
      %v5129 = vld [vmem:[%s5127 + $0x4] sm:$0xf]
      %v5130 = vld [vmem:[%s5127 + $0x8] sm:$0xf]
      %v5131 = vld [vmem:[%s5127 + $0xc] sm:$0xf]
      %v5132 = vld [vmem:[%s5127 + $0x10] sm:$0xf]
      %v5133 = vld [vmem:[%s5127 + $0x14] sm:$0xf]
      %v5134 = vld [vmem:[%s5127 + $0x18] sm:$0xf]
      %v5135 = vld [vmem:[%s5127 + $0x1c] sm:$0xf]
      %v5144 = vunpack.c.l.b16 %v5128
      %v5145 = vunpack.c.l.b16 %v5129
      %v5146 = vunpack.c.l.b16 %v5130
      %v5147 = vunpack.c.l.b16 %v5131
      %v5148 = vunpack.c.l.b16 %v5132
      %v5149 = vunpack.c.l.b16 %v5133
      %v5150 = vunpack.c.l.b16 %v5134
      %v5151 = vunpack.c.l.b16 %v5135
      %v5152 = vpack.c.b16 %v5145, %v5144
      %v5153 = vpack.c.b16 %v5147, %v5146
      %v5154 = vpack.c.b16 %v5149, %v5148
      %v5155 = vpack.c.b16 %v5151, %v5150
      %vm5160 = vcmask 523264
      %v5162 = vsel %vm5160, %v5095, 0
      %v5165 = vsel %vm5160, %v5096, 0
      %v5168 = vsel %vm5160, %v5097, 0
      %v5171 = vsel %vm5160, %v5098, 0
      %v5174 = vsel %vm5160, %v5099, 0
      %v5177 = vsel %vm5160, %v5100, 0
      %v5180 = vsel %vm5160, %v5101, 0
      %v5183 = vsel %vm5160, %v5102, 0
      %v5186 = vsel %vm5160, %v5119, 0
      %v5189 = vsel %vm5160, %v5120, 0
      %v5192 = vsel %vm5160, %v5121, 0
      %v5195 = vsel %vm5160, %v5122, 0
      %v5198 = vsel %vm5160, %v5123, 0
      %v5201 = vsel %vm5160, %v5124, 0
      %v5204 = vsel %vm5160, %v5125, 0
      %v5207 = vsel %vm5160, %v5126, 0
      %5209 = vmatpush.bf16.msra.mxu0 0
      %5210 = vmatpush.bf16.msra.mxu0 0
      %5211 = vmatpush.bf16.msra.mxu0 0
      %5212 = vmatpush.bf16.msra.mxu0 0
      %5213 = vmatpush.bf16.msra.mxu0 %v5155
      %5214 = vmatpush.bf16.msra.mxu0 %v5154
      %5215 = vmatpush.bf16.msra.mxu0 %v5153
      %5216 = vmatpush.bf16.msra.mxu0 %v5152
      %5217 = vmatmul.bf16.gmra.mxu0 %v5162
      %v5218 = vpop.f32.mrf.mxu0
      %v5219 = vadd.f32 0.0, %v5218
      %v5220 = vpop.f32.mrf.mxu0
      %v5221 = vadd.f32 0.0, %v5220
      %5222 = vmatmul.bf16.gmra.mxu0 %v5165
      %v5223 = vpop.f32.mrf.mxu0
      %v5224 = vadd.f32 0.0, %v5223
      %v5225 = vpop.f32.mrf.mxu0
      %v5226 = vadd.f32 0.0, %v5225
      %5227 = vmatmul.bf16.gmra.mxu0 %v5168
      %v5228 = vpop.f32.mrf.mxu0
      %v5229 = vadd.f32 0.0, %v5228
      %v5230 = vpop.f32.mrf.mxu0
      %v5231 = vadd.f32 0.0, %v5230
      %5232 = vmatmul.bf16.gmra.mxu0 %v5171
      %v5233 = vpop.f32.mrf.mxu0
      %v5234 = vadd.f32 0.0, %v5233
      %v5235 = vpop.f32.mrf.mxu0
      %v5236 = vadd.f32 0.0, %v5235
      %5237 = vmatmul.bf16.gmra.mxu0 %v5174
      %v5238 = vpop.f32.mrf.mxu0
      %v5239 = vadd.f32 0.0, %v5238
      %v5240 = vpop.f32.mrf.mxu0
      %v5241 = vadd.f32 0.0, %v5240
      %5242 = vmatmul.bf16.gmra.mxu0 %v5177
      %v5243 = vpop.f32.mrf.mxu0
      %v5244 = vadd.f32 0.0, %v5243
      %v5245 = vpop.f32.mrf.mxu0
      %v5246 = vadd.f32 0.0, %v5245
      %5247 = vmatmul.bf16.gmra.mxu0 %v5180
      %v5248 = vpop.f32.mrf.mxu0
      %v5249 = vadd.f32 0.0, %v5248
      %v5250 = vpop.f32.mrf.mxu0
      %v5251 = vadd.f32 0.0, %v5250
      %5252 = vmatmul.bf16.gmra.mxu0 %v5183
      %v5253 = vpop.f32.mrf.mxu0
      %v5254 = vadd.f32 0.0, %v5253
      %v5255 = vpop.f32.mrf.mxu0
      %v5256 = vadd.f32 0.0, %v5255
      %5257 = vmatmul.bf16.gmra.mxu0 %v5186
      %v5258 = vpop.f32.mrf.mxu0
      %v5259 = vadd.f32 0.0, %v5258
      %v5260 = vpop.f32.mrf.mxu0
      %v5261 = vadd.f32 0.0, %v5260
      %5262 = vmatmul.bf16.gmra.mxu0 %v5189
      %v5263 = vpop.f32.mrf.mxu0
      %v5264 = vadd.f32 0.0, %v5263
      %v5265 = vpop.f32.mrf.mxu0
      %v5266 = vadd.f32 0.0, %v5265
      %5267 = vmatmul.bf16.gmra.mxu0 %v5192
      %v5268 = vpop.f32.mrf.mxu0
      %v5269 = vadd.f32 0.0, %v5268
      %v5270 = vpop.f32.mrf.mxu0
      %v5271 = vadd.f32 0.0, %v5270
      %5272 = vmatmul.bf16.gmra.mxu0 %v5195
      %v5273 = vpop.f32.mrf.mxu0
      %v5274 = vadd.f32 0.0, %v5273
      %v5275 = vpop.f32.mrf.mxu0
      %v5276 = vadd.f32 0.0, %v5275
      %5277 = vmatmul.bf16.gmra.mxu0 %v5198
      %v5278 = vpop.f32.mrf.mxu0
      %v5279 = vadd.f32 0.0, %v5278
      %v5280 = vpop.f32.mrf.mxu0
      %v5281 = vadd.f32 0.0, %v5280
      %5282 = vmatmul.bf16.gmra.mxu0 %v5201
      %v5283 = vpop.f32.mrf.mxu0
      %v5284 = vadd.f32 0.0, %v5283
      %v5285 = vpop.f32.mrf.mxu0
      %v5286 = vadd.f32 0.0, %v5285
      %5287 = vmatmul.bf16.gmra.mxu0 %v5204
      %v5288 = vpop.f32.mrf.mxu0
      %v5289 = vadd.f32 0.0, %v5288
      %v5290 = vpop.f32.mrf.mxu0
      %v5291 = vadd.f32 0.0, %v5290
      %5292 = vmatmul.bf16.gmra.mxu0 %v5207
      %v5293 = vpop.f32.mrf.mxu0
      %v5294 = vadd.f32 0.0, %v5293
      %v5295 = vpop.f32.mrf.mxu0
      %v5296 = vadd.f32 0.0, %v5295
      %5297 = vdwg.mxu0
      %v5306 = vunpack.c.l.b16 %v4895
      %v5307 = vunpack.c.l.b16 %v4896
      %v5308 = vunpack.c.l.b16 %v4897
      %v5309 = vunpack.c.l.b16 %v4898
      %v5310 = vunpack.c.l.b16 %v4899
      %v5311 = vunpack.c.l.b16 %v4900
      %v5312 = vunpack.c.l.b16 %v4901
      %v5313 = vunpack.c.l.b16 %v4902
      %v5314 = vpack.c.b16 %v5307, %v5306
      %v5315 = vpack.c.b16 %v5309, %v5308
      %v5316 = vpack.c.b16 %v5311, %v5310
      %v5317 = vpack.c.b16 %v5313, %v5312
      %v5323 = vsel %vm5160, %v4863, 0
      %v5326 = vsel %vm5160, %v4864, 0
      %v5329 = vsel %vm5160, %v4865, 0
      %v5332 = vsel %vm5160, %v4866, 0
      %v5335 = vsel %vm5160, %v4867, 0
      %v5338 = vsel %vm5160, %v4868, 0
      %v5341 = vsel %vm5160, %v4869, 0
      %v5344 = vsel %vm5160, %v4870, 0
      %v5347 = vsel %vm5160, %v4887, 0
      %v5350 = vsel %vm5160, %v4888, 0
      %v5353 = vsel %vm5160, %v4889, 0
      %v5356 = vsel %vm5160, %v4890, 0
      %v5359 = vsel %vm5160, %v4891, 0
      %v5362 = vsel %vm5160, %v4892, 0
      %v5365 = vsel %vm5160, %v4893, 0
      %v5368 = vsel %vm5160, %v4894, 0
      %5370 = vmatpush.bf16.msra.mxu0 0
      %5371 = vmatpush.bf16.msra.mxu0 0
      %5372 = vmatpush.bf16.msra.mxu0 0
      %5373 = vmatpush.bf16.msra.mxu0 0
      %5374 = vmatpush.bf16.msra.mxu0 %v5317
      %5375 = vmatpush.bf16.msra.mxu0 %v5316
      %5376 = vmatpush.bf16.msra.mxu0 %v5315
      %5377 = vmatpush.bf16.msra.mxu0 %v5314
      %5378 = vmatmul.bf16.gmra.mxu0 %v5323
      %v5379 = vpop.f32.mrf.mxu0
      %v5380 = vadd.f32 %v5219, %v5379
      %v5381 = vpop.f32.mrf.mxu0
      %v5382 = vadd.f32 %v5221, %v5381
      %5383 = vmatmul.bf16.gmra.mxu0 %v5326
      %v5384 = vpop.f32.mrf.mxu0
      %v5385 = vadd.f32 %v5224, %v5384
      %v5386 = vpop.f32.mrf.mxu0
      %v5387 = vadd.f32 %v5226, %v5386
      %5388 = vmatmul.bf16.gmra.mxu0 %v5329
      %v5389 = vpop.f32.mrf.mxu0
      %v5390 = vadd.f32 %v5229, %v5389
      %v5391 = vpop.f32.mrf.mxu0
      %v5392 = vadd.f32 %v5231, %v5391
      %5393 = vmatmul.bf16.gmra.mxu0 %v5332
      %v5394 = vpop.f32.mrf.mxu0
      %v5395 = vadd.f32 %v5234, %v5394
      %v5396 = vpop.f32.mrf.mxu0
      %v5397 = vadd.f32 %v5236, %v5396
      %5398 = vmatmul.bf16.gmra.mxu0 %v5335
      %v5399 = vpop.f32.mrf.mxu0
      %v5400 = vadd.f32 %v5239, %v5399
      %v5401 = vpop.f32.mrf.mxu0
      %v5402 = vadd.f32 %v5241, %v5401
      %5403 = vmatmul.bf16.gmra.mxu0 %v5338
      %v5404 = vpop.f32.mrf.mxu0
      %v5405 = vadd.f32 %v5244, %v5404
      %v5406 = vpop.f32.mrf.mxu0
      %v5407 = vadd.f32 %v5246, %v5406
      %5408 = vmatmul.bf16.gmra.mxu0 %v5341
      %v5409 = vpop.f32.mrf.mxu0
      %v5410 = vadd.f32 %v5249, %v5409
      %v5411 = vpop.f32.mrf.mxu0
      %v5412 = vadd.f32 %v5251, %v5411
      %5413 = vmatmul.bf16.gmra.mxu0 %v5344
      %v5414 = vpop.f32.mrf.mxu0
      %v5415 = vadd.f32 %v5254, %v5414
      %v5416 = vpop.f32.mrf.mxu0
      %v5417 = vadd.f32 %v5256, %v5416
      %5418 = vmatmul.bf16.gmra.mxu0 %v5347
      %v5419 = vpop.f32.mrf.mxu0
      %v5420 = vadd.f32 %v5259, %v5419
      %v5421 = vpop.f32.mrf.mxu0
      %v5422 = vadd.f32 %v5261, %v5421
      %5423 = vmatmul.bf16.gmra.mxu0 %v5350
      %v5424 = vpop.f32.mrf.mxu0
      %v5425 = vadd.f32 %v5264, %v5424
      %v5426 = vpop.f32.mrf.mxu0
      %v5427 = vadd.f32 %v5266, %v5426
      %5428 = vmatmul.bf16.gmra.mxu0 %v5353
      %v5429 = vpop.f32.mrf.mxu0
      %v5430 = vadd.f32 %v5269, %v5429
      %v5431 = vpop.f32.mrf.mxu0
      %v5432 = vadd.f32 %v5271, %v5431
      %5433 = vmatmul.bf16.gmra.mxu0 %v5356
      %v5434 = vpop.f32.mrf.mxu0
      %v5435 = vadd.f32 %v5274, %v5434
      %v5436 = vpop.f32.mrf.mxu0
      %v5437 = vadd.f32 %v5276, %v5436
      %5438 = vmatmul.bf16.gmra.mxu0 %v5359
      %v5439 = vpop.f32.mrf.mxu0
      %v5440 = vadd.f32 %v5279, %v5439
      %v5441 = vpop.f32.mrf.mxu0
      %v5442 = vadd.f32 %v5281, %v5441
      %5443 = vmatmul.bf16.gmra.mxu0 %v5362
      %v5444 = vpop.f32.mrf.mxu0
      %v5445 = vadd.f32 %v5284, %v5444
      %v5446 = vpop.f32.mrf.mxu0
      %v5447 = vadd.f32 %v5286, %v5446
      %5448 = vmatmul.bf16.gmra.mxu0 %v5365
      %v5449 = vpop.f32.mrf.mxu0
      %v5450 = vadd.f32 %v5289, %v5449
      %v5451 = vpop.f32.mrf.mxu0
      %v5452 = vadd.f32 %v5291, %v5451
      %5453 = vmatmul.bf16.gmra.mxu0 %v5368
      %v5454 = vpop.f32.mrf.mxu0
      %v5455 = vadd.f32 %v5294, %v5454
      %v5456 = vpop.f32.mrf.mxu0
      %v5457 = vadd.f32 %v5296, %v5456
      %5458 = vdwg.mxu0
      %v5459 = vld [vmem:[#allocation4 + $0x8] sm:$0x3]
      %v5460 = vld [vmem:[#allocation4 + $0x14] sm:$0x3]
      %v5461 = vld [vmem:[#allocation4 + $0x20] sm:$0x3]
      %v5462 = vld [vmem:[#allocation4 + $0x2c] sm:$0x3]
      %v5463 = vld [vmem:[#allocation4 + $0x38] sm:$0x3]
      %v5464 = vld [vmem:[#allocation4 + $0x44] sm:$0x3]
      %v5465 = vld [vmem:[#allocation4 + $0x50] sm:$0x3]
      %v5466 = vld [vmem:[#allocation4 + $0x5c] sm:$0x3]
      %vm5467 = vsmask.f32 2304
      %vm5468 = vsmask.f32 6416
      %vm5469 = vmor %vm5467, %vm5468
      %v5471 = vshrl.u32 %v4903, 16
      %v5473 = vrot.slane %v5471, 5
      %v5474 = vshll.u32 %v4903, 16
      %v5476 = vrot.slane %v5474, 6
      %v5477 = vor.u32 %v5473, %v5476
      %v5478 = vrot.slane %v5477, 4
      %v5479 = vrot.slane %v4453, 5
      %v5480 = vrot.slane %v4449, 6
      %v5481 = vor.u32 %v5479, %v5480
      %v5482 = vsel %vm5469, %v5478, %v5481
      %v5483 = vrot.slane %v5481, 4
      %v5485 = vshrl.u32 %v5459, 16
      %v5487 = vrot.slane %v5485, 5
      %v5488 = vshll.u32 %v5459, 16
      %v5490 = vrot.slane %v5488, 6
      %v5491 = vor.u32 %v5487, %v5490
      %v5492 = vsel %vm5469, %v5483, %v5491
      %v5494 = vshrl.u32 %v4904, 16
      %v5496 = vrot.slane %v5494, 5
      %v5497 = vshll.u32 %v4904, 16
      %v5499 = vrot.slane %v5497, 6
      %v5500 = vor.u32 %v5496, %v5499
      %v5501 = vrot.slane %v5500, 4
      %v5502 = vrot.slane %v4477, 5
      %v5503 = vrot.slane %v4473, 6
      %v5504 = vor.u32 %v5502, %v5503
      %v5505 = vsel %vm5469, %v5501, %v5504
      %v5506 = vrot.slane %v5504, 4
      %v5508 = vshrl.u32 %v5460, 16
      %v5510 = vrot.slane %v5508, 5
      %v5511 = vshll.u32 %v5460, 16
      %v5513 = vrot.slane %v5511, 6
      %v5514 = vor.u32 %v5510, %v5513
      %v5515 = vsel %vm5469, %v5506, %v5514
      %v5517 = vshrl.u32 %v4905, 16
      %v5519 = vrot.slane %v5517, 5
      %v5520 = vshll.u32 %v4905, 16
      %v5522 = vrot.slane %v5520, 6
      %v5523 = vor.u32 %v5519, %v5522
      %v5524 = vrot.slane %v5523, 4
      %v5525 = vrot.slane %v4501, 5
      %v5526 = vrot.slane %v4497, 6
      %v5527 = vor.u32 %v5525, %v5526
      %v5528 = vsel %vm5469, %v5524, %v5527
      %v5529 = vrot.slane %v5527, 4
      %v5531 = vshrl.u32 %v5461, 16
      %v5533 = vrot.slane %v5531, 5
      %v5534 = vshll.u32 %v5461, 16
      %v5536 = vrot.slane %v5534, 6
      %v5537 = vor.u32 %v5533, %v5536
      %v5538 = vsel %vm5469, %v5529, %v5537
      %v5540 = vshrl.u32 %v4906, 16
      %v5542 = vrot.slane %v5540, 5
      %v5543 = vshll.u32 %v4906, 16
      %v5545 = vrot.slane %v5543, 6
      %v5546 = vor.u32 %v5542, %v5545
      %v5547 = vrot.slane %v5546, 4
      %v5548 = vrot.slane %v4525, 5
      %v5549 = vrot.slane %v4521, 6
      %v5550 = vor.u32 %v5548, %v5549
      %v5551 = vsel %vm5469, %v5547, %v5550
      %v5552 = vrot.slane %v5550, 4
      %v5554 = vshrl.u32 %v5462, 16
      %v5556 = vrot.slane %v5554, 5
      %v5557 = vshll.u32 %v5462, 16
      %v5559 = vrot.slane %v5557, 6
      %v5560 = vor.u32 %v5556, %v5559
      %v5561 = vsel %vm5469, %v5552, %v5560
      %v5563 = vshrl.u32 %v4907, 16
      %v5565 = vrot.slane %v5563, 5
      %v5566 = vshll.u32 %v4907, 16
      %v5568 = vrot.slane %v5566, 6
      %v5569 = vor.u32 %v5565, %v5568
      %v5570 = vrot.slane %v5569, 4
      %v5571 = vrot.slane %v4549, 5
      %v5572 = vrot.slane %v4545, 6
      %v5573 = vor.u32 %v5571, %v5572
      %v5574 = vsel %vm5469, %v5570, %v5573
      %v5575 = vrot.slane %v5573, 4
      %v5577 = vshrl.u32 %v5463, 16
      %v5579 = vrot.slane %v5577, 5
      %v5580 = vshll.u32 %v5463, 16
      %v5582 = vrot.slane %v5580, 6
      %v5583 = vor.u32 %v5579, %v5582
      %v5584 = vsel %vm5469, %v5575, %v5583
      %v5586 = vshrl.u32 %v4908, 16
      %v5588 = vrot.slane %v5586, 5
      %v5589 = vshll.u32 %v4908, 16
      %v5591 = vrot.slane %v5589, 6
      %v5592 = vor.u32 %v5588, %v5591
      %v5593 = vrot.slane %v5592, 4
      %v5594 = vrot.slane %v4573, 5
      %v5595 = vrot.slane %v4569, 6
      %v5596 = vor.u32 %v5594, %v5595
      %v5597 = vsel %vm5469, %v5593, %v5596
      %v5598 = vrot.slane %v5596, 4
      %v5600 = vshrl.u32 %v5464, 16
      %v5602 = vrot.slane %v5600, 5
      %v5603 = vshll.u32 %v5464, 16
      %v5605 = vrot.slane %v5603, 6
      %v5606 = vor.u32 %v5602, %v5605
      %v5607 = vsel %vm5469, %v5598, %v5606
      %v5609 = vshrl.u32 %v4909, 16
      %v5611 = vrot.slane %v5609, 5
      %v5612 = vshll.u32 %v4909, 16
      %v5614 = vrot.slane %v5612, 6
      %v5615 = vor.u32 %v5611, %v5614
      %v5616 = vrot.slane %v5615, 4
      %v5617 = vrot.slane %v4597, 5
      %v5618 = vrot.slane %v4593, 6
      %v5619 = vor.u32 %v5617, %v5618
      %v5620 = vsel %vm5469, %v5616, %v5619
      %v5621 = vrot.slane %v5619, 4
      %v5623 = vshrl.u32 %v5465, 16
      %v5625 = vrot.slane %v5623, 5
      %v5626 = vshll.u32 %v5465, 16
      %v5628 = vrot.slane %v5626, 6
      %v5629 = vor.u32 %v5625, %v5628
      %v5630 = vsel %vm5469, %v5621, %v5629
      %v5632 = vshrl.u32 %v4910, 16
      %v5634 = vrot.slane %v5632, 5
      %v5635 = vshll.u32 %v4910, 16
      %v5637 = vrot.slane %v5635, 6
      %v5638 = vor.u32 %v5634, %v5637
      %v5639 = vrot.slane %v5638, 4
      %v5640 = vrot.slane %v4621, 5
      %v5641 = vrot.slane %v4617, 6
      %v5642 = vor.u32 %v5640, %v5641
      %v5643 = vsel %vm5469, %v5639, %v5642
      %v5644 = vrot.slane %v5642, 4
      %v5646 = vshrl.u32 %v5466, 16
      %v5648 = vrot.slane %v5646, 5
      %v5649 = vshll.u32 %v5466, 16
      %v5651 = vrot.slane %v5649, 6
      %v5652 = vor.u32 %v5648, %v5651
      %v5653 = vsel %vm5469, %v5644, %v5652
      %v5654 = vld [vmem:[#allocation5 + $0x8] sm:$0x3]
      %v5655 = vld [vmem:[#allocation5 + $0x14] sm:$0x3]
      %v5656 = vld [vmem:[#allocation5 + $0x20] sm:$0x3]
      %v5657 = vld [vmem:[#allocation5 + $0x2c] sm:$0x3]
      %v5658 = vld [vmem:[#allocation5 + $0x38] sm:$0x3]
      %v5659 = vld [vmem:[#allocation5 + $0x44] sm:$0x3]
      %v5660 = vld [vmem:[#allocation5 + $0x50] sm:$0x3]
      %v5661 = vld [vmem:[#allocation5 + $0x5c] sm:$0x3]
      %v5663 = vshrl.u32 %v4991, 16
      %v5665 = vrot.slane %v5663, 5
      %v5666 = vshll.u32 %v4991, 16
      %v5668 = vrot.slane %v5666, 6
      %v5669 = vor.u32 %v5665, %v5668
      %v5670 = vrot.slane %v5669, 4
      %v5671 = vrot.slane %v4669, 5
      %v5672 = vrot.slane %v4665, 6
      %v5673 = vor.u32 %v5671, %v5672
      %v5674 = vsel %vm5469, %v5670, %v5673
      %v5675 = vrot.slane %v5673, 4
      %v5677 = vshrl.u32 %v5654, 16
      %v5679 = vrot.slane %v5677, 5
      %v5680 = vshll.u32 %v5654, 16
      %v5682 = vrot.slane %v5680, 6
      %v5683 = vor.u32 %v5679, %v5682
      %v5684 = vsel %vm5469, %v5675, %v5683
      %v5686 = vshrl.u32 %v4992, 16
      %v5688 = vrot.slane %v5686, 5
      %v5689 = vshll.u32 %v4992, 16
      %v5691 = vrot.slane %v5689, 6
      %v5692 = vor.u32 %v5688, %v5691
      %v5693 = vrot.slane %v5692, 4
      %v5694 = vrot.slane %v4693, 5
      %v5695 = vrot.slane %v4689, 6
      %v5696 = vor.u32 %v5694, %v5695
      %v5697 = vsel %vm5469, %v5693, %v5696
      %v5698 = vrot.slane %v5696, 4
      %v5700 = vshrl.u32 %v5655, 16
      %v5702 = vrot.slane %v5700, 5
      %v5703 = vshll.u32 %v5655, 16
      %v5705 = vrot.slane %v5703, 6
      %v5706 = vor.u32 %v5702, %v5705
      %v5707 = vsel %vm5469, %v5698, %v5706
      %v5709 = vshrl.u32 %v4993, 16
      %v5711 = vrot.slane %v5709, 5
      %v5712 = vshll.u32 %v4993, 16
      %v5714 = vrot.slane %v5712, 6
      %v5715 = vor.u32 %v5711, %v5714
      %v5716 = vrot.slane %v5715, 4
      %v5717 = vrot.slane %v4717, 5
      %v5718 = vrot.slane %v4713, 6
      %v5719 = vor.u32 %v5717, %v5718
      %v5720 = vsel %vm5469, %v5716, %v5719
      %v5721 = vrot.slane %v5719, 4
      %v5723 = vshrl.u32 %v5656, 16
      %v5725 = vrot.slane %v5723, 5
      %v5726 = vshll.u32 %v5656, 16
      %v5728 = vrot.slane %v5726, 6
      %v5729 = vor.u32 %v5725, %v5728
      %v5730 = vsel %vm5469, %v5721, %v5729
      %v5732 = vshrl.u32 %v4994, 16
      %v5734 = vrot.slane %v5732, 5
      %v5735 = vshll.u32 %v4994, 16
      %v5737 = vrot.slane %v5735, 6
      %v5738 = vor.u32 %v5734, %v5737
      %v5739 = vrot.slane %v5738, 4
      %v5740 = vrot.slane %v4741, 5
      %v5741 = vrot.slane %v4737, 6
      %v5742 = vor.u32 %v5740, %v5741
      %v5743 = vsel %vm5469, %v5739, %v5742
      %v5744 = vrot.slane %v5742, 4
      %v5746 = vshrl.u32 %v5657, 16
      %v5748 = vrot.slane %v5746, 5
      %v5749 = vshll.u32 %v5657, 16
      %v5751 = vrot.slane %v5749, 6
      %v5752 = vor.u32 %v5748, %v5751
      %v5753 = vsel %vm5469, %v5744, %v5752
      %v5755 = vshrl.u32 %v4995, 16
      %v5757 = vrot.slane %v5755, 5
      %v5758 = vshll.u32 %v4995, 16
      %v5760 = vrot.slane %v5758, 6
      %v5761 = vor.u32 %v5757, %v5760
      %v5762 = vrot.slane %v5761, 4
      %v5763 = vrot.slane %v4765, 5
      %v5764 = vrot.slane %v4761, 6
      %v5765 = vor.u32 %v5763, %v5764
      %v5766 = vsel %vm5469, %v5762, %v5765
      %v5767 = vrot.slane %v5765, 4
      %v5769 = vshrl.u32 %v5658, 16
      %v5771 = vrot.slane %v5769, 5
      %v5772 = vshll.u32 %v5658, 16
      %v5774 = vrot.slane %v5772, 6
      %v5775 = vor.u32 %v5771, %v5774
      %v5776 = vsel %vm5469, %v5767, %v5775
      %v5778 = vshrl.u32 %v4996, 16
      %v5780 = vrot.slane %v5778, 5
      %v5781 = vshll.u32 %v4996, 16
      %v5783 = vrot.slane %v5781, 6
      %v5784 = vor.u32 %v5780, %v5783
      %v5785 = vrot.slane %v5784, 4
      %v5786 = vrot.slane %v4789, 5
      %v5787 = vrot.slane %v4785, 6
      %v5788 = vor.u32 %v5786, %v5787
      %v5789 = vsel %vm5469, %v5785, %v5788
      %v5790 = vrot.slane %v5788, 4
      %v5792 = vshrl.u32 %v5659, 16
      %v5794 = vrot.slane %v5792, 5
      %v5795 = vshll.u32 %v5659, 16
      %v5797 = vrot.slane %v5795, 6
      %v5798 = vor.u32 %v5794, %v5797
      %v5799 = vsel %vm5469, %v5790, %v5798
      %v5801 = vshrl.u32 %v4997, 16
      %v5803 = vrot.slane %v5801, 5
      %v5804 = vshll.u32 %v4997, 16
      %v5806 = vrot.slane %v5804, 6
      %v5807 = vor.u32 %v5803, %v5806
      %v5808 = vrot.slane %v5807, 4
      %v5809 = vrot.slane %v4813, 5
      %v5810 = vrot.slane %v4809, 6
      %v5811 = vor.u32 %v5809, %v5810
      %v5812 = vsel %vm5469, %v5808, %v5811
      %v5813 = vrot.slane %v5811, 4
      %v5815 = vshrl.u32 %v5660, 16
      %v5817 = vrot.slane %v5815, 5
      %v5818 = vshll.u32 %v5660, 16
      %v5820 = vrot.slane %v5818, 6
      %v5821 = vor.u32 %v5817, %v5820
      %v5822 = vsel %vm5469, %v5813, %v5821
      %v5824 = vshrl.u32 %v4998, 16
      %v5826 = vrot.slane %v5824, 5
      %v5827 = vshll.u32 %v4998, 16
      %v5829 = vrot.slane %v5827, 6
      %v5830 = vor.u32 %v5826, %v5829
      %v5831 = vrot.slane %v5830, 4
      %v5832 = vrot.slane %v4837, 5
      %v5833 = vrot.slane %v4833, 6
      %v5834 = vor.u32 %v5832, %v5833
      %v5835 = vsel %vm5469, %v5831, %v5834
      %v5836 = vrot.slane %v5834, 4
      %v5838 = vshrl.u32 %v5661, 16
      %v5840 = vrot.slane %v5838, 5
      %v5841 = vshll.u32 %v5661, 16
      %v5843 = vrot.slane %v5841, 6
      %v5844 = vor.u32 %v5840, %v5843
      %v5845 = vsel %vm5469, %v5836, %v5844
      %v5846 = vunpack.c.l.b16 %v5482
      %v5847 = vunpack.c.l.b16 %v5492
      %v5848 = vunpack.c.l.b16 %v5505
      %v5849 = vunpack.c.l.b16 %v5515
      %v5850 = vunpack.c.l.b16 %v5528
      %v5851 = vunpack.c.l.b16 %v5538
      %v5852 = vunpack.c.l.b16 %v5551
      %v5853 = vunpack.c.l.b16 %v5561
      %v5854 = vunpack.c.l.b16 %v5574
      %v5855 = vunpack.c.l.b16 %v5584
      %v5856 = vunpack.c.l.b16 %v5597
      %v5857 = vunpack.c.l.b16 %v5607
      %v5858 = vunpack.c.l.b16 %v5620
      %v5859 = vunpack.c.l.b16 %v5630
      %v5860 = vunpack.c.l.b16 %v5643
      %v5861 = vunpack.c.l.b16 %v5653
      %v5862 = vpack.c.b16 %v5847, %v5846
      %v5863 = vpack.c.b16 %v5849, %v5848
      %v5864 = vpack.c.b16 %v5851, %v5850
      %v5865 = vpack.c.b16 %v5853, %v5852
      %v5866 = vpack.c.b16 %v5855, %v5854
      %v5867 = vpack.c.b16 %v5857, %v5856
      %v5868 = vpack.c.b16 %v5859, %v5858
      %v5869 = vpack.c.b16 %v5861, %v5860
      %v5870 = vunpack.c.l.b16 %v5674
      %v5871 = vunpack.c.l.b16 %v5684
      %v5872 = vunpack.c.l.b16 %v5697
      %v5873 = vunpack.c.l.b16 %v5707
      %v5874 = vunpack.c.l.b16 %v5720
      %v5875 = vunpack.c.l.b16 %v5730
      %v5876 = vunpack.c.l.b16 %v5743
      %v5877 = vunpack.c.l.b16 %v5753
      %v5878 = vunpack.c.l.b16 %v5766
      %v5879 = vunpack.c.l.b16 %v5776
      %v5880 = vunpack.c.l.b16 %v5789
      %v5881 = vunpack.c.l.b16 %v5799
      %v5882 = vunpack.c.l.b16 %v5812
      %v5883 = vunpack.c.l.b16 %v5822
      %v5884 = vunpack.c.l.b16 %v5835
      %v5885 = vunpack.c.l.b16 %v5845
      %v5886 = vpack.c.b16 %v5871, %v5870
      %v5887 = vpack.c.b16 %v5873, %v5872
      %v5888 = vpack.c.b16 %v5875, %v5874
      %v5889 = vpack.c.b16 %v5877, %v5876
      %v5890 = vpack.c.b16 %v5879, %v5878
      %v5891 = vpack.c.b16 %v5881, %v5880
      %v5892 = vpack.c.b16 %v5883, %v5882
      %v5893 = vpack.c.b16 %v5885, %v5884
      %s5894 = scalar_lea.vmem %s5, 64
      %v5895 = vld [vmem:[%s5894] sm:$0xf]
      %v5896 = vld [vmem:[%s5894 + $0x4] sm:$0xf]
      %v5897 = vld [vmem:[%s5894 + $0x8] sm:$0xf]
      %v5898 = vld [vmem:[%s5894 + $0xc] sm:$0xf]
      %v5899 = vld [vmem:[%s5894 + $0x10] sm:$0xf]
      %v5900 = vld [vmem:[%s5894 + $0x14] sm:$0xf]
      %v5901 = vld [vmem:[%s5894 + $0x18] sm:$0xf]
      %v5902 = vld [vmem:[%s5894 + $0x1c] sm:$0xf]
      %v5911 = vunpack.c.l.b16 %v5895
      %v5912 = vunpack.c.l.b16 %v5896
      %v5913 = vunpack.c.l.b16 %v5897
      %v5914 = vunpack.c.l.b16 %v5898
      %v5915 = vunpack.c.l.b16 %v5899
      %v5916 = vunpack.c.l.b16 %v5900
      %v5917 = vunpack.c.l.b16 %v5901
      %v5918 = vunpack.c.l.b16 %v5902
      %v5919 = vpack.c.b16 %v5912, %v5911
      %v5920 = vpack.c.b16 %v5914, %v5913
      %v5921 = vpack.c.b16 %v5916, %v5915
      %v5922 = vpack.c.b16 %v5918, %v5917
      %v5928 = vsel %vm5160, %v5862, 0
      %v5931 = vsel %vm5160, %v5863, 0
      %v5934 = vsel %vm5160, %v5864, 0
      %v5937 = vsel %vm5160, %v5865, 0
      %v5940 = vsel %vm5160, %v5866, 0
      %v5943 = vsel %vm5160, %v5867, 0
      %v5946 = vsel %vm5160, %v5868, 0
      %v5949 = vsel %vm5160, %v5869, 0
      %v5952 = vsel %vm5160, %v5886, 0
      %v5955 = vsel %vm5160, %v5887, 0
      %v5958 = vsel %vm5160, %v5888, 0
      %v5961 = vsel %vm5160, %v5889, 0
      %v5964 = vsel %vm5160, %v5890, 0
      %v5967 = vsel %vm5160, %v5891, 0
      %v5970 = vsel %vm5160, %v5892, 0
      %v5973 = vsel %vm5160, %v5893, 0
      %5975 = vmatpush.bf16.msra.mxu0 0
      %5976 = vmatpush.bf16.msra.mxu0 0
      %5977 = vmatpush.bf16.msra.mxu0 0
      %5978 = vmatpush.bf16.msra.mxu0 0
      %5979 = vmatpush.bf16.msra.mxu0 %v5922
      %5980 = vmatpush.bf16.msra.mxu0 %v5921
      %5981 = vmatpush.bf16.msra.mxu0 %v5920
      %5982 = vmatpush.bf16.msra.mxu0 %v5919
      %5983 = vmatmul.bf16.gmra.mxu0 %v5928
      %v5984 = vpop.f32.mrf.mxu0
      %v5985 = vadd.f32 0.0, %v5984
      %v5986 = vpop.f32.mrf.mxu0
      %v5987 = vadd.f32 0.0, %v5986
      %5988 = vmatmul.bf16.gmra.mxu0 %v5931
      %v5989 = vpop.f32.mrf.mxu0
      %v5990 = vadd.f32 0.0, %v5989
      %v5991 = vpop.f32.mrf.mxu0
      %v5992 = vadd.f32 0.0, %v5991
      %5993 = vmatmul.bf16.gmra.mxu0 %v5934
      %v5994 = vpop.f32.mrf.mxu0
      %v5995 = vadd.f32 0.0, %v5994
      %v5996 = vpop.f32.mrf.mxu0
      %v5997 = vadd.f32 0.0, %v5996
      %5998 = vmatmul.bf16.gmra.mxu0 %v5937
      %v5999 = vpop.f32.mrf.mxu0
      %v6000 = vadd.f32 0.0, %v5999
      %v6001 = vpop.f32.mrf.mxu0
      %v6002 = vadd.f32 0.0, %v6001
      %6003 = vmatmul.bf16.gmra.mxu0 %v5940
      %v6004 = vpop.f32.mrf.mxu0
      %v6005 = vadd.f32 0.0, %v6004
      %v6006 = vpop.f32.mrf.mxu0
      %v6007 = vadd.f32 0.0, %v6006
      %6008 = vmatmul.bf16.gmra.mxu0 %v5943
      %v6009 = vpop.f32.mrf.mxu0
      %v6010 = vadd.f32 0.0, %v6009
      %v6011 = vpop.f32.mrf.mxu0
      %v6012 = vadd.f32 0.0, %v6011
      %6013 = vmatmul.bf16.gmra.mxu0 %v5946
      %v6014 = vpop.f32.mrf.mxu0
      %v6015 = vadd.f32 0.0, %v6014
      %v6016 = vpop.f32.mrf.mxu0
      %v6017 = vadd.f32 0.0, %v6016
      %6018 = vmatmul.bf16.gmra.mxu0 %v5949
      %v6019 = vpop.f32.mrf.mxu0
      %v6020 = vadd.f32 0.0, %v6019
      %v6021 = vpop.f32.mrf.mxu0
      %v6022 = vadd.f32 0.0, %v6021
      %6023 = vmatmul.bf16.gmra.mxu0 %v5952
      %v6024 = vpop.f32.mrf.mxu0
      %v6025 = vadd.f32 0.0, %v6024
      %v6026 = vpop.f32.mrf.mxu0
      %v6027 = vadd.f32 0.0, %v6026
      %6028 = vmatmul.bf16.gmra.mxu0 %v5955
      %v6029 = vpop.f32.mrf.mxu0
      %v6030 = vadd.f32 0.0, %v6029
      %v6031 = vpop.f32.mrf.mxu0
      %v6032 = vadd.f32 0.0, %v6031
      %6033 = vmatmul.bf16.gmra.mxu0 %v5958
      %v6034 = vpop.f32.mrf.mxu0
      %v6035 = vadd.f32 0.0, %v6034
      %v6036 = vpop.f32.mrf.mxu0
      %v6037 = vadd.f32 0.0, %v6036
      %6038 = vmatmul.bf16.gmra.mxu0 %v5961
      %v6039 = vpop.f32.mrf.mxu0
      %v6040 = vadd.f32 0.0, %v6039
      %v6041 = vpop.f32.mrf.mxu0
      %v6042 = vadd.f32 0.0, %v6041
      %6043 = vmatmul.bf16.gmra.mxu0 %v5964
      %v6044 = vpop.f32.mrf.mxu0
      %v6045 = vadd.f32 0.0, %v6044
      %v6046 = vpop.f32.mrf.mxu0
      %v6047 = vadd.f32 0.0, %v6046
      %6048 = vmatmul.bf16.gmra.mxu0 %v5967
      %v6049 = vpop.f32.mrf.mxu0
      %v6050 = vadd.f32 0.0, %v6049
      %v6051 = vpop.f32.mrf.mxu0
      %v6052 = vadd.f32 0.0, %v6051
      %6053 = vmatmul.bf16.gmra.mxu0 %v5970
      %v6054 = vpop.f32.mrf.mxu0
      %v6055 = vadd.f32 0.0, %v6054
      %v6056 = vpop.f32.mrf.mxu0
      %v6057 = vadd.f32 0.0, %v6056
      %6058 = vmatmul.bf16.gmra.mxu0 %v5973
      %v6059 = vpop.f32.mrf.mxu0
      %v6060 = vadd.f32 0.0, %v6059
      %v6061 = vpop.f32.mrf.mxu0
      %v6062 = vadd.f32 0.0, %v6061
      %6063 = vdwg.mxu0
      %v6064 = vadd.f32 %v5380, %v5985
      %v6065 = vadd.f32 %v5382, %v5987
      %v6066 = vadd.f32 %v5385, %v5990
      %v6067 = vadd.f32 %v5387, %v5992
      %v6068 = vadd.f32 %v5390, %v5995
      %v6069 = vadd.f32 %v5392, %v5997
      %v6070 = vadd.f32 %v5395, %v6000
      %v6071 = vadd.f32 %v5397, %v6002
      %v6072 = vadd.f32 %v5400, %v6005
      %v6073 = vadd.f32 %v5402, %v6007
      %v6074 = vadd.f32 %v5405, %v6010
      %v6075 = vadd.f32 %v5407, %v6012
      %v6076 = vadd.f32 %v5410, %v6015
      %v6077 = vadd.f32 %v5412, %v6017
      %v6078 = vadd.f32 %v5415, %v6020
      %v6079 = vadd.f32 %v5417, %v6022
      %v6080 = vadd.f32 %v5420, %v6025
      %v6081 = vadd.f32 %v5422, %v6027
      %v6082 = vadd.f32 %v5425, %v6030
      %v6083 = vadd.f32 %v5427, %v6032
      %v6084 = vadd.f32 %v5430, %v6035
      %v6085 = vadd.f32 %v5432, %v6037
      %v6086 = vadd.f32 %v5435, %v6040
      %v6087 = vadd.f32 %v5437, %v6042
      %v6088 = vadd.f32 %v5440, %v6045
      %v6089 = vadd.f32 %v5442, %v6047
      %v6090 = vadd.f32 %v5445, %v6050
      %v6091 = vadd.f32 %v5447, %v6052
      %v6092 = vadd.f32 %v5450, %v6055
      %v6093 = vadd.f32 %v5452, %v6057
      %v6094 = vadd.f32 %v5455, %v6060
      %v6095 = vadd.f32 %v5457, %v6062
      %v6096 = vld [vmem:[%s4390] sm:$0xf]
      %v6097 = vld [vmem:[%s4390 + $0x4] sm:$0xf]
      %v6098 = vld [vmem:[%s4390 + $0x8] sm:$0x1]
      %v6099 = vld [vmem:[%s4390 + $0xc] sm:$0xf]
      %v6100 = vld [vmem:[%s4390 + $0x10] sm:$0xf]
      %v6101 = vld [vmem:[%s4390 + $0x14] sm:$0x1]
      %v6102 = vld [vmem:[%s4390 + $0x18] sm:$0xf]
      %v6103 = vld [vmem:[%s4390 + $0x1c] sm:$0xf]
      %v6104 = vld [vmem:[%s4390 + $0x20] sm:$0x1]
      %v6105 = vld [vmem:[%s4390 + $0x24] sm:$0xf]
      %v6106 = vld [vmem:[%s4390 + $0x28] sm:$0xf]
      %v6107 = vld [vmem:[%s4390 + $0x2c] sm:$0x1]
      %v6108 = vld [vmem:[%s4390 + $0x30] sm:$0xf]
      %v6109 = vld [vmem:[%s4390 + $0x34] sm:$0xf]
      %v6110 = vld [vmem:[%s4390 + $0x38] sm:$0x1]
      %v6111 = vld [vmem:[%s4390 + $0x3c] sm:$0xf]
      %v6112 = vld [vmem:[%s4390 + $0x40] sm:$0xf]
      %v6113 = vld [vmem:[%s4390 + $0x44] sm:$0x1]
      %v6114 = vld [vmem:[%s4390 + $0x48] sm:$0xf]
      %v6115 = vld [vmem:[%s4390 + $0x4c] sm:$0xf]
      %v6116 = vld [vmem:[%s4390 + $0x50] sm:$0x1]
      %v6117 = vld [vmem:[%s4390 + $0x54] sm:$0xf]
      %v6118 = vld [vmem:[%s4390 + $0x58] sm:$0xf]
      %v6119 = vld [vmem:[%s4390 + $0x5c] sm:$0x1]
      %v6121 = vshrl.u32 %v6096, 16
      %v6123 = vrot.slane %v6121, 4
      %v6124 = vshll.u32 %v6096, 16
      %v6126 = vrot.slane %v6124, 5
      %v6127 = vor.u32 %v6123, %v6126
      %v6128 = vrot.slane %v6127, 4
      %v6130 = vshll.u32 %v6097, 16
      %v6132 = vrot.slane %v6130, 5
      %v6133 = vsel %vm879, %v6128, %v6132
      %v6134 = vshrl.u32 %v6097, 16
      %v6136 = vrot.slane %v6134, 4
      %v6137 = vor.u32 %v6136, %v6132
      %v6138 = vrot.slane %v6137, 4
      %v6140 = vshll.u32 %v6098, 16
      %v6142 = vrot.slane %v6140, 5
      %v6143 = vsel %vm879, %v6138, %v6142
      %v6145 = vshrl.u32 %v6099, 16
      %v6147 = vrot.slane %v6145, 4
      %v6148 = vshll.u32 %v6099, 16
      %v6150 = vrot.slane %v6148, 5
      %v6151 = vor.u32 %v6147, %v6150
      %v6152 = vrot.slane %v6151, 4
      %v6154 = vshll.u32 %v6100, 16
      %v6156 = vrot.slane %v6154, 5
      %v6157 = vsel %vm879, %v6152, %v6156
      %v6158 = vshrl.u32 %v6100, 16
      %v6160 = vrot.slane %v6158, 4
      %v6161 = vor.u32 %v6160, %v6156
      %v6162 = vrot.slane %v6161, 4
      %v6164 = vshll.u32 %v6101, 16
      %v6166 = vrot.slane %v6164, 5
      %v6167 = vsel %vm879, %v6162, %v6166
      %v6169 = vshrl.u32 %v6102, 16
      %v6171 = vrot.slane %v6169, 4
      %v6172 = vshll.u32 %v6102, 16
      %v6174 = vrot.slane %v6172, 5
      %v6175 = vor.u32 %v6171, %v6174
      %v6176 = vrot.slane %v6175, 4
      %v6178 = vshll.u32 %v6103, 16
      %v6180 = vrot.slane %v6178, 5
      %v6181 = vsel %vm879, %v6176, %v6180
      %v6182 = vshrl.u32 %v6103, 16
      %v6184 = vrot.slane %v6182, 4
      %v6185 = vor.u32 %v6184, %v6180
      %v6186 = vrot.slane %v6185, 4
      %v6188 = vshll.u32 %v6104, 16
      %v6190 = vrot.slane %v6188, 5
      %v6191 = vsel %vm879, %v6186, %v6190
      %v6193 = vshrl.u32 %v6105, 16
      %v6195 = vrot.slane %v6193, 4
      %v6196 = vshll.u32 %v6105, 16
      %v6198 = vrot.slane %v6196, 5
      %v6199 = vor.u32 %v6195, %v6198
      %v6200 = vrot.slane %v6199, 4
      %v6202 = vshll.u32 %v6106, 16
      %v6204 = vrot.slane %v6202, 5
      %v6205 = vsel %vm879, %v6200, %v6204
      %v6206 = vshrl.u32 %v6106, 16
      %v6208 = vrot.slane %v6206, 4
      %v6209 = vor.u32 %v6208, %v6204
      %v6210 = vrot.slane %v6209, 4
      %v6212 = vshll.u32 %v6107, 16
      %v6214 = vrot.slane %v6212, 5
      %v6215 = vsel %vm879, %v6210, %v6214
      %v6217 = vshrl.u32 %v6108, 16
      %v6219 = vrot.slane %v6217, 4
      %v6220 = vshll.u32 %v6108, 16
      %v6222 = vrot.slane %v6220, 5
      %v6223 = vor.u32 %v6219, %v6222
      %v6224 = vrot.slane %v6223, 4
      %v6226 = vshll.u32 %v6109, 16
      %v6228 = vrot.slane %v6226, 5
      %v6229 = vsel %vm879, %v6224, %v6228
      %v6230 = vshrl.u32 %v6109, 16
      %v6232 = vrot.slane %v6230, 4
      %v6233 = vor.u32 %v6232, %v6228
      %v6234 = vrot.slane %v6233, 4
      %v6236 = vshll.u32 %v6110, 16
      %v6238 = vrot.slane %v6236, 5
      %v6239 = vsel %vm879, %v6234, %v6238
      %v6241 = vshrl.u32 %v6111, 16
      %v6243 = vrot.slane %v6241, 4
      %v6244 = vshll.u32 %v6111, 16
      %v6246 = vrot.slane %v6244, 5
      %v6247 = vor.u32 %v6243, %v6246
      %v6248 = vrot.slane %v6247, 4
      %v6250 = vshll.u32 %v6112, 16
      %v6252 = vrot.slane %v6250, 5
      %v6253 = vsel %vm879, %v6248, %v6252
      %v6254 = vshrl.u32 %v6112, 16
      %v6256 = vrot.slane %v6254, 4
      %v6257 = vor.u32 %v6256, %v6252
      %v6258 = vrot.slane %v6257, 4
      %v6260 = vshll.u32 %v6113, 16
      %v6262 = vrot.slane %v6260, 5
      %v6263 = vsel %vm879, %v6258, %v6262
      %v6265 = vshrl.u32 %v6114, 16
      %v6267 = vrot.slane %v6265, 4
      %v6268 = vshll.u32 %v6114, 16
      %v6270 = vrot.slane %v6268, 5
      %v6271 = vor.u32 %v6267, %v6270
      %v6272 = vrot.slane %v6271, 4
      %v6274 = vshll.u32 %v6115, 16
      %v6276 = vrot.slane %v6274, 5
      %v6277 = vsel %vm879, %v6272, %v6276
      %v6278 = vshrl.u32 %v6115, 16
      %v6280 = vrot.slane %v6278, 4
      %v6281 = vor.u32 %v6280, %v6276
      %v6282 = vrot.slane %v6281, 4
      %v6284 = vshll.u32 %v6116, 16
      %v6286 = vrot.slane %v6284, 5
      %v6287 = vsel %vm879, %v6282, %v6286
      %v6289 = vshrl.u32 %v6117, 16
      %v6291 = vrot.slane %v6289, 4
      %v6292 = vshll.u32 %v6117, 16
      %v6294 = vrot.slane %v6292, 5
      %v6295 = vor.u32 %v6291, %v6294
      %v6296 = vrot.slane %v6295, 4
      %v6298 = vshll.u32 %v6118, 16
      %v6300 = vrot.slane %v6298, 5
      %v6301 = vsel %vm879, %v6296, %v6300
      %v6302 = vshrl.u32 %v6118, 16
      %v6304 = vrot.slane %v6302, 4
      %v6305 = vor.u32 %v6304, %v6300
      %v6306 = vrot.slane %v6305, 4
      %v6308 = vshll.u32 %v6119, 16
      %v6310 = vrot.slane %v6308, 5
      %v6311 = vsel %vm879, %v6306, %v6310
      %v6312 = vunpack.c.l.b16 %v6133
      %v6313 = vunpack.c.l.b16 %v6143
      %v6314 = vunpack.c.l.b16 %v6157
      %v6315 = vunpack.c.l.b16 %v6167
      %v6316 = vunpack.c.l.b16 %v6181
      %v6317 = vunpack.c.l.b16 %v6191
      %v6318 = vunpack.c.l.b16 %v6205
      %v6319 = vunpack.c.l.b16 %v6215
      %v6320 = vunpack.c.l.b16 %v6229
      %v6321 = vunpack.c.l.b16 %v6239
      %v6322 = vunpack.c.l.b16 %v6253
      %v6323 = vunpack.c.l.b16 %v6263
      %v6324 = vunpack.c.l.b16 %v6277
      %v6325 = vunpack.c.l.b16 %v6287
      %v6326 = vunpack.c.l.b16 %v6301
      %v6327 = vunpack.c.l.b16 %v6311
      %v6328 = vpack.c.b16 %v6313, %v6312
      %v6329 = vpack.c.b16 %v6315, %v6314
      %v6330 = vpack.c.b16 %v6317, %v6316
      %v6331 = vpack.c.b16 %v6319, %v6318
      %v6332 = vpack.c.b16 %v6321, %v6320
      %v6333 = vpack.c.b16 %v6323, %v6322
      %v6334 = vpack.c.b16 %v6325, %v6324
      %v6335 = vpack.c.b16 %v6327, %v6326
      %s6336 = scalar_lea.vmem %s5, 96
      %v6337 = vld [vmem:[%s6336] sm:$0xf]
      %v6338 = vld [vmem:[%s6336 + $0x4] sm:$0xf]
      %v6339 = vld [vmem:[%s6336 + $0x8] sm:$0xf]
      %v6340 = vld [vmem:[%s6336 + $0xc] sm:$0xf]
      %v6341 = vld [vmem:[%s6336 + $0x10] sm:$0xf]
      %v6342 = vld [vmem:[%s6336 + $0x14] sm:$0xf]
      %v6343 = vld [vmem:[%s6336 + $0x18] sm:$0xf]
      %v6344 = vld [vmem:[%s6336 + $0x1c] sm:$0xf]
      %v6353 = vunpack.c.l.b16 %v6337
      %v6354 = vunpack.c.l.b16 %v6338
      %v6355 = vunpack.c.l.b16 %v6339
      %v6356 = vunpack.c.l.b16 %v6340
      %v6357 = vunpack.c.l.b16 %v6341
      %v6358 = vunpack.c.l.b16 %v6342
      %v6359 = vunpack.c.l.b16 %v6343
      %v6360 = vunpack.c.l.b16 %v6344
      %v6361 = vpack.c.b16 %v6354, %v6353
      %v6362 = vpack.c.b16 %v6356, %v6355
      %v6363 = vpack.c.b16 %v6358, %v6357
      %v6364 = vpack.c.b16 %v6360, %v6359
      %v6370 = vsel %vm5160, %v6328, 0
      %v6373 = vsel %vm5160, %v6329, 0
      %v6376 = vsel %vm5160, %v6330, 0
      %v6379 = vsel %vm5160, %v6331, 0
      %v6382 = vsel %vm5160, %v6332, 0
      %v6385 = vsel %vm5160, %v6333, 0
      %v6388 = vsel %vm5160, %v6334, 0
      %v6391 = vsel %vm5160, %v6335, 0
      %6393 = vmatpush.bf16.msra.mxu0 0
      %6394 = vmatpush.bf16.msra.mxu0 0
      %6395 = vmatpush.bf16.msra.mxu0 0
      %6396 = vmatpush.bf16.msra.mxu0 0
      %6397 = vmatpush.bf16.msra.mxu0 %v6364
      %6398 = vmatpush.bf16.msra.mxu0 %v6363
      %6399 = vmatpush.bf16.msra.mxu0 %v6362
      %6400 = vmatpush.bf16.msra.mxu0 %v6361
      %6401 = vmatmul.bf16.gmra.mxu0 %v5347
      %v6402 = vpop.f32.mrf.mxu0
      %v6403 = vadd.f32 0.0, %v6402
      %v6404 = vpop.f32.mrf.mxu0
      %v6405 = vadd.f32 0.0, %v6404
      %6406 = vmatmul.bf16.gmra.mxu0 %v5350
      %v6407 = vpop.f32.mrf.mxu0
      %v6408 = vadd.f32 0.0, %v6407
      %v6409 = vpop.f32.mrf.mxu0
      %v6410 = vadd.f32 0.0, %v6409
      %6411 = vmatmul.bf16.gmra.mxu0 %v5353
      %v6412 = vpop.f32.mrf.mxu0
      %v6413 = vadd.f32 0.0, %v6412
      %v6414 = vpop.f32.mrf.mxu0
      %v6415 = vadd.f32 0.0, %v6414
      %6416 = vmatmul.bf16.gmra.mxu0 %v5356
      %v6417 = vpop.f32.mrf.mxu0
      %v6418 = vadd.f32 0.0, %v6417
      %v6419 = vpop.f32.mrf.mxu0
      %v6420 = vadd.f32 0.0, %v6419
      %6421 = vmatmul.bf16.gmra.mxu0 %v5359
      %v6422 = vpop.f32.mrf.mxu0
      %v6423 = vadd.f32 0.0, %v6422
      %v6424 = vpop.f32.mrf.mxu0
      %v6425 = vadd.f32 0.0, %v6424
      %6426 = vmatmul.bf16.gmra.mxu0 %v5362
      %v6427 = vpop.f32.mrf.mxu0
      %v6428 = vadd.f32 0.0, %v6427
      %v6429 = vpop.f32.mrf.mxu0
      %v6430 = vadd.f32 0.0, %v6429
      %6431 = vmatmul.bf16.gmra.mxu0 %v5365
      %v6432 = vpop.f32.mrf.mxu0
      %v6433 = vadd.f32 0.0, %v6432
      %v6434 = vpop.f32.mrf.mxu0
      %v6435 = vadd.f32 0.0, %v6434
      %6436 = vmatmul.bf16.gmra.mxu0 %v5368
      %v6437 = vpop.f32.mrf.mxu0
      %v6438 = vadd.f32 0.0, %v6437
      %v6439 = vpop.f32.mrf.mxu0
      %v6440 = vadd.f32 0.0, %v6439
      %6441 = vmatmul.bf16.gmra.mxu0 %v6370
      %v6442 = vpop.f32.mrf.mxu0
      %v6443 = vadd.f32 0.0, %v6442
      %v6444 = vpop.f32.mrf.mxu0
      %v6445 = vadd.f32 0.0, %v6444
      %6446 = vmatmul.bf16.gmra.mxu0 %v6373
      %v6447 = vpop.f32.mrf.mxu0
      %v6448 = vadd.f32 0.0, %v6447
      %v6449 = vpop.f32.mrf.mxu0
      %v6450 = vadd.f32 0.0, %v6449
      %6451 = vmatmul.bf16.gmra.mxu0 %v6376
      %v6452 = vpop.f32.mrf.mxu0
      %v6453 = vadd.f32 0.0, %v6452
      %v6454 = vpop.f32.mrf.mxu0
      %v6455 = vadd.f32 0.0, %v6454
      %6456 = vmatmul.bf16.gmra.mxu0 %v6379
      %v6457 = vpop.f32.mrf.mxu0
      %v6458 = vadd.f32 0.0, %v6457
      %v6459 = vpop.f32.mrf.mxu0
      %v6460 = vadd.f32 0.0, %v6459
      %6461 = vmatmul.bf16.gmra.mxu0 %v6382
      %v6462 = vpop.f32.mrf.mxu0
      %v6463 = vadd.f32 0.0, %v6462
      %v6464 = vpop.f32.mrf.mxu0
      %v6465 = vadd.f32 0.0, %v6464
      %6466 = vmatmul.bf16.gmra.mxu0 %v6385
      %v6467 = vpop.f32.mrf.mxu0
      %v6468 = vadd.f32 0.0, %v6467
      %v6469 = vpop.f32.mrf.mxu0
      %v6470 = vadd.f32 0.0, %v6469
      %6471 = vmatmul.bf16.gmra.mxu0 %v6388
      %v6472 = vpop.f32.mrf.mxu0
      %v6473 = vadd.f32 0.0, %v6472
      %v6474 = vpop.f32.mrf.mxu0
      %v6475 = vadd.f32 0.0, %v6474
      %6476 = vmatmul.bf16.gmra.mxu0 %v6391
      %v6477 = vpop.f32.mrf.mxu0
      %v6478 = vadd.f32 0.0, %v6477
      %v6479 = vpop.f32.mrf.mxu0
      %v6480 = vadd.f32 0.0, %v6479
      %6481 = vdwg.mxu0
      %v6482 = vadd.f32 %v6064, %v6403
      %v6483 = vadd.f32 %v6065, %v6405
      %v6484 = vadd.f32 %v6066, %v6408
      %v6485 = vadd.f32 %v6067, %v6410
      %v6486 = vadd.f32 %v6068, %v6413
      %v6487 = vadd.f32 %v6069, %v6415
      %v6488 = vadd.f32 %v6070, %v6418
      %v6489 = vadd.f32 %v6071, %v6420
      %v6490 = vadd.f32 %v6072, %v6423
      %v6491 = vadd.f32 %v6073, %v6425
      %v6492 = vadd.f32 %v6074, %v6428
      %v6493 = vadd.f32 %v6075, %v6430
      %v6494 = vadd.f32 %v6076, %v6433
      %v6495 = vadd.f32 %v6077, %v6435
      %v6496 = vadd.f32 %v6078, %v6438
      %v6497 = vadd.f32 %v6079, %v6440
      %v6498 = vadd.f32 %v6080, %v6443
      %v6499 = vadd.f32 %v6081, %v6445
      %v6500 = vadd.f32 %v6082, %v6448
      %v6501 = vadd.f32 %v6083, %v6450
      %v6502 = vadd.f32 %v6084, %v6453
      %v6503 = vadd.f32 %v6085, %v6455
      %v6504 = vadd.f32 %v6086, %v6458
      %v6505 = vadd.f32 %v6087, %v6460
      %v6506 = vadd.f32 %v6088, %v6463
      %v6507 = vadd.f32 %v6089, %v6465
      %v6508 = vadd.f32 %v6090, %v6468
      %v6509 = vadd.f32 %v6091, %v6470
      %v6510 = vadd.f32 %v6092, %v6473
      %v6511 = vadd.f32 %v6093, %v6475
      %v6512 = vadd.f32 %v6094, %v6478
      %v6513 = vadd.f32 %v6095, %v6480
      %v6514 = vld [vmem:[%s4390] sm:$0xe]
      %v6515 = vld [vmem:[%s4390 + $0xc] sm:$0xe]
      %v6516 = vld [vmem:[%s4390 + $0x18] sm:$0xe]
      %v6517 = vld [vmem:[%s4390 + $0x24] sm:$0xe]
      %v6518 = vld [vmem:[%s4390 + $0x30] sm:$0xe]
      %v6519 = vld [vmem:[%s4390 + $0x3c] sm:$0xe]
      %v6520 = vld [vmem:[%s4390 + $0x48] sm:$0xe]
      %v6521 = vld [vmem:[%s4390 + $0x54] sm:$0xe]
      %v6546 = vrot.slane %v6514, 5
      %v6547 = vrot.slane %v6546, 4
      %v6548 = vrot.slane %v6097, 5
      %v6549 = vsel %vm1653, %v6547, %v6548
      %v6550 = vrot.slane %v6548, 4
      %v6551 = vrot.slane %v6098, 5
      %v6552 = vsel %vm1653, %v6550, %v6551
      %v6553 = vrot.slane %v6515, 5
      %v6554 = vrot.slane %v6553, 4
      %v6555 = vrot.slane %v6100, 5
      %v6556 = vsel %vm1653, %v6554, %v6555
      %v6557 = vrot.slane %v6555, 4
      %v6558 = vrot.slane %v6101, 5
      %v6559 = vsel %vm1653, %v6557, %v6558
      %v6560 = vrot.slane %v6516, 5
      %v6561 = vrot.slane %v6560, 4
      %v6562 = vrot.slane %v6103, 5
      %v6563 = vsel %vm1653, %v6561, %v6562
      %v6564 = vrot.slane %v6562, 4
      %v6565 = vrot.slane %v6104, 5
      %v6566 = vsel %vm1653, %v6564, %v6565
      %v6567 = vrot.slane %v6517, 5
      %v6568 = vrot.slane %v6567, 4
      %v6569 = vrot.slane %v6106, 5
      %v6570 = vsel %vm1653, %v6568, %v6569
      %v6571 = vrot.slane %v6569, 4
      %v6572 = vrot.slane %v6107, 5
      %v6573 = vsel %vm1653, %v6571, %v6572
      %v6574 = vrot.slane %v6518, 5
      %v6575 = vrot.slane %v6574, 4
      %v6576 = vrot.slane %v6109, 5
      %v6577 = vsel %vm1653, %v6575, %v6576
      %v6578 = vrot.slane %v6576, 4
      %v6579 = vrot.slane %v6110, 5
      %v6580 = vsel %vm1653, %v6578, %v6579
      %v6581 = vrot.slane %v6519, 5
      %v6582 = vrot.slane %v6581, 4
      %v6583 = vrot.slane %v6112, 5
      %v6584 = vsel %vm1653, %v6582, %v6583
      %v6585 = vrot.slane %v6583, 4
      %v6586 = vrot.slane %v6113, 5
      %v6587 = vsel %vm1653, %v6585, %v6586
      %v6588 = vrot.slane %v6520, 5
      %v6589 = vrot.slane %v6588, 4
      %v6590 = vrot.slane %v6115, 5
      %v6591 = vsel %vm1653, %v6589, %v6590
      %v6592 = vrot.slane %v6590, 4
      %v6593 = vrot.slane %v6116, 5
      %v6594 = vsel %vm1653, %v6592, %v6593
      %v6595 = vrot.slane %v6521, 5
      %v6596 = vrot.slane %v6595, 4
      %v6597 = vrot.slane %v6118, 5
      %v6598 = vsel %vm1653, %v6596, %v6597
      %v6599 = vrot.slane %v6597, 4
      %v6600 = vrot.slane %v6119, 5
      %v6601 = vsel %vm1653, %v6599, %v6600
      %v6602 = vunpack.c.l.b16 %v6549
      %v6603 = vunpack.c.l.b16 %v6552
      %v6604 = vunpack.c.l.b16 %v6556
      %v6605 = vunpack.c.l.b16 %v6559
      %v6606 = vunpack.c.l.b16 %v6563
      %v6607 = vunpack.c.l.b16 %v6566
      %v6608 = vunpack.c.l.b16 %v6570
      %v6609 = vunpack.c.l.b16 %v6573
      %v6610 = vunpack.c.l.b16 %v6577
      %v6611 = vunpack.c.l.b16 %v6580
      %v6612 = vunpack.c.l.b16 %v6584
      %v6613 = vunpack.c.l.b16 %v6587
      %v6614 = vunpack.c.l.b16 %v6591
      %v6615 = vunpack.c.l.b16 %v6594
      %v6616 = vunpack.c.l.b16 %v6598
      %v6617 = vunpack.c.l.b16 %v6601
      %v6618 = vpack.c.b16 %v6603, %v6602
      %v6619 = vpack.c.b16 %v6605, %v6604
      %v6620 = vpack.c.b16 %v6607, %v6606
      %v6621 = vpack.c.b16 %v6609, %v6608
      %v6622 = vpack.c.b16 %v6611, %v6610
      %v6623 = vpack.c.b16 %v6613, %v6612
      %v6624 = vpack.c.b16 %v6615, %v6614
      %v6625 = vpack.c.b16 %v6617, %v6616
      %s6626 = scalar_lea.vmem %s5, 128
      %v6627 = vld [vmem:[%s6626] sm:$0xf]
      %v6628 = vld [vmem:[%s6626 + $0x4] sm:$0xf]
      %v6629 = vld [vmem:[%s6626 + $0x8] sm:$0xf]
      %v6630 = vld [vmem:[%s6626 + $0xc] sm:$0xf]
      %v6631 = vld [vmem:[%s6626 + $0x10] sm:$0xf]
      %v6632 = vld [vmem:[%s6626 + $0x14] sm:$0xf]
      %v6633 = vld [vmem:[%s6626 + $0x18] sm:$0xf]
      %v6634 = vld [vmem:[%s6626 + $0x1c] sm:$0xf]
      %v6643 = vunpack.c.l.b16 %v6627
      %v6644 = vunpack.c.l.b16 %v6628
      %v6645 = vunpack.c.l.b16 %v6629
      %v6646 = vunpack.c.l.b16 %v6630
      %v6647 = vunpack.c.l.b16 %v6631
      %v6648 = vunpack.c.l.b16 %v6632
      %v6649 = vunpack.c.l.b16 %v6633
      %v6650 = vunpack.c.l.b16 %v6634
      %v6651 = vpack.c.b16 %v6644, %v6643
      %v6652 = vpack.c.b16 %v6646, %v6645
      %v6653 = vpack.c.b16 %v6648, %v6647
      %v6654 = vpack.c.b16 %v6650, %v6649
      %v6660 = vsel %vm5160, %v6618, 0
      %v6663 = vsel %vm5160, %v6619, 0
      %v6666 = vsel %vm5160, %v6620, 0
      %v6669 = vsel %vm5160, %v6621, 0
      %v6672 = vsel %vm5160, %v6622, 0
      %v6675 = vsel %vm5160, %v6623, 0
      %v6678 = vsel %vm5160, %v6624, 0
      %v6681 = vsel %vm5160, %v6625, 0
      %6683 = vmatpush.bf16.msra.mxu0 0
      %6684 = vmatpush.bf16.msra.mxu0 0
      %6685 = vmatpush.bf16.msra.mxu0 0
      %6686 = vmatpush.bf16.msra.mxu0 0
      %6687 = vmatpush.bf16.msra.mxu0 %v6654
      %6688 = vmatpush.bf16.msra.mxu0 %v6653
      %6689 = vmatpush.bf16.msra.mxu0 %v6652
      %6690 = vmatpush.bf16.msra.mxu0 %v6651
      %6691 = vmatmul.bf16.gmra.mxu0 %v5186
      %v6692 = vpop.f32.mrf.mxu0
      %v6693 = vadd.f32 0.0, %v6692
      %v6694 = vpop.f32.mrf.mxu0
      %v6695 = vadd.f32 0.0, %v6694
      %6696 = vmatmul.bf16.gmra.mxu0 %v5189
      %v6697 = vpop.f32.mrf.mxu0
      %v6698 = vadd.f32 0.0, %v6697
      %v6699 = vpop.f32.mrf.mxu0
      %v6700 = vadd.f32 0.0, %v6699
      %6701 = vmatmul.bf16.gmra.mxu0 %v5192
      %v6702 = vpop.f32.mrf.mxu0
      %v6703 = vadd.f32 0.0, %v6702
      %v6704 = vpop.f32.mrf.mxu0
      %v6705 = vadd.f32 0.0, %v6704
      %6706 = vmatmul.bf16.gmra.mxu0 %v5195
      %v6707 = vpop.f32.mrf.mxu0
      %v6708 = vadd.f32 0.0, %v6707
      %v6709 = vpop.f32.mrf.mxu0
      %v6710 = vadd.f32 0.0, %v6709
      %6711 = vmatmul.bf16.gmra.mxu0 %v5198
      %v6712 = vpop.f32.mrf.mxu0
      %v6713 = vadd.f32 0.0, %v6712
      %v6714 = vpop.f32.mrf.mxu0
      %v6715 = vadd.f32 0.0, %v6714
      %6716 = vmatmul.bf16.gmra.mxu0 %v5201
      %v6717 = vpop.f32.mrf.mxu0
      %v6718 = vadd.f32 0.0, %v6717
      %v6719 = vpop.f32.mrf.mxu0
      %v6720 = vadd.f32 0.0, %v6719
      %6721 = vmatmul.bf16.gmra.mxu0 %v5204
      %v6722 = vpop.f32.mrf.mxu0
      %v6723 = vadd.f32 0.0, %v6722
      %v6724 = vpop.f32.mrf.mxu0
      %v6725 = vadd.f32 0.0, %v6724
      %6726 = vmatmul.bf16.gmra.mxu0 %v5207
      %v6727 = vpop.f32.mrf.mxu0
      %v6728 = vadd.f32 0.0, %v6727
      %v6729 = vpop.f32.mrf.mxu0
      %v6730 = vadd.f32 0.0, %v6729
      %6731 = vmatmul.bf16.gmra.mxu0 %v6660
      %v6732 = vpop.f32.mrf.mxu0
      %v6733 = vadd.f32 0.0, %v6732
      %v6734 = vpop.f32.mrf.mxu0
      %v6735 = vadd.f32 0.0, %v6734
      %6736 = vmatmul.bf16.gmra.mxu0 %v6663
      %v6737 = vpop.f32.mrf.mxu0
      %v6738 = vadd.f32 0.0, %v6737
      %v6739 = vpop.f32.mrf.mxu0
      %v6740 = vadd.f32 0.0, %v6739
      %6741 = vmatmul.bf16.gmra.mxu0 %v6666
      %v6742 = vpop.f32.mrf.mxu0
      %v6743 = vadd.f32 0.0, %v6742
      %v6744 = vpop.f32.mrf.mxu0
      %v6745 = vadd.f32 0.0, %v6744
      %6746 = vmatmul.bf16.gmra.mxu0 %v6669
      %v6747 = vpop.f32.mrf.mxu0
      %v6748 = vadd.f32 0.0, %v6747
      %v6749 = vpop.f32.mrf.mxu0
      %v6750 = vadd.f32 0.0, %v6749
      %6751 = vmatmul.bf16.gmra.mxu0 %v6672
      %v6752 = vpop.f32.mrf.mxu0
      %v6753 = vadd.f32 0.0, %v6752
      %v6754 = vpop.f32.mrf.mxu0
      %v6755 = vadd.f32 0.0, %v6754
      %6756 = vmatmul.bf16.gmra.mxu0 %v6675
      %v6757 = vpop.f32.mrf.mxu0
      %v6758 = vadd.f32 0.0, %v6757
      %v6759 = vpop.f32.mrf.mxu0
      %v6760 = vadd.f32 0.0, %v6759
      %6761 = vmatmul.bf16.gmra.mxu0 %v6678
      %v6762 = vpop.f32.mrf.mxu0
      %v6763 = vadd.f32 0.0, %v6762
      %v6764 = vpop.f32.mrf.mxu0
      %v6765 = vadd.f32 0.0, %v6764
      %6766 = vmatmul.bf16.gmra.mxu0 %v6681
      %v6767 = vpop.f32.mrf.mxu0
      %v6768 = vadd.f32 0.0, %v6767
      %v6769 = vpop.f32.mrf.mxu0
      %v6770 = vadd.f32 0.0, %v6769
      %6771 = vdwg.mxu0
      %v6772 = vadd.f32 %v6482, %v6693
      %v6773 = vadd.f32 %v6483, %v6695
      %v6774 = vadd.f32 %v6484, %v6698
      %v6775 = vadd.f32 %v6485, %v6700
      %v6776 = vadd.f32 %v6486, %v6703
      %v6777 = vadd.f32 %v6487, %v6705
      %v6778 = vadd.f32 %v6488, %v6708
      %v6779 = vadd.f32 %v6489, %v6710
      %v6780 = vadd.f32 %v6490, %v6713
      %v6781 = vadd.f32 %v6491, %v6715
      %v6782 = vadd.f32 %v6492, %v6718
      %v6783 = vadd.f32 %v6493, %v6720
      %v6784 = vadd.f32 %v6494, %v6723
      %v6785 = vadd.f32 %v6495, %v6725
      %v6786 = vadd.f32 %v6496, %v6728
      %v6787 = vadd.f32 %v6497, %v6730
      %v6788 = vadd.f32 %v6498, %v6733
      %v6789 = vadd.f32 %v6499, %v6735
      %v6790 = vadd.f32 %v6500, %v6738
      %v6791 = vadd.f32 %v6501, %v6740
      %v6792 = vadd.f32 %v6502, %v6743
      %v6793 = vadd.f32 %v6503, %v6745
      %v6794 = vadd.f32 %v6504, %v6748
      %v6795 = vadd.f32 %v6505, %v6750
      %v6796 = vadd.f32 %v6506, %v6753
      %v6797 = vadd.f32 %v6507, %v6755
      %v6798 = vadd.f32 %v6508, %v6758
      %v6799 = vadd.f32 %v6509, %v6760
      %v6800 = vadd.f32 %v6510, %v6763
      %v6801 = vadd.f32 %v6511, %v6765
      %v6802 = vadd.f32 %v6512, %v6768
      %v6803 = vadd.f32 %v6513, %v6770
      %v6804 = vld [vmem:[%s4390 + $0x8] sm:$0x3]
      %v6805 = vld [vmem:[%s4390 + $0x14] sm:$0x3]
      %v6806 = vld [vmem:[%s4390 + $0x20] sm:$0x3]
      %v6807 = vld [vmem:[%s4390 + $0x2c] sm:$0x3]
      %v6808 = vld [vmem:[%s4390 + $0x38] sm:$0x3]
      %v6809 = vld [vmem:[%s4390 + $0x44] sm:$0x3]
      %v6810 = vld [vmem:[%s4390 + $0x50] sm:$0x3]
      %v6811 = vld [vmem:[%s4390 + $0x5c] sm:$0x3]
      %v6813 = vshrl.u32 %v6514, 16
      %v6815 = vrot.slane %v6813, 5
      %v6816 = vshll.u32 %v6514, 16
      %v6818 = vrot.slane %v6816, 6
      %v6819 = vor.u32 %v6815, %v6818
      %v6820 = vrot.slane %v6819, 4
      %v6821 = vrot.slane %v6134, 5
      %v6822 = vrot.slane %v6130, 6
      %v6823 = vor.u32 %v6821, %v6822
      %v6824 = vsel %vm5469, %v6820, %v6823
      %v6825 = vrot.slane %v6823, 4
      %v6827 = vshrl.u32 %v6804, 16
      %v6829 = vrot.slane %v6827, 5
      %v6830 = vshll.u32 %v6804, 16
      %v6832 = vrot.slane %v6830, 6
      %v6833 = vor.u32 %v6829, %v6832
      %v6834 = vsel %vm5469, %v6825, %v6833
      %v6836 = vshrl.u32 %v6515, 16
      %v6838 = vrot.slane %v6836, 5
      %v6839 = vshll.u32 %v6515, 16
      %v6841 = vrot.slane %v6839, 6
      %v6842 = vor.u32 %v6838, %v6841
      %v6843 = vrot.slane %v6842, 4
      %v6844 = vrot.slane %v6158, 5
      %v6845 = vrot.slane %v6154, 6
      %v6846 = vor.u32 %v6844, %v6845
      %v6847 = vsel %vm5469, %v6843, %v6846
      %v6848 = vrot.slane %v6846, 4
      %v6850 = vshrl.u32 %v6805, 16
      %v6852 = vrot.slane %v6850, 5
      %v6853 = vshll.u32 %v6805, 16
      %v6855 = vrot.slane %v6853, 6
      %v6856 = vor.u32 %v6852, %v6855
      %v6857 = vsel %vm5469, %v6848, %v6856
      %v6859 = vshrl.u32 %v6516, 16
      %v6861 = vrot.slane %v6859, 5
      %v6862 = vshll.u32 %v6516, 16
      %v6864 = vrot.slane %v6862, 6
      %v6865 = vor.u32 %v6861, %v6864
      %v6866 = vrot.slane %v6865, 4
      %v6867 = vrot.slane %v6182, 5
      %v6868 = vrot.slane %v6178, 6
      %v6869 = vor.u32 %v6867, %v6868
      %v6870 = vsel %vm5469, %v6866, %v6869
      %v6871 = vrot.slane %v6869, 4
      %v6873 = vshrl.u32 %v6806, 16
      %v6875 = vrot.slane %v6873, 5
      %v6876 = vshll.u32 %v6806, 16
      %v6878 = vrot.slane %v6876, 6
      %v6879 = vor.u32 %v6875, %v6878
      %v6880 = vsel %vm5469, %v6871, %v6879
      %v6882 = vshrl.u32 %v6517, 16
      %v6884 = vrot.slane %v6882, 5
      %v6885 = vshll.u32 %v6517, 16
      %v6887 = vrot.slane %v6885, 6
      %v6888 = vor.u32 %v6884, %v6887
      %v6889 = vrot.slane %v6888, 4
      %v6890 = vrot.slane %v6206, 5
      %v6891 = vrot.slane %v6202, 6
      %v6892 = vor.u32 %v6890, %v6891
      %v6893 = vsel %vm5469, %v6889, %v6892
      %v6894 = vrot.slane %v6892, 4
      %v6896 = vshrl.u32 %v6807, 16
      %v6898 = vrot.slane %v6896, 5
      %v6899 = vshll.u32 %v6807, 16
      %v6901 = vrot.slane %v6899, 6
      %v6902 = vor.u32 %v6898, %v6901
      %v6903 = vsel %vm5469, %v6894, %v6902
      %v6905 = vshrl.u32 %v6518, 16
      %v6907 = vrot.slane %v6905, 5
      %v6908 = vshll.u32 %v6518, 16
      %v6910 = vrot.slane %v6908, 6
      %v6911 = vor.u32 %v6907, %v6910
      %v6912 = vrot.slane %v6911, 4
      %v6913 = vrot.slane %v6230, 5
      %v6914 = vrot.slane %v6226, 6
      %v6915 = vor.u32 %v6913, %v6914
      %v6916 = vsel %vm5469, %v6912, %v6915
      %v6917 = vrot.slane %v6915, 4
      %v6919 = vshrl.u32 %v6808, 16
      %v6921 = vrot.slane %v6919, 5
      %v6922 = vshll.u32 %v6808, 16
      %v6924 = vrot.slane %v6922, 6
      %v6925 = vor.u32 %v6921, %v6924
      %v6926 = vsel %vm5469, %v6917, %v6925
      %v6928 = vshrl.u32 %v6519, 16
      %v6930 = vrot.slane %v6928, 5
      %v6931 = vshll.u32 %v6519, 16
      %v6933 = vrot.slane %v6931, 6
      %v6934 = vor.u32 %v6930, %v6933
      %v6935 = vrot.slane %v6934, 4
      %v6936 = vrot.slane %v6254, 5
      %v6937 = vrot.slane %v6250, 6
      %v6938 = vor.u32 %v6936, %v6937
      %v6939 = vsel %vm5469, %v6935, %v6938
      %v6940 = vrot.slane %v6938, 4
      %v6942 = vshrl.u32 %v6809, 16
      %v6944 = vrot.slane %v6942, 5
      %v6945 = vshll.u32 %v6809, 16
      %v6947 = vrot.slane %v6945, 6
      %v6948 = vor.u32 %v6944, %v6947
      %v6949 = vsel %vm5469, %v6940, %v6948
      %v6951 = vshrl.u32 %v6520, 16
      %v6953 = vrot.slane %v6951, 5
      %v6954 = vshll.u32 %v6520, 16
      %v6956 = vrot.slane %v6954, 6
      %v6957 = vor.u32 %v6953, %v6956
      %v6958 = vrot.slane %v6957, 4
      %v6959 = vrot.slane %v6278, 5
      %v6960 = vrot.slane %v6274, 6
      %v6961 = vor.u32 %v6959, %v6960
      %v6962 = vsel %vm5469, %v6958, %v6961
      %v6963 = vrot.slane %v6961, 4
      %v6965 = vshrl.u32 %v6810, 16
      %v6967 = vrot.slane %v6965, 5
      %v6968 = vshll.u32 %v6810, 16
      %v6970 = vrot.slane %v6968, 6
      %v6971 = vor.u32 %v6967, %v6970
      %v6972 = vsel %vm5469, %v6963, %v6971
      %v6974 = vshrl.u32 %v6521, 16
      %v6976 = vrot.slane %v6974, 5
      %v6977 = vshll.u32 %v6521, 16
      %v6979 = vrot.slane %v6977, 6
      %v6980 = vor.u32 %v6976, %v6979
      %v6981 = vrot.slane %v6980, 4
      %v6982 = vrot.slane %v6302, 5
      %v6983 = vrot.slane %v6298, 6
      %v6984 = vor.u32 %v6982, %v6983
      %v6985 = vsel %vm5469, %v6981, %v6984
      %v6986 = vrot.slane %v6984, 4
      %v6988 = vshrl.u32 %v6811, 16
      %v6990 = vrot.slane %v6988, 5
      %v6991 = vshll.u32 %v6811, 16
      %v6993 = vrot.slane %v6991, 6
      %v6994 = vor.u32 %v6990, %v6993
      %v6995 = vsel %vm5469, %v6986, %v6994
      %v6996 = vunpack.c.l.b16 %v6824
      %v6997 = vunpack.c.l.b16 %v6834
      %v6998 = vunpack.c.l.b16 %v6847
      %v6999 = vunpack.c.l.b16 %v6857
      %v7000 = vunpack.c.l.b16 %v6870
      %v7001 = vunpack.c.l.b16 %v6880
      %v7002 = vunpack.c.l.b16 %v6893
      %v7003 = vunpack.c.l.b16 %v6903
      %v7004 = vunpack.c.l.b16 %v6916
      %v7005 = vunpack.c.l.b16 %v6926
      %v7006 = vunpack.c.l.b16 %v6939
      %v7007 = vunpack.c.l.b16 %v6949
      %v7008 = vunpack.c.l.b16 %v6962
      %v7009 = vunpack.c.l.b16 %v6972
      %v7010 = vunpack.c.l.b16 %v6985
      %v7011 = vunpack.c.l.b16 %v6995
      %v7012 = vpack.c.b16 %v6997, %v6996
      %v7013 = vpack.c.b16 %v6999, %v6998
      %v7014 = vpack.c.b16 %v7001, %v7000
      %v7015 = vpack.c.b16 %v7003, %v7002
      %v7016 = vpack.c.b16 %v7005, %v7004
      %v7017 = vpack.c.b16 %v7007, %v7006
      %v7018 = vpack.c.b16 %v7009, %v7008
      %v7019 = vpack.c.b16 %v7011, %v7010
      %s7020 = scalar_lea.vmem %s5, 160
      %v7021 = vld [vmem:[%s7020] sm:$0xf]
      %v7022 = vld [vmem:[%s7020 + $0x4] sm:$0xf]
      %v7023 = vld [vmem:[%s7020 + $0x8] sm:$0xf]
      %v7024 = vld [vmem:[%s7020 + $0xc] sm:$0xf]
      %v7025 = vld [vmem:[%s7020 + $0x10] sm:$0xf]
      %v7026 = vld [vmem:[%s7020 + $0x14] sm:$0xf]
      %v7027 = vld [vmem:[%s7020 + $0x18] sm:$0xf]
      %v7028 = vld [vmem:[%s7020 + $0x1c] sm:$0xf]
      %v7037 = vunpack.c.l.b16 %v7021
      %v7038 = vunpack.c.l.b16 %v7022
      %v7039 = vunpack.c.l.b16 %v7023
      %v7040 = vunpack.c.l.b16 %v7024
      %v7041 = vunpack.c.l.b16 %v7025
      %v7042 = vunpack.c.l.b16 %v7026
      %v7043 = vunpack.c.l.b16 %v7027
      %v7044 = vunpack.c.l.b16 %v7028
      %v7045 = vpack.c.b16 %v7038, %v7037
      %v7046 = vpack.c.b16 %v7040, %v7039
      %v7047 = vpack.c.b16 %v7042, %v7041
      %v7048 = vpack.c.b16 %v7044, %v7043
      %v7054 = vsel %vm5160, %v7012, 0
      %v7057 = vsel %vm5160, %v7013, 0
      %v7060 = vsel %vm5160, %v7014, 0
      %v7063 = vsel %vm5160, %v7015, 0
      %v7066 = vsel %vm5160, %v7016, 0
      %v7069 = vsel %vm5160, %v7017, 0
      %v7072 = vsel %vm5160, %v7018, 0
      %v7075 = vsel %vm5160, %v7019, 0
      %7077 = vmatpush.bf16.msra.mxu0 0
      %7078 = vmatpush.bf16.msra.mxu0 0
      %7079 = vmatpush.bf16.msra.mxu0 0
      %7080 = vmatpush.bf16.msra.mxu0 0
      %7081 = vmatpush.bf16.msra.mxu0 %v7048
      %7082 = vmatpush.bf16.msra.mxu0 %v7047
      %7083 = vmatpush.bf16.msra.mxu0 %v7046
      %7084 = vmatpush.bf16.msra.mxu0 %v7045
      %7085 = vmatmul.bf16.gmra.mxu0 %v5952
      %v7086 = vpop.f32.mrf.mxu0
      %v7087 = vadd.f32 0.0, %v7086
      %v7088 = vpop.f32.mrf.mxu0
      %v7089 = vadd.f32 0.0, %v7088
      %7090 = vmatmul.bf16.gmra.mxu0 %v5955
      %v7091 = vpop.f32.mrf.mxu0
      %v7092 = vadd.f32 0.0, %v7091
      %v7093 = vpop.f32.mrf.mxu0
      %v7094 = vadd.f32 0.0, %v7093
      %7095 = vmatmul.bf16.gmra.mxu0 %v5958
      %v7096 = vpop.f32.mrf.mxu0
      %v7097 = vadd.f32 0.0, %v7096
      %v7098 = vpop.f32.mrf.mxu0
      %v7099 = vadd.f32 0.0, %v7098
      %7100 = vmatmul.bf16.gmra.mxu0 %v5961
      %v7101 = vpop.f32.mrf.mxu0
      %v7102 = vadd.f32 0.0, %v7101
      %v7103 = vpop.f32.mrf.mxu0
      %v7104 = vadd.f32 0.0, %v7103
      %7105 = vmatmul.bf16.gmra.mxu0 %v5964
      %v7106 = vpop.f32.mrf.mxu0
      %v7107 = vadd.f32 0.0, %v7106
      %v7108 = vpop.f32.mrf.mxu0
      %v7109 = vadd.f32 0.0, %v7108
      %7110 = vmatmul.bf16.gmra.mxu0 %v5967
      %v7111 = vpop.f32.mrf.mxu0
      %v7112 = vadd.f32 0.0, %v7111
      %v7113 = vpop.f32.mrf.mxu0
      %v7114 = vadd.f32 0.0, %v7113
      %7115 = vmatmul.bf16.gmra.mxu0 %v5970
      %v7116 = vpop.f32.mrf.mxu0
      %v7117 = vadd.f32 0.0, %v7116
      %v7118 = vpop.f32.mrf.mxu0
      %v7119 = vadd.f32 0.0, %v7118
      %7120 = vmatmul.bf16.gmra.mxu0 %v5973
      %v7121 = vpop.f32.mrf.mxu0
      %v7122 = vadd.f32 0.0, %v7121
      %v7123 = vpop.f32.mrf.mxu0
      %v7124 = vadd.f32 0.0, %v7123
      %7125 = vmatmul.bf16.gmra.mxu0 %v7054
      %v7126 = vpop.f32.mrf.mxu0
      %v7127 = vadd.f32 0.0, %v7126
      %v7128 = vpop.f32.mrf.mxu0
      %v7129 = vadd.f32 0.0, %v7128
      %7130 = vmatmul.bf16.gmra.mxu0 %v7057
      %v7131 = vpop.f32.mrf.mxu0
      %v7132 = vadd.f32 0.0, %v7131
      %v7133 = vpop.f32.mrf.mxu0
      %v7134 = vadd.f32 0.0, %v7133
      %7135 = vmatmul.bf16.gmra.mxu0 %v7060
      %v7136 = vpop.f32.mrf.mxu0
      %v7137 = vadd.f32 0.0, %v7136
      %v7138 = vpop.f32.mrf.mxu0
      %v7139 = vadd.f32 0.0, %v7138
      %7140 = vmatmul.bf16.gmra.mxu0 %v7063
      %v7141 = vpop.f32.mrf.mxu0
      %v7142 = vadd.f32 0.0, %v7141
      %v7143 = vpop.f32.mrf.mxu0
      %v7144 = vadd.f32 0.0, %v7143
      %7145 = vmatmul.bf16.gmra.mxu0 %v7066
      %v7146 = vpop.f32.mrf.mxu0
      %v7147 = vadd.f32 0.0, %v7146
      %v7148 = vpop.f32.mrf.mxu0
      %v7149 = vadd.f32 0.0, %v7148
      %7150 = vmatmul.bf16.gmra.mxu0 %v7069
      %v7151 = vpop.f32.mrf.mxu0
      %v7152 = vadd.f32 0.0, %v7151
      %v7153 = vpop.f32.mrf.mxu0
      %v7154 = vadd.f32 0.0, %v7153
      %7155 = vmatmul.bf16.gmra.mxu0 %v7072
      %v7156 = vpop.f32.mrf.mxu0
      %v7157 = vadd.f32 0.0, %v7156
      %v7158 = vpop.f32.mrf.mxu0
      %v7159 = vadd.f32 0.0, %v7158
      %7160 = vmatmul.bf16.gmra.mxu0 %v7075
      %v7161 = vpop.f32.mrf.mxu0
      %v7162 = vadd.f32 0.0, %v7161
      %v7163 = vpop.f32.mrf.mxu0
      %v7164 = vadd.f32 0.0, %v7163
      %7165 = vdwg.mxu0
      %v7166 = vadd.f32 %v6772, %v7087
      %v7167 = vadd.f32 %v6773, %v7089
      %v7168 = vadd.f32 %v6774, %v7092
      %v7169 = vadd.f32 %v6775, %v7094
      %v7170 = vadd.f32 %v6776, %v7097
      %v7171 = vadd.f32 %v6777, %v7099
      %v7172 = vadd.f32 %v6778, %v7102
      %v7173 = vadd.f32 %v6779, %v7104
      %v7174 = vadd.f32 %v6780, %v7107
      %v7175 = vadd.f32 %v6781, %v7109
      %v7176 = vadd.f32 %v6782, %v7112
      %v7177 = vadd.f32 %v6783, %v7114
      %v7178 = vadd.f32 %v6784, %v7117
      %v7179 = vadd.f32 %v6785, %v7119
      %v7180 = vadd.f32 %v6786, %v7122
      %v7181 = vadd.f32 %v6787, %v7124
      %v7182 = vadd.f32 %v6788, %v7127
      %v7183 = vadd.f32 %v6789, %v7129
      %v7184 = vadd.f32 %v6790, %v7132
      %v7185 = vadd.f32 %v6791, %v7134
      %v7186 = vadd.f32 %v6792, %v7137
      %v7187 = vadd.f32 %v6793, %v7139
      %v7188 = vadd.f32 %v6794, %v7142
      %v7189 = vadd.f32 %v6795, %v7144
      %v7190 = vadd.f32 %v6796, %v7147
      %v7191 = vadd.f32 %v6797, %v7149
      %v7192 = vadd.f32 %v6798, %v7152
      %v7193 = vadd.f32 %v6799, %v7154
      %v7194 = vadd.f32 %v6800, %v7157
      %v7195 = vadd.f32 %v6801, %v7159
      %v7196 = vadd.f32 %v6802, %v7162
      %v7197 = vadd.f32 %v6803, %v7164
      %s7198 = scalar_lea.vmem [#allocation5], 12
      %v7199 = vld [vmem:[%s7198] sm:$0xf]
      %v7200 = vld [vmem:[%s7198 + $0x4] sm:$0xf]
      %v7201 = vld [vmem:[%s7198 + $0x8] sm:$0x1]
      %v7202 = vld [vmem:[%s7198 + $0xc] sm:$0xf]
      %v7203 = vld [vmem:[%s7198 + $0x10] sm:$0xf]
      %v7204 = vld [vmem:[%s7198 + $0x14] sm:$0x1]
      %v7205 = vld [vmem:[%s7198 + $0x18] sm:$0xf]
      %v7206 = vld [vmem:[%s7198 + $0x1c] sm:$0xf]
      %v7207 = vld [vmem:[%s7198 + $0x20] sm:$0x1]
      %v7208 = vld [vmem:[%s7198 + $0x24] sm:$0xf]
      %v7209 = vld [vmem:[%s7198 + $0x28] sm:$0xf]
      %v7210 = vld [vmem:[%s7198 + $0x2c] sm:$0x1]
      %v7211 = vld [vmem:[%s7198 + $0x30] sm:$0xf]
      %v7212 = vld [vmem:[%s7198 + $0x34] sm:$0xf]
      %v7213 = vld [vmem:[%s7198 + $0x38] sm:$0x1]
      %v7214 = vld [vmem:[%s7198 + $0x3c] sm:$0xf]
      %v7215 = vld [vmem:[%s7198 + $0x40] sm:$0xf]
      %v7216 = vld [vmem:[%s7198 + $0x44] sm:$0x1]
      %v7217 = vld [vmem:[%s7198 + $0x48] sm:$0xf]
      %v7218 = vld [vmem:[%s7198 + $0x4c] sm:$0xf]
      %v7219 = vld [vmem:[%s7198 + $0x50] sm:$0x1]
      %v7220 = vld [vmem:[%s7198 + $0x54] sm:$0xf]
      %v7221 = vld [vmem:[%s7198 + $0x58] sm:$0xf]
      %v7222 = vld [vmem:[%s7198 + $0x5c] sm:$0x1]
      %v7224 = vshrl.u32 %v7199, 16
      %v7226 = vrot.slane %v7224, 4
      %v7227 = vshll.u32 %v7199, 16
      %v7229 = vrot.slane %v7227, 5
      %v7230 = vor.u32 %v7226, %v7229
      %v7231 = vrot.slane %v7230, 4
      %v7233 = vshll.u32 %v7200, 16
      %v7235 = vrot.slane %v7233, 5
      %v7236 = vsel %vm879, %v7231, %v7235
      %v7237 = vshrl.u32 %v7200, 16
      %v7239 = vrot.slane %v7237, 4
      %v7240 = vor.u32 %v7239, %v7235
      %v7241 = vrot.slane %v7240, 4
      %v7243 = vshll.u32 %v7201, 16
      %v7245 = vrot.slane %v7243, 5
      %v7246 = vsel %vm879, %v7241, %v7245
      %v7248 = vshrl.u32 %v7202, 16
      %v7250 = vrot.slane %v7248, 4
      %v7251 = vshll.u32 %v7202, 16
      %v7253 = vrot.slane %v7251, 5
      %v7254 = vor.u32 %v7250, %v7253
      %v7255 = vrot.slane %v7254, 4
      %v7257 = vshll.u32 %v7203, 16
      %v7259 = vrot.slane %v7257, 5
      %v7260 = vsel %vm879, %v7255, %v7259
      %v7261 = vshrl.u32 %v7203, 16
      %v7263 = vrot.slane %v7261, 4
      %v7264 = vor.u32 %v7263, %v7259
      %v7265 = vrot.slane %v7264, 4
      %v7267 = vshll.u32 %v7204, 16
      %v7269 = vrot.slane %v7267, 5
      %v7270 = vsel %vm879, %v7265, %v7269
      %v7272 = vshrl.u32 %v7205, 16
      %v7274 = vrot.slane %v7272, 4
      %v7275 = vshll.u32 %v7205, 16
      %v7277 = vrot.slane %v7275, 5
      %v7278 = vor.u32 %v7274, %v7277
      %v7279 = vrot.slane %v7278, 4
      %v7281 = vshll.u32 %v7206, 16
      %v7283 = vrot.slane %v7281, 5
      %v7284 = vsel %vm879, %v7279, %v7283
      %v7285 = vshrl.u32 %v7206, 16
      %v7287 = vrot.slane %v7285, 4
      %v7288 = vor.u32 %v7287, %v7283
      %v7289 = vrot.slane %v7288, 4
      %v7291 = vshll.u32 %v7207, 16
      %v7293 = vrot.slane %v7291, 5
      %v7294 = vsel %vm879, %v7289, %v7293
      %v7296 = vshrl.u32 %v7208, 16
      %v7298 = vrot.slane %v7296, 4
      %v7299 = vshll.u32 %v7208, 16
      %v7301 = vrot.slane %v7299, 5
      %v7302 = vor.u32 %v7298, %v7301
      %v7303 = vrot.slane %v7302, 4
      %v7305 = vshll.u32 %v7209, 16
      %v7307 = vrot.slane %v7305, 5
      %v7308 = vsel %vm879, %v7303, %v7307
      %v7309 = vshrl.u32 %v7209, 16
      %v7311 = vrot.slane %v7309, 4
      %v7312 = vor.u32 %v7311, %v7307
      %v7313 = vrot.slane %v7312, 4
      %v7315 = vshll.u32 %v7210, 16
      %v7317 = vrot.slane %v7315, 5
      %v7318 = vsel %vm879, %v7313, %v7317
      %v7320 = vshrl.u32 %v7211, 16
      %v7322 = vrot.slane %v7320, 4
      %v7323 = vshll.u32 %v7211, 16
      %v7325 = vrot.slane %v7323, 5
      %v7326 = vor.u32 %v7322, %v7325
      %v7327 = vrot.slane %v7326, 4
      %v7329 = vshll.u32 %v7212, 16
      %v7331 = vrot.slane %v7329, 5
      %v7332 = vsel %vm879, %v7327, %v7331
      %v7333 = vshrl.u32 %v7212, 16
      %v7335 = vrot.slane %v7333, 4
      %v7336 = vor.u32 %v7335, %v7331
      %v7337 = vrot.slane %v7336, 4
      %v7339 = vshll.u32 %v7213, 16
      %v7341 = vrot.slane %v7339, 5
      %v7342 = vsel %vm879, %v7337, %v7341
      %v7344 = vshrl.u32 %v7214, 16
      %v7346 = vrot.slane %v7344, 4
      %v7347 = vshll.u32 %v7214, 16
      %v7349 = vrot.slane %v7347, 5
      %v7350 = vor.u32 %v7346, %v7349
      %v7351 = vrot.slane %v7350, 4
      %v7353 = vshll.u32 %v7215, 16
      %v7355 = vrot.slane %v7353, 5
      %v7356 = vsel %vm879, %v7351, %v7355
      %v7357 = vshrl.u32 %v7215, 16
      %v7359 = vrot.slane %v7357, 4
      %v7360 = vor.u32 %v7359, %v7355
      %v7361 = vrot.slane %v7360, 4
      %v7363 = vshll.u32 %v7216, 16
      %v7365 = vrot.slane %v7363, 5
      %v7366 = vsel %vm879, %v7361, %v7365
      %v7368 = vshrl.u32 %v7217, 16
      %v7370 = vrot.slane %v7368, 4
      %v7371 = vshll.u32 %v7217, 16
      %v7373 = vrot.slane %v7371, 5
      %v7374 = vor.u32 %v7370, %v7373
      %v7375 = vrot.slane %v7374, 4
      %v7377 = vshll.u32 %v7218, 16
      %v7379 = vrot.slane %v7377, 5
      %v7380 = vsel %vm879, %v7375, %v7379
      %v7381 = vshrl.u32 %v7218, 16
      %v7383 = vrot.slane %v7381, 4
      %v7384 = vor.u32 %v7383, %v7379
      %v7385 = vrot.slane %v7384, 4
      %v7387 = vshll.u32 %v7219, 16
      %v7389 = vrot.slane %v7387, 5
      %v7390 = vsel %vm879, %v7385, %v7389
      %v7392 = vshrl.u32 %v7220, 16
      %v7394 = vrot.slane %v7392, 4
      %v7395 = vshll.u32 %v7220, 16
      %v7397 = vrot.slane %v7395, 5
      %v7398 = vor.u32 %v7394, %v7397
      %v7399 = vrot.slane %v7398, 4
      %v7401 = vshll.u32 %v7221, 16
      %v7403 = vrot.slane %v7401, 5
      %v7404 = vsel %vm879, %v7399, %v7403
      %v7405 = vshrl.u32 %v7221, 16
      %v7407 = vrot.slane %v7405, 4
      %v7408 = vor.u32 %v7407, %v7403
      %v7409 = vrot.slane %v7408, 4
      %v7411 = vshll.u32 %v7222, 16
      %v7413 = vrot.slane %v7411, 5
      %v7414 = vsel %vm879, %v7409, %v7413
      %v7415 = vunpack.c.l.b16 %v7236
      %v7416 = vunpack.c.l.b16 %v7246
      %v7417 = vunpack.c.l.b16 %v7260
      %v7418 = vunpack.c.l.b16 %v7270
      %v7419 = vunpack.c.l.b16 %v7284
      %v7420 = vunpack.c.l.b16 %v7294
      %v7421 = vunpack.c.l.b16 %v7308
      %v7422 = vunpack.c.l.b16 %v7318
      %v7423 = vunpack.c.l.b16 %v7332
      %v7424 = vunpack.c.l.b16 %v7342
      %v7425 = vunpack.c.l.b16 %v7356
      %v7426 = vunpack.c.l.b16 %v7366
      %v7427 = vunpack.c.l.b16 %v7380
      %v7428 = vunpack.c.l.b16 %v7390
      %v7429 = vunpack.c.l.b16 %v7404
      %v7430 = vunpack.c.l.b16 %v7414
      %v7431 = vpack.c.b16 %v7416, %v7415
      %v7432 = vpack.c.b16 %v7418, %v7417
      %v7433 = vpack.c.b16 %v7420, %v7419
      %v7434 = vpack.c.b16 %v7422, %v7421
      %v7435 = vpack.c.b16 %v7424, %v7423
      %v7436 = vpack.c.b16 %v7426, %v7425
      %v7437 = vpack.c.b16 %v7428, %v7427
      %v7438 = vpack.c.b16 %v7430, %v7429
      %s7439 = scalar_lea.vmem %s5, 192
      %v7440 = vld [vmem:[%s7439] sm:$0xf]
      %v7441 = vld [vmem:[%s7439 + $0x4] sm:$0xf]
      %v7442 = vld [vmem:[%s7439 + $0x8] sm:$0xf]
      %v7443 = vld [vmem:[%s7439 + $0xc] sm:$0xf]
      %v7444 = vld [vmem:[%s7439 + $0x10] sm:$0xf]
      %v7445 = vld [vmem:[%s7439 + $0x14] sm:$0xf]
      %v7446 = vld [vmem:[%s7439 + $0x18] sm:$0xf]
      %v7447 = vld [vmem:[%s7439 + $0x1c] sm:$0xf]
      %v7456 = vunpack.c.l.b16 %v7440
      %v7457 = vunpack.c.l.b16 %v7441
      %v7458 = vunpack.c.l.b16 %v7442
      %v7459 = vunpack.c.l.b16 %v7443
      %v7460 = vunpack.c.l.b16 %v7444
      %v7461 = vunpack.c.l.b16 %v7445
      %v7462 = vunpack.c.l.b16 %v7446
      %v7463 = vunpack.c.l.b16 %v7447
      %v7464 = vpack.c.b16 %v7457, %v7456
      %v7465 = vpack.c.b16 %v7459, %v7458
      %v7466 = vpack.c.b16 %v7461, %v7460
      %v7467 = vpack.c.b16 %v7463, %v7462
      %v7473 = vsel %vm5160, %v7431, 0
      %v7476 = vsel %vm5160, %v7432, 0
      %v7479 = vsel %vm5160, %v7433, 0
      %v7482 = vsel %vm5160, %v7434, 0
      %v7485 = vsel %vm5160, %v7435, 0
      %v7488 = vsel %vm5160, %v7436, 0
      %v7491 = vsel %vm5160, %v7437, 0
      %v7494 = vsel %vm5160, %v7438, 0
      %7496 = vmatpush.bf16.msra.mxu0 0
      %7497 = vmatpush.bf16.msra.mxu0 0
      %7498 = vmatpush.bf16.msra.mxu0 0
      %7499 = vmatpush.bf16.msra.mxu0 0
      %7500 = vmatpush.bf16.msra.mxu0 %v7467
      %7501 = vmatpush.bf16.msra.mxu0 %v7466
      %7502 = vmatpush.bf16.msra.mxu0 %v7465
      %7503 = vmatpush.bf16.msra.mxu0 %v7464
      %7504 = vmatmul.bf16.gmra.mxu0 %v6370
      %v7505 = vpop.f32.mrf.mxu0
      %v7506 = vadd.f32 0.0, %v7505
      %v7507 = vpop.f32.mrf.mxu0
      %v7508 = vadd.f32 0.0, %v7507
      %7509 = vmatmul.bf16.gmra.mxu0 %v6373
      %v7510 = vpop.f32.mrf.mxu0
      %v7511 = vadd.f32 0.0, %v7510
      %v7512 = vpop.f32.mrf.mxu0
      %v7513 = vadd.f32 0.0, %v7512
      %7514 = vmatmul.bf16.gmra.mxu0 %v6376
      %v7515 = vpop.f32.mrf.mxu0
      %v7516 = vadd.f32 0.0, %v7515
      %v7517 = vpop.f32.mrf.mxu0
      %v7518 = vadd.f32 0.0, %v7517
      %7519 = vmatmul.bf16.gmra.mxu0 %v6379
      %v7520 = vpop.f32.mrf.mxu0
      %v7521 = vadd.f32 0.0, %v7520
      %v7522 = vpop.f32.mrf.mxu0
      %v7523 = vadd.f32 0.0, %v7522
      %7524 = vmatmul.bf16.gmra.mxu0 %v6382
      %v7525 = vpop.f32.mrf.mxu0
      %v7526 = vadd.f32 0.0, %v7525
      %v7527 = vpop.f32.mrf.mxu0
      %v7528 = vadd.f32 0.0, %v7527
      %7529 = vmatmul.bf16.gmra.mxu0 %v6385
      %v7530 = vpop.f32.mrf.mxu0
      %v7531 = vadd.f32 0.0, %v7530
      %v7532 = vpop.f32.mrf.mxu0
      %v7533 = vadd.f32 0.0, %v7532
      %7534 = vmatmul.bf16.gmra.mxu0 %v6388
      %v7535 = vpop.f32.mrf.mxu0
      %v7536 = vadd.f32 0.0, %v7535
      %v7537 = vpop.f32.mrf.mxu0
      %v7538 = vadd.f32 0.0, %v7537
      %7539 = vmatmul.bf16.gmra.mxu0 %v6391
      %v7540 = vpop.f32.mrf.mxu0
      %v7541 = vadd.f32 0.0, %v7540
      %v7542 = vpop.f32.mrf.mxu0
      %v7543 = vadd.f32 0.0, %v7542
      %7544 = vmatmul.bf16.gmra.mxu0 %v7473
      %v7545 = vpop.f32.mrf.mxu0
      %v7546 = vadd.f32 0.0, %v7545
      %v7547 = vpop.f32.mrf.mxu0
      %v7548 = vadd.f32 0.0, %v7547
      %7549 = vmatmul.bf16.gmra.mxu0 %v7476
      %v7550 = vpop.f32.mrf.mxu0
      %v7551 = vadd.f32 0.0, %v7550
      %v7552 = vpop.f32.mrf.mxu0
      %v7553 = vadd.f32 0.0, %v7552
      %7554 = vmatmul.bf16.gmra.mxu0 %v7479
      %v7555 = vpop.f32.mrf.mxu0
      %v7556 = vadd.f32 0.0, %v7555
      %v7557 = vpop.f32.mrf.mxu0
      %v7558 = vadd.f32 0.0, %v7557
      %7559 = vmatmul.bf16.gmra.mxu0 %v7482
      %v7560 = vpop.f32.mrf.mxu0
      %v7561 = vadd.f32 0.0, %v7560
      %v7562 = vpop.f32.mrf.mxu0
      %v7563 = vadd.f32 0.0, %v7562
      %7564 = vmatmul.bf16.gmra.mxu0 %v7485
      %v7565 = vpop.f32.mrf.mxu0
      %v7566 = vadd.f32 0.0, %v7565
      %v7567 = vpop.f32.mrf.mxu0
      %v7568 = vadd.f32 0.0, %v7567
      %7569 = vmatmul.bf16.gmra.mxu0 %v7488
      %v7570 = vpop.f32.mrf.mxu0
      %v7571 = vadd.f32 0.0, %v7570
      %v7572 = vpop.f32.mrf.mxu0
      %v7573 = vadd.f32 0.0, %v7572
      %7574 = vmatmul.bf16.gmra.mxu0 %v7491
      %v7575 = vpop.f32.mrf.mxu0
      %v7576 = vadd.f32 0.0, %v7575
      %v7577 = vpop.f32.mrf.mxu0
      %v7578 = vadd.f32 0.0, %v7577
      %7579 = vmatmul.bf16.gmra.mxu0 %v7494
      %v7580 = vpop.f32.mrf.mxu0
      %v7581 = vadd.f32 0.0, %v7580
      %v7582 = vpop.f32.mrf.mxu0
      %v7583 = vadd.f32 0.0, %v7582
      %7584 = vdwg.mxu0
      %v7585 = vadd.f32 %v7166, %v7506
      %v7586 = vadd.f32 %v7167, %v7508
      %v7587 = vadd.f32 %v7168, %v7511
      %v7588 = vadd.f32 %v7169, %v7513
      %v7589 = vadd.f32 %v7170, %v7516
      %v7590 = vadd.f32 %v7171, %v7518
      %v7591 = vadd.f32 %v7172, %v7521
      %v7592 = vadd.f32 %v7173, %v7523
      %v7593 = vadd.f32 %v7174, %v7526
      %v7594 = vadd.f32 %v7175, %v7528
      %v7595 = vadd.f32 %v7176, %v7531
      %v7596 = vadd.f32 %v7177, %v7533
      %v7597 = vadd.f32 %v7178, %v7536
      %v7598 = vadd.f32 %v7179, %v7538
      %v7599 = vadd.f32 %v7180, %v7541
      %v7600 = vadd.f32 %v7181, %v7543
      %v7601 = vadd.f32 %v7182, %v7546
      %v7602 = vadd.f32 %v7183, %v7548
      %v7603 = vadd.f32 %v7184, %v7551
      %v7604 = vadd.f32 %v7185, %v7553
      %v7605 = vadd.f32 %v7186, %v7556
      %v7606 = vadd.f32 %v7187, %v7558
      %v7607 = vadd.f32 %v7188, %v7561
      %v7608 = vadd.f32 %v7189, %v7563
      %v7609 = vadd.f32 %v7190, %v7566
      %v7610 = vadd.f32 %v7191, %v7568
      %v7611 = vadd.f32 %v7192, %v7571
      %v7612 = vadd.f32 %v7193, %v7573
      %v7613 = vadd.f32 %v7194, %v7576
      %v7614 = vadd.f32 %v7195, %v7578
      %v7615 = vadd.f32 %v7196, %v7581
      %v7616 = vadd.f32 %v7197, %v7583
      %v7617 = vld [vmem:[%s7198] sm:$0xe]
      %v7618 = vld [vmem:[%s7198 + $0xc] sm:$0xe]
      %v7619 = vld [vmem:[%s7198 + $0x18] sm:$0xe]
      %v7620 = vld [vmem:[%s7198 + $0x24] sm:$0xe]
      %v7621 = vld [vmem:[%s7198 + $0x30] sm:$0xe]
      %v7622 = vld [vmem:[%s7198 + $0x3c] sm:$0xe]
      %v7623 = vld [vmem:[%s7198 + $0x48] sm:$0xe]
      %v7624 = vld [vmem:[%s7198 + $0x54] sm:$0xe]
      %v7649 = vrot.slane %v7617, 5
      %v7650 = vrot.slane %v7649, 4
      %v7651 = vrot.slane %v7200, 5
      %v7652 = vsel %vm1653, %v7650, %v7651
      %v7653 = vrot.slane %v7651, 4
      %v7654 = vrot.slane %v7201, 5
      %v7655 = vsel %vm1653, %v7653, %v7654
      %v7656 = vrot.slane %v7618, 5
      %v7657 = vrot.slane %v7656, 4
      %v7658 = vrot.slane %v7203, 5
      %v7659 = vsel %vm1653, %v7657, %v7658
      %v7660 = vrot.slane %v7658, 4
      %v7661 = vrot.slane %v7204, 5
      %v7662 = vsel %vm1653, %v7660, %v7661
      %v7663 = vrot.slane %v7619, 5
      %v7664 = vrot.slane %v7663, 4
      %v7665 = vrot.slane %v7206, 5
      %v7666 = vsel %vm1653, %v7664, %v7665
      %v7667 = vrot.slane %v7665, 4
      %v7668 = vrot.slane %v7207, 5
      %v7669 = vsel %vm1653, %v7667, %v7668
      %v7670 = vrot.slane %v7620, 5
      %v7671 = vrot.slane %v7670, 4
      %v7672 = vrot.slane %v7209, 5
      %v7673 = vsel %vm1653, %v7671, %v7672
      %v7674 = vrot.slane %v7672, 4
      %v7675 = vrot.slane %v7210, 5
      %v7676 = vsel %vm1653, %v7674, %v7675
      %v7677 = vrot.slane %v7621, 5
      %v7678 = vrot.slane %v7677, 4
      %v7679 = vrot.slane %v7212, 5
      %v7680 = vsel %vm1653, %v7678, %v7679
      %v7681 = vrot.slane %v7679, 4
      %v7682 = vrot.slane %v7213, 5
      %v7683 = vsel %vm1653, %v7681, %v7682
      %v7684 = vrot.slane %v7622, 5
      %v7685 = vrot.slane %v7684, 4
      %v7686 = vrot.slane %v7215, 5
      %v7687 = vsel %vm1653, %v7685, %v7686
      %v7688 = vrot.slane %v7686, 4
      %v7689 = vrot.slane %v7216, 5
      %v7690 = vsel %vm1653, %v7688, %v7689
      %v7691 = vrot.slane %v7623, 5
      %v7692 = vrot.slane %v7691, 4
      %v7693 = vrot.slane %v7218, 5
      %v7694 = vsel %vm1653, %v7692, %v7693
      %v7695 = vrot.slane %v7693, 4
      %v7696 = vrot.slane %v7219, 5
      %v7697 = vsel %vm1653, %v7695, %v7696
      %v7698 = vrot.slane %v7624, 5
      %v7699 = vrot.slane %v7698, 4
      %v7700 = vrot.slane %v7221, 5
      %v7701 = vsel %vm1653, %v7699, %v7700
      %v7702 = vrot.slane %v7700, 4
      %v7703 = vrot.slane %v7222, 5
      %v7704 = vsel %vm1653, %v7702, %v7703
      %v7705 = vunpack.c.l.b16 %v7652
      %v7706 = vunpack.c.l.b16 %v7655
      %v7707 = vunpack.c.l.b16 %v7659
      %v7708 = vunpack.c.l.b16 %v7662
      %v7709 = vunpack.c.l.b16 %v7666
      %v7710 = vunpack.c.l.b16 %v7669
      %v7711 = vunpack.c.l.b16 %v7673
      %v7712 = vunpack.c.l.b16 %v7676
      %v7713 = vunpack.c.l.b16 %v7680
      %v7714 = vunpack.c.l.b16 %v7683
      %v7715 = vunpack.c.l.b16 %v7687
      %v7716 = vunpack.c.l.b16 %v7690
      %v7717 = vunpack.c.l.b16 %v7694
      %v7718 = vunpack.c.l.b16 %v7697
      %v7719 = vunpack.c.l.b16 %v7701
      %v7720 = vunpack.c.l.b16 %v7704
      %v7721 = vpack.c.b16 %v7706, %v7705
      %v7722 = vpack.c.b16 %v7708, %v7707
      %v7723 = vpack.c.b16 %v7710, %v7709
      %v7724 = vpack.c.b16 %v7712, %v7711
      %v7725 = vpack.c.b16 %v7714, %v7713
      %v7726 = vpack.c.b16 %v7716, %v7715
      %v7727 = vpack.c.b16 %v7718, %v7717
      %v7728 = vpack.c.b16 %v7720, %v7719
      %s7729 = scalar_lea.vmem %s5, 224
      %v7730 = vld [vmem:[%s7729] sm:$0xf]
      %v7731 = vld [vmem:[%s7729 + $0x4] sm:$0xf]
      %v7732 = vld [vmem:[%s7729 + $0x8] sm:$0xf]
      %v7733 = vld [vmem:[%s7729 + $0xc] sm:$0xf]
      %v7734 = vld [vmem:[%s7729 + $0x10] sm:$0xf]
      %v7735 = vld [vmem:[%s7729 + $0x14] sm:$0xf]
      %v7736 = vld [vmem:[%s7729 + $0x18] sm:$0xf]
      %v7737 = vld [vmem:[%s7729 + $0x1c] sm:$0xf]
      %v7746 = vunpack.c.l.b16 %v7730
      %v7747 = vunpack.c.l.b16 %v7731
      %v7748 = vunpack.c.l.b16 %v7732
      %v7749 = vunpack.c.l.b16 %v7733
      %v7750 = vunpack.c.l.b16 %v7734
      %v7751 = vunpack.c.l.b16 %v7735
      %v7752 = vunpack.c.l.b16 %v7736
      %v7753 = vunpack.c.l.b16 %v7737
      %v7754 = vpack.c.b16 %v7747, %v7746
      %v7755 = vpack.c.b16 %v7749, %v7748
      %v7756 = vpack.c.b16 %v7751, %v7750
      %v7757 = vpack.c.b16 %v7753, %v7752
      %v7763 = vsel %vm5160, %v7721, 0
      %v7766 = vsel %vm5160, %v7722, 0
      %v7769 = vsel %vm5160, %v7723, 0
      %v7772 = vsel %vm5160, %v7724, 0
      %v7775 = vsel %vm5160, %v7725, 0
      %v7778 = vsel %vm5160, %v7726, 0
      %v7781 = vsel %vm5160, %v7727, 0
      %v7784 = vsel %vm5160, %v7728, 0
      %7786 = vmatpush.bf16.msra.mxu0 0
      %7787 = vmatpush.bf16.msra.mxu0 0
      %7788 = vmatpush.bf16.msra.mxu0 0
      %7789 = vmatpush.bf16.msra.mxu0 0
      %7790 = vmatpush.bf16.msra.mxu0 %v7757
      %7791 = vmatpush.bf16.msra.mxu0 %v7756
      %7792 = vmatpush.bf16.msra.mxu0 %v7755
      %7793 = vmatpush.bf16.msra.mxu0 %v7754
      %7794 = vmatmul.bf16.gmra.mxu0 %v6660
      %v7795 = vpop.f32.mrf.mxu0
      %v7796 = vadd.f32 0.0, %v7795
      %v7797 = vpop.f32.mrf.mxu0
      %v7798 = vadd.f32 0.0, %v7797
      %7799 = vmatmul.bf16.gmra.mxu0 %v6663
      %v7800 = vpop.f32.mrf.mxu0
      %v7801 = vadd.f32 0.0, %v7800
      %v7802 = vpop.f32.mrf.mxu0
      %v7803 = vadd.f32 0.0, %v7802
      %7804 = vmatmul.bf16.gmra.mxu0 %v6666
      %v7805 = vpop.f32.mrf.mxu0
      %v7806 = vadd.f32 0.0, %v7805
      %v7807 = vpop.f32.mrf.mxu0
      %v7808 = vadd.f32 0.0, %v7807
      %7809 = vmatmul.bf16.gmra.mxu0 %v6669
      %v7810 = vpop.f32.mrf.mxu0
      %v7811 = vadd.f32 0.0, %v7810
      %v7812 = vpop.f32.mrf.mxu0
      %v7813 = vadd.f32 0.0, %v7812
      %7814 = vmatmul.bf16.gmra.mxu0 %v6672
      %v7815 = vpop.f32.mrf.mxu0
      %v7816 = vadd.f32 0.0, %v7815
      %v7817 = vpop.f32.mrf.mxu0
      %v7818 = vadd.f32 0.0, %v7817
      %7819 = vmatmul.bf16.gmra.mxu0 %v6675
      %v7820 = vpop.f32.mrf.mxu0
      %v7821 = vadd.f32 0.0, %v7820
      %v7822 = vpop.f32.mrf.mxu0
      %v7823 = vadd.f32 0.0, %v7822
      %7824 = vmatmul.bf16.gmra.mxu0 %v6678
      %v7825 = vpop.f32.mrf.mxu0
      %v7826 = vadd.f32 0.0, %v7825
      %v7827 = vpop.f32.mrf.mxu0
      %v7828 = vadd.f32 0.0, %v7827
      %7829 = vmatmul.bf16.gmra.mxu0 %v6681
      %v7830 = vpop.f32.mrf.mxu0
      %v7831 = vadd.f32 0.0, %v7830
      %v7832 = vpop.f32.mrf.mxu0
      %v7833 = vadd.f32 0.0, %v7832
      %7834 = vmatmul.bf16.gmra.mxu0 %v7763
      %v7835 = vpop.f32.mrf.mxu0
      %v7836 = vadd.f32 0.0, %v7835
      %v7837 = vpop.f32.mrf.mxu0
      %v7838 = vadd.f32 0.0, %v7837
      %7839 = vmatmul.bf16.gmra.mxu0 %v7766
      %v7840 = vpop.f32.mrf.mxu0
      %v7841 = vadd.f32 0.0, %v7840
      %v7842 = vpop.f32.mrf.mxu0
      %v7843 = vadd.f32 0.0, %v7842
      %7844 = vmatmul.bf16.gmra.mxu0 %v7769
      %v7845 = vpop.f32.mrf.mxu0
      %v7846 = vadd.f32 0.0, %v7845
      %v7847 = vpop.f32.mrf.mxu0
      %v7848 = vadd.f32 0.0, %v7847
      %7849 = vmatmul.bf16.gmra.mxu0 %v7772
      %v7850 = vpop.f32.mrf.mxu0
      %v7851 = vadd.f32 0.0, %v7850
      %v7852 = vpop.f32.mrf.mxu0
      %v7853 = vadd.f32 0.0, %v7852
      %7854 = vmatmul.bf16.gmra.mxu0 %v7775
      %v7855 = vpop.f32.mrf.mxu0
      %v7856 = vadd.f32 0.0, %v7855
      %v7857 = vpop.f32.mrf.mxu0
      %v7858 = vadd.f32 0.0, %v7857
      %7859 = vmatmul.bf16.gmra.mxu0 %v7778
      %v7860 = vpop.f32.mrf.mxu0
      %v7861 = vadd.f32 0.0, %v7860
      %v7862 = vpop.f32.mrf.mxu0
      %v7863 = vadd.f32 0.0, %v7862
      %7864 = vmatmul.bf16.gmra.mxu0 %v7781
      %v7865 = vpop.f32.mrf.mxu0
      %v7866 = vadd.f32 0.0, %v7865
      %v7867 = vpop.f32.mrf.mxu0
      %v7868 = vadd.f32 0.0, %v7867
      %7869 = vmatmul.bf16.gmra.mxu0 %v7784
      %v7870 = vpop.f32.mrf.mxu0
      %v7871 = vadd.f32 0.0, %v7870
      %v7872 = vpop.f32.mrf.mxu0
      %v7873 = vadd.f32 0.0, %v7872
      %7874 = vdwg.mxu0
      %v7875 = vadd.f32 %v7585, %v7796
      %v7876 = vadd.f32 %v7586, %v7798
      %v7877 = vadd.f32 %v7587, %v7801
      %v7878 = vadd.f32 %v7588, %v7803
      %v7879 = vadd.f32 %v7589, %v7806
      %v7880 = vadd.f32 %v7590, %v7808
      %v7881 = vadd.f32 %v7591, %v7811
      %v7882 = vadd.f32 %v7592, %v7813
      %v7883 = vadd.f32 %v7593, %v7816
      %v7884 = vadd.f32 %v7594, %v7818
      %v7885 = vadd.f32 %v7595, %v7821
      %v7886 = vadd.f32 %v7596, %v7823
      %v7887 = vadd.f32 %v7597, %v7826
      %v7888 = vadd.f32 %v7598, %v7828
      %v7889 = vadd.f32 %v7599, %v7831
      %v7890 = vadd.f32 %v7600, %v7833
      %v7891 = vadd.f32 %v7601, %v7836
      %v7892 = vadd.f32 %v7602, %v7838
      %v7893 = vadd.f32 %v7603, %v7841
      %v7894 = vadd.f32 %v7604, %v7843
      %v7895 = vadd.f32 %v7605, %v7846
      %v7896 = vadd.f32 %v7606, %v7848
      %v7897 = vadd.f32 %v7607, %v7851
      %v7898 = vadd.f32 %v7608, %v7853
      %v7899 = vadd.f32 %v7609, %v7856
      %v7900 = vadd.f32 %v7610, %v7858
      %v7901 = vadd.f32 %v7611, %v7861
      %v7902 = vadd.f32 %v7612, %v7863
      %v7903 = vadd.f32 %v7613, %v7866
      %v7904 = vadd.f32 %v7614, %v7868
      %v7905 = vadd.f32 %v7615, %v7871
      %v7906 = vadd.f32 %v7616, %v7873
      %v7907 = vld [vmem:[%s7198 + $0x8] sm:$0x3]
      %v7908 = vld [vmem:[%s7198 + $0x14] sm:$0x3]
      %v7909 = vld [vmem:[%s7198 + $0x20] sm:$0x3]
      %v7910 = vld [vmem:[%s7198 + $0x2c] sm:$0x3]
      %v7911 = vld [vmem:[%s7198 + $0x38] sm:$0x3]
      %v7912 = vld [vmem:[%s7198 + $0x44] sm:$0x3]
      %v7913 = vld [vmem:[%s7198 + $0x50] sm:$0x3]
      %v7914 = vld [vmem:[%s7198 + $0x5c] sm:$0x3]
      %v7916 = vshrl.u32 %v7617, 16
      %v7918 = vrot.slane %v7916, 5
      %v7919 = vshll.u32 %v7617, 16
      %v7921 = vrot.slane %v7919, 6
      %v7922 = vor.u32 %v7918, %v7921
      %v7923 = vrot.slane %v7922, 4
      %v7924 = vrot.slane %v7237, 5
      %v7925 = vrot.slane %v7233, 6
      %v7926 = vor.u32 %v7924, %v7925
      %v7927 = vsel %vm5469, %v7923, %v7926
      %v7928 = vrot.slane %v7926, 4
      %v7930 = vshrl.u32 %v7907, 16
      %v7932 = vrot.slane %v7930, 5
      %v7933 = vshll.u32 %v7907, 16
      %v7935 = vrot.slane %v7933, 6
      %v7936 = vor.u32 %v7932, %v7935
      %v7937 = vsel %vm5469, %v7928, %v7936
      %v7939 = vshrl.u32 %v7618, 16
      %v7941 = vrot.slane %v7939, 5
      %v7942 = vshll.u32 %v7618, 16
      %v7944 = vrot.slane %v7942, 6
      %v7945 = vor.u32 %v7941, %v7944
      %v7946 = vrot.slane %v7945, 4
      %v7947 = vrot.slane %v7261, 5
      %v7948 = vrot.slane %v7257, 6
      %v7949 = vor.u32 %v7947, %v7948
      %v7950 = vsel %vm5469, %v7946, %v7949
      %v7951 = vrot.slane %v7949, 4
      %v7953 = vshrl.u32 %v7908, 16
      %v7955 = vrot.slane %v7953, 5
      %v7956 = vshll.u32 %v7908, 16
      %v7958 = vrot.slane %v7956, 6
      %v7959 = vor.u32 %v7955, %v7958
      %v7960 = vsel %vm5469, %v7951, %v7959
      %v7962 = vshrl.u32 %v7619, 16
      %v7964 = vrot.slane %v7962, 5
      %v7965 = vshll.u32 %v7619, 16
      %v7967 = vrot.slane %v7965, 6
      %v7968 = vor.u32 %v7964, %v7967
      %v7969 = vrot.slane %v7968, 4
      %v7970 = vrot.slane %v7285, 5
      %v7971 = vrot.slane %v7281, 6
      %v7972 = vor.u32 %v7970, %v7971
      %v7973 = vsel %vm5469, %v7969, %v7972
      %v7974 = vrot.slane %v7972, 4
      %v7976 = vshrl.u32 %v7909, 16
      %v7978 = vrot.slane %v7976, 5
      %v7979 = vshll.u32 %v7909, 16
      %v7981 = vrot.slane %v7979, 6
      %v7982 = vor.u32 %v7978, %v7981
      %v7983 = vsel %vm5469, %v7974, %v7982
      %v7985 = vshrl.u32 %v7620, 16
      %v7987 = vrot.slane %v7985, 5
      %v7988 = vshll.u32 %v7620, 16
      %v7990 = vrot.slane %v7988, 6
      %v7991 = vor.u32 %v7987, %v7990
      %v7992 = vrot.slane %v7991, 4
      %v7993 = vrot.slane %v7309, 5
      %v7994 = vrot.slane %v7305, 6
      %v7995 = vor.u32 %v7993, %v7994
      %v7996 = vsel %vm5469, %v7992, %v7995
      %v7997 = vrot.slane %v7995, 4
      %v7999 = vshrl.u32 %v7910, 16
      %v8001 = vrot.slane %v7999, 5
      %v8002 = vshll.u32 %v7910, 16
      %v8004 = vrot.slane %v8002, 6
      %v8005 = vor.u32 %v8001, %v8004
      %v8006 = vsel %vm5469, %v7997, %v8005
      %v8008 = vshrl.u32 %v7621, 16
      %v8010 = vrot.slane %v8008, 5
      %v8011 = vshll.u32 %v7621, 16
      %v8013 = vrot.slane %v8011, 6
      %v8014 = vor.u32 %v8010, %v8013
      %v8015 = vrot.slane %v8014, 4
      %v8016 = vrot.slane %v7333, 5
      %v8017 = vrot.slane %v7329, 6
      %v8018 = vor.u32 %v8016, %v8017
      %v8019 = vsel %vm5469, %v8015, %v8018
      %v8020 = vrot.slane %v8018, 4
      %v8022 = vshrl.u32 %v7911, 16
      %v8024 = vrot.slane %v8022, 5
      %v8025 = vshll.u32 %v7911, 16
      %v8027 = vrot.slane %v8025, 6
      %v8028 = vor.u32 %v8024, %v8027
      %v8029 = vsel %vm5469, %v8020, %v8028
      %v8031 = vshrl.u32 %v7622, 16
      %v8033 = vrot.slane %v8031, 5
      %v8034 = vshll.u32 %v7622, 16
      %v8036 = vrot.slane %v8034, 6
      %v8037 = vor.u32 %v8033, %v8036
      %v8038 = vrot.slane %v8037, 4
      %v8039 = vrot.slane %v7357, 5
      %v8040 = vrot.slane %v7353, 6
      %v8041 = vor.u32 %v8039, %v8040
      %v8042 = vsel %vm5469, %v8038, %v8041
      %v8043 = vrot.slane %v8041, 4
      %v8045 = vshrl.u32 %v7912, 16
      %v8047 = vrot.slane %v8045, 5
      %v8048 = vshll.u32 %v7912, 16
      %v8050 = vrot.slane %v8048, 6
      %v8051 = vor.u32 %v8047, %v8050
      %v8052 = vsel %vm5469, %v8043, %v8051
      %v8054 = vshrl.u32 %v7623, 16
      %v8056 = vrot.slane %v8054, 5
      %v8057 = vshll.u32 %v7623, 16
      %v8059 = vrot.slane %v8057, 6
      %v8060 = vor.u32 %v8056, %v8059
      %v8061 = vrot.slane %v8060, 4
      %v8062 = vrot.slane %v7381, 5
      %v8063 = vrot.slane %v7377, 6
      %v8064 = vor.u32 %v8062, %v8063
      %v8065 = vsel %vm5469, %v8061, %v8064
      %v8066 = vrot.slane %v8064, 4
      %v8068 = vshrl.u32 %v7913, 16
      %v8070 = vrot.slane %v8068, 5
      %v8071 = vshll.u32 %v7913, 16
      %v8073 = vrot.slane %v8071, 6
      %v8074 = vor.u32 %v8070, %v8073
      %v8075 = vsel %vm5469, %v8066, %v8074
      %v8077 = vshrl.u32 %v7624, 16
      %v8079 = vrot.slane %v8077, 5
      %v8080 = vshll.u32 %v7624, 16
      %v8082 = vrot.slane %v8080, 6
      %v8083 = vor.u32 %v8079, %v8082
      %v8084 = vrot.slane %v8083, 4
      %v8085 = vrot.slane %v7405, 5
      %v8086 = vrot.slane %v7401, 6
      %v8087 = vor.u32 %v8085, %v8086
      %v8088 = vsel %vm5469, %v8084, %v8087
      %v8089 = vrot.slane %v8087, 4
      %v8091 = vshrl.u32 %v7914, 16
      %v8093 = vrot.slane %v8091, 5
      %v8094 = vshll.u32 %v7914, 16
      %v8096 = vrot.slane %v8094, 6
      %v8097 = vor.u32 %v8093, %v8096
      %v8098 = vsel %vm5469, %v8089, %v8097
      %v8099 = vunpack.c.l.b16 %v7927
      %v8100 = vunpack.c.l.b16 %v7937
      %v8101 = vunpack.c.l.b16 %v7950
      %v8102 = vunpack.c.l.b16 %v7960
      %v8103 = vunpack.c.l.b16 %v7973
      %v8104 = vunpack.c.l.b16 %v7983
      %v8105 = vunpack.c.l.b16 %v7996
      %v8106 = vunpack.c.l.b16 %v8006
      %v8107 = vunpack.c.l.b16 %v8019
      %v8108 = vunpack.c.l.b16 %v8029
      %v8109 = vunpack.c.l.b16 %v8042
      %v8110 = vunpack.c.l.b16 %v8052
      %v8111 = vunpack.c.l.b16 %v8065
      %v8112 = vunpack.c.l.b16 %v8075
      %v8113 = vunpack.c.l.b16 %v8088
      %v8114 = vunpack.c.l.b16 %v8098
      %v8115 = vpack.c.b16 %v8100, %v8099
      %v8116 = vpack.c.b16 %v8102, %v8101
      %v8117 = vpack.c.b16 %v8104, %v8103
      %v8118 = vpack.c.b16 %v8106, %v8105
      %v8119 = vpack.c.b16 %v8108, %v8107
      %v8120 = vpack.c.b16 %v8110, %v8109
      %v8121 = vpack.c.b16 %v8112, %v8111
      %v8122 = vpack.c.b16 %v8114, %v8113
      %s8123 = scalar_lea.vmem %s5, 256
      %v8124 = vld [vmem:[%s8123] sm:$0xf]
      %v8125 = vld [vmem:[%s8123 + $0x4] sm:$0xf]
      %v8126 = vld [vmem:[%s8123 + $0x8] sm:$0xf]
      %v8127 = vld [vmem:[%s8123 + $0xc] sm:$0xf]
      %v8128 = vld [vmem:[%s8123 + $0x10] sm:$0xf]
      %v8129 = vld [vmem:[%s8123 + $0x14] sm:$0xf]
      %v8130 = vld [vmem:[%s8123 + $0x18] sm:$0xf]
      %v8131 = vld [vmem:[%s8123 + $0x1c] sm:$0xf]
      %v8140 = vunpack.c.l.b16 %v8124
      %v8141 = vunpack.c.l.b16 %v8125
      %v8142 = vunpack.c.l.b16 %v8126
      %v8143 = vunpack.c.l.b16 %v8127
      %v8144 = vunpack.c.l.b16 %v8128
      %v8145 = vunpack.c.l.b16 %v8129
      %v8146 = vunpack.c.l.b16 %v8130
      %v8147 = vunpack.c.l.b16 %v8131
      %v8148 = vpack.c.b16 %v8141, %v8140
      %v8149 = vpack.c.b16 %v8143, %v8142
      %v8150 = vpack.c.b16 %v8145, %v8144
      %v8151 = vpack.c.b16 %v8147, %v8146
      %v8157 = vsel %vm5160, %v8115, 0
      %v8160 = vsel %vm5160, %v8116, 0
      %v8163 = vsel %vm5160, %v8117, 0
      %v8166 = vsel %vm5160, %v8118, 0
      %v8169 = vsel %vm5160, %v8119, 0
      %v8172 = vsel %vm5160, %v8120, 0
      %v8175 = vsel %vm5160, %v8121, 0
      %v8178 = vsel %vm5160, %v8122, 0
      %8180 = vmatpush.bf16.msra.mxu0 0
      %8181 = vmatpush.bf16.msra.mxu0 0
      %8182 = vmatpush.bf16.msra.mxu0 0
      %8183 = vmatpush.bf16.msra.mxu0 0
      %8184 = vmatpush.bf16.msra.mxu0 %v8151
      %8185 = vmatpush.bf16.msra.mxu0 %v8150
      %8186 = vmatpush.bf16.msra.mxu0 %v8149
      %8187 = vmatpush.bf16.msra.mxu0 %v8148
      %8188 = vmatmul.bf16.gmra.mxu0 %v7054
      %v8189 = vpop.f32.mrf.mxu0
      %v8190 = vadd.f32 0.0, %v8189
      %v8191 = vpop.f32.mrf.mxu0
      %v8192 = vadd.f32 0.0, %v8191
      %8193 = vmatmul.bf16.gmra.mxu0 %v7057
      %v8194 = vpop.f32.mrf.mxu0
      %v8195 = vadd.f32 0.0, %v8194
      %v8196 = vpop.f32.mrf.mxu0
      %v8197 = vadd.f32 0.0, %v8196
      %8198 = vmatmul.bf16.gmra.mxu0 %v7060
      %v8199 = vpop.f32.mrf.mxu0
      %v8200 = vadd.f32 0.0, %v8199
      %v8201 = vpop.f32.mrf.mxu0
      %v8202 = vadd.f32 0.0, %v8201
      %8203 = vmatmul.bf16.gmra.mxu0 %v7063
      %v8204 = vpop.f32.mrf.mxu0
      %v8205 = vadd.f32 0.0, %v8204
      %v8206 = vpop.f32.mrf.mxu0
      %v8207 = vadd.f32 0.0, %v8206
      %8208 = vmatmul.bf16.gmra.mxu0 %v7066
      %v8209 = vpop.f32.mrf.mxu0
      %v8210 = vadd.f32 0.0, %v8209
      %v8211 = vpop.f32.mrf.mxu0
      %v8212 = vadd.f32 0.0, %v8211
      %8213 = vmatmul.bf16.gmra.mxu0 %v7069
      %v8214 = vpop.f32.mrf.mxu0
      %v8215 = vadd.f32 0.0, %v8214
      %v8216 = vpop.f32.mrf.mxu0
      %v8217 = vadd.f32 0.0, %v8216
      %8218 = vmatmul.bf16.gmra.mxu0 %v7072
      %v8219 = vpop.f32.mrf.mxu0
      %v8220 = vadd.f32 0.0, %v8219
      %v8221 = vpop.f32.mrf.mxu0
      %v8222 = vadd.f32 0.0, %v8221
      %8223 = vmatmul.bf16.gmra.mxu0 %v7075
      %v8224 = vpop.f32.mrf.mxu0
      %v8225 = vadd.f32 0.0, %v8224
      %v8226 = vpop.f32.mrf.mxu0
      %v8227 = vadd.f32 0.0, %v8226
      %8228 = vmatmul.bf16.gmra.mxu0 %v8157
      %v8229 = vpop.f32.mrf.mxu0
      %v8230 = vadd.f32 0.0, %v8229
      %v8231 = vpop.f32.mrf.mxu0
      %v8232 = vadd.f32 0.0, %v8231
      %8233 = vmatmul.bf16.gmra.mxu0 %v8160
      %v8234 = vpop.f32.mrf.mxu0
      %v8235 = vadd.f32 0.0, %v8234
      %v8236 = vpop.f32.mrf.mxu0
      %v8237 = vadd.f32 0.0, %v8236
      %8238 = vmatmul.bf16.gmra.mxu0 %v8163
      %v8239 = vpop.f32.mrf.mxu0
      %v8240 = vadd.f32 0.0, %v8239
      %v8241 = vpop.f32.mrf.mxu0
      %v8242 = vadd.f32 0.0, %v8241
      %8243 = vmatmul.bf16.gmra.mxu0 %v8166
      %v8244 = vpop.f32.mrf.mxu0
      %v8245 = vadd.f32 0.0, %v8244
      %v8246 = vpop.f32.mrf.mxu0
      %v8247 = vadd.f32 0.0, %v8246
      %8248 = vmatmul.bf16.gmra.mxu0 %v8169
      %v8249 = vpop.f32.mrf.mxu0
      %v8250 = vadd.f32 0.0, %v8249
      %v8251 = vpop.f32.mrf.mxu0
      %v8252 = vadd.f32 0.0, %v8251
      %8253 = vmatmul.bf16.gmra.mxu0 %v8172
      %v8254 = vpop.f32.mrf.mxu0
      %v8255 = vadd.f32 0.0, %v8254
      %v8256 = vpop.f32.mrf.mxu0
      %v8257 = vadd.f32 0.0, %v8256
      %8258 = vmatmul.bf16.gmra.mxu0 %v8175
      %v8259 = vpop.f32.mrf.mxu0
      %v8260 = vadd.f32 0.0, %v8259
      %v8261 = vpop.f32.mrf.mxu0
      %v8262 = vadd.f32 0.0, %v8261
      %8263 = vmatmul.bf16.gmra.mxu0 %v8178
      %v8264 = vpop.f32.mrf.mxu0
      %v8265 = vadd.f32 0.0, %v8264
      %v8266 = vpop.f32.mrf.mxu0
      %v8267 = vadd.f32 0.0, %v8266
      %8268 = vdwg.mxu0
      %v8269 = vadd.f32 %v7875, %v8190
      %v8270 = vadd.f32 %v7876, %v8192
      %v8271 = vadd.f32 %v7877, %v8195
      %v8272 = vadd.f32 %v7878, %v8197
      %v8273 = vadd.f32 %v7879, %v8200
      %v8274 = vadd.f32 %v7880, %v8202
      %v8275 = vadd.f32 %v7881, %v8205
      %v8276 = vadd.f32 %v7882, %v8207
      %v8277 = vadd.f32 %v7883, %v8210
      %v8278 = vadd.f32 %v7884, %v8212
      %v8279 = vadd.f32 %v7885, %v8215
      %v8280 = vadd.f32 %v7886, %v8217
      %v8281 = vadd.f32 %v7887, %v8220
      %v8282 = vadd.f32 %v7888, %v8222
      %v8283 = vadd.f32 %v7889, %v8225
      %v8284 = vadd.f32 %v7890, %v8227
      %v8285 = vadd.f32 %v7891, %v8230
      %v8286 = vadd.f32 %v7892, %v8232
      %v8287 = vadd.f32 %v7893, %v8235
      %v8288 = vadd.f32 %v7894, %v8237
      %v8289 = vadd.f32 %v7895, %v8240
      %v8290 = vadd.f32 %v7896, %v8242
      %v8291 = vadd.f32 %v7897, %v8245
      %v8292 = vadd.f32 %v7898, %v8247
      %v8293 = vadd.f32 %v7899, %v8250
      %v8294 = vadd.f32 %v7900, %v8252
      %v8295 = vadd.f32 %v7901, %v8255
      %v8296 = vadd.f32 %v7902, %v8257
      %v8297 = vadd.f32 %v7903, %v8260
      %v8298 = vadd.f32 %v7904, %v8262
      %v8299 = vadd.f32 %v7905, %v8265
      %v8300 = vadd.f32 %v7906, %v8267
      %v8301 = vld [vmem:[%s6] sm:$0x1]
      %v8303 = vperm.slane %v8301, 0
      %v8305 = vmul.f32 %v8269, %v8303
      %v8306 = vmul.f32 %v8270, %v8303
      %v8307 = vmul.f32 %v8271, %v8303
      %v8308 = vmul.f32 %v8272, %v8303
      %v8309 = vmul.f32 %v8273, %v8303
      %v8310 = vmul.f32 %v8274, %v8303
      %v8311 = vmul.f32 %v8275, %v8303
      %v8312 = vmul.f32 %v8276, %v8303
      %v8313 = vmul.f32 %v8277, %v8303
      %v8314 = vmul.f32 %v8278, %v8303
      %v8315 = vmul.f32 %v8279, %v8303
      %v8316 = vmul.f32 %v8280, %v8303
      %v8317 = vmul.f32 %v8281, %v8303
      %v8318 = vmul.f32 %v8282, %v8303
      %v8319 = vmul.f32 %v8283, %v8303
      %v8320 = vmul.f32 %v8284, %v8303
      %v8321 = vmul.f32 %v8285, %v8303
      %v8322 = vmul.f32 %v8286, %v8303
      %v8323 = vmul.f32 %v8287, %v8303
      %v8324 = vmul.f32 %v8288, %v8303
      %v8325 = vmul.f32 %v8289, %v8303
      %v8326 = vmul.f32 %v8290, %v8303
      %v8327 = vmul.f32 %v8291, %v8303
      %v8328 = vmul.f32 %v8292, %v8303
      %v8329 = vmul.f32 %v8293, %v8303
      %v8330 = vmul.f32 %v8294, %v8303
      %v8331 = vmul.f32 %v8295, %v8303
      %v8332 = vmul.f32 %v8296, %v8303
      %v8333 = vmul.f32 %v8297, %v8303
      %v8334 = vmul.f32 %v8298, %v8303
      %v8335 = vmul.f32 %v8299, %v8303
      %v8336 = vmul.f32 %v8300, %v8303
      %v8337 = vld [vmem:[%s7] sm:$0x1]
      %v8339 = vperm.slane %v8337, 0
      %v8341 = vadd.f32 %v8305, %v8339
      %v8342 = vadd.f32 %v8306, %v8339
      %v8343 = vadd.f32 %v8307, %v8339
      %v8344 = vadd.f32 %v8308, %v8339
      %v8345 = vadd.f32 %v8309, %v8339
      %v8346 = vadd.f32 %v8310, %v8339
      %v8347 = vadd.f32 %v8311, %v8339
      %v8348 = vadd.f32 %v8312, %v8339
      %v8349 = vadd.f32 %v8313, %v8339
      %v8350 = vadd.f32 %v8314, %v8339
      %v8351 = vadd.f32 %v8315, %v8339
      %v8352 = vadd.f32 %v8316, %v8339
      %v8353 = vadd.f32 %v8317, %v8339
      %v8354 = vadd.f32 %v8318, %v8339
      %v8355 = vadd.f32 %v8319, %v8339
      %v8356 = vadd.f32 %v8320, %v8339
      %v8357 = vadd.f32 %v8321, %v8339
      %v8358 = vadd.f32 %v8322, %v8339
      %v8359 = vadd.f32 %v8323, %v8339
      %v8360 = vadd.f32 %v8324, %v8339
      %v8361 = vadd.f32 %v8325, %v8339
      %v8362 = vadd.f32 %v8326, %v8339
      %v8363 = vadd.f32 %v8327, %v8339
      %v8364 = vadd.f32 %v8328, %v8339
      %v8365 = vadd.f32 %v8329, %v8339
      %v8366 = vadd.f32 %v8330, %v8339
      %v8367 = vadd.f32 %v8331, %v8339
      %v8368 = vadd.f32 %v8332, %v8339
      %v8369 = vadd.f32 %v8333, %v8339
      %v8370 = vadd.f32 %v8334, %v8339
      %v8371 = vadd.f32 %v8335, %v8339
      %v8372 = vadd.f32 %v8336, %v8339
      %v8373 = vmax.f32 %v8341, 0.0
      %v8374 = vmax.f32 %v8342, 0.0
      %v8375 = vmax.f32 %v8343, 0.0
      %v8376 = vmax.f32 %v8344, 0.0
      %v8377 = vmax.f32 %v8345, 0.0
      %v8378 = vmax.f32 %v8346, 0.0
      %v8379 = vmax.f32 %v8347, 0.0
      %v8380 = vmax.f32 %v8348, 0.0
      %v8381 = vmax.f32 %v8349, 0.0
      %v8382 = vmax.f32 %v8350, 0.0
      %v8383 = vmax.f32 %v8351, 0.0
      %v8384 = vmax.f32 %v8352, 0.0
      %v8385 = vmax.f32 %v8353, 0.0
      %v8386 = vmax.f32 %v8354, 0.0
      %v8387 = vmax.f32 %v8355, 0.0
      %v8388 = vmax.f32 %v8356, 0.0
      %v8389 = vmax.f32 %v8357, 0.0
      %v8390 = vmax.f32 %v8358, 0.0
      %v8391 = vmax.f32 %v8359, 0.0
      %v8392 = vmax.f32 %v8360, 0.0
      %v8393 = vmax.f32 %v8361, 0.0
      %v8394 = vmax.f32 %v8362, 0.0
      %v8395 = vmax.f32 %v8363, 0.0
      %v8396 = vmax.f32 %v8364, 0.0
      %v8397 = vmax.f32 %v8365, 0.0
      %v8398 = vmax.f32 %v8366, 0.0
      %v8399 = vmax.f32 %v8367, 0.0
      %v8400 = vmax.f32 %v8368, 0.0
      %v8401 = vmax.f32 %v8369, 0.0
      %v8402 = vmax.f32 %v8370, 0.0
      %v8403 = vmax.f32 %v8371, 0.0
      %v8404 = vmax.f32 %v8372, 0.0
      %8405 = vst.msk [vmem:[%s325] sm:$0xff] %vm5160, %v8373
      %8406 = vst.msk [vmem:[%s325 + $0x8] sm:$0xff] %vm5160, %v8374
      %8407 = vst.msk [vmem:[%s325 + $0x10] sm:$0xff] %vm5160, %v8375
      %8408 = vst.msk [vmem:[%s325 + $0x18] sm:$0xff] %vm5160, %v8376
      %8409 = vst.msk [vmem:[%s325 + $0x20] sm:$0xff] %vm5160, %v8377
      %8410 = vst.msk [vmem:[%s325 + $0x28] sm:$0xff] %vm5160, %v8378
      %8411 = vst.msk [vmem:[%s325 + $0x30] sm:$0xff] %vm5160, %v8379
      %8412 = vst.msk [vmem:[%s325 + $0x38] sm:$0xff] %vm5160, %v8380
      %8413 = vst.msk [vmem:[%s325 + $0x40] sm:$0xff] %vm5160, %v8381
      %8414 = vst.msk [vmem:[%s325 + $0x48] sm:$0xff] %vm5160, %v8382
      %8415 = vst.msk [vmem:[%s325 + $0x50] sm:$0xff] %vm5160, %v8383
      %8416 = vst.msk [vmem:[%s325 + $0x58] sm:$0xff] %vm5160, %v8384
      %8417 = vst.msk [vmem:[%s325 + $0x60] sm:$0xff] %vm5160, %v8385
      %8418 = vst.msk [vmem:[%s325 + $0x68] sm:$0xff] %vm5160, %v8386
      %8419 = vst.msk [vmem:[%s325 + $0x70] sm:$0xff] %vm5160, %v8387
      %8420 = vst.msk [vmem:[%s325 + $0x78] sm:$0xff] %vm5160, %v8388
      %8437 = vrot.lane.b32.xlu0 %v8389, 64
      %v8438 = vpop.permute.xlu0 %8437
      %8439 = vrot.lane.b32.xlu0 %v8390, 64
      %v8440 = vpop.permute.xlu0 %8439
      %8441 = vrot.lane.b32.xlu0 %v8391, 64
      %v8442 = vpop.permute.xlu0 %8441
      %8443 = vrot.lane.b32.xlu0 %v8392, 64
      %v8444 = vpop.permute.xlu0 %8443
      %8445 = vrot.lane.b32.xlu0 %v8393, 64
      %v8446 = vpop.permute.xlu0 %8445
      %8447 = vrot.lane.b32.xlu0 %v8394, 64
      %v8448 = vpop.permute.xlu0 %8447
      %8449 = vrot.lane.b32.xlu0 %v8395, 64
      %v8450 = vpop.permute.xlu0 %8449
      %8451 = vrot.lane.b32.xlu0 %v8396, 64
      %v8452 = vpop.permute.xlu0 %8451
      %8453 = vrot.lane.b32.xlu0 %v8397, 64
      %v8454 = vpop.permute.xlu0 %8453
      %8455 = vrot.lane.b32.xlu0 %v8398, 64
      %v8456 = vpop.permute.xlu0 %8455
      %8457 = vrot.lane.b32.xlu0 %v8399, 64
      %v8458 = vpop.permute.xlu0 %8457
      %8459 = vrot.lane.b32.xlu0 %v8400, 64
      %v8460 = vpop.permute.xlu0 %8459
      %8461 = vrot.lane.b32.xlu0 %v8401, 64
      %v8462 = vpop.permute.xlu0 %8461
      %8463 = vrot.lane.b32.xlu0 %v8402, 64
      %v8464 = vpop.permute.xlu0 %8463
      %8465 = vrot.lane.b32.xlu0 %v8403, 64
      %v8466 = vpop.permute.xlu0 %8465
      %8467 = vrot.lane.b32.xlu0 %v8404, 64
      %v8468 = vpop.permute.xlu0 %8467
      %vm8485 = vcmask 1048064
      %8486 = vst.msk [vmem:[%s325] sm:$0xff] %vm8485, %v8438
      %8487 = vst.msk [vmem:[%s325 + $0x8] sm:$0xff] %vm8485, %v8440
      %8488 = vst.msk [vmem:[%s325 + $0x10] sm:$0xff] %vm8485, %v8442
      %8489 = vst.msk [vmem:[%s325 + $0x18] sm:$0xff] %vm8485, %v8444
      %8490 = vst.msk [vmem:[%s325 + $0x20] sm:$0xff] %vm8485, %v8446
      %8491 = vst.msk [vmem:[%s325 + $0x28] sm:$0xff] %vm8485, %v8448
      %8492 = vst.msk [vmem:[%s325 + $0x30] sm:$0xff] %vm8485, %v8450
      %8493 = vst.msk [vmem:[%s325 + $0x38] sm:$0xff] %vm8485, %v8452
      %8494 = vst.msk [vmem:[%s325 + $0x40] sm:$0xff] %vm8485, %v8454
      %8495 = vst.msk [vmem:[%s325 + $0x48] sm:$0xff] %vm8485, %v8456
      %8496 = vst.msk [vmem:[%s325 + $0x50] sm:$0xff] %vm8485, %v8458
      %8497 = vst.msk [vmem:[%s325 + $0x58] sm:$0xff] %vm8485, %v8460
      %8498 = vst.msk [vmem:[%s325 + $0x60] sm:$0xff] %vm8485, %v8462
      %8499 = vst.msk [vmem:[%s325 + $0x68] sm:$0xff] %vm8485, %v8464
      %8500 = vst.msk [vmem:[%s325 + $0x70] sm:$0xff] %vm8485, %v8466
      %8501 = vst.msk [vmem:[%s325 + $0x78] sm:$0xff] %vm8485, %v8468
      %p8502 = scmp.lt.s32.totalorder %s19, 1
      %s8503 = scalar_select %p8502, %s19, 1
      %s8504 = smul.addr %s8503, 16
      %s8505 = smul.addr %s8504, 8
      %s8506 = scalar_lea.vmem %s8, %s8505
      // Predicated region
      $region53: #{up_forward.1} parent=51 // pred_check
        %p8507 = pneg %p215
      $region54: #{up_forward.1} parent=51 // pred_check_branch
        %8509 = sbr.rel (%p8507) target = $region56
      $region55: #{up_forward.1} parent=51 // pred_region
        _
      $region56: #{up_forward.1} parent=51 // pred_fallthru
        _
    $region52: #{up_forward.1} parent=5 // pred_fallthru
      _
    %p8510 = scmp.le.s32.totalorder 2, %s14
    // Predicated region
    $region57: #{up_forward.1} parent=5 // pred_check
      %p8511 = pneg %p8510
    $region58: #{up_forward.1} parent=5 // pred_check_branch
      %8513 = sbr.rel (%p8511) target = $region60
    $region59: #{up_forward.1} parent=5 // pred_region
      %s8514 = ssub.s32 %s14, 2
      // Predicated region
      $region61: #{up_forward.1} parent=59 // pred_check
        %p8515 = pneg %p221
      $region62: #{up_forward.1} parent=59 // pred_check_branch
        %8517 = sbr.rel (%p8515) target = $region64
      $region63: #{up_forward.1} parent=59 // pred_region
        %p8518 = scmp.lt.s32.totalorder %s20, 1
        %s8519 = scalar_select %p8518, %s20, 1
        %s8520 = smul.addr %s8519, 16
        %s8521 = smul.addr %s8520, 8
        %s8522 = scalar_lea.vmem %s8, %s8521
      $region64: #{up_forward.1} parent=59 // pred_fallthru
        _
    $region60: #{up_forward.1} parent=5 // pred_fallthru
      _
  $region6: #{up_forward.1} parent=0 // loop_footer
    %s18 = sadd.s32 1, %s14
  $region7: #{up_forward.1} parent=0 // loop_footer_branch
    %13 = sbr.rel target = $region3
  $region8: #{up_forward.1} parent=0 // loop_exit
    _

</llo_original>
